<compile_context>
chip_gen: v7x
topology: tpu7x:2x2x1
jax: 0.10.0
libtpu: 0.0.40
codegen_flags: <defaults>
</compile_context>

<pallas_src>
import functools

import jax
import jax.numpy as jnp
from jax.experimental import pallas as pl
from jax.experimental.pallas import tpu as pltpu


def _round_up(x, m):
    return -(-x // m) * m


# ----------------------------------------------------------------------------
# Pallas kernel: fused bf16 matmul (f32 accumulate) + bias + optional ReLU
# ----------------------------------------------------------------------------
def _mm_bias_act_kernel(a_ref, b_ref, bias_ref, o_ref, *, apply_relu):
    acc = jnp.dot(a_ref[...], b_ref[...], preferred_element_type=jnp.float32)
    acc = acc + bias_ref[...]
    if apply_relu:
        acc = jnp.maximum(acc, 0.0)
    o_ref[...] = acc.astype(o_ref.dtype)


def matmul_bias_act(a, w, bias2d, *, apply_relu, out_dtype):
    """act(A @ W + bias).  A:(M,Kp) bf16, W:(Kp,Np) bf16, bias:(1,Np) f32."""
    M, Kp = a.shape
    Kp2, Np = w.shape
    assert Kp == Kp2 and Kp % 128 == 0 and Np % 128 == 0

    Mp = _round_up(M, 8)
    tm = min(512, Mp)
    Mp = _round_up(Mp, tm)
    tn = 256 if (Np % 256 == 0) else 128

    # Keep >= 2 grid steps when the layer allows it so both TensorCores on
    # v7x have work under dimension_semantics=("parallel", "parallel").
    if (Mp // tm) * (Np // tn) == 1 and Mp >= 16 and Mp % 16 == 0:
        tm = Mp // 2

    if Mp != M:
        a = jnp.pad(a, ((0, Mp - M), (0, 0)))

    # Grid: N outer, M inner -> the (Kp, tn) weight tile is reused (no re-DMA)
    # across every M step.
    grid = (Np // tn, Mp // tm)

    out = pl.pallas_call(
        functools.partial(_mm_bias_act_kernel, apply_relu=apply_relu),
        out_shape=jax.ShapeDtypeStruct((Mp, Np), out_dtype),
        grid=grid,
        in_specs=[
            pl.BlockSpec((tm, Kp), lambda j, i: (i, 0)),
            pl.BlockSpec((Kp, tn), lambda j, i: (0, j)),
            pl.BlockSpec((1, tn), lambda j, i: (0, j)),
        ],
        out_specs=pl.BlockSpec((tm, tn), lambda j, i: (i, j)),
        compiler_params=pltpu.CompilerParams(
            dimension_semantics=("parallel", "parallel"),
            vmem_limit_bytes=32 * 1024 * 1024,
        ),
    )(a, w, bias2d)
    return out[:M, :]


# ----------------------------------------------------------------------------
# Conv as bf16 im2col (K padding folded into the single concatenate) + kernel
# ----------------------------------------------------------------------------
def _im2col_bf16(x_nhwc, ksize, stride, pad, k_padded):
    N, H, W, C = x_nhwc.shape
    x = x_nhwc.astype(jnp.bfloat16)
    if pad:
        x = jnp.pad(x, ((0, 0), (pad, pad), (pad, pad), (0, 0)))
    Ho = (H + 2 * pad - ksize) // stride + 1
    Wo = (W + 2 * pad - ksize) // stride + 1
    patches = [
        x[:, ki:ki + stride * Ho:stride, kj:kj + stride * Wo:stride, :]
        for ki in range(ksize)
        for kj in range(ksize)
    ]
    K = ksize * ksize * C
    if k_padded > K:  # fold K-padding into the same write
        patches.append(jnp.zeros((N, Ho, Wo, k_padded - K), jnp.bfloat16))
    cols = patches[0] if len(patches) == 1 else jnp.concatenate(patches, axis=-1)
    # TODO(synk): for very large images, fuse im2col into the kernel via a
    # (row-tile, kh*kw) grid instead of materializing cols (bf16 keeps it 2x
    # smaller than before already).
    return cols.reshape(N * Ho * Wo, k_padded), Ho, Wo


def conv2d_pallas(x_nhwc, packed, *, stride, pad, relu, out_dtype):
    w, b2, out_c, k = packed["w"], packed["b"], packed["out_c"], packed["k"]
    cols, Ho, Wo = _im2col_bf16(x_nhwc, k, stride, pad, w.shape[0])
    y = matmul_bias_act(cols, w, b2, apply_relu=relu, out_dtype=out_dtype)
    N = x_nhwc.shape[0]
    return y[:, :out_c].reshape(N, Ho, Wo, out_c)


# ----------------------------------------------------------------------------
# Parameters: init (f32, PyTorch-style OIHW) + one-time packing for the kernel
# ----------------------------------------------------------------------------
def init_params(num_classes, key):
    def conv_init(k, out_c, in_c, ks):
        fan_in = in_c * ks * ks
        std = (2.0 / fan_in) ** 0.5
        w = jax.random.normal(k, (out_c, in_c, ks, ks), jnp.float32) * std
        b = jnp.zeros((out_c,), jnp.float32)
        return w, b

    keys = jax.random.split(key, 8)
    return {
        "bb1": conv_init(keys[0], 64, 3, 3),
        "bb2": conv_init(keys[1], 128, 64, 3),
        "bb3": conv_init(keys[2], 256, 128, 3),
        "bb4": conv_init(keys[3], 512, 256, 3),
        "h1_cls": conv_init(keys[4], num_classes, 512, 1),
        "h1_reg": conv_init(keys[5], 4, 512, 1),
        "h2_cls": conv_init(keys[6], num_classes, 512, 1),
        "h2_reg": conv_init(keys[7], 4, 512, 1),
    }


def _pack_conv(w_oihw, b):
    out_c, in_c, kh, kw = w_oihw.shape
    K = kh * kw * in_c
    Kp = _round_up(K, 128)
    Np = _round_up(out_c, 128)
    # (O,I,kh,kw) -> (kh,kw,I,O) -> (K,O); matches im2col (ki,kj,C) ordering.
    w_mat = jnp.transpose(w_oihw, (2, 3, 1, 0)).reshape(K, out_c)
    w_mat = jnp.pad(w_mat, ((0, Kp - K), (0, Np - out_c))).astype(jnp.bfloat16)
    b2 = jnp.pad(b.astype(jnp.float32).reshape(1, out_c), ((0, 0), (0, Np - out_c)))
    return {"w": w_mat, "b": b2, "out_c": out_c, "k": kh}


def pack_params(params):
    packed = {n: _pack_conv(*params[n]) for n in ("bb1", "bb2", "bb3", "bb4")}
    # Fuse the four 1x1 head convs into one matmul along the output axis:
    # [h1_cls | h1_reg | h2_cls | h2_reg]  ->  one (512, 2*nc+8) weight matrix.
    w_h = jnp.concatenate(
        [params[n][0] for n in ("h1_cls", "h1_reg", "h2_cls", "h2_reg")], axis=0)
    b_h = jnp.concatenate(
        [params[n][1] for n in ("h1_cls", "h1_reg", "h2_cls", "h2_reg")], axis=0)
    packed["heads"] = _pack_conv(w_h, b_h)
    return packed


# ----------------------------------------------------------------------------
# Full-model forward (NCHW in / NCHW out, like the PyTorch module)
# ----------------------------------------------------------------------------
def yolov10_forward(packed, num_classes, x_nchw):
    x = jnp.transpose(x_nchw, (0, 2, 3, 1))  # NCHW -> NHWC for the kernel path
    x = conv2d_pallas(x, packed["bb1"], stride=2, pad=1, relu=True,
                      out_dtype=jnp.bfloat16)
    x = conv2d_pallas(x, packed["bb2"], stride=2, pad=1, relu=True,
                      out_dtype=jnp.bfloat16)
    x = conv2d_pallas(x, packed["bb3"], stride=2, pad=1, relu=True,
                      out_dtype=jnp.bfloat16)
    f = conv2d_pallas(x, packed["bb4"], stride=2, pad=1, relu=True,
                      out_dtype=jnp.bfloat16)
    # Both heads in ONE fused 1x1-conv matmul, then split channels.
    h = conv2d_pallas(f, packed["heads"], stride=1, pad=0, relu=False,
                      out_dtype=jnp.float32)
    nc = num_classes
    cls1 = h[..., :nc]
    reg1 = h[..., nc:nc + 4]
    cls2 = h[..., nc + 4:2 * nc + 4]
    reg2 = h[..., 2 * nc + 4:2 * nc + 8]
    to_nchw = lambda t: jnp.transpose(t, (0, 3, 1, 2))
    return to_nchw(cls1), to_nchw(reg1), to_nchw(cls2), to_nchw(reg2)


# ----------------------------------------------------------------------------
# Pure-JAX reference with matching bf16-input / f32-accumulate numerics
# ----------------------------------------------------------------------------
def _conv_ref(x_nchw, w, b, stride, pad, relu, out_bf16):
    y = jax.lax.conv_general_dilated(
        x_nchw.astype(jnp.bfloat16), w.astype(jnp.bfloat16),
        window_strides=(stride, stride),
        padding=((pad, pad), (pad, pad)),
        dimension_numbers=("NCHW", "OIHW", "NCHW"),
        preferred_element_type=jnp.float32,
    ) + b.reshape(1, -1, 1, 1).astype(jnp.float32)
    if relu:
        y = jnp.maximum(y, 0.0)
    return y.astype(jnp.bfloat16) if out_bf16 else y


def yolov10_ref(params, x_nchw):
    x = _conv_ref(x_nchw, *params["bb1"], 2, 1, True, True)
    x = _conv_ref(x, *params["bb2"], 2, 1, True, True)
    x = _conv_ref(x, *params["bb3"], 2, 1, True, True)
    f = _conv_ref(x, *params["bb4"], 2, 1, True, True)
    return (
        _conv_ref(f, *params["h1_cls"], 1, 0, False, False),
        _conv_ref(f, *params["h1_reg"], 1, 0, False, False),
        _conv_ref(f, *params["h2_cls"], 1, 0, False, False),
        _conv_ref(f, *params["h2_reg"], 1, 0, False, False),
    )


if __name__ == "__main__":
    num_classes = 20
    key = jax.random.PRNGKey(0)
    k_param, k_x = jax.random.split(key)
    params = init_params(num_classes, k_param)
    packed = pack_params(params)  # one-time weight pack/pad/transpose (bf16)

    # NCHW input, like the PyTorch module
    x = jax.random.normal(k_x, (2, 3, 32, 32), jnp.float32)

    fwd = jax.jit(functools.partial(yolov10_forward, packed, num_classes))
    outs = jax.block_until_ready(fwd(x))

    refs = yolov10_ref(params, x)
    for o, r in zip(outs, refs):
        assert o.shape == r.shape, (o.shape, r.shape)
        max_err = float(jnp.max(jnp.abs(o.astype(jnp.float32) - r.astype(jnp.float32))))
        assert jnp.allclose(o.astype(jnp.float32), r.astype(jnp.float32),
                            rtol=2e-2, atol=2e-2), max_err

    # Expected shapes: cls (2, 20, 2, 2), reg (2, 4, 2, 2) for both heads.
    print("KERNEL_OK")
</pallas_src>

<mosaic_0001>
module attributes {stable_mosaic.version = 11 : i64} {
  func.func @_mm_bias_act_kernel(%arg0: i32, %arg1: i32, %arg2: memref<256x128xbf16, #tpu.memory_space<vmem>>, %arg3: memref<128x128xbf16, #tpu.memory_space<vmem>>, %arg4: memref<1x128xf32, #tpu.memory_space<vmem>>, %arg5: memref<256x128xbf16, #tpu.memory_space<vmem>>) attributes {dimension_semantics = [#tpu.dimension_semantics<parallel>, #tpu.dimension_semantics<parallel>], iteration_bounds = array<i64: 1, 2>, scalar_prefetch = 0 : i64, scratch_operands = 0 : i64, tpu.core_type = #tpu.core_type<tc>, window_params = [{transform_indices = @transform_0, window_bounds = array<i64: 256, 128>}, {transform_indices = @transform_1, window_bounds = array<i64: 128, 128>}, {transform_indices = @transform_2, window_bounds = array<i64: 1, 128>}, {transform_indices = @transform_3, window_bounds = array<i64: 256, 128>}]} {
    %c0 = arith.constant 0 : index
    %c0_0 = arith.constant 0 : index
    %0 = vector.load %arg2[%c0, %c0_0] : memref<256x128xbf16, #tpu.memory_space<vmem>>, vector<256x128xbf16>
    %c0_1 = arith.constant 0 : index
    %c0_2 = arith.constant 0 : index
    %1 = vector.load %arg3[%c0_1, %c0_2] : memref<128x128xbf16, #tpu.memory_space<vmem>>, vector<128x128xbf16>
    %cst = arith.constant dense<0.000000e+00> : vector<256x128xf32>
    %2 = tpu.matmul %0, %1, %cst {dimension_numbers = #tpu.dot_dimension_numbers<[1], [0], [0], [1], [0, 0, 1, 1], [], []>} : vector<256x128xbf16>, vector<128x128xbf16>, vector<256x128xf32> -> vector<256x128xf32>
    %c0_3 = arith.constant 0 : index
    %c0_4 = arith.constant 0 : index
    %3 = vector.load %arg4[%c0_3, %c0_4] : memref<1x128xf32, #tpu.memory_space<vmem>>, vector<1x128xf32>
    %4 = vector.broadcast %3 : vector<1x128xf32> to vector<256x128xf32>
    %5 = arith.addf %2, %4 : vector<256x128xf32>
    %cst_5 = arith.constant 0.000000e+00 : f32
    %6 = vector.broadcast %cst_5 : f32 to vector<256x128xf32>
    %7 = arith.maximumf %5, %6 : vector<256x128xf32>
    %8 = arith.truncf %7 : vector<256x128xf32> to vector<256x128xbf16>
    %c0_6 = arith.constant 0 : index
    %c0_7 = arith.constant 0 : index
    %9 = vector.load %arg5[%c0_6, %c0_7] : memref<256x128xbf16, #tpu.memory_space<vmem>>, vector<256x128xbf16>
    tpu.vector_store %arg5[%c0_6, %c0_7], %8 {strides = array<i32>} : memref<256x128xbf16, #tpu.memory_space<vmem>>, vector<256x128xbf16>,
    return
  }
  func.func @transform_0(%arg0: i32, %arg1: i32) -> (i32, i32) {
    %c0_i32 = arith.constant 0 : i32
    %c0_i32_0 = arith.constant 0 : i32
    return %arg1, %c0_i32 : i32, i32
  }
  func.func @transform_1(%arg0: i32, %arg1: i32) -> (i32, i32) {
    %c0_i32 = arith.constant 0 : i32
    %c0_i32_0 = arith.constant 0 : i32
    return %c0_i32, %arg0 : i32, i32
  }
  func.func @transform_2(%arg0: i32, %arg1: i32) -> (i32, i32) {
    %c0_i32 = arith.constant 0 : i32
    %c0_i32_0 = arith.constant 0 : i32
    return %c0_i32, %arg0 : i32, i32
  }
  func.func @transform_3(%arg0: i32, %arg1: i32) -> (i32, i32) {
    %c0_i32 = arith.constant 0 : i32
    return %arg1, %arg0 : i32, i32
  }
}

module attributes {stable_mosaic.version = 11 : i64} {
  func.func @_mm_bias_act_kernel(%arg0: i32, %arg1: i32, %arg2: memref<64x640xbf16, #tpu.memory_space<vmem>>, %arg3: memref<640x128xbf16, #tpu.memory_space<vmem>>, %arg4: memref<1x128xf32, #tpu.memory_space<vmem>>, %arg5: memref<64x128xbf16, #tpu.memory_space<vmem>>) attributes {dimension_semantics = [#tpu.dimension_semantics<parallel>, #tpu.dimension_semantics<parallel>], iteration_bounds = array<i64: 1, 2>, scalar_prefetch = 0 : i64, scratch_operands = 0 : i64, tpu.core_type = #tpu.core_type<tc>, window_params = [{transform_indices = @transform_0, window_bounds = array<i64: 64, 640>}, {transform_indices = @transform_1, window_bounds = array<i64: 640, 128>}, {transform_indices = @transform_2, window_bounds = array<i64: 1, 128>}, {transform_indices = @transform_3, window_bounds = array<i64: 64, 128>}]} {
    %c0 = arith.constant 0 : index
    %c0_0 = arith.constant 0 : index
    %0 = vector.load %arg2[%c0, %c0_0] : memref<64x640xbf16, #tpu.memory_space<vmem>>, vector<64x640xbf16>
    %c0_1 = arith.constant 0 : index
    %c0_2 = arith.constant 0 : index
    %1 = vector.load %arg3[%c0_1, %c0_2] : memref<640x128xbf16, #tpu.memory_space<vmem>>, vector<640x128xbf16>
    %cst = arith.constant dense<0.000000e+00> : vector<64x128xf32>
    %2 = tpu.matmul %0, %1, %cst {dimension_numbers = #tpu.dot_dimension_numbers<[1], [0], [0], [1], [0, 0, 1, 1], [], []>} : vector<64x640xbf16>, vector<640x128xbf16>, vector<64x128xf32> -> vector<64x128xf32>
    %c0_3 = arith.constant 0 : index
    %c0_4 = arith.constant 0 : index
    %3 = vector.load %arg4[%c0_3, %c0_4] : memref<1x128xf32, #tpu.memory_space<vmem>>, vector<1x128xf32>
    %4 = vector.broadcast %3 : vector<1x128xf32> to vector<64x128xf32>
    %5 = arith.addf %2, %4 : vector<64x128xf32>
    %cst_5 = arith.constant 0.000000e+00 : f32
    %6 = vector.broadcast %cst_5 : f32 to vector<64x128xf32>
    %7 = arith.maximumf %5, %6 : vector<64x128xf32>
    %8 = arith.truncf %7 : vector<64x128xf32> to vector<64x128xbf16>
    %c0_6 = arith.constant 0 : index
    %c0_7 = arith.constant 0 : index
    %9 = vector.load %arg5[%c0_6, %c0_7] : memref<64x128xbf16, #tpu.memory_space<vmem>>, vector<64x128xbf16>
    tpu.vector_store %arg5[%c0_6, %c0_7], %8 {strides = array<i32>} : memref<64x128xbf16, #tpu.memory_space<vmem>>, vector<64x128xbf16>,
    return
  }
  func.func @transform_0(%arg0: i32, %arg1: i32) -> (i32, i32) {
    %c0_i32 = arith.constant 0 : i32
    %c0_i32_0 = arith.constant 0 : i32
    return %arg1, %c0_i32 : i32, i32
  }
  func.func @transform_1(%arg0: i32, %arg1: i32) -> (i32, i32) {
    %c0_i32 = arith.constant 0 : i32
    %c0_i32_0 = arith.constant 0 : i32
    return %c0_i32, %arg0 : i32, i32
  }
  func.func @transform_2(%arg0: i32, %arg1: i32) -> (i32, i32) {
    %c0_i32 = arith.constant 0 : i32
    %c0_i32_0 = arith.constant 0 : i32
    return %c0_i32, %arg0 : i32, i32
  }
  func.func @transform_3(%arg0: i32, %arg1: i32) -> (i32, i32) {
    %c0_i32 = arith.constant 0 : i32
    return %arg1, %arg0 : i32, i32
  }
}

module attributes {stable_mosaic.version = 11 : i64} {
  func.func @_mm_bias_act_kernel(%arg0: i32, %arg1: i32, %arg2: memref<16x1152xbf16, #tpu.memory_space<vmem>>, %arg3: memref<1152x256xbf16, #tpu.memory_space<vmem>>, %arg4: memref<1x256xf32, #tpu.memory_space<vmem>>, %arg5: memref<16x256xbf16, #tpu.memory_space<vmem>>) attributes {dimension_semantics = [#tpu.dimension_semantics<parallel>, #tpu.dimension_semantics<parallel>], iteration_bounds = array<i64: 1, 2>, scalar_prefetch = 0 : i64, scratch_operands = 0 : i64, tpu.core_type = #tpu.core_type<tc>, window_params = [{transform_indices = @transform_0, window_bounds = array<i64: 16, 1152>}, {transform_indices = @transform_1, window_bounds = array<i64: 1152, 256>}, {transform_indices = @transform_2, window_bounds = array<i64: 1, 256>}, {transform_indices = @transform_3, window_bounds = array<i64: 16, 256>}]} {
    %c0 = arith.constant 0 : index
    %c0_0 = arith.constant 0 : index
    %0 = vector.load %arg2[%c0, %c0_0] : memref<16x1152xbf16, #tpu.memory_space<vmem>>, vector<16x1152xbf16>
    %c0_1 = arith.constant 0 : index
    %c0_2 = arith.constant 0 : index
    %1 = vector.load %arg3[%c0_1, %c0_2] : memref<1152x256xbf16, #tpu.memory_space<vmem>>, vector<1152x256xbf16>
    %cst = arith.constant dense<0.000000e+00> : vector<16x256xf32>
    %2 = tpu.matmul %0, %1, %cst {dimension_numbers = #tpu.dot_dimension_numbers<[1], [0], [0], [1], [0, 0, 1, 1], [], []>} : vector<16x1152xbf16>, vector<1152x256xbf16>, vector<16x256xf32> -> vector<16x256xf32>
    %c0_3 = arith.constant 0 : index
    %c0_4 = arith.constant 0 : index
    %3 = vector.load %arg4[%c0_3, %c0_4] : memref<1x256xf32, #tpu.memory_space<vmem>>, vector<1x256xf32>
    %4 = vector.broadcast %3 : vector<1x256xf32> to vector<16x256xf32>
    %5 = arith.addf %2, %4 : vector<16x256xf32>
    %cst_5 = arith.constant 0.000000e+00 : f32
    %6 = vector.broadcast %cst_5 : f32 to vector<16x256xf32>
    %7 = arith.maximumf %5, %6 : vector<16x256xf32>
    %8 = arith.truncf %7 : vector<16x256xf32> to vector<16x256xbf16>
    %c0_6 = arith.constant 0 : index
    %c0_7 = arith.constant 0 : index
    %9 = vector.load %arg5[%c0_6, %c0_7] : memref<16x256xbf16, #tpu.memory_space<vmem>>, vector<16x256xbf16>
    tpu.vector_store %arg5[%c0_6, %c0_7], %8 {strides = array<i32>} : memref<16x256xbf16, #tpu.memory_space<vmem>>, vector<16x256xbf16>,
    return
  }
  func.func @transform_0(%arg0: i32, %arg1: i32) -> (i32, i32) {
    %c0_i32 = arith.constant 0 : i32
    %c0_i32_0 = arith.constant 0 : i32
    return %arg1, %c0_i32 : i32, i32
  }
  func.func @transform_1(%arg0: i32, %arg1: i32) -> (i32, i32) {
    %c0_i32 = arith.constant 0 : i32
    %c0_i32_0 = arith.constant 0 : i32
    return %c0_i32, %arg0 : i32, i32
  }
  func.func @transform_2(%arg0: i32, %arg1: i32) -> (i32, i32) {
    %c0_i32 = arith.constant 0 : i32
    %c0_i32_0 = arith.constant 0 : i32
    return %c0_i32, %arg0 : i32, i32
  }
  func.func @transform_3(%arg0: i32, %arg1: i32) -> (i32, i32) {
    %c0_i32 = arith.constant 0 : i32
    return %arg1, %arg0 : i32, i32
  }
}

module attributes {stable_mosaic.version = 11 : i64} {
  func.func @_mm_bias_act_kernel(%arg0: i32, %arg1: i32, %arg2: memref<8x512xbf16, #tpu.memory_space<vmem>>, %arg3: memref<512x128xbf16, #tpu.memory_space<vmem>>, %arg4: memref<1x128xf32, #tpu.memory_space<vmem>>, %arg5: memref<8x128xf32, #tpu.memory_space<vmem>>) attributes {dimension_semantics = [#tpu.dimension_semantics<parallel>, #tpu.dimension_semantics<parallel>], iteration_bounds = array<i64: 1, 1>, scalar_prefetch = 0 : i64, scratch_operands = 0 : i64, tpu.core_type = #tpu.core_type<tc>, window_params = [{transform_indices = @transform_0, window_bounds = array<i64: 8, 512>}, {transform_indices = @transform_1, window_bounds = array<i64: 512, 128>}, {transform_indices = @transform_2, window_bounds = array<i64: 1, 128>}, {transform_indices = @transform_3, window_bounds = array<i64: 8, 128>}]} {
    %c0 = arith.constant 0 : index
    %c0_0 = arith.constant 0 : index
    %0 = vector.load %arg2[%c0, %c0_0] : memref<8x512xbf16, #tpu.memory_space<vmem>>, vector<8x512xbf16>
    %c0_1 = arith.constant 0 : index
    %c0_2 = arith.constant 0 : index
    %1 = vector.load %arg3[%c0_1, %c0_2] : memref<512x128xbf16, #tpu.memory_space<vmem>>, vector<512x128xbf16>
    %cst = arith.constant dense<0.000000e+00> : vector<8x128xf32>
    %2 = tpu.matmul %0, %1, %cst {dimension_numbers = #tpu.dot_dimension_numbers<[1], [0], [0], [1], [0, 0, 1, 1], [], []>} : vector<8x512xbf16>, vector<512x128xbf16>, vector<8x128xf32> -> vector<8x128xf32>
    %c0_3 = arith.constant 0 : index
    %c0_4 = arith.constant 0 : index
    %3 = vector.load %arg4[%c0_3, %c0_4] : memref<1x128xf32, #tpu.memory_space<vmem>>, vector<1x128xf32>
    %4 = vector.broadcast %3 : vector<1x128xf32> to vector<8x128xf32>
    %5 = arith.addf %2, %4 : vector<8x128xf32>
    %c0_5 = arith.constant 0 : index
    %c0_6 = arith.constant 0 : index
    %6 = vector.load %arg5[%c0_5, %c0_6] : memref<8x128xf32, #tpu.memory_space<vmem>>, vector<8x128xf32>
    tpu.vector_store %arg5[%c0_5, %c0_6], %5 {strides = array<i32>} : memref<8x128xf32, #tpu.memory_space<vmem>>, vector<8x128xf32>,
    return
  }
  func.func @transform_0(%arg0: i32, %arg1: i32) -> (i32, i32) {
    %c0_i32 = arith.constant 0 : i32
    %c0_i32_0 = arith.constant 0 : i32
    return %arg1, %c0_i32 : i32, i32
  }
  func.func @transform_1(%arg0: i32, %arg1: i32) -> (i32, i32) {
    %c0_i32 = arith.constant 0 : i32
    %c0_i32_0 = arith.constant 0 : i32
    return %c0_i32, %arg0 : i32, i32
  }
  func.func @transform_2(%arg0: i32, %arg1: i32) -> (i32, i32) {
    %c0_i32 = arith.constant 0 : i32
    %c0_i32_0 = arith.constant 0 : i32
    return %c0_i32, %arg0 : i32, i32
  }
  func.func @transform_3(%arg0: i32, %arg1: i32) -> (i32, i32) {
    %c0_i32 = arith.constant 0 : i32
    return %arg1, %arg0 : i32, i32
  }
}

module attributes {stable_mosaic.version = 11 : i64} {
  func.func @_mm_bias_act_kernel(%arg0: i32, %arg1: i32, %arg2: memref<8x2304xbf16, #tpu.memory_space<vmem>>, %arg3: memref<2304x256xbf16, #tpu.memory_space<vmem>>, %arg4: memref<1x256xf32, #tpu.memory_space<vmem>>, %arg5: memref<8x256xbf16, #tpu.memory_space<vmem>>) attributes {dimension_semantics = [#tpu.dimension_semantics<parallel>, #tpu.dimension_semantics<parallel>], iteration_bounds = array<i64: 2, 1>, scalar_prefetch = 0 : i64, scratch_operands = 0 : i64, tpu.core_type = #tpu.core_type<tc>, window_params = [{transform_indices = @transform_0, window_bounds = array<i64: 8, 2304>}, {transform_indices = @transform_1, window_bounds = array<i64: 2304, 256>}, {transform_indices = @transform_2, window_bounds = array<i64: 1, 256>}, {transform_indices = @transform_3, window_bounds = array<i64: 8, 256>}]} {
    %c0 = arith.constant 0 : index
    %c0_0 = arith.constant 0 : index
    %0 = vector.load %arg2[%c0, %c0_0] : memref<8x2304xbf16, #tpu.memory_space<vmem>>, vector<8x2304xbf16>
    %c0_1 = arith.constant 0 : index
    %c0_2 = arith.constant 0 : index
    %1 = vector.load %arg3[%c0_1, %c0_2] : memref<2304x256xbf16, #tpu.memory_space<vmem>>, vector<2304x256xbf16>
    %cst = arith.constant dense<0.000000e+00> : vector<8x256xf32>
    %2 = tpu.matmul %0, %1, %cst {dimension_numbers = #tpu.dot_dimension_numbers<[1], [0], [0], [1], [0, 0, 1, 1], [], []>} : vector<8x2304xbf16>, vector<2304x256xbf16>, vector<8x256xf32> -> vector<8x256xf32>
    %c0_3 = arith.constant 0 : index
    %c0_4 = arith.constant 0 : index
    %3 = vector.load %arg4[%c0_3, %c0_4] : memref<1x256xf32, #tpu.memory_space<vmem>>, vector<1x256xf32>
    %4 = vector.broadcast %3 : vector<1x256xf32> to vector<8x256xf32>
    %5 = arith.addf %2, %4 : vector<8x256xf32>
    %cst_5 = arith.constant 0.000000e+00 : f32
    %6 = vector.broadcast %cst_5 : f32 to vector<8x256xf32>
    %7 = arith.maximumf %5, %6 : vector<8x256xf32>
    %8 = arith.truncf %7 : vector<8x256xf32> to vector<8x256xbf16>
    %c0_6 = arith.constant 0 : index
    %c0_7 = arith.constant 0 : index
    %9 = vector.load %arg5[%c0_6, %c0_7] : memref<8x256xbf16, #tpu.memory_space<vmem>>, vector<8x256xbf16>
    tpu.vector_store %arg5[%c0_6, %c0_7], %8 {strides = array<i32>} : memref<8x256xbf16, #tpu.memory_space<vmem>>, vector<8x256xbf16>,
    return
  }
  func.func @transform_0(%arg0: i32, %arg1: i32) -> (i32, i32) {
    %c0_i32 = arith.constant 0 : i32
    %c0_i32_0 = arith.constant 0 : i32
    return %arg1, %c0_i32 : i32, i32
  }
  func.func @transform_1(%arg0: i32, %arg1: i32) -> (i32, i32) {
    %c0_i32 = arith.constant 0 : i32
    %c0_i32_0 = arith.constant 0 : i32
    return %c0_i32, %arg0 : i32, i32
  }
  func.func @transform_2(%arg0: i32, %arg1: i32) -> (i32, i32) {
    %c0_i32 = arith.constant 0 : i32
    %c0_i32_0 = arith.constant 0 : i32
    return %c0_i32, %arg0 : i32, i32
  }
  func.func @transform_3(%arg0: i32, %arg1: i32) -> (i32, i32) {
    %c0_i32 = arith.constant 0 : i32
    return %arg1, %arg0 : i32, i32
  }
}

</mosaic_0001>

<llo_original>
// kernel: yolov10_forward.5
$region0: #{yolov10_forward.5}
  #allocation0 [shape = 'u32[]', space=smem, size = 0x4, offset = 0x4, fixed_abs, tag = 'smem constant byte address 0x4 - core index']
  #allocation1 [shape = 'u32[144,128]{1,0:T(1,128)}', space=vmem, size = 0x12000, scoped, tag = 'internal scratch']
  %s0 = inlined_call_operand.vmem [shape: bf16[512,128], index: 0, kind: input, shape index: {}]
  %s1 = inlined_call_operand.vmem [shape: bf16[128,128], index: 1, kind: input, shape index: {}]
  %s2 = inlined_call_operand.vmem [shape: f32[1,128], index: 2, kind: input, shape index: {}]
  %s3 = inlined_call_operand.vmem [shape: bf16[512,128], index: 3, kind: output, shape index: {}]
  %s4 = sld [smem:[#allocation0]]
  $region45: #{yolov10_forward.5} parent=0
    _
  %s6 = ssub.s32 1, %s4
  %s7 = scalar_select 0, %s6, %s4
  loop: start=0, step=1, limit=4
  $region2: #{yolov10_forward.5} parent=0 // loop_pre_header
    _
  $region3: #{yolov10_forward.5} parent=0 // loop_header
    %s9 = sphi 0, %s13
    %p10 = scmp.ge.s32.totalorder %s9, 4
    %s16 = sphi 0, %s28
    %s17 = sphi 0, %s24
    %s18 = sphi 0, %s16
    %s19 = sphi 0, %s17
    %s20 = sphi 0, %s18
    %s21 = sphi 0, %s19
    %s31 = sphi 0, %s33
    %s34 = sphi 0, %s31
    %s35 = sphi 0, %s34
    %s51 = sphi 0, %s35
    %s57 = sphi 0, %s59
    %s60 = sphi 0, %s57
    %s61 = sphi 0, %s60
    %s77 = sphi 0, %s61
    %s83 = sphi 0, %s85
    %s86 = sphi 0, %s83
    %s87 = sphi 0, %s86
    %s103 = sphi 0, %s87
    %s111 = sphi 0, %s113
    %s114 = sphi 0, %s111
    %s115 = sphi 0, %s114
    %s131 = sphi 0, %s115
  $region4: #{yolov10_forward.5} parent=0 // loop_header_branch
    %12 = sbr.rel (%p10) target = $region8
  $region5: #{yolov10_forward.5} parent=0 // loop_body
    %s14 = ssub.s32 %s9, 1
    %s15 = ssub.s32 %s9, 2
    %s22 = sadd.s32 1, %s17
    %p23 = scmp.ge.s32.totalorder %s22, 2
    %s24 = scalar_select %p23, 0, %s22
    %s25 = sadd.s32 1, %s16
    %s26 = scalar_select %p23, %s25, %s16
    %p27 = scmp.ge.s32.totalorder %s26, 1
    %s28 = scalar_select %p27, 0, %s26
    %s29 = ssub.s32 %s17, %s24
    %p30 = scmp.eq.s32.totalorder %s29, 0
    %s32 = sadd.s32 %s31, 1
    %s33 = scalar_select %p30, %s31, %s32
    %p36 = pneg %p30
    %p37 = scmp.eq.s32.totalorder %s9, 1
    %p38 = por %p36, %p37
    %p39 = scmp.ne.s32.totalorder %s31, %s34
    %p40 = scmp.eq.s32.totalorder %s9, 0
    %p41 = por %p39, %p40
    %p42 = scmp.ne.s32.totalorder %s31, %s34
    %p43 = scmp.eq.s32.totalorder %s14, 1
    %p44 = por %p42, %p43
    %p45 = scmp.ne.s32.totalorder %s34, %s35
    %p46 = scmp.eq.s32.totalorder %s14, 0
    %p47 = por %p45, %p46
    %p48 = scmp.ne.s32.totalorder %s34, %s35
    %p49 = scmp.eq.s32.totalorder %s15, 1
    %p50 = por %p48, %p49
    %p52 = scmp.ne.s32.totalorder %s35, %s51
    %p53 = scmp.eq.s32.totalorder %s15, 0
    %p54 = por %p52, %p53
    %s55 = ssub.s32 %s16, %s28
    %p56 = scmp.eq.s32.totalorder %s55, 0
    %s58 = sadd.s32 %s57, 1
    %s59 = scalar_select %p56, %s57, %s58
    %p62 = pneg %p56
    %p63 = scmp.eq.s32.totalorder %s9, 1
    %p64 = por %p62, %p63
    %p65 = scmp.ne.s32.totalorder %s57, %s60
    %p66 = scmp.eq.s32.totalorder %s9, 0
    %p67 = por %p65, %p66
    %p68 = scmp.ne.s32.totalorder %s57, %s60
    %p69 = scmp.eq.s32.totalorder %s14, 1
    %p70 = por %p68, %p69
    %p71 = scmp.ne.s32.totalorder %s60, %s61
    %p72 = scmp.eq.s32.totalorder %s14, 0
    %p73 = por %p71, %p72
    %p74 = scmp.ne.s32.totalorder %s60, %s61
    %p75 = scmp.eq.s32.totalorder %s15, 1
    %p76 = por %p74, %p75
    %p78 = scmp.ne.s32.totalorder %s61, %s77
    %p79 = scmp.eq.s32.totalorder %s15, 0
    %p80 = por %p78, %p79
    %s81 = ssub.s32 %s16, %s28
    %p82 = scmp.eq.s32.totalorder %s81, 0
    %s84 = sadd.s32 %s83, 1
    %s85 = scalar_select %p82, %s83, %s84
    %p88 = pneg %p82
    %p89 = scmp.eq.s32.totalorder %s9, 1
    %p90 = por %p88, %p89
    %p91 = scmp.ne.s32.totalorder %s83, %s86
    %p92 = scmp.eq.s32.totalorder %s9, 0
    %p93 = por %p91, %p92
    %p94 = scmp.ne.s32.totalorder %s83, %s86
    %p95 = scmp.eq.s32.totalorder %s14, 1
    %p96 = por %p94, %p95
    %p97 = scmp.ne.s32.totalorder %s86, %s87
    %p98 = scmp.eq.s32.totalorder %s14, 0
    %p99 = por %p97, %p98
    %p100 = scmp.ne.s32.totalorder %s86, %s87
    %p101 = scmp.eq.s32.totalorder %s15, 1
    %p102 = por %p100, %p101
    %p104 = scmp.ne.s32.totalorder %s87, %s103
    %p105 = scmp.eq.s32.totalorder %s15, 0
    %p106 = por %p104, %p105
    %s107 = ssub.s32 %s17, %s24
    %s108 = ssub.s32 %s16, %s28
    %s109 = sor.u32 %s107, %s108
    %p110 = scmp.eq.s32.totalorder %s109, 0
    %s112 = sadd.s32 %s111, 1
    %s113 = scalar_select %p110, %s111, %s112
    %p116 = pneg %p110
    %p117 = scmp.eq.s32.totalorder %s9, 1
    %p118 = por %p116, %p117
    %p119 = scmp.ne.s32.totalorder %s111, %s114
    %p120 = scmp.eq.s32.totalorder %s9, 0
    %p121 = por %p119, %p120
    %p122 = scmp.ne.s32.totalorder %s111, %s114
    %p123 = scmp.eq.s32.totalorder %s14, 1
    %p124 = por %p122, %p123
    %p125 = scmp.ne.s32.totalorder %s114, %s115
    %p126 = scmp.eq.s32.totalorder %s14, 0
    %p127 = por %p125, %p126
    %p128 = scmp.ne.s32.totalorder %s114, %s115
    %p129 = scmp.eq.s32.totalorder %s15, 1
    %p130 = por %p128, %p129
    %p132 = scmp.ne.s32.totalorder %s115, %s131
    %p133 = scmp.eq.s32.totalorder %s15, 0
    %p134 = por %p132, %p133
    %p135 = scmp.le.s32.totalorder 1, %s9
    %p136 = scmp.lt.s32.totalorder %s9, 3
    %p137 = pnand %p135, %p136
    %p138 = pneg %p137
    // Predicated region
    $region9: #{yolov10_forward.5} parent=5 // pred_check
      _
    $region10: #{yolov10_forward.5} parent=5 // pred_check_branch
      %140 = sbr.rel (%p137) target = $region12
    $region11: #{yolov10_forward.5} parent=5 // pred_region
      %s141 = ssub.s32 %s9, 1
      // Predicated region
      $region13: #{yolov10_forward.5} parent=11 // pred_check
        %p142 = pneg %p73
      $region14: #{yolov10_forward.5} parent=11 // pred_check_branch
        %144 = sbr.rel (%p142) target = $region16
      $region15: #{yolov10_forward.5} parent=11 // pred_region
        %p145 = scmp.lt.s32.totalorder %s18, 0
        %s146 = scalar_select %p145, %s18, 0
        %s147 = smul.addr %s146, 4
        %s148 = scalar_lea.vmem %s1, %s147
      $region16: #{yolov10_forward.5} parent=11 // pred_fallthru
        _
      // Predicated region
      $region17: #{yolov10_forward.5} parent=11 // pred_check
        %p149 = pneg %p99
      $region18: #{yolov10_forward.5} parent=11 // pred_check_branch
        %151 = sbr.rel (%p149) target = $region20
      $region19: #{yolov10_forward.5} parent=11 // pred_region
        %p152 = scmp.lt.s32.totalorder %s18, 0
        %s153 = scalar_select %p152, %s18, 0
        %s154 = scalar_lea.vmem %s2, %s153
      $region20: #{yolov10_forward.5} parent=11 // pred_fallthru
        _
    $region12: #{yolov10_forward.5} parent=5 // pred_fallthru
      _
    %p155 = scmp.lt.s32.totalorder %s9, 2
    // Predicated region
    $region21: #{yolov10_forward.5} parent=5 // pred_check
      %p156 = pneg %p155
    $region22: #{yolov10_forward.5} parent=5 // pred_check_branch
      %158 = sbr.rel (%p156) target = $region24
    $region23: #{yolov10_forward.5} parent=5 // pred_region
      // Predicated region
      $region25: #{yolov10_forward.5} parent=23 // pred_check
        %p159 = pneg %p41
      $region26: #{yolov10_forward.5} parent=23 // pred_check_branch
        %161 = sbr.rel (%p159) target = $region28
      $region27: #{yolov10_forward.5} parent=23 // pred_region
        %s162 = smul.u32 32, %s17
        %p163 = scmp.lt.s32.totalorder %s162, 63
        %s164 = scalar_select %p163, %s162, 63
        %s165 = smul.addr %s164, 4
        %s166 = scalar_lea.vmem %s0, %s165
        %s167 = smul.u32 32, %s17
      $region28: #{yolov10_forward.5} parent=23 // pred_fallthru
        _
    $region24: #{yolov10_forward.5} parent=5 // pred_fallthru
      _
    %p168 = scmp.le.s32.totalorder 1, %s9
    %p169 = scmp.lt.s32.totalorder %s9, 3
    %p170 = pnand %p168, %p169
    %p171 = pneg %p170
    // Predicated region
    $region29: #{yolov10_forward.5} parent=5 // pred_check
      _
    $region30: #{yolov10_forward.5} parent=5 // pred_check_branch
      %173 = sbr.rel (%p170) target = $region32
    $region31: #{yolov10_forward.5} parent=5 // pred_region
      %s174 = ssub.s32 %s9, 1
      %s175 = smul.u32 32, %s19
      %p176 = scmp.lt.s32.totalorder %s175, 63
      %s177 = scalar_select %p176, %s175, 63
      %s178 = smul.addr %s177, 4
      %s179 = scalar_lea.vmem %s0, %s178
      %p180 = pneg %p47
      %p181 = pneg %p44
      %p182 = scmp.lt.s32.totalorder %s18, 0
      %s183 = scalar_select %p182, %s18, 0
      %s184 = smul.addr %s183, 4
      %s185 = scalar_lea.vmem %s1, %s184
      %p186 = pneg %p73
      %p187 = pneg %p70
      %p188 = scmp.lt.s32.totalorder %s18, 0
      %s189 = scalar_select %p188, %s18, 0
      %s190 = scalar_lea.vmem %s2, %s189
      %p191 = pneg %p99
      %p192 = pneg %p96
      %p193 = pneg %p127
      %p194 = pneg %p124
      %s195 = smul.u32 32, %s19
      %p196 = scmp.lt.s32.totalorder %s195, 63
      %s197 = scalar_select %p196, %s195, 63
      %p198 = scmp.lt.s32.totalorder %s18, 0
      %s199 = scalar_select %p198, %s18, 0
      %s200 = sadd.s32 %s199, %s197
      %s201 = smul.addr %s200, 4
      %s202 = scalar_lea.vmem %s3, %s201
      %s203 = smul.u32 32, %s19
      %p204 = scmp.lt.s32.totalorder %s203, 63
      %s205 = scalar_select %p204, %s203, 63
      %s206 = smul.addr %s205, 4
      %s207 = scalar_lea.vmem %s0, %s206
      %s208 = smul.u32 32, %s19
      %p209 = scmp.lt.s32.totalorder %s18, 0
      %s210 = scalar_select %p209, %s18, 0
      %s211 = smul.addr %s210, 4
      %s212 = scalar_lea.vmem %s1, %s211
      %p213 = scmp.lt.s32.totalorder %s18, 0
      %s214 = scalar_select %p213, %s18, 0
      %s215 = scalar_lea.vmem %s2, %s214
      %s216 = smul.u32 32, %s19
      %p217 = scmp.lt.s32.totalorder %s216, 63
      %s218 = scalar_select %p217, %s216, 63
      %p219 = scmp.lt.s32.totalorder %s18, 0
      %s220 = scalar_select %p219, %s18, 0
      %s221 = sadd.s32 %s220, %s218
      %s222 = smul.addr %s221, 4
      %s223 = scalar_lea.vmem %s3, %s222
      %s224 = smul.u32 32, %s19
      %v226 = vld [vmem:[%s207] sm:$0xf]
      %v227 = vld [vmem:[%s207 + $0x4] sm:$0xf]
      %v228 = vld [vmem:[%s207 + $0x8] sm:$0xf]
      %v229 = vld [vmem:[%s207 + $0xc] sm:$0xf]
      %v230 = vld [vmem:[%s207 + $0x10] sm:$0xf]
      %v231 = vld [vmem:[%s207 + $0x14] sm:$0xf]
      %v232 = vld [vmem:[%s207 + $0x18] sm:$0xf]
      %v233 = vld [vmem:[%s207 + $0x1c] sm:$0xf]
      %v234 = vld [vmem:[%s207 + $0x20] sm:$0xf]
      %v235 = vld [vmem:[%s207 + $0x24] sm:$0xf]
      %v236 = vld [vmem:[%s207 + $0x28] sm:$0xf]
      %v237 = vld [vmem:[%s207 + $0x2c] sm:$0xf]
      %v238 = vld [vmem:[%s207 + $0x30] sm:$0xf]
      %v239 = vld [vmem:[%s207 + $0x34] sm:$0xf]
      %v240 = vld [vmem:[%s207 + $0x38] sm:$0xf]
      %v241 = vld [vmem:[%s207 + $0x3c] sm:$0xf]
      %v242 = vld [vmem:[%s207 + $0x40] sm:$0xf]
      %v243 = vld [vmem:[%s207 + $0x44] sm:$0xf]
      %v244 = vld [vmem:[%s207 + $0x48] sm:$0xf]
      %v245 = vld [vmem:[%s207 + $0x4c] sm:$0xf]
      %v246 = vld [vmem:[%s207 + $0x50] sm:$0xf]
      %v247 = vld [vmem:[%s207 + $0x54] sm:$0xf]
      %v248 = vld [vmem:[%s207 + $0x58] sm:$0xf]
      %v249 = vld [vmem:[%s207 + $0x5c] sm:$0xf]
      %v250 = vld [vmem:[%s207 + $0x60] sm:$0xf]
      %v251 = vld [vmem:[%s207 + $0x64] sm:$0xf]
      %v252 = vld [vmem:[%s207 + $0x68] sm:$0xf]
      %v253 = vld [vmem:[%s207 + $0x6c] sm:$0xf]
      %v254 = vld [vmem:[%s207 + $0x70] sm:$0xf]
      %v255 = vld [vmem:[%s207 + $0x74] sm:$0xf]
      %v256 = vld [vmem:[%s207 + $0x78] sm:$0xf]
      %v257 = vld [vmem:[%s207 + $0x7c] sm:$0xf]
      %v258 = vld [vmem:[%s212] sm:$0xf]
      %v259 = vld [vmem:[%s212 + $0x4] sm:$0xf]
      %v260 = vld [vmem:[%s212 + $0x8] sm:$0xf]
      %v261 = vld [vmem:[%s212 + $0xc] sm:$0xf]
      %v262 = vld [vmem:[%s212 + $0x10] sm:$0xf]
      %v263 = vld [vmem:[%s212 + $0x14] sm:$0xf]
      %v264 = vld [vmem:[%s212 + $0x18] sm:$0xf]
      %v265 = vld [vmem:[%s212 + $0x1c] sm:$0xf]
      %v266 = vld [vmem:[%s212 + $0x20] sm:$0xf]
      %v267 = vld [vmem:[%s212 + $0x24] sm:$0xf]
      %v268 = vld [vmem:[%s212 + $0x28] sm:$0xf]
      %v269 = vld [vmem:[%s212 + $0x2c] sm:$0xf]
      %v270 = vld [vmem:[%s212 + $0x30] sm:$0xf]
      %v271 = vld [vmem:[%s212 + $0x34] sm:$0xf]
      %v272 = vld [vmem:[%s212 + $0x38] sm:$0xf]
      %v273 = vld [vmem:[%s212 + $0x3c] sm:$0xf]
      %v274 = vld [vmem:[%s215] sm:$0x1]
      %v276 = vlaneseq
      %v277 = vshrl.u32 %v276, 7
      %v278 = vsub.s32 0, %v277
      %v279 = vrot.slane %v274, %v278
      %v313 = vunpack.c.l.b16 %v226
      %v314 = vunpack.c.l.b16 %v227
      %v315 = vunpack.c.l.b16 %v228
      %v316 = vunpack.c.l.b16 %v229
      %v317 = vunpack.c.l.b16 %v230
      %v318 = vunpack.c.l.b16 %v231
      %v319 = vunpack.c.l.b16 %v232
      %v320 = vunpack.c.l.b16 %v233
      %v321 = vunpack.c.l.b16 %v234
      %v322 = vunpack.c.l.b16 %v235
      %v323 = vunpack.c.l.b16 %v236
      %v324 = vunpack.c.l.b16 %v237
      %v325 = vunpack.c.l.b16 %v238
      %v326 = vunpack.c.l.b16 %v239
      %v327 = vunpack.c.l.b16 %v240
      %v328 = vunpack.c.l.b16 %v241
      %v329 = vunpack.c.l.b16 %v242
      %v330 = vunpack.c.l.b16 %v243
      %v331 = vunpack.c.l.b16 %v244
      %v332 = vunpack.c.l.b16 %v245
      %v333 = vunpack.c.l.b16 %v246
      %v334 = vunpack.c.l.b16 %v247
      %v335 = vunpack.c.l.b16 %v248
      %v336 = vunpack.c.l.b16 %v249
      %v337 = vunpack.c.l.b16 %v250
      %v338 = vunpack.c.l.b16 %v251
      %v339 = vunpack.c.l.b16 %v252
      %v340 = vunpack.c.l.b16 %v253
      %v341 = vunpack.c.l.b16 %v254
      %v342 = vunpack.c.l.b16 %v255
      %v343 = vunpack.c.l.b16 %v256
      %v344 = vunpack.c.l.b16 %v257
      %v345 = vpack.c.b16 %v314, %v313
      %v346 = vpack.c.b16 %v316, %v315
      %v347 = vpack.c.b16 %v318, %v317
      %v348 = vpack.c.b16 %v320, %v319
      %v349 = vpack.c.b16 %v322, %v321
      %v350 = vpack.c.b16 %v324, %v323
      %v351 = vpack.c.b16 %v326, %v325
      %v352 = vpack.c.b16 %v328, %v327
      %v353 = vpack.c.b16 %v330, %v329
      %v354 = vpack.c.b16 %v332, %v331
      %v355 = vpack.c.b16 %v334, %v333
      %v356 = vpack.c.b16 %v336, %v335
      %v357 = vpack.c.b16 %v338, %v337
      %v358 = vpack.c.b16 %v340, %v339
      %v359 = vpack.c.b16 %v342, %v341
      %v360 = vpack.c.b16 %v344, %v343
      %v393 = vunpack.c.l.b16 %v258
      %v394 = vunpack.c.l.b16 %v259
      %v395 = vunpack.c.l.b16 %v260
      %v396 = vunpack.c.l.b16 %v261
      %v397 = vunpack.c.l.b16 %v262
      %v398 = vunpack.c.l.b16 %v263
      %v399 = vunpack.c.l.b16 %v264
      %v400 = vunpack.c.l.b16 %v265
      %v401 = vunpack.c.l.b16 %v266
      %v402 = vunpack.c.l.b16 %v267
      %v403 = vunpack.c.l.b16 %v268
      %v404 = vunpack.c.l.b16 %v269
      %v405 = vunpack.c.l.b16 %v270
      %v406 = vunpack.c.l.b16 %v271
      %v407 = vunpack.c.l.b16 %v272
      %v408 = vunpack.c.l.b16 %v273
      %v409 = vpack.c.b16 %v394, %v393
      %v410 = vpack.c.b16 %v396, %v395
      %v411 = vpack.c.b16 %v398, %v397
      %v412 = vpack.c.b16 %v400, %v399
      %v413 = vpack.c.b16 %v402, %v401
      %v414 = vpack.c.b16 %v404, %v403
      %v415 = vpack.c.b16 %v406, %v405
      %v416 = vpack.c.b16 %v408, %v407
      %425 = vmatprep.subr.bf16.mxu0 0
      %426 = vmatpush1.bf16.msra.mxu0 %v409
      %427 = vmatprep.subr.bf16.mxu0 0
      %428 = vmatpush1.bf16.msra.mxu0 %v410
      %429 = vmatprep.subr.bf16.mxu0 0
      %430 = vmatpush1.bf16.msra.mxu0 %v411
      %431 = vmatprep.subr.bf16.mxu0 0
      %432 = vmatpush1.bf16.msra.mxu0 %v412
      %433 = vmatprep.subr.bf16.mxu0 0
      %434 = vmatpush1.bf16.msra.mxu0 %v413
      %435 = vmatprep.subr.bf16.mxu0 0
      %436 = vmatpush1.bf16.msra.mxu0 %v414
      %437 = vmatprep.subr.bf16.mxu0 0
      %438 = vmatpush1.bf16.msra.mxu0 %v415
      %439 = vmatprep.subr.bf16.mxu0 0
      %440 = vmatpush1.bf16.msra.mxu0 %v416
      %441 = vmatprep.subr.bf16.mxu0 0
      %442 = vmatpush1.bf16.msra.mxu0 0
      %443 = vmatprep.subr.bf16.mxu0 0
      %444 = vmatpush1.bf16.msra.mxu0 0
      %445 = vmatprep.subr.bf16.mxu0 0
      %446 = vmatpush1.bf16.msra.mxu0 0
      %447 = vmatprep.subr.bf16.mxu0 0
      %448 = vmatpush1.bf16.msra.mxu0 0
      %449 = vmatprep.subr.bf16.mxu0 0
      %450 = vmatpush1.bf16.msra.mxu0 0
      %451 = vmatprep.subr.bf16.mxu0 0
      %452 = vmatpush1.bf16.msra.mxu0 0
      %453 = vmatprep.subr.bf16.mxu0 0
      %454 = vmatpush1.bf16.msra.mxu0 0
      %455 = vmatprep.subr.bf16.mxu0 0
      %456 = vmatpush1.bf16.msra.mxu0 0
      %457 = vmatprep.mubr.bf16.mxu0 0
      %458 = vmatmul.mubr.bf16.gmra.mrb[0].mxu0 %v345
      %v459 = vpop.f32.mrb[0].mxu0
      %v460 = vadd.f32 %v279, %v459
      %v461 = vpop.f32.mrb[0].mxu0
      %v462 = vpop.f32.mrb[0].mxu0
      %v463 = vadd.f32 %v279, %v462
      %v464 = vpop.f32.mrb[0].mxu0
      %465 = vmatprep.mubr.bf16.mxu0 0
      %466 = vmatmul.mubr.bf16.gmra.mrb[0].mxu0 %v346
      %v467 = vpop.f32.mrb[0].mxu0
      %v468 = vadd.f32 %v279, %v467
      %v469 = vpop.f32.mrb[0].mxu0
      %v470 = vpop.f32.mrb[0].mxu0
      %v471 = vadd.f32 %v279, %v470
      %v472 = vpop.f32.mrb[0].mxu0
      %473 = vmatprep.mubr.bf16.mxu0 0
      %474 = vmatmul.mubr.bf16.gmra.mrb[0].mxu0 %v347
      %v475 = vpop.f32.mrb[0].mxu0
      %v476 = vadd.f32 %v279, %v475
      %v477 = vpop.f32.mrb[0].mxu0
      %v478 = vpop.f32.mrb[0].mxu0
      %v479 = vadd.f32 %v279, %v478
      %v480 = vpop.f32.mrb[0].mxu0
      %481 = vmatprep.mubr.bf16.mxu0 0
      %482 = vmatmul.mubr.bf16.gmra.mrb[0].mxu0 %v348
      %v483 = vpop.f32.mrb[0].mxu0
      %v484 = vadd.f32 %v279, %v483
      %v485 = vpop.f32.mrb[0].mxu0
      %v486 = vpop.f32.mrb[0].mxu0
      %v487 = vadd.f32 %v279, %v486
      %v488 = vpop.f32.mrb[0].mxu0
      %489 = vmatprep.mubr.bf16.mxu0 0
      %490 = vmatmul.mubr.bf16.gmra.mrb[0].mxu0 %v349
      %v491 = vpop.f32.mrb[0].mxu0
      %v492 = vadd.f32 %v279, %v491
      %v493 = vpop.f32.mrb[0].mxu0
      %v494 = vpop.f32.mrb[0].mxu0
      %v495 = vadd.f32 %v279, %v494
      %v496 = vpop.f32.mrb[0].mxu0
      %497 = vmatprep.mubr.bf16.mxu0 0
      %498 = vmatmul.mubr.bf16.gmra.mrb[0].mxu0 %v350
      %v499 = vpop.f32.mrb[0].mxu0
      %v500 = vadd.f32 %v279, %v499
      %v501 = vpop.f32.mrb[0].mxu0
      %v502 = vpop.f32.mrb[0].mxu0
      %v503 = vadd.f32 %v279, %v502
      %v504 = vpop.f32.mrb[0].mxu0
      %505 = vmatprep.mubr.bf16.mxu0 0
      %506 = vmatmul.mubr.bf16.gmra.mrb[0].mxu0 %v351
      %v507 = vpop.f32.mrb[0].mxu0
      %v508 = vadd.f32 %v279, %v507
      %v509 = vpop.f32.mrb[0].mxu0
      %v510 = vpop.f32.mrb[0].mxu0
      %v511 = vadd.f32 %v279, %v510
      %v512 = vpop.f32.mrb[0].mxu0
      %513 = vmatprep.mubr.bf16.mxu0 0
      %514 = vmatmul.mubr.bf16.gmra.mrb[0].mxu0 %v352
      %v515 = vpop.f32.mrb[0].mxu0
      %v516 = vadd.f32 %v279, %v515
      %v517 = vpop.f32.mrb[0].mxu0
      %v518 = vpop.f32.mrb[0].mxu0
      %v519 = vadd.f32 %v279, %v518
      %v520 = vpop.f32.mrb[0].mxu0
      %521 = vmatprep.mubr.bf16.mxu0 0
      %522 = vmatmul.mubr.bf16.gmra.mrb[0].mxu0 %v353
      %v523 = vpop.f32.mrb[0].mxu0
      %v524 = vadd.f32 %v279, %v523
      %v525 = vpop.f32.mrb[0].mxu0
      %v526 = vpop.f32.mrb[0].mxu0
      %v527 = vadd.f32 %v279, %v526
      %v528 = vpop.f32.mrb[0].mxu0
      %529 = vmatprep.mubr.bf16.mxu0 0
      %530 = vmatmul.mubr.bf16.gmra.mrb[0].mxu0 %v354
      %v531 = vpop.f32.mrb[0].mxu0
      %v532 = vadd.f32 %v279, %v531
      %v533 = vpop.f32.mrb[0].mxu0
      %v534 = vpop.f32.mrb[0].mxu0
      %v535 = vadd.f32 %v279, %v534
      %v536 = vpop.f32.mrb[0].mxu0
      %537 = vmatprep.mubr.bf16.mxu0 0
      %538 = vmatmul.mubr.bf16.gmra.mrb[0].mxu0 %v355
      %v539 = vpop.f32.mrb[0].mxu0
      %v540 = vadd.f32 %v279, %v539
      %v541 = vpop.f32.mrb[0].mxu0
      %v542 = vpop.f32.mrb[0].mxu0
      %v543 = vadd.f32 %v279, %v542
      %v544 = vpop.f32.mrb[0].mxu0
      %545 = vmatprep.mubr.bf16.mxu0 0
      %546 = vmatmul.mubr.bf16.gmra.mrb[0].mxu0 %v356
      %v547 = vpop.f32.mrb[0].mxu0
      %v548 = vadd.f32 %v279, %v547
      %v549 = vpop.f32.mrb[0].mxu0
      %v550 = vpop.f32.mrb[0].mxu0
      %v551 = vadd.f32 %v279, %v550
      %v552 = vpop.f32.mrb[0].mxu0
      %553 = vmatprep.mubr.bf16.mxu0 0
      %554 = vmatmul.mubr.bf16.gmra.mrb[0].mxu0 %v357
      %v555 = vpop.f32.mrb[0].mxu0
      %v556 = vadd.f32 %v279, %v555
      %v557 = vpop.f32.mrb[0].mxu0
      %v558 = vpop.f32.mrb[0].mxu0
      %v559 = vadd.f32 %v279, %v558
      %v560 = vpop.f32.mrb[0].mxu0
      %561 = vmatprep.mubr.bf16.mxu0 0
      %562 = vmatmul.mubr.bf16.gmra.mrb[0].mxu0 %v358
      %v563 = vpop.f32.mrb[0].mxu0
      %v564 = vadd.f32 %v279, %v563
      %v565 = vpop.f32.mrb[0].mxu0
      %v566 = vpop.f32.mrb[0].mxu0
      %v567 = vadd.f32 %v279, %v566
      %v568 = vpop.f32.mrb[0].mxu0
      %569 = vmatprep.mubr.bf16.mxu0 0
      %570 = vmatmul.mubr.bf16.gmra.mrb[0].mxu0 %v359
      %v571 = vpop.f32.mrb[0].mxu0
      %v572 = vadd.f32 %v279, %v571
      %v573 = vpop.f32.mrb[0].mxu0
      %v574 = vpop.f32.mrb[0].mxu0
      %v575 = vadd.f32 %v279, %v574
      %v576 = vpop.f32.mrb[0].mxu0
      %577 = vmatprep.mubr.bf16.mxu0 0
      %578 = vmatmul.mubr.bf16.gmra.mrb[0].mxu0 %v360
      %v579 = vpop.f32.mrb[0].mxu0
      %v580 = vadd.f32 %v279, %v579
      %v581 = vpop.f32.mrb[0].mxu0
      %v582 = vpop.f32.mrb[0].mxu0
      %v583 = vadd.f32 %v279, %v582
      %v584 = vpop.f32.mrb[0].mxu0
      %585 = vdwg.mxu0
      %v586 = vmax.f32 %v460, 0.0
      %v587 = vmax.f32 %v463, 0.0
      %v588 = vmax.f32 %v468, 0.0
      %v589 = vmax.f32 %v471, 0.0
      %v590 = vmax.f32 %v476, 0.0
      %v591 = vmax.f32 %v479, 0.0
      %v592 = vmax.f32 %v484, 0.0
      %v593 = vmax.f32 %v487, 0.0
      %v594 = vmax.f32 %v492, 0.0
      %v595 = vmax.f32 %v495, 0.0
      %v596 = vmax.f32 %v500, 0.0
      %v597 = vmax.f32 %v503, 0.0
      %v598 = vmax.f32 %v508, 0.0
      %v599 = vmax.f32 %v511, 0.0
      %v600 = vmax.f32 %v516, 0.0
      %v601 = vmax.f32 %v519, 0.0
      %v602 = vmax.f32 %v524, 0.0
      %v603 = vmax.f32 %v527, 0.0
      %v604 = vmax.f32 %v532, 0.0
      %v605 = vmax.f32 %v535, 0.0
      %v606 = vmax.f32 %v540, 0.0
      %v607 = vmax.f32 %v543, 0.0
      %v608 = vmax.f32 %v548, 0.0
      %v609 = vmax.f32 %v551, 0.0
      %v610 = vmax.f32 %v556, 0.0
      %v611 = vmax.f32 %v559, 0.0
      %v612 = vmax.f32 %v564, 0.0
      %v613 = vmax.f32 %v567, 0.0
      %v614 = vmax.f32 %v572, 0.0
      %v615 = vmax.f32 %v575, 0.0
      %v616 = vmax.f32 %v580, 0.0
      %v617 = vmax.f32 %v583, 0.0
      %v618 = vpack.c.bf16 %v587, %v586
      %v619 = vpack.c.bf16 %v589, %v588
      %v620 = vpack.c.bf16 %v591, %v590
      %v621 = vpack.c.bf16 %v593, %v592
      %v622 = vpack.c.bf16 %v595, %v594
      %v623 = vpack.c.bf16 %v597, %v596
      %v624 = vpack.c.bf16 %v599, %v598
      %v625 = vpack.c.bf16 %v601, %v600
      %v626 = vpack.c.bf16 %v603, %v602
      %v627 = vpack.c.bf16 %v605, %v604
      %v628 = vpack.c.bf16 %v607, %v606
      %v629 = vpack.c.bf16 %v609, %v608
      %v630 = vpack.c.bf16 %v611, %v610
      %v631 = vpack.c.bf16 %v613, %v612
      %v632 = vpack.c.bf16 %v615, %v614
      %v633 = vpack.c.bf16 %v617, %v616
      %v650 = vunpack.c.l.b16 %v618
      %v651 = vunpack.c.h.b16 %v618
      %v652 = vunpack.c.l.b16 %v619
      %v653 = vunpack.c.h.b16 %v619
      %v654 = vunpack.c.l.b16 %v620
      %v655 = vunpack.c.h.b16 %v620
      %v656 = vunpack.c.l.b16 %v621
      %v657 = vunpack.c.h.b16 %v621
      %v658 = vunpack.c.l.b16 %v622
      %v659 = vunpack.c.h.b16 %v622
      %v660 = vunpack.c.l.b16 %v623
      %v661 = vunpack.c.h.b16 %v623
      %v662 = vunpack.c.l.b16 %v624
      %v663 = vunpack.c.h.b16 %v624
      %v664 = vunpack.c.l.b16 %v625
      %v665 = vunpack.c.h.b16 %v625
      %v666 = vunpack.c.l.b16 %v626
      %v667 = vunpack.c.h.b16 %v626
      %v668 = vunpack.c.l.b16 %v627
      %v669 = vunpack.c.h.b16 %v627
      %v670 = vunpack.c.l.b16 %v628
      %v671 = vunpack.c.h.b16 %v628
      %v672 = vunpack.c.l.b16 %v629
      %v673 = vunpack.c.h.b16 %v629
      %v674 = vunpack.c.l.b16 %v630
      %v675 = vunpack.c.h.b16 %v630
      %v676 = vunpack.c.l.b16 %v631
      %v677 = vunpack.c.h.b16 %v631
      %v678 = vunpack.c.l.b16 %v632
      %v679 = vunpack.c.h.b16 %v632
      %v680 = vunpack.c.l.b16 %v633
      %v681 = vunpack.c.h.b16 %v633
      %v682 = vpack.c.b16 %v650, %v650
      %v683 = vpack.c.b16 %v651, %v651
      %v684 = vpack.c.b16 %v652, %v652
      %v685 = vpack.c.b16 %v653, %v653
      %v686 = vpack.c.b16 %v654, %v654
      %v687 = vpack.c.b16 %v655, %v655
      %v688 = vpack.c.b16 %v656, %v656
      %v689 = vpack.c.b16 %v657, %v657
      %v690 = vpack.c.b16 %v658, %v658
      %v691 = vpack.c.b16 %v659, %v659
      %v692 = vpack.c.b16 %v660, %v660
      %v693 = vpack.c.b16 %v661, %v661
      %v694 = vpack.c.b16 %v662, %v662
      %v695 = vpack.c.b16 %v663, %v663
      %v696 = vpack.c.b16 %v664, %v664
      %v697 = vpack.c.b16 %v665, %v665
      %v698 = vpack.c.b16 %v666, %v666
      %v699 = vpack.c.b16 %v667, %v667
      %v700 = vpack.c.b16 %v668, %v668
      %v701 = vpack.c.b16 %v669, %v669
      %v702 = vpack.c.b16 %v670, %v670
      %v703 = vpack.c.b16 %v671, %v671
      %v704 = vpack.c.b16 %v672, %v672
      %v705 = vpack.c.b16 %v673, %v673
      %v706 = vpack.c.b16 %v674, %v674
      %v707 = vpack.c.b16 %v675, %v675
      %v708 = vpack.c.b16 %v676, %v676
      %v709 = vpack.c.b16 %v677, %v677
      %v710 = vpack.c.b16 %v678, %v678
      %v711 = vpack.c.b16 %v679, %v679
      %v712 = vpack.c.b16 %v680, %v680
      %v713 = vpack.c.b16 %v681, %v681
      %746 = vst [vmem:[%s223] sm:$0xf] %v682
      %747 = vst [vmem:[%s223 + $0x4] sm:$0xf] %v683
      %748 = vst [vmem:[%s223 + $0x8] sm:$0xf] %v684
      %749 = vst [vmem:[%s223 + $0xc] sm:$0xf] %v685
      %750 = vst [vmem:[%s223 + $0x10] sm:$0xf] %v686
      %751 = vst [vmem:[%s223 + $0x14] sm:$0xf] %v687
      %752 = vst [vmem:[%s223 + $0x18] sm:$0xf] %v688
      %753 = vst [vmem:[%s223 + $0x1c] sm:$0xf] %v689
      %754 = vst [vmem:[%s223 + $0x20] sm:$0xf] %v690
      %755 = vst [vmem:[%s223 + $0x24] sm:$0xf] %v691
      %756 = vst [vmem:[%s223 + $0x28] sm:$0xf] %v692
      %757 = vst [vmem:[%s223 + $0x2c] sm:$0xf] %v693
      %758 = vst [vmem:[%s223 + $0x30] sm:$0xf] %v694
      %759 = vst [vmem:[%s223 + $0x34] sm:$0xf] %v695
      %760 = vst [vmem:[%s223 + $0x38] sm:$0xf] %v696
      %761 = vst [vmem:[%s223 + $0x3c] sm:$0xf] %v697
      %762 = vst [vmem:[%s223 + $0x40] sm:$0xf] %v698
      %763 = vst [vmem:[%s223 + $0x44] sm:$0xf] %v699
      %764 = vst [vmem:[%s223 + $0x48] sm:$0xf] %v700
      %765 = vst [vmem:[%s223 + $0x4c] sm:$0xf] %v701
      %766 = vst [vmem:[%s223 + $0x50] sm:$0xf] %v702
      %767 = vst [vmem:[%s223 + $0x54] sm:$0xf] %v703
      %768 = vst [vmem:[%s223 + $0x58] sm:$0xf] %v704
      %769 = vst [vmem:[%s223 + $0x5c] sm:$0xf] %v705
      %770 = vst [vmem:[%s223 + $0x60] sm:$0xf] %v706
      %771 = vst [vmem:[%s223 + $0x64] sm:$0xf] %v707
      %772 = vst [vmem:[%s223 + $0x68] sm:$0xf] %v708
      %773 = vst [vmem:[%s223 + $0x6c] sm:$0xf] %v709
      %774 = vst [vmem:[%s223 + $0x70] sm:$0xf] %v710
      %775 = vst [vmem:[%s223 + $0x74] sm:$0xf] %v711
      %776 = vst [vmem:[%s223 + $0x78] sm:$0xf] %v712
      %777 = vst [vmem:[%s223 + $0x7c] sm:$0xf] %v713
      %s778 = smul.u32 32, %s19
      %p779 = scmp.lt.s32.totalorder %s778, 63
      %s780 = scalar_select %p779, %s778, 63
      %p781 = scmp.lt.s32.totalorder %s18, 0
      %s782 = scalar_select %p781, %s18, 0
      %s783 = sadd.s32 %s782, %s780
      %s784 = smul.addr %s783, 4
      %s785 = scalar_lea.vmem %s3, %s784
      // Predicated region
      $region33: #{yolov10_forward.5} parent=31 // pred_check
        %p786 = pneg %p124
      $region34: #{yolov10_forward.5} parent=31 // pred_check_branch
        %788 = sbr.rel (%p786) target = $region36
      $region35: #{yolov10_forward.5} parent=31 // pred_region
        %s789 = smul.u32 32, %s19
      $region36: #{yolov10_forward.5} parent=31 // pred_fallthru
        _
    $region32: #{yolov10_forward.5} parent=5 // pred_fallthru
      _
    %p790 = scmp.le.s32.totalorder 2, %s9
    // Predicated region
    $region37: #{yolov10_forward.5} parent=5 // pred_check
      %p791 = pneg %p790
    $region38: #{yolov10_forward.5} parent=5 // pred_check_branch
      %793 = sbr.rel (%p791) target = $region40
    $region39: #{yolov10_forward.5} parent=5 // pred_region
      %s794 = ssub.s32 %s9, 2
      // Predicated region
      $region41: #{yolov10_forward.5} parent=39 // pred_check
        %p795 = pneg %p130
      $region42: #{yolov10_forward.5} parent=39 // pred_check_branch
        %797 = sbr.rel (%p795) target = $region44
      $region43: #{yolov10_forward.5} parent=39 // pred_region
        %s798 = smul.u32 32, %s21
        %p799 = scmp.lt.s32.totalorder %s798, 63
        %s800 = scalar_select %p799, %s798, 63
        %p801 = scmp.lt.s32.totalorder %s20, 0
        %s802 = scalar_select %p801, %s20, 0
        %s803 = sadd.s32 %s802, %s800
        %s804 = smul.addr %s803, 4
        %s805 = scalar_lea.vmem %s3, %s804
      $region44: #{yolov10_forward.5} parent=39 // pred_fallthru
        _
    $region40: #{yolov10_forward.5} parent=5 // pred_fallthru
      _
  $region6: #{yolov10_forward.5} parent=0 // loop_footer
    %s13 = sadd.s32 1, %s9
  $region7: #{yolov10_forward.5} parent=0 // loop_footer_branch
    %8 = sbr.rel target = $region3
  $region8: #{yolov10_forward.5} parent=0 // loop_exit
    _

// kernel: yolov10_forward.6
$region0: #{yolov10_forward.6}
  #allocation0 [shape = 'u32[]', space=smem, size = 0x4, offset = 0x4, fixed_abs, tag = 'smem constant byte address 0x4 - core index']
  #allocation1 [shape = 'u32[144,128]{1,0:T(1,128)}', space=vmem, size = 0x12000, scoped, tag = 'internal scratch']
  %s0 = inlined_call_operand.vmem [shape: bf16[128,640], index: 0, kind: input, shape index: {}]
  %s1 = inlined_call_operand.vmem [shape: bf16[640,128], index: 1, kind: input, shape index: {}]
  %s2 = inlined_call_operand.vmem [shape: f32[1,128], index: 2, kind: input, shape index: {}]
  %s3 = inlined_call_operand.vmem [shape: bf16[128,128], index: 3, kind: output, shape index: {}]
  %s4 = sld [smem:[#allocation0]]
  $region45: #{yolov10_forward.6} parent=0
    _
  %s6 = ssub.s32 1, %s4
  %s7 = scalar_select 0, %s6, %s4
  loop: start=0, step=1, limit=4
  $region2: #{yolov10_forward.6} parent=0 // loop_pre_header
    _
  $region3: #{yolov10_forward.6} parent=0 // loop_header
    %s9 = sphi 0, %s13
    %p10 = scmp.ge.s32.totalorder %s9, 4
    %s16 = sphi 0, %s28
    %s17 = sphi 0, %s24
    %s18 = sphi 0, %s16
    %s19 = sphi 0, %s17
    %s20 = sphi 0, %s18
    %s21 = sphi 0, %s19
    %s31 = sphi 0, %s33
    %s34 = sphi 0, %s31
    %s35 = sphi 0, %s34
    %s51 = sphi 0, %s35
    %s57 = sphi 0, %s59
    %s60 = sphi 0, %s57
    %s61 = sphi 0, %s60
    %s77 = sphi 0, %s61
    %s83 = sphi 0, %s85
    %s86 = sphi 0, %s83
    %s87 = sphi 0, %s86
    %s103 = sphi 0, %s87
    %s111 = sphi 0, %s113
    %s114 = sphi 0, %s111
    %s115 = sphi 0, %s114
    %s131 = sphi 0, %s115
  $region4: #{yolov10_forward.6} parent=0 // loop_header_branch
    %12 = sbr.rel (%p10) target = $region8
  $region5: #{yolov10_forward.6} parent=0 // loop_body
    %s14 = ssub.s32 %s9, 1
    %s15 = ssub.s32 %s9, 2
    %s22 = sadd.s32 1, %s17
    %p23 = scmp.ge.s32.totalorder %s22, 2
    %s24 = scalar_select %p23, 0, %s22
    %s25 = sadd.s32 1, %s16
    %s26 = scalar_select %p23, %s25, %s16
    %p27 = scmp.ge.s32.totalorder %s26, 1
    %s28 = scalar_select %p27, 0, %s26
    %s29 = ssub.s32 %s17, %s24
    %p30 = scmp.eq.s32.totalorder %s29, 0
    %s32 = sadd.s32 %s31, 1
    %s33 = scalar_select %p30, %s31, %s32
    %p36 = pneg %p30
    %p37 = scmp.eq.s32.totalorder %s9, 1
    %p38 = por %p36, %p37
    %p39 = scmp.ne.s32.totalorder %s31, %s34
    %p40 = scmp.eq.s32.totalorder %s9, 0
    %p41 = por %p39, %p40
    %p42 = scmp.ne.s32.totalorder %s31, %s34
    %p43 = scmp.eq.s32.totalorder %s14, 1
    %p44 = por %p42, %p43
    %p45 = scmp.ne.s32.totalorder %s34, %s35
    %p46 = scmp.eq.s32.totalorder %s14, 0
    %p47 = por %p45, %p46
    %p48 = scmp.ne.s32.totalorder %s34, %s35
    %p49 = scmp.eq.s32.totalorder %s15, 1
    %p50 = por %p48, %p49
    %p52 = scmp.ne.s32.totalorder %s35, %s51
    %p53 = scmp.eq.s32.totalorder %s15, 0
    %p54 = por %p52, %p53
    %s55 = ssub.s32 %s16, %s28
    %p56 = scmp.eq.s32.totalorder %s55, 0
    %s58 = sadd.s32 %s57, 1
    %s59 = scalar_select %p56, %s57, %s58
    %p62 = pneg %p56
    %p63 = scmp.eq.s32.totalorder %s9, 1
    %p64 = por %p62, %p63
    %p65 = scmp.ne.s32.totalorder %s57, %s60
    %p66 = scmp.eq.s32.totalorder %s9, 0
    %p67 = por %p65, %p66
    %p68 = scmp.ne.s32.totalorder %s57, %s60
    %p69 = scmp.eq.s32.totalorder %s14, 1
    %p70 = por %p68, %p69
    %p71 = scmp.ne.s32.totalorder %s60, %s61
    %p72 = scmp.eq.s32.totalorder %s14, 0
    %p73 = por %p71, %p72
    %p74 = scmp.ne.s32.totalorder %s60, %s61
    %p75 = scmp.eq.s32.totalorder %s15, 1
    %p76 = por %p74, %p75
    %p78 = scmp.ne.s32.totalorder %s61, %s77
    %p79 = scmp.eq.s32.totalorder %s15, 0
    %p80 = por %p78, %p79
    %s81 = ssub.s32 %s16, %s28
    %p82 = scmp.eq.s32.totalorder %s81, 0
    %s84 = sadd.s32 %s83, 1
    %s85 = scalar_select %p82, %s83, %s84
    %p88 = pneg %p82
    %p89 = scmp.eq.s32.totalorder %s9, 1
    %p90 = por %p88, %p89
    %p91 = scmp.ne.s32.totalorder %s83, %s86
    %p92 = scmp.eq.s32.totalorder %s9, 0
    %p93 = por %p91, %p92
    %p94 = scmp.ne.s32.totalorder %s83, %s86
    %p95 = scmp.eq.s32.totalorder %s14, 1
    %p96 = por %p94, %p95
    %p97 = scmp.ne.s32.totalorder %s86, %s87
    %p98 = scmp.eq.s32.totalorder %s14, 0
    %p99 = por %p97, %p98
    %p100 = scmp.ne.s32.totalorder %s86, %s87
    %p101 = scmp.eq.s32.totalorder %s15, 1
    %p102 = por %p100, %p101
    %p104 = scmp.ne.s32.totalorder %s87, %s103
    %p105 = scmp.eq.s32.totalorder %s15, 0
    %p106 = por %p104, %p105
    %s107 = ssub.s32 %s17, %s24
    %s108 = ssub.s32 %s16, %s28
    %s109 = sor.u32 %s107, %s108
    %p110 = scmp.eq.s32.totalorder %s109, 0
    %s112 = sadd.s32 %s111, 1
    %s113 = scalar_select %p110, %s111, %s112
    %p116 = pneg %p110
    %p117 = scmp.eq.s32.totalorder %s9, 1
    %p118 = por %p116, %p117
    %p119 = scmp.ne.s32.totalorder %s111, %s114
    %p120 = scmp.eq.s32.totalorder %s9, 0
    %p121 = por %p119, %p120
    %p122 = scmp.ne.s32.totalorder %s111, %s114
    %p123 = scmp.eq.s32.totalorder %s14, 1
    %p124 = por %p122, %p123
    %p125 = scmp.ne.s32.totalorder %s114, %s115
    %p126 = scmp.eq.s32.totalorder %s14, 0
    %p127 = por %p125, %p126
    %p128 = scmp.ne.s32.totalorder %s114, %s115
    %p129 = scmp.eq.s32.totalorder %s15, 1
    %p130 = por %p128, %p129
    %p132 = scmp.ne.s32.totalorder %s115, %s131
    %p133 = scmp.eq.s32.totalorder %s15, 0
    %p134 = por %p132, %p133
    %p135 = scmp.le.s32.totalorder 1, %s9
    %p136 = scmp.lt.s32.totalorder %s9, 3
    %p137 = pnand %p135, %p136
    %p138 = pneg %p137
    // Predicated region
    $region9: #{yolov10_forward.6} parent=5 // pred_check
      _
    $region10: #{yolov10_forward.6} parent=5 // pred_check_branch
      %140 = sbr.rel (%p137) target = $region12
    $region11: #{yolov10_forward.6} parent=5 // pred_region
      %s141 = ssub.s32 %s9, 1
      // Predicated region
      $region13: #{yolov10_forward.6} parent=11 // pred_check
        %p142 = pneg %p73
      $region14: #{yolov10_forward.6} parent=11 // pred_check_branch
        %144 = sbr.rel (%p142) target = $region16
      $region15: #{yolov10_forward.6} parent=11 // pred_region
        %p145 = scmp.lt.s32.totalorder %s18, 0
        %s146 = scalar_select %p145, %s18, 0
        %s147 = smul.addr %s146, 4
        %s148 = scalar_lea.vmem %s1, %s147
      $region16: #{yolov10_forward.6} parent=11 // pred_fallthru
        _
      // Predicated region
      $region17: #{yolov10_forward.6} parent=11 // pred_check
        %p149 = pneg %p99
      $region18: #{yolov10_forward.6} parent=11 // pred_check_branch
        %151 = sbr.rel (%p149) target = $region20
      $region19: #{yolov10_forward.6} parent=11 // pred_region
        %p152 = scmp.lt.s32.totalorder %s18, 0
        %s153 = scalar_select %p152, %s18, 0
        %s154 = scalar_lea.vmem %s2, %s153
      $region20: #{yolov10_forward.6} parent=11 // pred_fallthru
        _
    $region12: #{yolov10_forward.6} parent=5 // pred_fallthru
      _
    %p155 = scmp.lt.s32.totalorder %s9, 2
    // Predicated region
    $region21: #{yolov10_forward.6} parent=5 // pred_check
      %p156 = pneg %p155
    $region22: #{yolov10_forward.6} parent=5 // pred_check_branch
      %158 = sbr.rel (%p156) target = $region24
    $region23: #{yolov10_forward.6} parent=5 // pred_region
      // Predicated region
      $region25: #{yolov10_forward.6} parent=23 // pred_check
        %p159 = pneg %p41
      $region26: #{yolov10_forward.6} parent=23 // pred_check_branch
        %161 = sbr.rel (%p159) target = $region28
      $region27: #{yolov10_forward.6} parent=23 // pred_region
        %s162 = smul.u32 8, %s17
        %p163 = scmp.lt.s32.totalorder %s162, 15
        %s164 = scalar_select %p163, %s162, 15
        %s165 = smul.addr %s164, 5
        %s166 = smul.addr %s165, 4
        %s167 = scalar_lea.vmem %s0, %s166
        %s168 = smul.u32 8, %s17
      $region28: #{yolov10_forward.6} parent=23 // pred_fallthru
        _
    $region24: #{yolov10_forward.6} parent=5 // pred_fallthru
      _
    %p169 = scmp.le.s32.totalorder 1, %s9
    %p170 = scmp.lt.s32.totalorder %s9, 3
    %p171 = pnand %p169, %p170
    %p172 = pneg %p171
    // Predicated region
    $region29: #{yolov10_forward.6} parent=5 // pred_check
      _
    $region30: #{yolov10_forward.6} parent=5 // pred_check_branch
      %174 = sbr.rel (%p171) target = $region32
    $region31: #{yolov10_forward.6} parent=5 // pred_region
      %s175 = ssub.s32 %s9, 1
      %s176 = smul.u32 8, %s19
      %p177 = scmp.lt.s32.totalorder %s176, 15
      %s178 = scalar_select %p177, %s176, 15
      %s179 = smul.addr %s178, 5
      %s180 = smul.addr %s179, 4
      %s181 = scalar_lea.vmem %s0, %s180
      %p182 = pneg %p47
      %p183 = pneg %p44
      %p184 = scmp.lt.s32.totalorder %s18, 0
      %s185 = scalar_select %p184, %s18, 0
      %s186 = smul.addr %s185, 4
      %s187 = scalar_lea.vmem %s1, %s186
      %p188 = pneg %p73
      %p189 = pneg %p70
      %p190 = scmp.lt.s32.totalorder %s18, 0
      %s191 = scalar_select %p190, %s18, 0
      %s192 = scalar_lea.vmem %s2, %s191
      %p193 = pneg %p99
      %p194 = pneg %p96
      %p195 = pneg %p127
      %p196 = pneg %p124
      %s197 = smul.u32 8, %s19
      %p198 = scmp.lt.s32.totalorder %s197, 15
      %s199 = scalar_select %p198, %s197, 15
      %p200 = scmp.lt.s32.totalorder %s18, 0
      %s201 = scalar_select %p200, %s18, 0
      %s202 = sadd.s32 %s201, %s199
      %s203 = smul.addr %s202, 4
      %s204 = scalar_lea.vmem %s3, %s203
      %s205 = smul.u32 8, %s19
      %p206 = scmp.lt.s32.totalorder %s205, 15
      %s207 = scalar_select %p206, %s205, 15
      %s208 = smul.addr %s207, 5
      %s209 = smul.addr %s208, 4
      %s210 = scalar_lea.vmem %s0, %s209
      %s211 = smul.u32 8, %s19
      %p212 = scmp.lt.s32.totalorder %s18, 0
      %s213 = scalar_select %p212, %s18, 0
      %s214 = smul.addr %s213, 4
      %s215 = scalar_lea.vmem %s1, %s214
      %p216 = scmp.lt.s32.totalorder %s18, 0
      %s217 = scalar_select %p216, %s18, 0
      %s218 = scalar_lea.vmem %s2, %s217
      %s219 = smul.u32 8, %s19
      %p220 = scmp.lt.s32.totalorder %s219, 15
      %s221 = scalar_select %p220, %s219, 15
      %p222 = scmp.lt.s32.totalorder %s18, 0
      %s223 = scalar_select %p222, %s18, 0
      %s224 = sadd.s32 %s223, %s221
      %s225 = smul.addr %s224, 4
      %s226 = scalar_lea.vmem %s3, %s225
      %s227 = smul.u32 8, %s19
      %v229 = vld [vmem:[%s210] sm:$0xff]
      %v230 = vld [vmem:[%s210 + $0x8] sm:$0xff]
      %v231 = vld [vmem:[%s210 + $0x10] sm:$0xf]
      %v232 = vld [vmem:[%s210 + $0x14] sm:$0xff]
      %v233 = vld [vmem:[%s210 + $0x1c] sm:$0xff]
      %v234 = vld [vmem:[%s210 + $0x24] sm:$0xf]
      %v235 = vld [vmem:[%s210 + $0x28] sm:$0xff]
      %v236 = vld [vmem:[%s210 + $0x30] sm:$0xff]
      %v237 = vld [vmem:[%s210 + $0x38] sm:$0xf]
      %v238 = vld [vmem:[%s210 + $0x3c] sm:$0xff]
      %v239 = vld [vmem:[%s210 + $0x44] sm:$0xff]
      %v240 = vld [vmem:[%s210 + $0x4c] sm:$0xf]
      %v241 = vld [vmem:[%s210 + $0x50] sm:$0xff]
      %v242 = vld [vmem:[%s210 + $0x58] sm:$0xff]
      %v243 = vld [vmem:[%s210 + $0x60] sm:$0xf]
      %v244 = vld [vmem:[%s210 + $0x64] sm:$0xff]
      %v245 = vld [vmem:[%s210 + $0x6c] sm:$0xff]
      %v246 = vld [vmem:[%s210 + $0x74] sm:$0xf]
      %v247 = vld [vmem:[%s210 + $0x78] sm:$0xff]
      %v248 = vld [vmem:[%s210 + $0x80] sm:$0xff]
      %v249 = vld [vmem:[%s210 + $0x88] sm:$0xf]
      %v250 = vld [vmem:[%s210 + $0x8c] sm:$0xff]
      %v251 = vld [vmem:[%s210 + $0x94] sm:$0xff]
      %v252 = vld [vmem:[%s210 + $0x9c] sm:$0xf]
      %v253 = vld [vmem:[%s215] sm:$0xf]
      %v254 = vld [vmem:[%s215 + $0x4] sm:$0xf]
      %v255 = vld [vmem:[%s215 + $0x8] sm:$0xf]
      %v256 = vld [vmem:[%s215 + $0xc] sm:$0xf]
      %v257 = vld [vmem:[%s215 + $0x10] sm:$0xf]
      %v258 = vld [vmem:[%s215 + $0x14] sm:$0xf]
      %v259 = vld [vmem:[%s215 + $0x18] sm:$0xf]
      %v260 = vld [vmem:[%s215 + $0x1c] sm:$0xf]
      %v261 = vld [vmem:[%s215 + $0x20] sm:$0xf]
      %v262 = vld [vmem:[%s215 + $0x24] sm:$0xf]
      %v263 = vld [vmem:[%s215 + $0x28] sm:$0xf]
      %v264 = vld [vmem:[%s215 + $0x2c] sm:$0xf]
      %v265 = vld [vmem:[%s215 + $0x30] sm:$0xf]
      %v266 = vld [vmem:[%s215 + $0x34] sm:$0xf]
      %v267 = vld [vmem:[%s215 + $0x38] sm:$0xf]
      %v268 = vld [vmem:[%s215 + $0x3c] sm:$0xf]
      %v269 = vld [vmem:[%s215 + $0x40] sm:$0xf]
      %v270 = vld [vmem:[%s215 + $0x44] sm:$0xf]
      %v271 = vld [vmem:[%s215 + $0x48] sm:$0xf]
      %v272 = vld [vmem:[%s215 + $0x4c] sm:$0xf]
      %v273 = vld [vmem:[%s215 + $0x50] sm:$0xf]
      %v274 = vld [vmem:[%s215 + $0x54] sm:$0xf]
      %v275 = vld [vmem:[%s215 + $0x58] sm:$0xf]
      %v276 = vld [vmem:[%s215 + $0x5c] sm:$0xf]
      %v277 = vld [vmem:[%s215 + $0x60] sm:$0xf]
      %v278 = vld [vmem:[%s215 + $0x64] sm:$0xf]
      %v279 = vld [vmem:[%s215 + $0x68] sm:$0xf]
      %v280 = vld [vmem:[%s215 + $0x6c] sm:$0xf]
      %v281 = vld [vmem:[%s215 + $0x70] sm:$0xf]
      %v282 = vld [vmem:[%s215 + $0x74] sm:$0xf]
      %v283 = vld [vmem:[%s215 + $0x78] sm:$0xf]
      %v284 = vld [vmem:[%s215 + $0x7c] sm:$0xf]
      %v285 = vld [vmem:[%s215 + $0x80] sm:$0xf]
      %v286 = vld [vmem:[%s215 + $0x84] sm:$0xf]
      %v287 = vld [vmem:[%s215 + $0x88] sm:$0xf]
      %v288 = vld [vmem:[%s215 + $0x8c] sm:$0xf]
      %v289 = vld [vmem:[%s215 + $0x90] sm:$0xf]
      %v290 = vld [vmem:[%s215 + $0x94] sm:$0xf]
      %v291 = vld [vmem:[%s215 + $0x98] sm:$0xf]
      %v292 = vld [vmem:[%s215 + $0x9c] sm:$0xf]
      %v293 = vld [vmem:[%s215 + $0xa0] sm:$0xf]
      %v294 = vld [vmem:[%s215 + $0xa4] sm:$0xf]
      %v295 = vld [vmem:[%s215 + $0xa8] sm:$0xf]
      %v296 = vld [vmem:[%s215 + $0xac] sm:$0xf]
      %v297 = vld [vmem:[%s215 + $0xb0] sm:$0xf]
      %v298 = vld [vmem:[%s215 + $0xb4] sm:$0xf]
      %v299 = vld [vmem:[%s215 + $0xb8] sm:$0xf]
      %v300 = vld [vmem:[%s215 + $0xbc] sm:$0xf]
      %v301 = vld [vmem:[%s215 + $0xc0] sm:$0xf]
      %v302 = vld [vmem:[%s215 + $0xc4] sm:$0xf]
      %v303 = vld [vmem:[%s215 + $0xc8] sm:$0xf]
      %v304 = vld [vmem:[%s215 + $0xcc] sm:$0xf]
      %v305 = vld [vmem:[%s215 + $0xd0] sm:$0xf]
      %v306 = vld [vmem:[%s215 + $0xd4] sm:$0xf]
      %v307 = vld [vmem:[%s215 + $0xd8] sm:$0xf]
      %v308 = vld [vmem:[%s215 + $0xdc] sm:$0xf]
      %v309 = vld [vmem:[%s215 + $0xe0] sm:$0xf]
      %v310 = vld [vmem:[%s215 + $0xe4] sm:$0xf]
      %v311 = vld [vmem:[%s215 + $0xe8] sm:$0xf]
      %v312 = vld [vmem:[%s215 + $0xec] sm:$0xf]
      %v313 = vld [vmem:[%s215 + $0xf0] sm:$0xf]
      %v314 = vld [vmem:[%s215 + $0xf4] sm:$0xf]
      %v315 = vld [vmem:[%s215 + $0xf8] sm:$0xf]
      %v316 = vld [vmem:[%s215 + $0xfc] sm:$0xf]
      %v317 = vld [vmem:[%s215 + $0x100] sm:$0xf]
      %v318 = vld [vmem:[%s215 + $0x104] sm:$0xf]
      %v319 = vld [vmem:[%s215 + $0x108] sm:$0xf]
      %v320 = vld [vmem:[%s215 + $0x10c] sm:$0xf]
      %v321 = vld [vmem:[%s215 + $0x110] sm:$0xf]
      %v322 = vld [vmem:[%s215 + $0x114] sm:$0xf]
      %v323 = vld [vmem:[%s215 + $0x118] sm:$0xf]
      %v324 = vld [vmem:[%s215 + $0x11c] sm:$0xf]
      %v325 = vld [vmem:[%s215 + $0x120] sm:$0xf]
      %v326 = vld [vmem:[%s215 + $0x124] sm:$0xf]
      %v327 = vld [vmem:[%s215 + $0x128] sm:$0xf]
      %v328 = vld [vmem:[%s215 + $0x12c] sm:$0xf]
      %v329 = vld [vmem:[%s215 + $0x130] sm:$0xf]
      %v330 = vld [vmem:[%s215 + $0x134] sm:$0xf]
      %v331 = vld [vmem:[%s215 + $0x138] sm:$0xf]
      %v332 = vld [vmem:[%s215 + $0x13c] sm:$0xf]
      %v333 = vld [vmem:[%s218] sm:$0x1]
      %v335 = vlaneseq
      %v336 = vshrl.u32 %v335, 7
      %v337 = vsub.s32 0, %v336
      %v338 = vrot.slane %v333, %v337
      %v364 = vunpack.c.l.b16 %v229
      %v365 = vunpack.c.h.b16 %v229
      %v366 = vunpack.c.l.b16 %v230
      %v367 = vunpack.c.h.b16 %v230
      %v368 = vunpack.c.l.b16 %v231
      %v369 = vunpack.c.l.b16 %v232
      %v370 = vunpack.c.h.b16 %v232
      %v371 = vunpack.c.l.b16 %v233
      %v372 = vunpack.c.h.b16 %v233
      %v373 = vunpack.c.l.b16 %v234
      %v374 = vunpack.c.l.b16 %v235
      %v375 = vunpack.c.h.b16 %v235
      %v376 = vunpack.c.l.b16 %v236
      %v377 = vunpack.c.h.b16 %v236
      %v378 = vunpack.c.l.b16 %v237
      %v379 = vunpack.c.l.b16 %v238
      %v380 = vunpack.c.h.b16 %v238
      %v381 = vunpack.c.l.b16 %v239
      %v382 = vunpack.c.h.b16 %v239
      %v383 = vunpack.c.l.b16 %v240
      %v384 = vunpack.c.l.b16 %v241
      %v385 = vunpack.c.h.b16 %v241
      %v386 = vunpack.c.l.b16 %v242
      %v387 = vunpack.c.h.b16 %v242
      %v388 = vunpack.c.l.b16 %v243
      %v389 = vunpack.c.l.b16 %v244
      %v390 = vunpack.c.h.b16 %v244
      %v391 = vunpack.c.l.b16 %v245
      %v392 = vunpack.c.h.b16 %v245
      %v393 = vunpack.c.l.b16 %v246
      %v394 = vunpack.c.l.b16 %v247
      %v395 = vunpack.c.h.b16 %v247
      %v396 = vunpack.c.l.b16 %v248
      %v397 = vunpack.c.h.b16 %v248
      %v398 = vunpack.c.l.b16 %v249
      %v399 = vunpack.c.l.b16 %v250
      %v400 = vunpack.c.h.b16 %v250
      %v401 = vunpack.c.l.b16 %v251
      %v402 = vunpack.c.h.b16 %v251
      %v403 = vunpack.c.l.b16 %v252
      %v404 = vpack.c.b16 %v369, %v364
      %v405 = vpack.c.b16 %v370, %v365
      %v406 = vpack.c.b16 %v371, %v366
      %v407 = vpack.c.b16 %v372, %v367
      %v408 = vpack.c.b16 %v373, %v368
      %v409 = vpack.c.b16 %v379, %v374
      %v410 = vpack.c.b16 %v380, %v375
      %v411 = vpack.c.b16 %v381, %v376
      %v412 = vpack.c.b16 %v382, %v377
      %v413 = vpack.c.b16 %v383, %v378
      %v414 = vpack.c.b16 %v389, %v384
      %v415 = vpack.c.b16 %v390, %v385
      %v416 = vpack.c.b16 %v391, %v386
      %v417 = vpack.c.b16 %v392, %v387
      %v418 = vpack.c.b16 %v393, %v388
      %v419 = vpack.c.b16 %v399, %v394
      %v420 = vpack.c.b16 %v400, %v395
      %v421 = vpack.c.b16 %v401, %v396
      %v422 = vpack.c.b16 %v402, %v397
      %v423 = vpack.c.b16 %v403, %v398
      %v524 = vunpack.c.l.b16 %v253
      %v525 = vunpack.c.l.b16 %v254
      %v526 = vunpack.c.l.b16 %v255
      %v527 = vunpack.c.l.b16 %v256
      %v528 = vunpack.c.l.b16 %v257
      %v529 = vunpack.c.l.b16 %v258
      %v530 = vunpack.c.l.b16 %v259
      %v531 = vunpack.c.l.b16 %v260
      %v532 = vunpack.c.l.b16 %v261
      %v533 = vunpack.c.l.b16 %v262
      %v534 = vunpack.c.l.b16 %v263
      %v535 = vunpack.c.l.b16 %v264
      %v536 = vunpack.c.l.b16 %v265
      %v537 = vunpack.c.l.b16 %v266
      %v538 = vunpack.c.l.b16 %v267
      %v539 = vunpack.c.l.b16 %v268
      %v540 = vunpack.c.l.b16 %v269
      %v541 = vunpack.c.l.b16 %v270
      %v542 = vunpack.c.l.b16 %v271
      %v543 = vunpack.c.l.b16 %v272
      %v544 = vunpack.c.l.b16 %v273
      %v545 = vunpack.c.l.b16 %v274
      %v546 = vunpack.c.l.b16 %v275
      %v547 = vunpack.c.l.b16 %v276
      %v548 = vunpack.c.l.b16 %v277
      %v549 = vunpack.c.l.b16 %v278
      %v550 = vunpack.c.l.b16 %v279
      %v551 = vunpack.c.l.b16 %v280
      %v552 = vunpack.c.l.b16 %v281
      %v553 = vunpack.c.l.b16 %v282
      %v554 = vunpack.c.l.b16 %v283
      %v555 = vunpack.c.l.b16 %v284
      %v556 = vunpack.c.l.b16 %v285
      %v557 = vunpack.c.l.b16 %v286
      %v558 = vunpack.c.l.b16 %v287
      %v559 = vunpack.c.l.b16 %v288
      %v560 = vunpack.c.l.b16 %v289
      %v561 = vunpack.c.l.b16 %v290
      %v562 = vunpack.c.l.b16 %v291
      %v563 = vunpack.c.l.b16 %v292
      %v564 = vunpack.c.l.b16 %v293
      %v565 = vunpack.c.l.b16 %v294
      %v566 = vunpack.c.l.b16 %v295
      %v567 = vunpack.c.l.b16 %v296
      %v568 = vunpack.c.l.b16 %v297
      %v569 = vunpack.c.l.b16 %v298
      %v570 = vunpack.c.l.b16 %v299
      %v571 = vunpack.c.l.b16 %v300
      %v572 = vunpack.c.l.b16 %v301
      %v573 = vunpack.c.l.b16 %v302
      %v574 = vunpack.c.l.b16 %v303
      %v575 = vunpack.c.l.b16 %v304
      %v576 = vunpack.c.l.b16 %v305
      %v577 = vunpack.c.l.b16 %v306
      %v578 = vunpack.c.l.b16 %v307
      %v579 = vunpack.c.l.b16 %v308
      %v580 = vunpack.c.l.b16 %v309
      %v581 = vunpack.c.l.b16 %v310
      %v582 = vunpack.c.l.b16 %v311
      %v583 = vunpack.c.l.b16 %v312
      %v584 = vunpack.c.l.b16 %v313
      %v585 = vunpack.c.l.b16 %v314
      %v586 = vunpack.c.l.b16 %v315
      %v587 = vunpack.c.l.b16 %v316
      %v588 = vunpack.c.l.b16 %v317
      %v589 = vunpack.c.l.b16 %v318
      %v590 = vunpack.c.l.b16 %v319
      %v591 = vunpack.c.l.b16 %v320
      %v592 = vunpack.c.l.b16 %v321
      %v593 = vunpack.c.l.b16 %v322
      %v594 = vunpack.c.l.b16 %v323
      %v595 = vunpack.c.l.b16 %v324
      %v596 = vunpack.c.l.b16 %v325
      %v597 = vunpack.c.l.b16 %v326
      %v598 = vunpack.c.l.b16 %v327
      %v599 = vunpack.c.l.b16 %v328
      %v600 = vunpack.c.l.b16 %v329
      %v601 = vunpack.c.l.b16 %v330
      %v602 = vunpack.c.l.b16 %v331
      %v603 = vunpack.c.l.b16 %v332
      %v604 = vpack.c.b16 %v525, %v524
      %v605 = vpack.c.b16 %v527, %v526
      %v606 = vpack.c.b16 %v529, %v528
      %v607 = vpack.c.b16 %v531, %v530
      %v608 = vpack.c.b16 %v533, %v532
      %v609 = vpack.c.b16 %v535, %v534
      %v610 = vpack.c.b16 %v537, %v536
      %v611 = vpack.c.b16 %v539, %v538
      %v612 = vpack.c.b16 %v541, %v540
      %v613 = vpack.c.b16 %v543, %v542
      %v614 = vpack.c.b16 %v545, %v544
      %v615 = vpack.c.b16 %v547, %v546
      %v616 = vpack.c.b16 %v549, %v548
      %v617 = vpack.c.b16 %v551, %v550
      %v618 = vpack.c.b16 %v553, %v552
      %v619 = vpack.c.b16 %v555, %v554
      %v620 = vpack.c.b16 %v557, %v556
      %v621 = vpack.c.b16 %v559, %v558
      %v622 = vpack.c.b16 %v561, %v560
      %v623 = vpack.c.b16 %v563, %v562
      %v624 = vpack.c.b16 %v565, %v564
      %v625 = vpack.c.b16 %v567, %v566
      %v626 = vpack.c.b16 %v569, %v568
      %v627 = vpack.c.b16 %v571, %v570
      %v628 = vpack.c.b16 %v573, %v572
      %v629 = vpack.c.b16 %v575, %v574
      %v630 = vpack.c.b16 %v577, %v576
      %v631 = vpack.c.b16 %v579, %v578
      %v632 = vpack.c.b16 %v581, %v580
      %v633 = vpack.c.b16 %v583, %v582
      %v634 = vpack.c.b16 %v585, %v584
      %v635 = vpack.c.b16 %v587, %v586
      %v636 = vpack.c.b16 %v589, %v588
      %v637 = vpack.c.b16 %v591, %v590
      %v638 = vpack.c.b16 %v593, %v592
      %v639 = vpack.c.b16 %v595, %v594
      %v640 = vpack.c.b16 %v597, %v596
      %v641 = vpack.c.b16 %v599, %v598
      %v642 = vpack.c.b16 %v601, %v600
      %v643 = vpack.c.b16 %v603, %v602
      %684 = vmatprep.subr.bf16.mxu0 0
      %685 = vmatpush1.bf16.msra.mxu0 %v604
      %686 = vmatprep.subr.bf16.mxu0 0
      %687 = vmatpush1.bf16.msra.mxu0 %v605
      %688 = vmatprep.subr.bf16.mxu0 0
      %689 = vmatpush1.bf16.msra.mxu0 %v606
      %690 = vmatprep.subr.bf16.mxu0 0
      %691 = vmatpush1.bf16.msra.mxu0 %v607
      %692 = vmatprep.subr.bf16.mxu0 0
      %693 = vmatpush1.bf16.msra.mxu0 %v608
      %694 = vmatprep.subr.bf16.mxu0 0
      %695 = vmatpush1.bf16.msra.mxu0 %v609
      %696 = vmatprep.subr.bf16.mxu0 0
      %697 = vmatpush1.bf16.msra.mxu0 %v610
      %698 = vmatprep.subr.bf16.mxu0 0
      %699 = vmatpush1.bf16.msra.mxu0 %v611
      %700 = vmatprep.subr.bf16.mxu0 0
      %701 = vmatpush1.bf16.msra.mxu0 %v612
      %702 = vmatprep.subr.bf16.mxu0 0
      %703 = vmatpush1.bf16.msra.mxu0 %v613
      %704 = vmatprep.subr.bf16.mxu0 0
      %705 = vmatpush1.bf16.msra.mxu0 %v614
      %706 = vmatprep.subr.bf16.mxu0 0
      %707 = vmatpush1.bf16.msra.mxu0 %v615
      %708 = vmatprep.subr.bf16.mxu0 0
      %709 = vmatpush1.bf16.msra.mxu0 %v616
      %710 = vmatprep.subr.bf16.mxu0 0
      %711 = vmatpush1.bf16.msra.mxu0 %v617
      %712 = vmatprep.subr.bf16.mxu0 0
      %713 = vmatpush1.bf16.msra.mxu0 %v618
      %714 = vmatprep.subr.bf16.mxu0 0
      %715 = vmatpush1.bf16.msra.mxu0 %v619
      %716 = vmatprep.mubr.bf16.mxu0 %v405
      %717 = vmatmul.mubr.bf16.gmra.mrb[0].mxu0 %v404
      %v718 = vpop.f32.mrb[0].mxu0
      %v719 = vadd.f32 %v338, %v718
      %v720 = vpop.f32.mrb[0].mxu0
      %v721 = vpop.f32.mrb[0].mxu0
      %v722 = vadd.f32 %v338, %v721
      %v723 = vpop.f32.mrb[0].mxu0
      %724 = vmatprep.mubr.bf16.mxu0 %v410
      %725 = vmatmul.mubr.bf16.gmra.mrb[0].mxu0 %v409
      %v726 = vpop.f32.mrb[0].mxu0
      %v727 = vadd.f32 %v338, %v726
      %v728 = vpop.f32.mrb[0].mxu0
      %v729 = vpop.f32.mrb[0].mxu0
      %v730 = vadd.f32 %v338, %v729
      %v731 = vpop.f32.mrb[0].mxu0
      %732 = vmatprep.mubr.bf16.mxu0 %v415
      %733 = vmatmul.mubr.bf16.gmra.mrb[0].mxu0 %v414
      %v734 = vpop.f32.mrb[0].mxu0
      %v735 = vadd.f32 %v338, %v734
      %v736 = vpop.f32.mrb[0].mxu0
      %v737 = vpop.f32.mrb[0].mxu0
      %v738 = vadd.f32 %v338, %v737
      %v739 = vpop.f32.mrb[0].mxu0
      %740 = vmatprep.mubr.bf16.mxu0 %v420
      %741 = vmatmul.mubr.bf16.gmra.mrb[0].mxu0 %v419
      %v742 = vpop.f32.mrb[0].mxu0
      %v743 = vadd.f32 %v338, %v742
      %v744 = vpop.f32.mrb[0].mxu0
      %v745 = vpop.f32.mrb[0].mxu0
      %v746 = vadd.f32 %v338, %v745
      %v747 = vpop.f32.mrb[0].mxu0
      %748 = vdwg.mxu0
      %749 = vmatprep.subr.bf16.mxu0 0
      %750 = vmatpush1.bf16.msra.mxu0 %v620
      %751 = vmatprep.subr.bf16.mxu0 0
      %752 = vmatpush1.bf16.msra.mxu0 %v621
      %753 = vmatprep.subr.bf16.mxu0 0
      %754 = vmatpush1.bf16.msra.mxu0 %v622
      %755 = vmatprep.subr.bf16.mxu0 0
      %756 = vmatpush1.bf16.msra.mxu0 %v623
      %757 = vmatprep.subr.bf16.mxu0 0
      %758 = vmatpush1.bf16.msra.mxu0 %v624
      %759 = vmatprep.subr.bf16.mxu0 0
      %760 = vmatpush1.bf16.msra.mxu0 %v625
      %761 = vmatprep.subr.bf16.mxu0 0
      %762 = vmatpush1.bf16.msra.mxu0 %v626
      %763 = vmatprep.subr.bf16.mxu0 0
      %764 = vmatpush1.bf16.msra.mxu0 %v627
      %765 = vmatprep.subr.bf16.mxu0 0
      %766 = vmatpush1.bf16.msra.mxu0 %v628
      %767 = vmatprep.subr.bf16.mxu0 0
      %768 = vmatpush1.bf16.msra.mxu0 %v629
      %769 = vmatprep.subr.bf16.mxu0 0
      %770 = vmatpush1.bf16.msra.mxu0 %v630
      %771 = vmatprep.subr.bf16.mxu0 0
      %772 = vmatpush1.bf16.msra.mxu0 %v631
      %773 = vmatprep.subr.bf16.mxu0 0
      %774 = vmatpush1.bf16.msra.mxu0 %v632
      %775 = vmatprep.subr.bf16.mxu0 0
      %776 = vmatpush1.bf16.msra.mxu0 %v633
      %777 = vmatprep.subr.bf16.mxu0 0
      %778 = vmatpush1.bf16.msra.mxu0 %v634
      %779 = vmatprep.subr.bf16.mxu0 0
      %780 = vmatpush1.bf16.msra.mxu0 %v635
      %781 = vmatprep.mubr.bf16.mxu0 %v407
      %782 = vmatmul.mubr.bf16.gmra.mrb[0].mxu0 %v406
      %v783 = vpop.f32.mrb[0].mxu0
      %v784 = vadd.f32 %v719, %v783
      %v785 = vpop.f32.mrb[0].mxu0
      %v786 = vpop.f32.mrb[0].mxu0
      %v787 = vadd.f32 %v722, %v786
      %v788 = vpop.f32.mrb[0].mxu0
      %789 = vmatprep.mubr.bf16.mxu0 %v412
      %790 = vmatmul.mubr.bf16.gmra.mrb[0].mxu0 %v411
      %v791 = vpop.f32.mrb[0].mxu0
      %v792 = vadd.f32 %v727, %v791
      %v793 = vpop.f32.mrb[0].mxu0
      %v794 = vpop.f32.mrb[0].mxu0
      %v795 = vadd.f32 %v730, %v794
      %v796 = vpop.f32.mrb[0].mxu0
      %797 = vmatprep.mubr.bf16.mxu0 %v417
      %798 = vmatmul.mubr.bf16.gmra.mrb[0].mxu0 %v416
      %v799 = vpop.f32.mrb[0].mxu0
      %v800 = vadd.f32 %v735, %v799
      %v801 = vpop.f32.mrb[0].mxu0
      %v802 = vpop.f32.mrb[0].mxu0
      %v803 = vadd.f32 %v738, %v802
      %v804 = vpop.f32.mrb[0].mxu0
      %805 = vmatprep.mubr.bf16.mxu0 %v422
      %806 = vmatmul.mubr.bf16.gmra.mrb[0].mxu0 %v421
      %v807 = vpop.f32.mrb[0].mxu0
      %v808 = vadd.f32 %v743, %v807
      %v809 = vpop.f32.mrb[0].mxu0
      %v810 = vpop.f32.mrb[0].mxu0
      %v811 = vadd.f32 %v746, %v810
      %v812 = vpop.f32.mrb[0].mxu0
      %813 = vdwg.mxu0
      %814 = vmatprep.subr.bf16.mxu0 0
      %815 = vmatpush1.bf16.msra.mxu0 %v636
      %816 = vmatprep.subr.bf16.mxu0 0
      %817 = vmatpush1.bf16.msra.mxu0 %v637
      %818 = vmatprep.subr.bf16.mxu0 0
      %819 = vmatpush1.bf16.msra.mxu0 %v638
      %820 = vmatprep.subr.bf16.mxu0 0
      %821 = vmatpush1.bf16.msra.mxu0 %v639
      %822 = vmatprep.subr.bf16.mxu0 0
      %823 = vmatpush1.bf16.msra.mxu0 %v640
      %824 = vmatprep.subr.bf16.mxu0 0
      %825 = vmatpush1.bf16.msra.mxu0 %v641
      %826 = vmatprep.subr.bf16.mxu0 0
      %827 = vmatpush1.bf16.msra.mxu0 %v642
      %828 = vmatprep.subr.bf16.mxu0 0
      %829 = vmatpush1.bf16.msra.mxu0 %v643
      %830 = vmatprep.subr.bf16.mxu0 0
      %831 = vmatpush1.bf16.msra.mxu0 0
      %832 = vmatprep.subr.bf16.mxu0 0
      %833 = vmatpush1.bf16.msra.mxu0 0
      %834 = vmatprep.subr.bf16.mxu0 0
      %835 = vmatpush1.bf16.msra.mxu0 0
      %836 = vmatprep.subr.bf16.mxu0 0
      %837 = vmatpush1.bf16.msra.mxu0 0
      %838 = vmatprep.subr.bf16.mxu0 0
      %839 = vmatpush1.bf16.msra.mxu0 0
      %840 = vmatprep.subr.bf16.mxu0 0
      %841 = vmatpush1.bf16.msra.mxu0 0
      %842 = vmatprep.subr.bf16.mxu0 0
      %843 = vmatpush1.bf16.msra.mxu0 0
      %844 = vmatprep.subr.bf16.mxu0 0
      %845 = vmatpush1.bf16.msra.mxu0 0
      %846 = vmatprep.mubr.bf16.mxu0 0
      %847 = vmatmul.mubr.bf16.gmra.mrb[0].mxu0 %v408
      %v848 = vpop.f32.mrb[0].mxu0
      %v849 = vadd.f32 %v784, %v848
      %v850 = vpop.f32.mrb[0].mxu0
      %v851 = vpop.f32.mrb[0].mxu0
      %v852 = vadd.f32 %v787, %v851
      %v853 = vpop.f32.mrb[0].mxu0
      %854 = vmatprep.mubr.bf16.mxu0 0
      %855 = vmatmul.mubr.bf16.gmra.mrb[0].mxu0 %v413
      %v856 = vpop.f32.mrb[0].mxu0
      %v857 = vadd.f32 %v792, %v856
      %v858 = vpop.f32.mrb[0].mxu0
      %v859 = vpop.f32.mrb[0].mxu0
      %v860 = vadd.f32 %v795, %v859
      %v861 = vpop.f32.mrb[0].mxu0
      %862 = vmatprep.mubr.bf16.mxu0 0
      %863 = vmatmul.mubr.bf16.gmra.mrb[0].mxu0 %v418
      %v864 = vpop.f32.mrb[0].mxu0
      %v865 = vadd.f32 %v800, %v864
      %v866 = vpop.f32.mrb[0].mxu0
      %v867 = vpop.f32.mrb[0].mxu0
      %v868 = vadd.f32 %v803, %v867
      %v869 = vpop.f32.mrb[0].mxu0
      %870 = vmatprep.mubr.bf16.mxu0 0
      %871 = vmatmul.mubr.bf16.gmra.mrb[0].mxu0 %v423
      %v872 = vpop.f32.mrb[0].mxu0
      %v873 = vadd.f32 %v808, %v872
      %v874 = vpop.f32.mrb[0].mxu0
      %v875 = vpop.f32.mrb[0].mxu0
      %v876 = vadd.f32 %v811, %v875
      %v877 = vpop.f32.mrb[0].mxu0
      %878 = vdwg.mxu0
      %v879 = vmax.f32 %v849, 0.0
      %v880 = vmax.f32 %v852, 0.0
      %v881 = vmax.f32 %v857, 0.0
      %v882 = vmax.f32 %v860, 0.0
      %v883 = vmax.f32 %v865, 0.0
      %v884 = vmax.f32 %v868, 0.0
      %v885 = vmax.f32 %v873, 0.0
      %v886 = vmax.f32 %v876, 0.0
      %v887 = vpack.c.bf16 %v880, %v879
      %v888 = vpack.c.bf16 %v882, %v881
      %v889 = vpack.c.bf16 %v884, %v883
      %v890 = vpack.c.bf16 %v886, %v885
      %v895 = vunpack.c.l.b16 %v887
      %v896 = vunpack.c.h.b16 %v887
      %v897 = vunpack.c.l.b16 %v888
      %v898 = vunpack.c.h.b16 %v888
      %v899 = vunpack.c.l.b16 %v889
      %v900 = vunpack.c.h.b16 %v889
      %v901 = vunpack.c.l.b16 %v890
      %v902 = vunpack.c.h.b16 %v890
      %v903 = vpack.c.b16 %v895, %v895
      %v904 = vpack.c.b16 %v896, %v896
      %v905 = vpack.c.b16 %v897, %v897
      %v906 = vpack.c.b16 %v898, %v898
      %v907 = vpack.c.b16 %v899, %v899
      %v908 = vpack.c.b16 %v900, %v900
      %v909 = vpack.c.b16 %v901, %v901
      %v910 = vpack.c.b16 %v902, %v902
      %919 = vst [vmem:[%s226] sm:$0xf] %v903
      %920 = vst [vmem:[%s226 + $0x4] sm:$0xf] %v904
      %921 = vst [vmem:[%s226 + $0x8] sm:$0xf] %v905
      %922 = vst [vmem:[%s226 + $0xc] sm:$0xf] %v906
      %923 = vst [vmem:[%s226 + $0x10] sm:$0xf] %v907
      %924 = vst [vmem:[%s226 + $0x14] sm:$0xf] %v908
      %925 = vst [vmem:[%s226 + $0x18] sm:$0xf] %v909
      %926 = vst [vmem:[%s226 + $0x1c] sm:$0xf] %v910
      %s927 = smul.u32 8, %s19
      %p928 = scmp.lt.s32.totalorder %s927, 15
      %s929 = scalar_select %p928, %s927, 15
      %p930 = scmp.lt.s32.totalorder %s18, 0
      %s931 = scalar_select %p930, %s18, 0
      %s932 = sadd.s32 %s931, %s929
      %s933 = smul.addr %s932, 4
      %s934 = scalar_lea.vmem %s3, %s933
      // Predicated region
      $region33: #{yolov10_forward.6} parent=31 // pred_check
        %p935 = pneg %p124
      $region34: #{yolov10_forward.6} parent=31 // pred_check_branch
        %937 = sbr.rel (%p935) target = $region36
      $region35: #{yolov10_forward.6} parent=31 // pred_region
        %s938 = smul.u32 8, %s19
      $region36: #{yolov10_forward.6} parent=31 // pred_fallthru
        _
    $region32: #{yolov10_forward.6} parent=5 // pred_fallthru
      _
    %p939 = scmp.le.s32.totalorder 2, %s9
    // Predicated region
    $region37: #{yolov10_forward.6} parent=5 // pred_check
      %p940 = pneg %p939
    $region38: #{yolov10_forward.6} parent=5 // pred_check_branch
      %942 = sbr.rel (%p940) target = $region40
    $region39: #{yolov10_forward.6} parent=5 // pred_region
      %s943 = ssub.s32 %s9, 2
      // Predicated region
      $region41: #{yolov10_forward.6} parent=39 // pred_check
        %p944 = pneg %p130
      $region42: #{yolov10_forward.6} parent=39 // pred_check_branch
        %946 = sbr.rel (%p944) target = $region44
      $region43: #{yolov10_forward.6} parent=39 // pred_region
        %s947 = smul.u32 8, %s21
        %p948 = scmp.lt.s32.totalorder %s947, 15
        %s949 = scalar_select %p948, %s947, 15
        %p950 = scmp.lt.s32.totalorder %s20, 0
        %s951 = scalar_select %p950, %s20, 0
        %s952 = sadd.s32 %s951, %s949
        %s953 = smul.addr %s952, 4
        %s954 = scalar_lea.vmem %s3, %s953
      $region44: #{yolov10_forward.6} parent=39 // pred_fallthru
        _
    $region40: #{yolov10_forward.6} parent=5 // pred_fallthru
      _
  $region6: #{yolov10_forward.6} parent=0 // loop_footer
    %s13 = sadd.s32 1, %s9
  $region7: #{yolov10_forward.6} parent=0 // loop_footer_branch
    %8 = sbr.rel target = $region3
  $region8: #{yolov10_forward.6} parent=0 // loop_exit
    _

// kernel: yolov10_forward.7
$region0: #{yolov10_forward.7}
  #allocation0 [shape = 'u32[]', space=smem, size = 0x4, offset = 0x4, fixed_abs, tag = 'smem constant byte address 0x4 - core index']
  #allocation1 [shape = 'u32[144,128]{1,0:T(1,128)}', space=vmem, size = 0x12000, scoped, tag = 'internal scratch']
  %s0 = inlined_call_operand.vmem [shape: bf16[32,1152], index: 0, kind: input, shape index: {}]
  %s1 = inlined_call_operand.vmem [shape: bf16[1152,256], index: 1, kind: input, shape index: {}]
  %s2 = inlined_call_operand.vmem [shape: f32[1,256], index: 2, kind: input, shape index: {}]
  %s3 = inlined_call_operand.vmem [shape: bf16[32,256], index: 3, kind: output, shape index: {}]
  %s4 = sld [smem:[#allocation0]]
  $region45: #{yolov10_forward.7} parent=0
    _
  %s6 = ssub.s32 1, %s4
  %s7 = scalar_select 0, %s6, %s4
  loop: start=0, step=1, limit=4
  $region2: #{yolov10_forward.7} parent=0 // loop_pre_header
    _
  $region3: #{yolov10_forward.7} parent=0 // loop_header
    %s9 = sphi 0, %s13
    %p10 = scmp.ge.s32.totalorder %s9, 4
    %s16 = sphi 0, %s28
    %s17 = sphi 0, %s24
    %s18 = sphi 0, %s16
    %s19 = sphi 0, %s17
    %s20 = sphi 0, %s18
    %s21 = sphi 0, %s19
    %s31 = sphi 0, %s33
    %s34 = sphi 0, %s31
    %s35 = sphi 0, %s34
    %s51 = sphi 0, %s35
    %s57 = sphi 0, %s59
    %s60 = sphi 0, %s57
    %s61 = sphi 0, %s60
    %s77 = sphi 0, %s61
    %s83 = sphi 0, %s85
    %s86 = sphi 0, %s83
    %s87 = sphi 0, %s86
    %s103 = sphi 0, %s87
    %s111 = sphi 0, %s113
    %s114 = sphi 0, %s111
    %s115 = sphi 0, %s114
    %s131 = sphi 0, %s115
  $region4: #{yolov10_forward.7} parent=0 // loop_header_branch
    %12 = sbr.rel (%p10) target = $region8
  $region5: #{yolov10_forward.7} parent=0 // loop_body
    %s14 = ssub.s32 %s9, 1
    %s15 = ssub.s32 %s9, 2
    %s22 = sadd.s32 1, %s17
    %p23 = scmp.ge.s32.totalorder %s22, 2
    %s24 = scalar_select %p23, 0, %s22
    %s25 = sadd.s32 1, %s16
    %s26 = scalar_select %p23, %s25, %s16
    %p27 = scmp.ge.s32.totalorder %s26, 1
    %s28 = scalar_select %p27, 0, %s26
    %s29 = ssub.s32 %s17, %s24
    %p30 = scmp.eq.s32.totalorder %s29, 0
    %s32 = sadd.s32 %s31, 1
    %s33 = scalar_select %p30, %s31, %s32
    %p36 = pneg %p30
    %p37 = scmp.eq.s32.totalorder %s9, 1
    %p38 = por %p36, %p37
    %p39 = scmp.ne.s32.totalorder %s31, %s34
    %p40 = scmp.eq.s32.totalorder %s9, 0
    %p41 = por %p39, %p40
    %p42 = scmp.ne.s32.totalorder %s31, %s34
    %p43 = scmp.eq.s32.totalorder %s14, 1
    %p44 = por %p42, %p43
    %p45 = scmp.ne.s32.totalorder %s34, %s35
    %p46 = scmp.eq.s32.totalorder %s14, 0
    %p47 = por %p45, %p46
    %p48 = scmp.ne.s32.totalorder %s34, %s35
    %p49 = scmp.eq.s32.totalorder %s15, 1
    %p50 = por %p48, %p49
    %p52 = scmp.ne.s32.totalorder %s35, %s51
    %p53 = scmp.eq.s32.totalorder %s15, 0
    %p54 = por %p52, %p53
    %s55 = ssub.s32 %s16, %s28
    %p56 = scmp.eq.s32.totalorder %s55, 0
    %s58 = sadd.s32 %s57, 1
    %s59 = scalar_select %p56, %s57, %s58
    %p62 = pneg %p56
    %p63 = scmp.eq.s32.totalorder %s9, 1
    %p64 = por %p62, %p63
    %p65 = scmp.ne.s32.totalorder %s57, %s60
    %p66 = scmp.eq.s32.totalorder %s9, 0
    %p67 = por %p65, %p66
    %p68 = scmp.ne.s32.totalorder %s57, %s60
    %p69 = scmp.eq.s32.totalorder %s14, 1
    %p70 = por %p68, %p69
    %p71 = scmp.ne.s32.totalorder %s60, %s61
    %p72 = scmp.eq.s32.totalorder %s14, 0
    %p73 = por %p71, %p72
    %p74 = scmp.ne.s32.totalorder %s60, %s61
    %p75 = scmp.eq.s32.totalorder %s15, 1
    %p76 = por %p74, %p75
    %p78 = scmp.ne.s32.totalorder %s61, %s77
    %p79 = scmp.eq.s32.totalorder %s15, 0
    %p80 = por %p78, %p79
    %s81 = ssub.s32 %s16, %s28
    %p82 = scmp.eq.s32.totalorder %s81, 0
    %s84 = sadd.s32 %s83, 1
    %s85 = scalar_select %p82, %s83, %s84
    %p88 = pneg %p82
    %p89 = scmp.eq.s32.totalorder %s9, 1
    %p90 = por %p88, %p89
    %p91 = scmp.ne.s32.totalorder %s83, %s86
    %p92 = scmp.eq.s32.totalorder %s9, 0
    %p93 = por %p91, %p92
    %p94 = scmp.ne.s32.totalorder %s83, %s86
    %p95 = scmp.eq.s32.totalorder %s14, 1
    %p96 = por %p94, %p95
    %p97 = scmp.ne.s32.totalorder %s86, %s87
    %p98 = scmp.eq.s32.totalorder %s14, 0
    %p99 = por %p97, %p98
    %p100 = scmp.ne.s32.totalorder %s86, %s87
    %p101 = scmp.eq.s32.totalorder %s15, 1
    %p102 = por %p100, %p101
    %p104 = scmp.ne.s32.totalorder %s87, %s103
    %p105 = scmp.eq.s32.totalorder %s15, 0
    %p106 = por %p104, %p105
    %s107 = ssub.s32 %s17, %s24
    %s108 = ssub.s32 %s16, %s28
    %s109 = sor.u32 %s107, %s108
    %p110 = scmp.eq.s32.totalorder %s109, 0
    %s112 = sadd.s32 %s111, 1
    %s113 = scalar_select %p110, %s111, %s112
    %p116 = pneg %p110
    %p117 = scmp.eq.s32.totalorder %s9, 1
    %p118 = por %p116, %p117
    %p119 = scmp.ne.s32.totalorder %s111, %s114
    %p120 = scmp.eq.s32.totalorder %s9, 0
    %p121 = por %p119, %p120
    %p122 = scmp.ne.s32.totalorder %s111, %s114
    %p123 = scmp.eq.s32.totalorder %s14, 1
    %p124 = por %p122, %p123
    %p125 = scmp.ne.s32.totalorder %s114, %s115
    %p126 = scmp.eq.s32.totalorder %s14, 0
    %p127 = por %p125, %p126
    %p128 = scmp.ne.s32.totalorder %s114, %s115
    %p129 = scmp.eq.s32.totalorder %s15, 1
    %p130 = por %p128, %p129
    %p132 = scmp.ne.s32.totalorder %s115, %s131
    %p133 = scmp.eq.s32.totalorder %s15, 0
    %p134 = por %p132, %p133
    %p135 = scmp.le.s32.totalorder 1, %s9
    %p136 = scmp.lt.s32.totalorder %s9, 3
    %p137 = pnand %p135, %p136
    %p138 = pneg %p137
    // Predicated region
    $region9: #{yolov10_forward.7} parent=5 // pred_check
      _
    $region10: #{yolov10_forward.7} parent=5 // pred_check_branch
      %140 = sbr.rel (%p137) target = $region12
    $region11: #{yolov10_forward.7} parent=5 // pred_region
      %s141 = ssub.s32 %s9, 1
      // Predicated region
      $region13: #{yolov10_forward.7} parent=11 // pred_check
        %p142 = pneg %p73
      $region14: #{yolov10_forward.7} parent=11 // pred_check_branch
        %144 = sbr.rel (%p142) target = $region16
      $region15: #{yolov10_forward.7} parent=11 // pred_region
        %s145 = smul.u32 2, %s18
        %p146 = scmp.lt.s32.totalorder %s145, 1
        %s147 = scalar_select %p146, %s145, 1
        %s148 = smul.addr %s147, 4
        %s149 = scalar_lea.vmem %s1, %s148
        %s150 = smul.u32 2, %s18
      $region16: #{yolov10_forward.7} parent=11 // pred_fallthru
        _
      // Predicated region
      $region17: #{yolov10_forward.7} parent=11 // pred_check
        %p151 = pneg %p99
      $region18: #{yolov10_forward.7} parent=11 // pred_check_branch
        %153 = sbr.rel (%p151) target = $region20
      $region19: #{yolov10_forward.7} parent=11 // pred_region
        %s154 = smul.u32 2, %s18
        %p155 = scmp.lt.s32.totalorder %s154, 1
        %s156 = scalar_select %p155, %s154, 1
        %s157 = scalar_lea.vmem %s2, %s156
        %s158 = smul.u32 2, %s18
      $region20: #{yolov10_forward.7} parent=11 // pred_fallthru
        _
    $region12: #{yolov10_forward.7} parent=5 // pred_fallthru
      _
    %p159 = scmp.lt.s32.totalorder %s9, 2
    // Predicated region
    $region21: #{yolov10_forward.7} parent=5 // pred_check
      %p160 = pneg %p159
    $region22: #{yolov10_forward.7} parent=5 // pred_check_branch
      %162 = sbr.rel (%p160) target = $region24
    $region23: #{yolov10_forward.7} parent=5 // pred_region
      // Predicated region
      $region25: #{yolov10_forward.7} parent=23 // pred_check
        %p163 = pneg %p41
      $region26: #{yolov10_forward.7} parent=23 // pred_check_branch
        %165 = sbr.rel (%p163) target = $region28
      $region27: #{yolov10_forward.7} parent=23 // pred_region
        %s166 = smul.u32 2, %s17
        %p167 = scmp.lt.s32.totalorder %s166, 3
        %s168 = scalar_select %p167, %s166, 3
        %s169 = smul.addr %s168, 9
        %s170 = smul.addr %s169, 4
        %s171 = scalar_lea.vmem %s0, %s170
        %s172 = smul.u32 2, %s17
      $region28: #{yolov10_forward.7} parent=23 // pred_fallthru
        _
    $region24: #{yolov10_forward.7} parent=5 // pred_fallthru
      _
    %p173 = scmp.le.s32.totalorder 1, %s9
    %p174 = scmp.lt.s32.totalorder %s9, 3
    %p175 = pnand %p173, %p174
    %p176 = pneg %p175
    // Predicated region
    $region29: #{yolov10_forward.7} parent=5 // pred_check
      _
    $region30: #{yolov10_forward.7} parent=5 // pred_check_branch
      %178 = sbr.rel (%p175) target = $region32
    $region31: #{yolov10_forward.7} parent=5 // pred_region
      %s179 = ssub.s32 %s9, 1
      %s180 = smul.u32 2, %s19
      %p181 = scmp.lt.s32.totalorder %s180, 3
      %s182 = scalar_select %p181, %s180, 3
      %s183 = smul.addr %s182, 9
      %s184 = smul.addr %s183, 4
      %s185 = scalar_lea.vmem %s0, %s184
      %p186 = pneg %p47
      %p187 = pneg %p44
      %s188 = smul.u32 2, %s18
      %p189 = scmp.lt.s32.totalorder %s188, 1
      %s190 = scalar_select %p189, %s188, 1
      %s191 = smul.addr %s190, 4
      %s192 = scalar_lea.vmem %s1, %s191
      %p193 = pneg %p73
      %p194 = pneg %p70
      %s195 = smul.u32 2, %s18
      %p196 = scmp.lt.s32.totalorder %s195, 1
      %s197 = scalar_select %p196, %s195, 1
      %s198 = scalar_lea.vmem %s2, %s197
      %p199 = pneg %p99
      %p200 = pneg %p96
      %p201 = pneg %p127
      %p202 = pneg %p124
      %s203 = smul.u32 2, %s19
      %s204 = smul.u32 2, %s18
      %p205 = scmp.lt.s32.totalorder %s203, 3
      %s206 = scalar_select %p205, %s203, 3
      %p207 = scmp.lt.s32.totalorder %s204, 1
      %s208 = scalar_select %p207, %s204, 1
      %s209 = smul.addr %s206, 2
      %s210 = sadd.s32 %s208, %s209
      %s211 = smul.addr %s210, 4
      %s212 = scalar_lea.vmem %s3, %s211
      %s213 = smul.u32 2, %s19
      %p214 = scmp.lt.s32.totalorder %s213, 3
      %s215 = scalar_select %p214, %s213, 3
      %s216 = smul.addr %s215, 9
      %s217 = smul.addr %s216, 4
      %s218 = scalar_lea.vmem %s0, %s217
      %s219 = smul.u32 2, %s19
      %s220 = smul.u32 2, %s18
      %p221 = scmp.lt.s32.totalorder %s220, 1
      %s222 = scalar_select %p221, %s220, 1
      %s223 = smul.addr %s222, 4
      %s224 = scalar_lea.vmem %s1, %s223
      %s225 = smul.u32 2, %s18
      %s226 = smul.u32 2, %s18
      %p227 = scmp.lt.s32.totalorder %s226, 1
      %s228 = scalar_select %p227, %s226, 1
      %s229 = scalar_lea.vmem %s2, %s228
      %s230 = smul.u32 2, %s18
      %s231 = smul.u32 2, %s19
      %s232 = smul.u32 2, %s18
      %p233 = scmp.lt.s32.totalorder %s231, 3
      %s234 = scalar_select %p233, %s231, 3
      %p235 = scmp.lt.s32.totalorder %s232, 1
      %s236 = scalar_select %p235, %s232, 1
      %s237 = smul.addr %s234, 2
      %s238 = sadd.s32 %s236, %s237
      %s239 = smul.addr %s238, 4
      %s240 = scalar_lea.vmem %s3, %s239
      %s241 = smul.u32 2, %s19
      %s242 = smul.u32 2, %s18
      %v244 = vld [vmem:[%s218] sm:$0xff]
      %v245 = vld [vmem:[%s218 + $0x8] sm:$0xff]
      %v246 = vld [vmem:[%s218 + $0x10] sm:$0xff]
      %v247 = vld [vmem:[%s218 + $0x18] sm:$0xff]
      %v248 = vld [vmem:[%s218 + $0x20] sm:$0xf]
      %v249 = vld [vmem:[%s218 + $0x24] sm:$0xff]
      %v250 = vld [vmem:[%s218 + $0x2c] sm:$0xff]
      %v251 = vld [vmem:[%s218 + $0x34] sm:$0xff]
      %v252 = vld [vmem:[%s218 + $0x3c] sm:$0xff]
      %v253 = vld [vmem:[%s218 + $0x44] sm:$0xf]
      %v254 = vld [vmem:[%s224] sm:$0xff]
      %v255 = vld [vmem:[%s224 + $0x8] sm:$0xff]
      %v256 = vld [vmem:[%s224 + $0x10] sm:$0xff]
      %v257 = vld [vmem:[%s224 + $0x18] sm:$0xff]
      %v258 = vld [vmem:[%s224 + $0x20] sm:$0xff]
      %v259 = vld [vmem:[%s224 + $0x28] sm:$0xff]
      %v260 = vld [vmem:[%s224 + $0x30] sm:$0xff]
      %v261 = vld [vmem:[%s224 + $0x38] sm:$0xff]
      %v262 = vld [vmem:[%s224 + $0x40] sm:$0xff]
      %v263 = vld [vmem:[%s224 + $0x48] sm:$0xff]
      %v264 = vld [vmem:[%s224 + $0x50] sm:$0xff]
      %v265 = vld [vmem:[%s224 + $0x58] sm:$0xff]
      %v266 = vld [vmem:[%s224 + $0x60] sm:$0xff]
      %v267 = vld [vmem:[%s224 + $0x68] sm:$0xff]
      %v268 = vld [vmem:[%s224 + $0x70] sm:$0xff]
      %v269 = vld [vmem:[%s224 + $0x78] sm:$0xff]
      %v270 = vld [vmem:[%s224 + $0x80] sm:$0xff]
      %v271 = vld [vmem:[%s224 + $0x88] sm:$0xff]
      %v272 = vld [vmem:[%s224 + $0x90] sm:$0xff]
      %v273 = vld [vmem:[%s224 + $0x98] sm:$0xff]
      %v274 = vld [vmem:[%s224 + $0xa0] sm:$0xff]
      %v275 = vld [vmem:[%s224 + $0xa8] sm:$0xff]
      %v276 = vld [vmem:[%s224 + $0xb0] sm:$0xff]
      %v277 = vld [vmem:[%s224 + $0xb8] sm:$0xff]
      %v278 = vld [vmem:[%s224 + $0xc0] sm:$0xff]
      %v279 = vld [vmem:[%s224 + $0xc8] sm:$0xff]
      %v280 = vld [vmem:[%s224 + $0xd0] sm:$0xff]
      %v281 = vld [vmem:[%s224 + $0xd8] sm:$0xff]
      %v282 = vld [vmem:[%s224 + $0xe0] sm:$0xff]
      %v283 = vld [vmem:[%s224 + $0xe8] sm:$0xff]
      %v284 = vld [vmem:[%s224 + $0xf0] sm:$0xff]
      %v285 = vld [vmem:[%s224 + $0xf8] sm:$0xff]
      %v286 = vld [vmem:[%s224 + $0x100] sm:$0xff]
      %v287 = vld [vmem:[%s224 + $0x108] sm:$0xff]
      %v288 = vld [vmem:[%s224 + $0x110] sm:$0xff]
      %v289 = vld [vmem:[%s224 + $0x118] sm:$0xff]
      %v290 = vld [vmem:[%s224 + $0x120] sm:$0xff]
      %v291 = vld [vmem:[%s224 + $0x128] sm:$0xff]
      %v292 = vld [vmem:[%s224 + $0x130] sm:$0xff]
      %v293 = vld [vmem:[%s224 + $0x138] sm:$0xff]
      %v294 = vld [vmem:[%s224 + $0x140] sm:$0xff]
      %v295 = vld [vmem:[%s224 + $0x148] sm:$0xff]
      %v296 = vld [vmem:[%s224 + $0x150] sm:$0xff]
      %v297 = vld [vmem:[%s224 + $0x158] sm:$0xff]
      %v298 = vld [vmem:[%s224 + $0x160] sm:$0xff]
      %v299 = vld [vmem:[%s224 + $0x168] sm:$0xff]
      %v300 = vld [vmem:[%s224 + $0x170] sm:$0xff]
      %v301 = vld [vmem:[%s224 + $0x178] sm:$0xff]
      %v302 = vld [vmem:[%s224 + $0x180] sm:$0xff]
      %v303 = vld [vmem:[%s224 + $0x188] sm:$0xff]
      %v304 = vld [vmem:[%s224 + $0x190] sm:$0xff]
      %v305 = vld [vmem:[%s224 + $0x198] sm:$0xff]
      %v306 = vld [vmem:[%s224 + $0x1a0] sm:$0xff]
      %v307 = vld [vmem:[%s224 + $0x1a8] sm:$0xff]
      %v308 = vld [vmem:[%s224 + $0x1b0] sm:$0xff]
      %v309 = vld [vmem:[%s224 + $0x1b8] sm:$0xff]
      %v310 = vld [vmem:[%s224 + $0x1c0] sm:$0xff]
      %v311 = vld [vmem:[%s224 + $0x1c8] sm:$0xff]
      %v312 = vld [vmem:[%s224 + $0x1d0] sm:$0xff]
      %v313 = vld [vmem:[%s224 + $0x1d8] sm:$0xff]
      %v314 = vld [vmem:[%s224 + $0x1e0] sm:$0xff]
      %v315 = vld [vmem:[%s224 + $0x1e8] sm:$0xff]
      %v316 = vld [vmem:[%s224 + $0x1f0] sm:$0xff]
      %v317 = vld [vmem:[%s224 + $0x1f8] sm:$0xff]
      %v318 = vld [vmem:[%s224 + $0x200] sm:$0xff]
      %v319 = vld [vmem:[%s224 + $0x208] sm:$0xff]
      %v320 = vld [vmem:[%s224 + $0x210] sm:$0xff]
      %v321 = vld [vmem:[%s224 + $0x218] sm:$0xff]
      %v322 = vld [vmem:[%s224 + $0x220] sm:$0xff]
      %v323 = vld [vmem:[%s224 + $0x228] sm:$0xff]
      %v324 = vld [vmem:[%s224 + $0x230] sm:$0xff]
      %v325 = vld [vmem:[%s224 + $0x238] sm:$0xff]
      %v326 = vld [vmem:[%s224 + $0x240] sm:$0xff]
      %v327 = vld [vmem:[%s224 + $0x248] sm:$0xff]
      %v328 = vld [vmem:[%s224 + $0x250] sm:$0xff]
      %v329 = vld [vmem:[%s224 + $0x258] sm:$0xff]
      %v330 = vld [vmem:[%s224 + $0x260] sm:$0xff]
      %v331 = vld [vmem:[%s224 + $0x268] sm:$0xff]
      %v332 = vld [vmem:[%s224 + $0x270] sm:$0xff]
      %v333 = vld [vmem:[%s224 + $0x278] sm:$0xff]
      %v334 = vld [vmem:[%s224 + $0x280] sm:$0xff]
      %v335 = vld [vmem:[%s224 + $0x288] sm:$0xff]
      %v336 = vld [vmem:[%s224 + $0x290] sm:$0xff]
      %v337 = vld [vmem:[%s224 + $0x298] sm:$0xff]
      %v338 = vld [vmem:[%s224 + $0x2a0] sm:$0xff]
      %v339 = vld [vmem:[%s224 + $0x2a8] sm:$0xff]
      %v340 = vld [vmem:[%s224 + $0x2b0] sm:$0xff]
      %v341 = vld [vmem:[%s224 + $0x2b8] sm:$0xff]
      %v342 = vld [vmem:[%s224 + $0x2c0] sm:$0xff]
      %v343 = vld [vmem:[%s224 + $0x2c8] sm:$0xff]
      %v344 = vld [vmem:[%s224 + $0x2d0] sm:$0xff]
      %v345 = vld [vmem:[%s224 + $0x2d8] sm:$0xff]
      %v346 = vld [vmem:[%s224 + $0x2e0] sm:$0xff]
      %v347 = vld [vmem:[%s224 + $0x2e8] sm:$0xff]
      %v348 = vld [vmem:[%s224 + $0x2f0] sm:$0xff]
      %v349 = vld [vmem:[%s224 + $0x2f8] sm:$0xff]
      %v350 = vld [vmem:[%s224 + $0x300] sm:$0xff]
      %v351 = vld [vmem:[%s224 + $0x308] sm:$0xff]
      %v352 = vld [vmem:[%s224 + $0x310] sm:$0xff]
      %v353 = vld [vmem:[%s224 + $0x318] sm:$0xff]
      %v354 = vld [vmem:[%s224 + $0x320] sm:$0xff]
      %v355 = vld [vmem:[%s224 + $0x328] sm:$0xff]
      %v356 = vld [vmem:[%s224 + $0x330] sm:$0xff]
      %v357 = vld [vmem:[%s224 + $0x338] sm:$0xff]
      %v358 = vld [vmem:[%s224 + $0x340] sm:$0xff]
      %v359 = vld [vmem:[%s224 + $0x348] sm:$0xff]
      %v360 = vld [vmem:[%s224 + $0x350] sm:$0xff]
      %v361 = vld [vmem:[%s224 + $0x358] sm:$0xff]
      %v362 = vld [vmem:[%s224 + $0x360] sm:$0xff]
      %v363 = vld [vmem:[%s224 + $0x368] sm:$0xff]
      %v364 = vld [vmem:[%s224 + $0x370] sm:$0xff]
      %v365 = vld [vmem:[%s224 + $0x378] sm:$0xff]
      %v366 = vld [vmem:[%s224 + $0x380] sm:$0xff]
      %v367 = vld [vmem:[%s224 + $0x388] sm:$0xff]
      %v368 = vld [vmem:[%s224 + $0x390] sm:$0xff]
      %v369 = vld [vmem:[%s224 + $0x398] sm:$0xff]
      %v370 = vld [vmem:[%s224 + $0x3a0] sm:$0xff]
      %v371 = vld [vmem:[%s224 + $0x3a8] sm:$0xff]
      %v372 = vld [vmem:[%s224 + $0x3b0] sm:$0xff]
      %v373 = vld [vmem:[%s224 + $0x3b8] sm:$0xff]
      %v374 = vld [vmem:[%s224 + $0x3c0] sm:$0xff]
      %v375 = vld [vmem:[%s224 + $0x3c8] sm:$0xff]
      %v376 = vld [vmem:[%s224 + $0x3d0] sm:$0xff]
      %v377 = vld [vmem:[%s224 + $0x3d8] sm:$0xff]
      %v378 = vld [vmem:[%s224 + $0x3e0] sm:$0xff]
      %v379 = vld [vmem:[%s224 + $0x3e8] sm:$0xff]
      %v380 = vld [vmem:[%s224 + $0x3f0] sm:$0xff]
      %v381 = vld [vmem:[%s224 + $0x3f8] sm:$0xff]
      %v382 = vld [vmem:[%s224 + $0x400] sm:$0xff]
      %v383 = vld [vmem:[%s224 + $0x408] sm:$0xff]
      %v384 = vld [vmem:[%s224 + $0x410] sm:$0xff]
      %v385 = vld [vmem:[%s224 + $0x418] sm:$0xff]
      %v386 = vld [vmem:[%s224 + $0x420] sm:$0xff]
      %v387 = vld [vmem:[%s224 + $0x428] sm:$0xff]
      %v388 = vld [vmem:[%s224 + $0x430] sm:$0xff]
      %v389 = vld [vmem:[%s224 + $0x438] sm:$0xff]
      %v390 = vld [vmem:[%s224 + $0x440] sm:$0xff]
      %v391 = vld [vmem:[%s224 + $0x448] sm:$0xff]
      %v392 = vld [vmem:[%s224 + $0x450] sm:$0xff]
      %v393 = vld [vmem:[%s224 + $0x458] sm:$0xff]
      %v394 = vld [vmem:[%s224 + $0x460] sm:$0xff]
      %v395 = vld [vmem:[%s224 + $0x468] sm:$0xff]
      %v396 = vld [vmem:[%s224 + $0x470] sm:$0xff]
      %v397 = vld [vmem:[%s224 + $0x478] sm:$0xff]
      %v398 = vld [vmem:[%s229] sm:$0x3]
      %v400 = vlaneseq
      %v401 = vshrl.u32 %v400, 7
      %v402 = vsub.s32 0, %v401
      %v403 = vrot.slane %v398, %v402
      %v404 = vlaneseq
      %v405 = vshrl.u32 %v404, 7
      %v406 = vsub.s32 1, %v405
      %v407 = vrot.slane %v398, %v406
      %v420 = vunpack.c.l.b16 %v244
      %v421 = vunpack.c.h.b16 %v244
      %v422 = vunpack.c.l.b16 %v245
      %v423 = vunpack.c.h.b16 %v245
      %v424 = vunpack.c.l.b16 %v246
      %v425 = vunpack.c.h.b16 %v246
      %v426 = vunpack.c.l.b16 %v247
      %v427 = vunpack.c.h.b16 %v247
      %v428 = vunpack.c.l.b16 %v248
      %v429 = vunpack.c.l.b16 %v249
      %v430 = vunpack.c.h.b16 %v249
      %v431 = vunpack.c.l.b16 %v250
      %v432 = vunpack.c.h.b16 %v250
      %v433 = vunpack.c.l.b16 %v251
      %v434 = vunpack.c.h.b16 %v251
      %v435 = vunpack.c.l.b16 %v252
      %v436 = vunpack.c.h.b16 %v252
      %v437 = vunpack.c.l.b16 %v253
      %v438 = vpack.c.b16 %v429, %v420
      %v439 = vpack.c.b16 %v430, %v421
      %v440 = vpack.c.b16 %v431, %v422
      %v441 = vpack.c.b16 %v432, %v423
      %v442 = vpack.c.b16 %v433, %v424
      %v443 = vpack.c.b16 %v434, %v425
      %v444 = vpack.c.b16 %v435, %v426
      %v445 = vpack.c.b16 %v436, %v427
      %v446 = vpack.c.b16 %v437, %v428
      %v600 = vunpack.c.l.b16 %v254
      %v601 = vunpack.c.h.b16 %v254
      %v602 = vunpack.c.l.b16 %v255
      %v603 = vunpack.c.h.b16 %v255
      %v604 = vunpack.c.l.b16 %v256
      %v605 = vunpack.c.h.b16 %v256
      %v606 = vunpack.c.l.b16 %v257
      %v607 = vunpack.c.h.b16 %v257
      %v608 = vunpack.c.l.b16 %v258
      %v609 = vunpack.c.h.b16 %v258
      %v610 = vunpack.c.l.b16 %v259
      %v611 = vunpack.c.h.b16 %v259
      %v612 = vunpack.c.l.b16 %v260
      %v613 = vunpack.c.h.b16 %v260
      %v614 = vunpack.c.l.b16 %v261
      %v615 = vunpack.c.h.b16 %v261
      %v616 = vunpack.c.l.b16 %v262
      %v617 = vunpack.c.h.b16 %v262
      %v618 = vunpack.c.l.b16 %v263
      %v619 = vunpack.c.h.b16 %v263
      %v620 = vunpack.c.l.b16 %v264
      %v621 = vunpack.c.h.b16 %v264
      %v622 = vunpack.c.l.b16 %v265
      %v623 = vunpack.c.h.b16 %v265
      %v624 = vunpack.c.l.b16 %v266
      %v625 = vunpack.c.h.b16 %v266
      %v626 = vunpack.c.l.b16 %v267
      %v627 = vunpack.c.h.b16 %v267
      %v628 = vunpack.c.l.b16 %v268
      %v629 = vunpack.c.h.b16 %v268
      %v630 = vunpack.c.l.b16 %v269
      %v631 = vunpack.c.h.b16 %v269
      %v632 = vunpack.c.l.b16 %v270
      %v633 = vunpack.c.h.b16 %v270
      %v634 = vunpack.c.l.b16 %v271
      %v635 = vunpack.c.h.b16 %v271
      %v636 = vunpack.c.l.b16 %v272
      %v637 = vunpack.c.h.b16 %v272
      %v638 = vunpack.c.l.b16 %v273
      %v639 = vunpack.c.h.b16 %v273
      %v640 = vunpack.c.l.b16 %v274
      %v641 = vunpack.c.h.b16 %v274
      %v642 = vunpack.c.l.b16 %v275
      %v643 = vunpack.c.h.b16 %v275
      %v644 = vunpack.c.l.b16 %v276
      %v645 = vunpack.c.h.b16 %v276
      %v646 = vunpack.c.l.b16 %v277
      %v647 = vunpack.c.h.b16 %v277
      %v648 = vunpack.c.l.b16 %v278
      %v649 = vunpack.c.h.b16 %v278
      %v650 = vunpack.c.l.b16 %v279
      %v651 = vunpack.c.h.b16 %v279
      %v652 = vunpack.c.l.b16 %v280
      %v653 = vunpack.c.h.b16 %v280
      %v654 = vunpack.c.l.b16 %v281
      %v655 = vunpack.c.h.b16 %v281
      %v656 = vunpack.c.l.b16 %v282
      %v657 = vunpack.c.h.b16 %v282
      %v658 = vunpack.c.l.b16 %v283
      %v659 = vunpack.c.h.b16 %v283
      %v660 = vunpack.c.l.b16 %v284
      %v661 = vunpack.c.h.b16 %v284
      %v662 = vunpack.c.l.b16 %v285
      %v663 = vunpack.c.h.b16 %v285
      %v664 = vunpack.c.l.b16 %v286
      %v665 = vunpack.c.h.b16 %v286
      %v666 = vunpack.c.l.b16 %v287
      %v667 = vunpack.c.h.b16 %v287
      %v668 = vunpack.c.l.b16 %v288
      %v669 = vunpack.c.h.b16 %v288
      %v670 = vunpack.c.l.b16 %v289
      %v671 = vunpack.c.h.b16 %v289
      %v672 = vunpack.c.l.b16 %v290
      %v673 = vunpack.c.h.b16 %v290
      %v674 = vunpack.c.l.b16 %v291
      %v675 = vunpack.c.h.b16 %v291
      %v676 = vunpack.c.l.b16 %v292
      %v677 = vunpack.c.h.b16 %v292
      %v678 = vunpack.c.l.b16 %v293
      %v679 = vunpack.c.h.b16 %v293
      %v680 = vunpack.c.l.b16 %v294
      %v681 = vunpack.c.h.b16 %v294
      %v682 = vunpack.c.l.b16 %v295
      %v683 = vunpack.c.h.b16 %v295
      %v684 = vunpack.c.l.b16 %v296
      %v685 = vunpack.c.h.b16 %v296
      %v686 = vunpack.c.l.b16 %v297
      %v687 = vunpack.c.h.b16 %v297
      %v688 = vunpack.c.l.b16 %v298
      %v689 = vunpack.c.h.b16 %v298
      %v690 = vunpack.c.l.b16 %v299
      %v691 = vunpack.c.h.b16 %v299
      %v692 = vunpack.c.l.b16 %v300
      %v693 = vunpack.c.h.b16 %v300
      %v694 = vunpack.c.l.b16 %v301
      %v695 = vunpack.c.h.b16 %v301
      %v696 = vunpack.c.l.b16 %v302
      %v697 = vunpack.c.h.b16 %v302
      %v698 = vunpack.c.l.b16 %v303
      %v699 = vunpack.c.h.b16 %v303
      %v700 = vunpack.c.l.b16 %v304
      %v701 = vunpack.c.h.b16 %v304
      %v702 = vunpack.c.l.b16 %v305
      %v703 = vunpack.c.h.b16 %v305
      %v704 = vunpack.c.l.b16 %v306
      %v705 = vunpack.c.h.b16 %v306
      %v706 = vunpack.c.l.b16 %v307
      %v707 = vunpack.c.h.b16 %v307
      %v708 = vunpack.c.l.b16 %v308
      %v709 = vunpack.c.h.b16 %v308
      %v710 = vunpack.c.l.b16 %v309
      %v711 = vunpack.c.h.b16 %v309
      %v712 = vunpack.c.l.b16 %v310
      %v713 = vunpack.c.h.b16 %v310
      %v714 = vunpack.c.l.b16 %v311
      %v715 = vunpack.c.h.b16 %v311
      %v716 = vunpack.c.l.b16 %v312
      %v717 = vunpack.c.h.b16 %v312
      %v718 = vunpack.c.l.b16 %v313
      %v719 = vunpack.c.h.b16 %v313
      %v720 = vunpack.c.l.b16 %v314
      %v721 = vunpack.c.h.b16 %v314
      %v722 = vunpack.c.l.b16 %v315
      %v723 = vunpack.c.h.b16 %v315
      %v724 = vunpack.c.l.b16 %v316
      %v725 = vunpack.c.h.b16 %v316
      %v726 = vunpack.c.l.b16 %v317
      %v727 = vunpack.c.h.b16 %v317
      %v728 = vunpack.c.l.b16 %v318
      %v729 = vunpack.c.h.b16 %v318
      %v730 = vunpack.c.l.b16 %v319
      %v731 = vunpack.c.h.b16 %v319
      %v732 = vunpack.c.l.b16 %v320
      %v733 = vunpack.c.h.b16 %v320
      %v734 = vunpack.c.l.b16 %v321
      %v735 = vunpack.c.h.b16 %v321
      %v736 = vunpack.c.l.b16 %v322
      %v737 = vunpack.c.h.b16 %v322
      %v738 = vunpack.c.l.b16 %v323
      %v739 = vunpack.c.h.b16 %v323
      %v740 = vunpack.c.l.b16 %v324
      %v741 = vunpack.c.h.b16 %v324
      %v742 = vunpack.c.l.b16 %v325
      %v743 = vunpack.c.h.b16 %v325
      %v744 = vunpack.c.l.b16 %v326
      %v745 = vunpack.c.h.b16 %v326
      %v746 = vunpack.c.l.b16 %v327
      %v747 = vunpack.c.h.b16 %v327
      %v748 = vunpack.c.l.b16 %v328
      %v749 = vunpack.c.h.b16 %v328
      %v750 = vunpack.c.l.b16 %v329
      %v751 = vunpack.c.h.b16 %v329
      %v752 = vunpack.c.l.b16 %v330
      %v753 = vunpack.c.h.b16 %v330
      %v754 = vunpack.c.l.b16 %v331
      %v755 = vunpack.c.h.b16 %v331
      %v756 = vunpack.c.l.b16 %v332
      %v757 = vunpack.c.h.b16 %v332
      %v758 = vunpack.c.l.b16 %v333
      %v759 = vunpack.c.h.b16 %v333
      %v760 = vunpack.c.l.b16 %v334
      %v761 = vunpack.c.h.b16 %v334
      %v762 = vunpack.c.l.b16 %v335
      %v763 = vunpack.c.h.b16 %v335
      %v764 = vunpack.c.l.b16 %v336
      %v765 = vunpack.c.h.b16 %v336
      %v766 = vunpack.c.l.b16 %v337
      %v767 = vunpack.c.h.b16 %v337
      %v768 = vunpack.c.l.b16 %v338
      %v769 = vunpack.c.h.b16 %v338
      %v770 = vunpack.c.l.b16 %v339
      %v771 = vunpack.c.h.b16 %v339
      %v772 = vunpack.c.l.b16 %v340
      %v773 = vunpack.c.h.b16 %v340
      %v774 = vunpack.c.l.b16 %v341
      %v775 = vunpack.c.h.b16 %v341
      %v776 = vunpack.c.l.b16 %v342
      %v777 = vunpack.c.h.b16 %v342
      %v778 = vunpack.c.l.b16 %v343
      %v779 = vunpack.c.h.b16 %v343
      %v780 = vunpack.c.l.b16 %v344
      %v781 = vunpack.c.h.b16 %v344
      %v782 = vunpack.c.l.b16 %v345
      %v783 = vunpack.c.h.b16 %v345
      %v784 = vunpack.c.l.b16 %v346
      %v785 = vunpack.c.h.b16 %v346
      %v786 = vunpack.c.l.b16 %v347
      %v787 = vunpack.c.h.b16 %v347
      %v788 = vunpack.c.l.b16 %v348
      %v789 = vunpack.c.h.b16 %v348
      %v790 = vunpack.c.l.b16 %v349
      %v791 = vunpack.c.h.b16 %v349
      %v792 = vunpack.c.l.b16 %v350
      %v793 = vunpack.c.h.b16 %v350
      %v794 = vunpack.c.l.b16 %v351
      %v795 = vunpack.c.h.b16 %v351
      %v796 = vunpack.c.l.b16 %v352
      %v797 = vunpack.c.h.b16 %v352
      %v798 = vunpack.c.l.b16 %v353
      %v799 = vunpack.c.h.b16 %v353
      %v800 = vunpack.c.l.b16 %v354
      %v801 = vunpack.c.h.b16 %v354
      %v802 = vunpack.c.l.b16 %v355
      %v803 = vunpack.c.h.b16 %v355
      %v804 = vunpack.c.l.b16 %v356
      %v805 = vunpack.c.h.b16 %v356
      %v806 = vunpack.c.l.b16 %v357
      %v807 = vunpack.c.h.b16 %v357
      %v808 = vunpack.c.l.b16 %v358
      %v809 = vunpack.c.h.b16 %v358
      %v810 = vunpack.c.l.b16 %v359
      %v811 = vunpack.c.h.b16 %v359
      %v812 = vunpack.c.l.b16 %v360
      %v813 = vunpack.c.h.b16 %v360
      %v814 = vunpack.c.l.b16 %v361
      %v815 = vunpack.c.h.b16 %v361
      %v816 = vunpack.c.l.b16 %v362
      %v817 = vunpack.c.h.b16 %v362
      %v818 = vunpack.c.l.b16 %v363
      %v819 = vunpack.c.h.b16 %v363
      %v820 = vunpack.c.l.b16 %v364
      %v821 = vunpack.c.h.b16 %v364
      %v822 = vunpack.c.l.b16 %v365
      %v823 = vunpack.c.h.b16 %v365
      %v824 = vunpack.c.l.b16 %v366
      %v825 = vunpack.c.h.b16 %v366
      %v826 = vunpack.c.l.b16 %v367
      %v827 = vunpack.c.h.b16 %v367
      %v828 = vunpack.c.l.b16 %v368
      %v829 = vunpack.c.h.b16 %v368
      %v830 = vunpack.c.l.b16 %v369
      %v831 = vunpack.c.h.b16 %v369
      %v832 = vunpack.c.l.b16 %v370
      %v833 = vunpack.c.h.b16 %v370
      %v834 = vunpack.c.l.b16 %v371
      %v835 = vunpack.c.h.b16 %v371
      %v836 = vunpack.c.l.b16 %v372
      %v837 = vunpack.c.h.b16 %v372
      %v838 = vunpack.c.l.b16 %v373
      %v839 = vunpack.c.h.b16 %v373
      %v840 = vunpack.c.l.b16 %v374
      %v841 = vunpack.c.h.b16 %v374
      %v842 = vunpack.c.l.b16 %v375
      %v843 = vunpack.c.h.b16 %v375
      %v844 = vunpack.c.l.b16 %v376
      %v845 = vunpack.c.h.b16 %v376
      %v846 = vunpack.c.l.b16 %v377
      %v847 = vunpack.c.h.b16 %v377
      %v848 = vunpack.c.l.b16 %v378
      %v849 = vunpack.c.h.b16 %v378
      %v850 = vunpack.c.l.b16 %v379
      %v851 = vunpack.c.h.b16 %v379
      %v852 = vunpack.c.l.b16 %v380
      %v853 = vunpack.c.h.b16 %v380
      %v854 = vunpack.c.l.b16 %v381
      %v855 = vunpack.c.h.b16 %v381
      %v856 = vunpack.c.l.b16 %v382
      %v857 = vunpack.c.h.b16 %v382
      %v858 = vunpack.c.l.b16 %v383
      %v859 = vunpack.c.h.b16 %v383
      %v860 = vunpack.c.l.b16 %v384
      %v861 = vunpack.c.h.b16 %v384
      %v862 = vunpack.c.l.b16 %v385
      %v863 = vunpack.c.h.b16 %v385
      %v864 = vunpack.c.l.b16 %v386
      %v865 = vunpack.c.h.b16 %v386
      %v866 = vunpack.c.l.b16 %v387
      %v867 = vunpack.c.h.b16 %v387
      %v868 = vunpack.c.l.b16 %v388
      %v869 = vunpack.c.h.b16 %v388
      %v870 = vunpack.c.l.b16 %v389
      %v871 = vunpack.c.h.b16 %v389
      %v872 = vunpack.c.l.b16 %v390
      %v873 = vunpack.c.h.b16 %v390
      %v874 = vunpack.c.l.b16 %v391
      %v875 = vunpack.c.h.b16 %v391
      %v876 = vunpack.c.l.b16 %v392
      %v877 = vunpack.c.h.b16 %v392
      %v878 = vunpack.c.l.b16 %v393
      %v879 = vunpack.c.h.b16 %v393
      %v880 = vunpack.c.l.b16 %v394
      %v881 = vunpack.c.h.b16 %v394
      %v882 = vunpack.c.l.b16 %v395
      %v883 = vunpack.c.h.b16 %v395
      %v884 = vunpack.c.l.b16 %v396
      %v885 = vunpack.c.h.b16 %v396
      %v886 = vunpack.c.l.b16 %v397
      %v887 = vunpack.c.h.b16 %v397
      %v888 = vpack.c.b16 %v602, %v600
      %v889 = vpack.c.b16 %v603, %v601
      %v890 = vpack.c.b16 %v606, %v604
      %v891 = vpack.c.b16 %v607, %v605
      %v892 = vpack.c.b16 %v610, %v608
      %v893 = vpack.c.b16 %v611, %v609
      %v894 = vpack.c.b16 %v614, %v612
      %v895 = vpack.c.b16 %v615, %v613
      %v896 = vpack.c.b16 %v618, %v616
      %v897 = vpack.c.b16 %v619, %v617
      %v898 = vpack.c.b16 %v622, %v620
      %v899 = vpack.c.b16 %v623, %v621
      %v900 = vpack.c.b16 %v626, %v624
      %v901 = vpack.c.b16 %v627, %v625
      %v902 = vpack.c.b16 %v630, %v628
      %v903 = vpack.c.b16 %v631, %v629
      %v904 = vpack.c.b16 %v634, %v632
      %v905 = vpack.c.b16 %v635, %v633
      %v906 = vpack.c.b16 %v638, %v636
      %v907 = vpack.c.b16 %v639, %v637
      %v908 = vpack.c.b16 %v642, %v640
      %v909 = vpack.c.b16 %v643, %v641
      %v910 = vpack.c.b16 %v646, %v644
      %v911 = vpack.c.b16 %v647, %v645
      %v912 = vpack.c.b16 %v650, %v648
      %v913 = vpack.c.b16 %v651, %v649
      %v914 = vpack.c.b16 %v654, %v652
      %v915 = vpack.c.b16 %v655, %v653
      %v916 = vpack.c.b16 %v658, %v656
      %v917 = vpack.c.b16 %v659, %v657
      %v918 = vpack.c.b16 %v662, %v660
      %v919 = vpack.c.b16 %v663, %v661
      %v920 = vpack.c.b16 %v666, %v664
      %v921 = vpack.c.b16 %v667, %v665
      %v922 = vpack.c.b16 %v670, %v668
      %v923 = vpack.c.b16 %v671, %v669
      %v924 = vpack.c.b16 %v674, %v672
      %v925 = vpack.c.b16 %v675, %v673
      %v926 = vpack.c.b16 %v678, %v676
      %v927 = vpack.c.b16 %v679, %v677
      %v928 = vpack.c.b16 %v682, %v680
      %v929 = vpack.c.b16 %v683, %v681
      %v930 = vpack.c.b16 %v686, %v684
      %v931 = vpack.c.b16 %v687, %v685
      %v932 = vpack.c.b16 %v690, %v688
      %v933 = vpack.c.b16 %v691, %v689
      %v934 = vpack.c.b16 %v694, %v692
      %v935 = vpack.c.b16 %v695, %v693
      %v936 = vpack.c.b16 %v698, %v696
      %v937 = vpack.c.b16 %v699, %v697
      %v938 = vpack.c.b16 %v702, %v700
      %v939 = vpack.c.b16 %v703, %v701
      %v940 = vpack.c.b16 %v706, %v704
      %v941 = vpack.c.b16 %v707, %v705
      %v942 = vpack.c.b16 %v710, %v708
      %v943 = vpack.c.b16 %v711, %v709
      %v944 = vpack.c.b16 %v714, %v712
      %v945 = vpack.c.b16 %v715, %v713
      %v946 = vpack.c.b16 %v718, %v716
      %v947 = vpack.c.b16 %v719, %v717
      %v948 = vpack.c.b16 %v722, %v720
      %v949 = vpack.c.b16 %v723, %v721
      %v950 = vpack.c.b16 %v726, %v724
      %v951 = vpack.c.b16 %v727, %v725
      %v952 = vpack.c.b16 %v730, %v728
      %v953 = vpack.c.b16 %v731, %v729
      %v954 = vpack.c.b16 %v734, %v732
      %v955 = vpack.c.b16 %v735, %v733
      %v956 = vpack.c.b16 %v738, %v736
      %v957 = vpack.c.b16 %v739, %v737
      %v958 = vpack.c.b16 %v742, %v740
      %v959 = vpack.c.b16 %v743, %v741
      %v960 = vpack.c.b16 %v746, %v744
      %v961 = vpack.c.b16 %v747, %v745
      %v962 = vpack.c.b16 %v750, %v748
      %v963 = vpack.c.b16 %v751, %v749
      %v964 = vpack.c.b16 %v754, %v752
      %v965 = vpack.c.b16 %v755, %v753
      %v966 = vpack.c.b16 %v758, %v756
      %v967 = vpack.c.b16 %v759, %v757
      %v968 = vpack.c.b16 %v762, %v760
      %v969 = vpack.c.b16 %v763, %v761
      %v970 = vpack.c.b16 %v766, %v764
      %v971 = vpack.c.b16 %v767, %v765
      %v972 = vpack.c.b16 %v770, %v768
      %v973 = vpack.c.b16 %v771, %v769
      %v974 = vpack.c.b16 %v774, %v772
      %v975 = vpack.c.b16 %v775, %v773
      %v976 = vpack.c.b16 %v778, %v776
      %v977 = vpack.c.b16 %v779, %v777
      %v978 = vpack.c.b16 %v782, %v780
      %v979 = vpack.c.b16 %v783, %v781
      %v980 = vpack.c.b16 %v786, %v784
      %v981 = vpack.c.b16 %v787, %v785
      %v982 = vpack.c.b16 %v790, %v788
      %v983 = vpack.c.b16 %v791, %v789
      %v984 = vpack.c.b16 %v794, %v792
      %v985 = vpack.c.b16 %v795, %v793
      %v986 = vpack.c.b16 %v798, %v796
      %v987 = vpack.c.b16 %v799, %v797
      %v988 = vpack.c.b16 %v802, %v800
      %v989 = vpack.c.b16 %v803, %v801
      %v990 = vpack.c.b16 %v806, %v804
      %v991 = vpack.c.b16 %v807, %v805
      %v992 = vpack.c.b16 %v810, %v808
      %v993 = vpack.c.b16 %v811, %v809
      %v994 = vpack.c.b16 %v814, %v812
      %v995 = vpack.c.b16 %v815, %v813
      %v996 = vpack.c.b16 %v818, %v816
      %v997 = vpack.c.b16 %v819, %v817
      %v998 = vpack.c.b16 %v822, %v820
      %v999 = vpack.c.b16 %v823, %v821
      %v1000 = vpack.c.b16 %v826, %v824
      %v1001 = vpack.c.b16 %v827, %v825
      %v1002 = vpack.c.b16 %v830, %v828
      %v1003 = vpack.c.b16 %v831, %v829
      %v1004 = vpack.c.b16 %v834, %v832
      %v1005 = vpack.c.b16 %v835, %v833
      %v1006 = vpack.c.b16 %v838, %v836
      %v1007 = vpack.c.b16 %v839, %v837
      %v1008 = vpack.c.b16 %v842, %v840
      %v1009 = vpack.c.b16 %v843, %v841
      %v1010 = vpack.c.b16 %v846, %v844
      %v1011 = vpack.c.b16 %v847, %v845
      %v1012 = vpack.c.b16 %v850, %v848
      %v1013 = vpack.c.b16 %v851, %v849
      %v1014 = vpack.c.b16 %v854, %v852
      %v1015 = vpack.c.b16 %v855, %v853
      %v1016 = vpack.c.b16 %v858, %v856
      %v1017 = vpack.c.b16 %v859, %v857
      %v1018 = vpack.c.b16 %v862, %v860
      %v1019 = vpack.c.b16 %v863, %v861
      %v1020 = vpack.c.b16 %v866, %v864
      %v1021 = vpack.c.b16 %v867, %v865
      %v1022 = vpack.c.b16 %v870, %v868
      %v1023 = vpack.c.b16 %v871, %v869
      %v1024 = vpack.c.b16 %v874, %v872
      %v1025 = vpack.c.b16 %v875, %v873
      %v1026 = vpack.c.b16 %v878, %v876
      %v1027 = vpack.c.b16 %v879, %v877
      %v1028 = vpack.c.b16 %v882, %v880
      %v1029 = vpack.c.b16 %v883, %v881
      %v1030 = vpack.c.b16 %v886, %v884
      %v1031 = vpack.c.b16 %v887, %v885
      %1176 = vmatprep.subr.bf16.mxu0 %v889
      %1177 = vmatpush1.bf16.msra.mxu0 %v888
      %1178 = vmatprep.subr.bf16.mxu0 %v891
      %1179 = vmatpush1.bf16.msra.mxu0 %v890
      %1180 = vmatprep.subr.bf16.mxu0 %v893
      %1181 = vmatpush1.bf16.msra.mxu0 %v892
      %1182 = vmatprep.subr.bf16.mxu0 %v895
      %1183 = vmatpush1.bf16.msra.mxu0 %v894
      %1184 = vmatprep.subr.bf16.mxu0 %v897
      %1185 = vmatpush1.bf16.msra.mxu0 %v896
      %1186 = vmatprep.subr.bf16.mxu0 %v899
      %1187 = vmatpush1.bf16.msra.mxu0 %v898
      %1188 = vmatprep.subr.bf16.mxu0 %v901
      %1189 = vmatpush1.bf16.msra.mxu0 %v900
      %1190 = vmatprep.subr.bf16.mxu0 %v903
      %1191 = vmatpush1.bf16.msra.mxu0 %v902
      %1192 = vmatprep.subr.bf16.mxu0 %v905
      %1193 = vmatpush1.bf16.msra.mxu0 %v904
      %1194 = vmatprep.subr.bf16.mxu0 %v907
      %1195 = vmatpush1.bf16.msra.mxu0 %v906
      %1196 = vmatprep.subr.bf16.mxu0 %v909
      %1197 = vmatpush1.bf16.msra.mxu0 %v908
      %1198 = vmatprep.subr.bf16.mxu0 %v911
      %1199 = vmatpush1.bf16.msra.mxu0 %v910
      %1200 = vmatprep.subr.bf16.mxu0 %v913
      %1201 = vmatpush1.bf16.msra.mxu0 %v912
      %1202 = vmatprep.subr.bf16.mxu0 %v915
      %1203 = vmatpush1.bf16.msra.mxu0 %v914
      %1204 = vmatprep.subr.bf16.mxu0 %v917
      %1205 = vmatpush1.bf16.msra.mxu0 %v916
      %1206 = vmatprep.subr.bf16.mxu0 %v919
      %1207 = vmatpush1.bf16.msra.mxu0 %v918
      %1208 = vmatprep.mubr.bf16.mxu0 %v439
      %1209 = vmatmul.mubr.bf16.gmra.mrb[0].mxu0 %v438
      %v1210 = vpop.f32.mrb[0].mxu0
      %v1211 = vadd.f32 %v403, %v1210
      %v1212 = vpop.f32.mrb[0].mxu0
      %v1213 = vadd.f32 %v407, %v1212
      %v1214 = vpop.f32.mrb[0].mxu0
      %v1215 = vadd.f32 %v403, %v1214
      %v1216 = vpop.f32.mrb[0].mxu0
      %v1217 = vadd.f32 %v407, %v1216
      %1218 = vdwg.mxu0
      %1219 = vmatprep.subr.bf16.mxu0 %v921
      %1220 = vmatpush1.bf16.msra.mxu0 %v920
      %1221 = vmatprep.subr.bf16.mxu0 %v923
      %1222 = vmatpush1.bf16.msra.mxu0 %v922
      %1223 = vmatprep.subr.bf16.mxu0 %v925
      %1224 = vmatpush1.bf16.msra.mxu0 %v924
      %1225 = vmatprep.subr.bf16.mxu0 %v927
      %1226 = vmatpush1.bf16.msra.mxu0 %v926
      %1227 = vmatprep.subr.bf16.mxu0 %v929
      %1228 = vmatpush1.bf16.msra.mxu0 %v928
      %1229 = vmatprep.subr.bf16.mxu0 %v931
      %1230 = vmatpush1.bf16.msra.mxu0 %v930
      %1231 = vmatprep.subr.bf16.mxu0 %v933
      %1232 = vmatpush1.bf16.msra.mxu0 %v932
      %1233 = vmatprep.subr.bf16.mxu0 %v935
      %1234 = vmatpush1.bf16.msra.mxu0 %v934
      %1235 = vmatprep.subr.bf16.mxu0 %v937
      %1236 = vmatpush1.bf16.msra.mxu0 %v936
      %1237 = vmatprep.subr.bf16.mxu0 %v939
      %1238 = vmatpush1.bf16.msra.mxu0 %v938
      %1239 = vmatprep.subr.bf16.mxu0 %v941
      %1240 = vmatpush1.bf16.msra.mxu0 %v940
      %1241 = vmatprep.subr.bf16.mxu0 %v943
      %1242 = vmatpush1.bf16.msra.mxu0 %v942
      %1243 = vmatprep.subr.bf16.mxu0 %v945
      %1244 = vmatpush1.bf16.msra.mxu0 %v944
      %1245 = vmatprep.subr.bf16.mxu0 %v947
      %1246 = vmatpush1.bf16.msra.mxu0 %v946
      %1247 = vmatprep.subr.bf16.mxu0 %v949
      %1248 = vmatpush1.bf16.msra.mxu0 %v948
      %1249 = vmatprep.subr.bf16.mxu0 %v951
      %1250 = vmatpush1.bf16.msra.mxu0 %v950
      %1251 = vmatprep.mubr.bf16.mxu0 %v441
      %1252 = vmatmul.mubr.bf16.gmra.mrb[0].mxu0 %v440
      %v1253 = vpop.f32.mrb[0].mxu0
      %v1254 = vadd.f32 %v1211, %v1253
      %v1255 = vpop.f32.mrb[0].mxu0
      %v1256 = vadd.f32 %v1213, %v1255
      %v1257 = vpop.f32.mrb[0].mxu0
      %v1258 = vadd.f32 %v1215, %v1257
      %v1259 = vpop.f32.mrb[0].mxu0
      %v1260 = vadd.f32 %v1217, %v1259
      %1261 = vdwg.mxu0
      %1262 = vmatprep.subr.bf16.mxu0 %v953
      %1263 = vmatpush1.bf16.msra.mxu0 %v952
      %1264 = vmatprep.subr.bf16.mxu0 %v955
      %1265 = vmatpush1.bf16.msra.mxu0 %v954
      %1266 = vmatprep.subr.bf16.mxu0 %v957
      %1267 = vmatpush1.bf16.msra.mxu0 %v956
      %1268 = vmatprep.subr.bf16.mxu0 %v959
      %1269 = vmatpush1.bf16.msra.mxu0 %v958
      %1270 = vmatprep.subr.bf16.mxu0 %v961
      %1271 = vmatpush1.bf16.msra.mxu0 %v960
      %1272 = vmatprep.subr.bf16.mxu0 %v963
      %1273 = vmatpush1.bf16.msra.mxu0 %v962
      %1274 = vmatprep.subr.bf16.mxu0 %v965
      %1275 = vmatpush1.bf16.msra.mxu0 %v964
      %1276 = vmatprep.subr.bf16.mxu0 %v967
      %1277 = vmatpush1.bf16.msra.mxu0 %v966
      %1278 = vmatprep.subr.bf16.mxu0 %v969
      %1279 = vmatpush1.bf16.msra.mxu0 %v968
      %1280 = vmatprep.subr.bf16.mxu0 %v971
      %1281 = vmatpush1.bf16.msra.mxu0 %v970
      %1282 = vmatprep.subr.bf16.mxu0 %v973
      %1283 = vmatpush1.bf16.msra.mxu0 %v972
      %1284 = vmatprep.subr.bf16.mxu0 %v975
      %1285 = vmatpush1.bf16.msra.mxu0 %v974
      %1286 = vmatprep.subr.bf16.mxu0 %v977
      %1287 = vmatpush1.bf16.msra.mxu0 %v976
      %1288 = vmatprep.subr.bf16.mxu0 %v979
      %1289 = vmatpush1.bf16.msra.mxu0 %v978
      %1290 = vmatprep.subr.bf16.mxu0 %v981
      %1291 = vmatpush1.bf16.msra.mxu0 %v980
      %1292 = vmatprep.subr.bf16.mxu0 %v983
      %1293 = vmatpush1.bf16.msra.mxu0 %v982
      %1294 = vmatprep.mubr.bf16.mxu0 %v443
      %1295 = vmatmul.mubr.bf16.gmra.mrb[0].mxu0 %v442
      %v1296 = vpop.f32.mrb[0].mxu0
      %v1297 = vadd.f32 %v1254, %v1296
      %v1298 = vpop.f32.mrb[0].mxu0
      %v1299 = vadd.f32 %v1256, %v1298
      %v1300 = vpop.f32.mrb[0].mxu0
      %v1301 = vadd.f32 %v1258, %v1300
      %v1302 = vpop.f32.mrb[0].mxu0
      %v1303 = vadd.f32 %v1260, %v1302
      %1304 = vdwg.mxu0
      %1305 = vmatprep.subr.bf16.mxu0 %v985
      %1306 = vmatpush1.bf16.msra.mxu0 %v984
      %1307 = vmatprep.subr.bf16.mxu0 %v987
      %1308 = vmatpush1.bf16.msra.mxu0 %v986
      %1309 = vmatprep.subr.bf16.mxu0 %v989
      %1310 = vmatpush1.bf16.msra.mxu0 %v988
      %1311 = vmatprep.subr.bf16.mxu0 %v991
      %1312 = vmatpush1.bf16.msra.mxu0 %v990
      %1313 = vmatprep.subr.bf16.mxu0 %v993
      %1314 = vmatpush1.bf16.msra.mxu0 %v992
      %1315 = vmatprep.subr.bf16.mxu0 %v995
      %1316 = vmatpush1.bf16.msra.mxu0 %v994
      %1317 = vmatprep.subr.bf16.mxu0 %v997
      %1318 = vmatpush1.bf16.msra.mxu0 %v996
      %1319 = vmatprep.subr.bf16.mxu0 %v999
      %1320 = vmatpush1.bf16.msra.mxu0 %v998
      %1321 = vmatprep.subr.bf16.mxu0 %v1001
      %1322 = vmatpush1.bf16.msra.mxu0 %v1000
      %1323 = vmatprep.subr.bf16.mxu0 %v1003
      %1324 = vmatpush1.bf16.msra.mxu0 %v1002
      %1325 = vmatprep.subr.bf16.mxu0 %v1005
      %1326 = vmatpush1.bf16.msra.mxu0 %v1004
      %1327 = vmatprep.subr.bf16.mxu0 %v1007
      %1328 = vmatpush1.bf16.msra.mxu0 %v1006
      %1329 = vmatprep.subr.bf16.mxu0 %v1009
      %1330 = vmatpush1.bf16.msra.mxu0 %v1008
      %1331 = vmatprep.subr.bf16.mxu0 %v1011
      %1332 = vmatpush1.bf16.msra.mxu0 %v1010
      %1333 = vmatprep.subr.bf16.mxu0 %v1013
      %1334 = vmatpush1.bf16.msra.mxu0 %v1012
      %1335 = vmatprep.subr.bf16.mxu0 %v1015
      %1336 = vmatpush1.bf16.msra.mxu0 %v1014
      %1337 = vmatprep.mubr.bf16.mxu0 %v445
      %1338 = vmatmul.mubr.bf16.gmra.mrb[0].mxu0 %v444
      %v1339 = vpop.f32.mrb[0].mxu0
      %v1340 = vadd.f32 %v1297, %v1339
      %v1341 = vpop.f32.mrb[0].mxu0
      %v1342 = vadd.f32 %v1299, %v1341
      %v1343 = vpop.f32.mrb[0].mxu0
      %v1344 = vadd.f32 %v1301, %v1343
      %v1345 = vpop.f32.mrb[0].mxu0
      %v1346 = vadd.f32 %v1303, %v1345
      %1347 = vdwg.mxu0
      %1348 = vmatprep.subr.bf16.mxu0 %v1017
      %1349 = vmatpush1.bf16.msra.mxu0 %v1016
      %1350 = vmatprep.subr.bf16.mxu0 %v1019
      %1351 = vmatpush1.bf16.msra.mxu0 %v1018
      %1352 = vmatprep.subr.bf16.mxu0 %v1021
      %1353 = vmatpush1.bf16.msra.mxu0 %v1020
      %1354 = vmatprep.subr.bf16.mxu0 %v1023
      %1355 = vmatpush1.bf16.msra.mxu0 %v1022
      %1356 = vmatprep.subr.bf16.mxu0 %v1025
      %1357 = vmatpush1.bf16.msra.mxu0 %v1024
      %1358 = vmatprep.subr.bf16.mxu0 %v1027
      %1359 = vmatpush1.bf16.msra.mxu0 %v1026
      %1360 = vmatprep.subr.bf16.mxu0 %v1029
      %1361 = vmatpush1.bf16.msra.mxu0 %v1028
      %1362 = vmatprep.subr.bf16.mxu0 %v1031
      %1363 = vmatpush1.bf16.msra.mxu0 %v1030
      %1364 = vmatprep.subr.bf16.mxu0 0
      %1365 = vmatpush1.bf16.msra.mxu0 0
      %1366 = vmatprep.subr.bf16.mxu0 0
      %1367 = vmatpush1.bf16.msra.mxu0 0
      %1368 = vmatprep.subr.bf16.mxu0 0
      %1369 = vmatpush1.bf16.msra.mxu0 0
      %1370 = vmatprep.subr.bf16.mxu0 0
      %1371 = vmatpush1.bf16.msra.mxu0 0
      %1372 = vmatprep.subr.bf16.mxu0 0
      %1373 = vmatpush1.bf16.msra.mxu0 0
      %1374 = vmatprep.subr.bf16.mxu0 0
      %1375 = vmatpush1.bf16.msra.mxu0 0
      %1376 = vmatprep.subr.bf16.mxu0 0
      %1377 = vmatpush1.bf16.msra.mxu0 0
      %1378 = vmatprep.subr.bf16.mxu0 0
      %1379 = vmatpush1.bf16.msra.mxu0 0
      %1380 = vmatprep.mubr.bf16.mxu0 0
      %1381 = vmatmul.mubr.bf16.gmra.mrb[0].mxu0 %v446
      %v1382 = vpop.f32.mrb[0].mxu0
      %v1383 = vadd.f32 %v1340, %v1382
      %v1384 = vpop.f32.mrb[0].mxu0
      %v1385 = vadd.f32 %v1342, %v1384
      %v1386 = vpop.f32.mrb[0].mxu0
      %v1387 = vadd.f32 %v1344, %v1386
      %v1388 = vpop.f32.mrb[0].mxu0
      %v1389 = vadd.f32 %v1346, %v1388
      %1390 = vdwg.mxu0
      %v1391 = vmax.f32 %v1383, 0.0
      %v1392 = vmax.f32 %v1385, 0.0
      %v1393 = vmax.f32 %v1387, 0.0
      %v1394 = vmax.f32 %v1389, 0.0
      %v1395 = vpack.c.bf16 %v1393, %v1391
      %v1396 = vpack.c.bf16 %v1394, %v1392
      %v1399 = vunpack.c.l.b16 %v1395
      %v1400 = vunpack.c.l.b16 %v1396
      %v1401 = vunpack.c.h.b16 %v1395
      %v1402 = vunpack.c.h.b16 %v1396
      %v1403 = vpack.c.b16 %v1400, %v1399
      %v1404 = vpack.c.b16 %v1402, %v1401
      %1407 = vst [vmem:[%s240] sm:$0xff] %v1403
      %1408 = vst [vmem:[%s240 + $0x8] sm:$0xff] %v1404
      %s1409 = smul.u32 2, %s19
      %s1410 = smul.u32 2, %s18
      %p1411 = scmp.lt.s32.totalorder %s1409, 3
      %s1412 = scalar_select %p1411, %s1409, 3
      %p1413 = scmp.lt.s32.totalorder %s1410, 1
      %s1414 = scalar_select %p1413, %s1410, 1
      %s1415 = smul.addr %s1412, 2
      %s1416 = sadd.s32 %s1414, %s1415
      %s1417 = smul.addr %s1416, 4
      %s1418 = scalar_lea.vmem %s3, %s1417
      // Predicated region
      $region33: #{yolov10_forward.7} parent=31 // pred_check
        %p1419 = pneg %p124
      $region34: #{yolov10_forward.7} parent=31 // pred_check_branch
        %1421 = sbr.rel (%p1419) target = $region36
      $region35: #{yolov10_forward.7} parent=31 // pred_region
        %s1422 = smul.u32 2, %s19
        %s1423 = smul.u32 2, %s18
      $region36: #{yolov10_forward.7} parent=31 // pred_fallthru
        _
    $region32: #{yolov10_forward.7} parent=5 // pred_fallthru
      _
    %p1424 = scmp.le.s32.totalorder 2, %s9
    // Predicated region
    $region37: #{yolov10_forward.7} parent=5 // pred_check
      %p1425 = pneg %p1424
    $region38: #{yolov10_forward.7} parent=5 // pred_check_branch
      %1427 = sbr.rel (%p1425) target = $region40
    $region39: #{yolov10_forward.7} parent=5 // pred_region
      %s1428 = ssub.s32 %s9, 2
      // Predicated region
      $region41: #{yolov10_forward.7} parent=39 // pred_check
        %p1429 = pneg %p130
      $region42: #{yolov10_forward.7} parent=39 // pred_check_branch
        %1431 = sbr.rel (%p1429) target = $region44
      $region43: #{yolov10_forward.7} parent=39 // pred_region
        %s1432 = smul.u32 2, %s21
        %s1433 = smul.u32 2, %s20
        %p1434 = scmp.lt.s32.totalorder %s1432, 3
        %s1435 = scalar_select %p1434, %s1432, 3
        %p1436 = scmp.lt.s32.totalorder %s1433, 1
        %s1437 = scalar_select %p1436, %s1433, 1
        %s1438 = smul.addr %s1435, 2
        %s1439 = sadd.s32 %s1437, %s1438
        %s1440 = smul.addr %s1439, 4
        %s1441 = scalar_lea.vmem %s3, %s1440
      $region44: #{yolov10_forward.7} parent=39 // pred_fallthru
        _
    $region40: #{yolov10_forward.7} parent=5 // pred_fallthru
      _
  $region6: #{yolov10_forward.7} parent=0 // loop_footer
    %s13 = sadd.s32 1, %s9
  $region7: #{yolov10_forward.7} parent=0 // loop_footer_branch
    %8 = sbr.rel target = $region3
  $region8: #{yolov10_forward.7} parent=0 // loop_exit
    _

// kernel: yolov10_forward.9
$region0: #{yolov10_forward.9}
  #allocation0 [shape = 'u32[]', space=smem, size = 0x4, offset = 0x4, fixed_abs, tag = 'smem constant byte address 0x4 - core index']
  #allocation1 [shape = 'u32[144,128]{1,0:T(1,128)}', space=vmem, size = 0x12000, scoped, tag = 'internal scratch']
  %s0 = inlined_call_operand.vmem [shape: bf16[8,512], index: 0, kind: input, shape index: {}]
  %s1 = inlined_call_operand.vmem [shape: bf16[512,128], index: 1, kind: input, shape index: {}]
  %s2 = inlined_call_operand.vmem [shape: f32[1,128], index: 2, kind: input, shape index: {}]
  %s3 = inlined_call_operand.vmem [shape: f32[8,128], index: 3, kind: output, shape index: {}]
  %s4 = sld [smem:[#allocation0]]
  $region22: #{yolov10_forward.9} parent=0
    _
  %s6 = ssub.s32 1, %s4
  %s7 = scalar_select 0, %s6, %s4
  // Predicated region
  $region2: #{yolov10_forward.9} parent=0 // pred_check
    _
  $region3: #{yolov10_forward.9} parent=0 // pred_check_branch
    %9 = sbr.rel (0) target = $region5
  $region4: #{yolov10_forward.9} parent=0 // pred_region
    _
  $region5: #{yolov10_forward.9} parent=0 // pred_fallthru
    _
  // Predicated region
  $region6: #{yolov10_forward.9} parent=0 // pred_check
    _
  $region7: #{yolov10_forward.9} parent=0 // pred_check_branch
    %11 = sbr.rel (0) target = $region9
  $region8: #{yolov10_forward.9} parent=0 // pred_region
    _
  $region9: #{yolov10_forward.9} parent=0 // pred_fallthru
    _
  // Predicated region
  $region10: #{yolov10_forward.9} parent=0 // pred_check
    _
  $region11: #{yolov10_forward.9} parent=0 // pred_check_branch
    %13 = sbr.rel (0) target = $region13
  $region12: #{yolov10_forward.9} parent=0 // pred_region
    _
  $region13: #{yolov10_forward.9} parent=0 // pred_fallthru
    _
  %v15 = vld [vmem:[%s0] sm:$0xff]
  %v16 = vld [vmem:[%s0 + $0x8] sm:$0xff]
  %v17 = vld [vmem:[%s1] sm:$0xf]
  %v18 = vld [vmem:[%s1 + $0x4] sm:$0xf]
  %v19 = vld [vmem:[%s1 + $0x8] sm:$0xf]
  %v20 = vld [vmem:[%s1 + $0xc] sm:$0xf]
  %v21 = vld [vmem:[%s1 + $0x10] sm:$0xf]
  %v22 = vld [vmem:[%s1 + $0x14] sm:$0xf]
  %v23 = vld [vmem:[%s1 + $0x18] sm:$0xf]
  %v24 = vld [vmem:[%s1 + $0x1c] sm:$0xf]
  %v25 = vld [vmem:[%s1 + $0x20] sm:$0xf]
  %v26 = vld [vmem:[%s1 + $0x24] sm:$0xf]
  %v27 = vld [vmem:[%s1 + $0x28] sm:$0xf]
  %v28 = vld [vmem:[%s1 + $0x2c] sm:$0xf]
  %v29 = vld [vmem:[%s1 + $0x30] sm:$0xf]
  %v30 = vld [vmem:[%s1 + $0x34] sm:$0xf]
  %v31 = vld [vmem:[%s1 + $0x38] sm:$0xf]
  %v32 = vld [vmem:[%s1 + $0x3c] sm:$0xf]
  %v33 = vld [vmem:[%s1 + $0x40] sm:$0xf]
  %v34 = vld [vmem:[%s1 + $0x44] sm:$0xf]
  %v35 = vld [vmem:[%s1 + $0x48] sm:$0xf]
  %v36 = vld [vmem:[%s1 + $0x4c] sm:$0xf]
  %v37 = vld [vmem:[%s1 + $0x50] sm:$0xf]
  %v38 = vld [vmem:[%s1 + $0x54] sm:$0xf]
  %v39 = vld [vmem:[%s1 + $0x58] sm:$0xf]
  %v40 = vld [vmem:[%s1 + $0x5c] sm:$0xf]
  %v41 = vld [vmem:[%s1 + $0x60] sm:$0xf]
  %v42 = vld [vmem:[%s1 + $0x64] sm:$0xf]
  %v43 = vld [vmem:[%s1 + $0x68] sm:$0xf]
  %v44 = vld [vmem:[%s1 + $0x6c] sm:$0xf]
  %v45 = vld [vmem:[%s1 + $0x70] sm:$0xf]
  %v46 = vld [vmem:[%s1 + $0x74] sm:$0xf]
  %v47 = vld [vmem:[%s1 + $0x78] sm:$0xf]
  %v48 = vld [vmem:[%s1 + $0x7c] sm:$0xf]
  %v49 = vld [vmem:[%s1 + $0x80] sm:$0xf]
  %v50 = vld [vmem:[%s1 + $0x84] sm:$0xf]
  %v51 = vld [vmem:[%s1 + $0x88] sm:$0xf]
  %v52 = vld [vmem:[%s1 + $0x8c] sm:$0xf]
  %v53 = vld [vmem:[%s1 + $0x90] sm:$0xf]
  %v54 = vld [vmem:[%s1 + $0x94] sm:$0xf]
  %v55 = vld [vmem:[%s1 + $0x98] sm:$0xf]
  %v56 = vld [vmem:[%s1 + $0x9c] sm:$0xf]
  %v57 = vld [vmem:[%s1 + $0xa0] sm:$0xf]
  %v58 = vld [vmem:[%s1 + $0xa4] sm:$0xf]
  %v59 = vld [vmem:[%s1 + $0xa8] sm:$0xf]
  %v60 = vld [vmem:[%s1 + $0xac] sm:$0xf]
  %v61 = vld [vmem:[%s1 + $0xb0] sm:$0xf]
  %v62 = vld [vmem:[%s1 + $0xb4] sm:$0xf]
  %v63 = vld [vmem:[%s1 + $0xb8] sm:$0xf]
  %v64 = vld [vmem:[%s1 + $0xbc] sm:$0xf]
  %v65 = vld [vmem:[%s1 + $0xc0] sm:$0xf]
  %v66 = vld [vmem:[%s1 + $0xc4] sm:$0xf]
  %v67 = vld [vmem:[%s1 + $0xc8] sm:$0xf]
  %v68 = vld [vmem:[%s1 + $0xcc] sm:$0xf]
  %v69 = vld [vmem:[%s1 + $0xd0] sm:$0xf]
  %v70 = vld [vmem:[%s1 + $0xd4] sm:$0xf]
  %v71 = vld [vmem:[%s1 + $0xd8] sm:$0xf]
  %v72 = vld [vmem:[%s1 + $0xdc] sm:$0xf]
  %v73 = vld [vmem:[%s1 + $0xe0] sm:$0xf]
  %v74 = vld [vmem:[%s1 + $0xe4] sm:$0xf]
  %v75 = vld [vmem:[%s1 + $0xe8] sm:$0xf]
  %v76 = vld [vmem:[%s1 + $0xec] sm:$0xf]
  %v77 = vld [vmem:[%s1 + $0xf0] sm:$0xf]
  %v78 = vld [vmem:[%s1 + $0xf4] sm:$0xf]
  %v79 = vld [vmem:[%s1 + $0xf8] sm:$0xf]
  %v80 = vld [vmem:[%s1 + $0xfc] sm:$0xf]
  %v81 = vld [vmem:[%s2] sm:$0x1]
  %v83 = vlaneseq
  %v84 = vshrl.u32 %v83, 7
  %v85 = vsub.s32 0, %v84
  %v86 = vrot.slane %v81, %v85
  %v90 = vunpack.c.l.b16 %v15
  %v91 = vunpack.c.h.b16 %v15
  %v92 = vunpack.c.l.b16 %v16
  %v93 = vunpack.c.h.b16 %v16
  %v94 = vpack.c.b16 %v90, %v90
  %v95 = vpack.c.b16 %v91, %v91
  %v96 = vpack.c.b16 %v92, %v92
  %v97 = vpack.c.b16 %v93, %v93
  %v166 = vunpack.c.l.b16 %v17
  %v167 = vunpack.c.l.b16 %v18
  %v168 = vunpack.c.l.b16 %v19
  %v169 = vunpack.c.l.b16 %v20
  %v170 = vunpack.c.l.b16 %v21
  %v171 = vunpack.c.l.b16 %v22
  %v172 = vunpack.c.l.b16 %v23
  %v173 = vunpack.c.l.b16 %v24
  %v174 = vunpack.c.l.b16 %v25
  %v175 = vunpack.c.l.b16 %v26
  %v176 = vunpack.c.l.b16 %v27
  %v177 = vunpack.c.l.b16 %v28
  %v178 = vunpack.c.l.b16 %v29
  %v179 = vunpack.c.l.b16 %v30
  %v180 = vunpack.c.l.b16 %v31
  %v181 = vunpack.c.l.b16 %v32
  %v182 = vunpack.c.l.b16 %v33
  %v183 = vunpack.c.l.b16 %v34
  %v184 = vunpack.c.l.b16 %v35
  %v185 = vunpack.c.l.b16 %v36
  %v186 = vunpack.c.l.b16 %v37
  %v187 = vunpack.c.l.b16 %v38
  %v188 = vunpack.c.l.b16 %v39
  %v189 = vunpack.c.l.b16 %v40
  %v190 = vunpack.c.l.b16 %v41
  %v191 = vunpack.c.l.b16 %v42
  %v192 = vunpack.c.l.b16 %v43
  %v193 = vunpack.c.l.b16 %v44
  %v194 = vunpack.c.l.b16 %v45
  %v195 = vunpack.c.l.b16 %v46
  %v196 = vunpack.c.l.b16 %v47
  %v197 = vunpack.c.l.b16 %v48
  %v198 = vunpack.c.l.b16 %v49
  %v199 = vunpack.c.l.b16 %v50
  %v200 = vunpack.c.l.b16 %v51
  %v201 = vunpack.c.l.b16 %v52
  %v202 = vunpack.c.l.b16 %v53
  %v203 = vunpack.c.l.b16 %v54
  %v204 = vunpack.c.l.b16 %v55
  %v205 = vunpack.c.l.b16 %v56
  %v206 = vunpack.c.l.b16 %v57
  %v207 = vunpack.c.l.b16 %v58
  %v208 = vunpack.c.l.b16 %v59
  %v209 = vunpack.c.l.b16 %v60
  %v210 = vunpack.c.l.b16 %v61
  %v211 = vunpack.c.l.b16 %v62
  %v212 = vunpack.c.l.b16 %v63
  %v213 = vunpack.c.l.b16 %v64
  %v214 = vunpack.c.l.b16 %v65
  %v215 = vunpack.c.l.b16 %v66
  %v216 = vunpack.c.l.b16 %v67
  %v217 = vunpack.c.l.b16 %v68
  %v218 = vunpack.c.l.b16 %v69
  %v219 = vunpack.c.l.b16 %v70
  %v220 = vunpack.c.l.b16 %v71
  %v221 = vunpack.c.l.b16 %v72
  %v222 = vunpack.c.l.b16 %v73
  %v223 = vunpack.c.l.b16 %v74
  %v224 = vunpack.c.l.b16 %v75
  %v225 = vunpack.c.l.b16 %v76
  %v226 = vunpack.c.l.b16 %v77
  %v227 = vunpack.c.l.b16 %v78
  %v228 = vunpack.c.l.b16 %v79
  %v229 = vunpack.c.l.b16 %v80
  %v230 = vpack.c.b16 %v167, %v166
  %v231 = vpack.c.b16 %v169, %v168
  %v232 = vpack.c.b16 %v171, %v170
  %v233 = vpack.c.b16 %v173, %v172
  %v234 = vpack.c.b16 %v175, %v174
  %v235 = vpack.c.b16 %v177, %v176
  %v236 = vpack.c.b16 %v179, %v178
  %v237 = vpack.c.b16 %v181, %v180
  %v238 = vpack.c.b16 %v183, %v182
  %v239 = vpack.c.b16 %v185, %v184
  %v240 = vpack.c.b16 %v187, %v186
  %v241 = vpack.c.b16 %v189, %v188
  %v242 = vpack.c.b16 %v191, %v190
  %v243 = vpack.c.b16 %v193, %v192
  %v244 = vpack.c.b16 %v195, %v194
  %v245 = vpack.c.b16 %v197, %v196
  %v246 = vpack.c.b16 %v199, %v198
  %v247 = vpack.c.b16 %v201, %v200
  %v248 = vpack.c.b16 %v203, %v202
  %v249 = vpack.c.b16 %v205, %v204
  %v250 = vpack.c.b16 %v207, %v206
  %v251 = vpack.c.b16 %v209, %v208
  %v252 = vpack.c.b16 %v211, %v210
  %v253 = vpack.c.b16 %v213, %v212
  %v254 = vpack.c.b16 %v215, %v214
  %v255 = vpack.c.b16 %v217, %v216
  %v256 = vpack.c.b16 %v219, %v218
  %v257 = vpack.c.b16 %v221, %v220
  %v258 = vpack.c.b16 %v223, %v222
  %v259 = vpack.c.b16 %v225, %v224
  %v260 = vpack.c.b16 %v227, %v226
  %v261 = vpack.c.b16 %v229, %v228
  %294 = vmatprep.subr.bf16.mxu0 0
  %295 = vmatpush1.bf16.msra.mxu0 %v230
  %296 = vmatprep.subr.bf16.mxu0 0
  %297 = vmatpush1.bf16.msra.mxu0 %v231
  %298 = vmatprep.subr.bf16.mxu0 0
  %299 = vmatpush1.bf16.msra.mxu0 %v232
  %300 = vmatprep.subr.bf16.mxu0 0
  %301 = vmatpush1.bf16.msra.mxu0 %v233
  %302 = vmatprep.subr.bf16.mxu0 0
  %303 = vmatpush1.bf16.msra.mxu0 %v234
  %304 = vmatprep.subr.bf16.mxu0 0
  %305 = vmatpush1.bf16.msra.mxu0 %v235
  %306 = vmatprep.subr.bf16.mxu0 0
  %307 = vmatpush1.bf16.msra.mxu0 %v236
  %308 = vmatprep.subr.bf16.mxu0 0
  %309 = vmatpush1.bf16.msra.mxu0 %v237
  %310 = vmatprep.subr.bf16.mxu0 0
  %311 = vmatpush1.bf16.msra.mxu0 %v238
  %312 = vmatprep.subr.bf16.mxu0 0
  %313 = vmatpush1.bf16.msra.mxu0 %v239
  %314 = vmatprep.subr.bf16.mxu0 0
  %315 = vmatpush1.bf16.msra.mxu0 %v240
  %316 = vmatprep.subr.bf16.mxu0 0
  %317 = vmatpush1.bf16.msra.mxu0 %v241
  %318 = vmatprep.subr.bf16.mxu0 0
  %319 = vmatpush1.bf16.msra.mxu0 %v242
  %320 = vmatprep.subr.bf16.mxu0 0
  %321 = vmatpush1.bf16.msra.mxu0 %v243
  %322 = vmatprep.subr.bf16.mxu0 0
  %323 = vmatpush1.bf16.msra.mxu0 %v244
  %324 = vmatprep.subr.bf16.mxu0 0
  %325 = vmatpush1.bf16.msra.mxu0 %v245
  %326 = vmatprep.mubr.bf16.mxu0 %v95
  %327 = vmatmul.mubr.bf16.gmra.mrb[0].mxu0 %v94
  %v328 = vpop.f32.mrb[0].mxu0
  %v329 = vadd.f32 %v86, %v328
  %v330 = vpop.f32.mrb[0].mxu0
  %v331 = vpop.f32.mrb[0].mxu0
  %v332 = vpop.f32.mrb[0].mxu0
  %333 = vdwg.mxu0
  %334 = vmatprep.subr.bf16.mxu0 0
  %335 = vmatpush1.bf16.msra.mxu0 %v246
  %336 = vmatprep.subr.bf16.mxu0 0
  %337 = vmatpush1.bf16.msra.mxu0 %v247
  %338 = vmatprep.subr.bf16.mxu0 0
  %339 = vmatpush1.bf16.msra.mxu0 %v248
  %340 = vmatprep.subr.bf16.mxu0 0
  %341 = vmatpush1.bf16.msra.mxu0 %v249
  %342 = vmatprep.subr.bf16.mxu0 0
  %343 = vmatpush1.bf16.msra.mxu0 %v250
  %344 = vmatprep.subr.bf16.mxu0 0
  %345 = vmatpush1.bf16.msra.mxu0 %v251
  %346 = vmatprep.subr.bf16.mxu0 0
  %347 = vmatpush1.bf16.msra.mxu0 %v252
  %348 = vmatprep.subr.bf16.mxu0 0
  %349 = vmatpush1.bf16.msra.mxu0 %v253
  %350 = vmatprep.subr.bf16.mxu0 0
  %351 = vmatpush1.bf16.msra.mxu0 %v254
  %352 = vmatprep.subr.bf16.mxu0 0
  %353 = vmatpush1.bf16.msra.mxu0 %v255
  %354 = vmatprep.subr.bf16.mxu0 0
  %355 = vmatpush1.bf16.msra.mxu0 %v256
  %356 = vmatprep.subr.bf16.mxu0 0
  %357 = vmatpush1.bf16.msra.mxu0 %v257
  %358 = vmatprep.subr.bf16.mxu0 0
  %359 = vmatpush1.bf16.msra.mxu0 %v258
  %360 = vmatprep.subr.bf16.mxu0 0
  %361 = vmatpush1.bf16.msra.mxu0 %v259
  %362 = vmatprep.subr.bf16.mxu0 0
  %363 = vmatpush1.bf16.msra.mxu0 %v260
  %364 = vmatprep.subr.bf16.mxu0 0
  %365 = vmatpush1.bf16.msra.mxu0 %v261
  %366 = vmatprep.mubr.bf16.mxu0 %v97
  %367 = vmatmul.mubr.bf16.gmra.mrb[0].mxu0 %v96
  %v368 = vpop.f32.mrb[0].mxu0
  %v369 = vadd.f32 %v329, %v368
  %v370 = vpop.f32.mrb[0].mxu0
  %v371 = vpop.f32.mrb[0].mxu0
  %v372 = vpop.f32.mrb[0].mxu0
  %373 = vdwg.mxu0
  %374 = vst [vmem:[%s3] sm:$0xff] %v369
  // Predicated region
  $region14: #{yolov10_forward.9} parent=0 // pred_check
    _
  $region15: #{yolov10_forward.9} parent=0 // pred_check_branch
    %376 = sbr.rel (0) target = $region17
  $region16: #{yolov10_forward.9} parent=0 // pred_region
    _
  $region17: #{yolov10_forward.9} parent=0 // pred_fallthru
    _
  // Predicated region
  $region18: #{yolov10_forward.9} parent=0 // pred_check
    _
  $region19: #{yolov10_forward.9} parent=0 // pred_check_branch
    %378 = sbr.rel (0) target = $region21
  $region20: #{yolov10_forward.9} parent=0 // pred_region
    _
  $region21: #{yolov10_forward.9} parent=0 // pred_fallthru
    _

// kernel: yolov10_forward.8
$region0: #{yolov10_forward.8}
  #allocation0 [shape = 'u32[]', space=smem, size = 0x4, offset = 0x4, fixed_abs, tag = 'smem constant byte address 0x4 - core index']
  #allocation1 [shape = 'u32[144,128]{1,0:T(1,128)}', space=vmem, size = 0x12000, scoped, tag = 'internal scratch']
  %s0 = inlined_call_operand.vmem [shape: bf16[8,2304], index: 0, kind: input, shape index: {}]
  %s1 = inlined_call_operand.vmem [shape: bf16[2304,512], index: 1, kind: input, shape index: {}]
  %s2 = inlined_call_operand.vmem [shape: f32[1,512], index: 2, kind: input, shape index: {}]
  %s3 = inlined_call_operand.vmem [shape: bf16[8,512], index: 3, kind: output, shape index: {}]
  %s4 = sld [smem:[#allocation0]]
  $region83: #{yolov10_forward.8} parent=0
    _
  %s6 = ssub.s32 1, %s4
  %s7 = scalar_select 0, %s6, %s4
  $region1: #{yolov10_forward.8} parent=0
    #allocation2 [shape = 'u8[2359296]{0}', space=vmem, size = 0x240000, scoped, tag = 'input window, operand 1']
    loop: start=0, step=1, limit=4
    $region2: #{yolov10_forward.8} parent=1 // loop_pre_header
      _
    $region3: #{yolov10_forward.8} parent=1 // loop_header
      %s9 = sphi 0, %s13
      %p10 = scmp.ge.s32.totalorder %s9, 4
      %s16 = sphi 0, %s28
      %s17 = sphi 0, %s24
      %s18 = sphi 0, %s16
      %s19 = sphi 0, %s17
      %s20 = sphi 0, %s18
      %s21 = sphi 0, %s19
      %s31 = sphi 0, %s33
      %s34 = sphi 0, %s31
      %s35 = sphi 0, %s34
      %s51 = sphi 0, %s35
      %s57 = sphi 0, %s59
      %s60 = sphi 0, %s57
      %s61 = sphi 0, %s60
      %s77 = sphi 0, %s61
      %s83 = sphi 0, %s85
      %s86 = sphi 0, %s83
      %s87 = sphi 0, %s86
      %s103 = sphi 0, %s87
      %s111 = sphi 0, %s113
      %s114 = sphi 0, %s111
      %s115 = sphi 0, %s114
      %s131 = sphi 0, %s115
    $region4: #{yolov10_forward.8} parent=1 // loop_header_branch
      %12 = sbr.rel (%p10) target = $region8
    $region5: #{yolov10_forward.8} parent=1 // loop_body
      %s14 = ssub.s32 %s9, 1
      %s15 = ssub.s32 %s9, 2
      %s22 = sadd.s32 1, %s17
      %p23 = scmp.ge.s32.totalorder %s22, 1
      %s24 = scalar_select %p23, 0, %s22
      %s25 = sadd.s32 1, %s16
      %s26 = scalar_select %p23, %s25, %s16
      %p27 = scmp.ge.s32.totalorder %s26, 2
      %s28 = scalar_select %p27, 0, %s26
      %s29 = ssub.s32 %s17, %s24
      %p30 = scmp.eq.s32.totalorder %s29, 0
      %s32 = sadd.s32 %s31, 1
      %s33 = scalar_select %p30, %s31, %s32
      %p36 = pneg %p30
      %p37 = scmp.eq.s32.totalorder %s9, 1
      %p38 = por %p36, %p37
      %p39 = scmp.ne.s32.totalorder %s31, %s34
      %p40 = scmp.eq.s32.totalorder %s9, 0
      %p41 = por %p39, %p40
      %p42 = scmp.ne.s32.totalorder %s31, %s34
      %p43 = scmp.eq.s32.totalorder %s14, 1
      %p44 = por %p42, %p43
      %p45 = scmp.ne.s32.totalorder %s34, %s35
      %p46 = scmp.eq.s32.totalorder %s14, 0
      %p47 = por %p45, %p46
      %p48 = scmp.ne.s32.totalorder %s34, %s35
      %p49 = scmp.eq.s32.totalorder %s15, 1
      %p50 = por %p48, %p49
      %p52 = scmp.ne.s32.totalorder %s35, %s51
      %p53 = scmp.eq.s32.totalorder %s15, 0
      %p54 = por %p52, %p53
      %s55 = ssub.s32 %s16, %s28
      %p56 = scmp.eq.s32.totalorder %s55, 0
      %s58 = sadd.s32 %s57, 1
      %s59 = scalar_select %p56, %s57, %s58
      %p62 = pneg %p56
      %p63 = scmp.eq.s32.totalorder %s9, 1
      %p64 = por %p62, %p63
      %p65 = scmp.ne.s32.totalorder %s57, %s60
      %p66 = scmp.eq.s32.totalorder %s9, 0
      %p67 = por %p65, %p66
      %p68 = scmp.ne.s32.totalorder %s57, %s60
      %p69 = scmp.eq.s32.totalorder %s14, 1
      %p70 = por %p68, %p69
      %p71 = scmp.ne.s32.totalorder %s60, %s61
      %p72 = scmp.eq.s32.totalorder %s14, 0
      %p73 = por %p71, %p72
      %p74 = scmp.ne.s32.totalorder %s60, %s61
      %p75 = scmp.eq.s32.totalorder %s15, 1
      %p76 = por %p74, %p75
      %p78 = scmp.ne.s32.totalorder %s61, %s77
      %p79 = scmp.eq.s32.totalorder %s15, 0
      %p80 = por %p78, %p79
      %s81 = ssub.s32 %s16, %s28
      %p82 = scmp.eq.s32.totalorder %s81, 0
      %s84 = sadd.s32 %s83, 1
      %s85 = scalar_select %p82, %s83, %s84
      %p88 = pneg %p82
      %p89 = scmp.eq.s32.totalorder %s9, 1
      %p90 = por %p88, %p89
      %p91 = scmp.ne.s32.totalorder %s83, %s86
      %p92 = scmp.eq.s32.totalorder %s9, 0
      %p93 = por %p91, %p92
      %p94 = scmp.ne.s32.totalorder %s83, %s86
      %p95 = scmp.eq.s32.totalorder %s14, 1
      %p96 = por %p94, %p95
      %p97 = scmp.ne.s32.totalorder %s86, %s87
      %p98 = scmp.eq.s32.totalorder %s14, 0
      %p99 = por %p97, %p98
      %p100 = scmp.ne.s32.totalorder %s86, %s87
      %p101 = scmp.eq.s32.totalorder %s15, 1
      %p102 = por %p100, %p101
      %p104 = scmp.ne.s32.totalorder %s87, %s103
      %p105 = scmp.eq.s32.totalorder %s15, 0
      %p106 = por %p104, %p105
      %s107 = ssub.s32 %s17, %s24
      %s108 = ssub.s32 %s16, %s28
      %s109 = sor.u32 %s107, %s108
      %p110 = scmp.eq.s32.totalorder %s109, 0
      %s112 = sadd.s32 %s111, 1
      %s113 = scalar_select %p110, %s111, %s112
      %p116 = pneg %p110
      %p117 = scmp.eq.s32.totalorder %s9, 1
      %p118 = por %p116, %p117
      %p119 = scmp.ne.s32.totalorder %s111, %s114
      %p120 = scmp.eq.s32.totalorder %s9, 0
      %p121 = por %p119, %p120
      %p122 = scmp.ne.s32.totalorder %s111, %s114
      %p123 = scmp.eq.s32.totalorder %s14, 1
      %p124 = por %p122, %p123
      %p125 = scmp.ne.s32.totalorder %s114, %s115
      %p126 = scmp.eq.s32.totalorder %s14, 0
      %p127 = por %p125, %p126
      %p128 = scmp.ne.s32.totalorder %s114, %s115
      %p129 = scmp.eq.s32.totalorder %s15, 1
      %p130 = por %p128, %p129
      %p132 = scmp.ne.s32.totalorder %s115, %s131
      %p133 = scmp.eq.s32.totalorder %s15, 0
      %p134 = por %p132, %p133
      %p135 = scmp.le.s32.totalorder 1, %s9
      %p136 = scmp.lt.s32.totalorder %s9, 3
      %p137 = pnand %p135, %p136
      %p138 = pneg %p137
      // Predicated region
      $region9: #{yolov10_forward.8} parent=5 // pred_check
        _
      $region10: #{yolov10_forward.8} parent=5 // pred_check_branch
        %140 = sbr.rel (%p137) target = $region12
      $region11: #{yolov10_forward.8} parent=5 // pred_region
        %s141 = ssub.s32 %s9, 1
        // Predicated region
        $region13: #{yolov10_forward.8} parent=11 // pred_check
          %p142 = pneg %p47
        $region14: #{yolov10_forward.8} parent=11 // pred_check_branch
          %144 = sbr.rel (%p142) target = $region16
        $region15: #{yolov10_forward.8} parent=11 // pred_region
          %p145 = scmp.lt.s32.totalorder %s19, 0
          %s146 = scalar_select %p145, %s19, 0
          %s147 = smul.addr %s146, 18
          %s148 = smul.addr %s147, 4
          %s149 = scalar_lea.vmem %s0, %s148
        $region16: #{yolov10_forward.8} parent=11 // pred_fallthru
          _
      $region12: #{yolov10_forward.8} parent=5 // pred_fallthru
        _
      %p150 = scmp.lt.s32.totalorder %s9, 2
      // Predicated region
      $region17: #{yolov10_forward.8} parent=5 // pred_check
        %p151 = pneg %p150
      $region18: #{yolov10_forward.8} parent=5 // pred_check_branch
        %153 = sbr.rel (%p151) target = $region20
      $region19: #{yolov10_forward.8} parent=5 // pred_region
        // Predicated region
        $region21: #{yolov10_forward.8} parent=19 // pred_check
          %p154 = pneg %p67
        $region22: #{yolov10_forward.8} parent=19 // pred_check_branch
          %156 = sbr.rel (%p154) target = $region24
        $region23: #{yolov10_forward.8} parent=19 // pred_region
          %s157 = sand.u32 %s57, 1
          %s158 = sand.u32 %s57, 1
          %s159 = smul.addr %s158, 2304
          %s160 = scalar_lea.vmem [#allocation2], %s159
          %s161 = smul.u32 2, %s16
          %s162 = smul.addr %s161, 4
          %s163 = scalar_lea.vmem %s1, %s162
          // Predicated region
          $region25: #{yolov10_forward.8} parent=23 // pred_check
            _
          $region26: #{yolov10_forward.8} parent=23 // pred_check_branch
            %165 = sbr.rel (0) target = $region28
          $region27: #{yolov10_forward.8} parent=23 // pred_region
            // Predicated region
            $region29: #{yolov10_forward.8} parent=27 // pred_check
              _
            $region30: #{yolov10_forward.8} parent=27 // pred_check_branch
              %167 = sbr.rel (0) target = $region32
            $region31: #{yolov10_forward.8} parent=27 // pred_region
              // Predicated region
              $region44: #{yolov10_forward.8} parent=31 // pred_check
                _
              $region45: #{yolov10_forward.8} parent=31 // pred_check_branch
                %756 = sbr.rel (0) target = $region47
              $region46: #{yolov10_forward.8} parent=31 // pred_region
                loop: start=0, step=1, limit=1
                $region48: #{yolov10_forward.8} parent=46 // loop_pre_header
                  _
                $region49: #{yolov10_forward.8} parent=46 // loop_header
                  %s758 = sphi 0, %s762
                  %p759 = scmp.ge.s32.totalorder %s758, 1
                  %s763 = sphi %s163, %s163
                  %s764 = sphi %s160, %s160
                $region50: #{yolov10_forward.8} parent=46 // loop_header_branch
                  %761 = sbr.rel (%p759) target = $region54
                $region51: #{yolov10_forward.8} parent=46 // loop_body
                  %v765 = vld [vmem:[%s763] sm:$0xff]
                  %766 = vst [vmem:[%s764] sm:$0xff] %v765
                  %v767 = vld [vmem:[%s763 + $0x10] sm:$0xff]
                  %768 = vst [vmem:[%s764 + $0x8] sm:$0xff] %v767
                  %v769 = vld [vmem:[%s763 + $0x20] sm:$0xff]
                  %770 = vst [vmem:[%s764 + $0x10] sm:$0xff] %v769
                  %v771 = vld [vmem:[%s763 + $0x30] sm:$0xff]
                  %772 = vst [vmem:[%s764 + $0x18] sm:$0xff] %v771
                  %v773 = vld [vmem:[%s763 + $0x40] sm:$0xff]
                  %774 = vst [vmem:[%s764 + $0x20] sm:$0xff] %v773
                  %v775 = vld [vmem:[%s763 + $0x50] sm:$0xff]
                  %776 = vst [vmem:[%s764 + $0x28] sm:$0xff] %v775
                  %v777 = vld [vmem:[%s763 + $0x60] sm:$0xff]
                  %778 = vst [vmem:[%s764 + $0x30] sm:$0xff] %v777
                  %v779 = vld [vmem:[%s763 + $0x70] sm:$0xff]
                  %780 = vst [vmem:[%s764 + $0x38] sm:$0xff] %v779
                  %v781 = vld [vmem:[%s763 + $0x80] sm:$0xff]
                  %782 = vst [vmem:[%s764 + $0x40] sm:$0xff] %v781
                  %v783 = vld [vmem:[%s763 + $0x90] sm:$0xff]
                  %784 = vst [vmem:[%s764 + $0x48] sm:$0xff] %v783
                  %v785 = vld [vmem:[%s763 + $0xa0] sm:$0xff]
                  %786 = vst [vmem:[%s764 + $0x50] sm:$0xff] %v785
                  %v787 = vld [vmem:[%s763 + $0xb0] sm:$0xff]
                  %788 = vst [vmem:[%s764 + $0x58] sm:$0xff] %v787
                  %v789 = vld [vmem:[%s763 + $0xc0] sm:$0xff]
                  %790 = vst [vmem:[%s764 + $0x60] sm:$0xff] %v789
                  %v791 = vld [vmem:[%s763 + $0xd0] sm:$0xff]
                  %792 = vst [vmem:[%s764 + $0x68] sm:$0xff] %v791
                  %v793 = vld [vmem:[%s763 + $0xe0] sm:$0xff]
                  %794 = vst [vmem:[%s764 + $0x70] sm:$0xff] %v793
                  %v795 = vld [vmem:[%s763 + $0xf0] sm:$0xff]
                  %796 = vst [vmem:[%s764 + $0x78] sm:$0xff] %v795
                  %v797 = vld [vmem:[%s763 + $0x100] sm:$0xff]
                  %798 = vst [vmem:[%s764 + $0x80] sm:$0xff] %v797
                  %v799 = vld [vmem:[%s763 + $0x110] sm:$0xff]
                  %800 = vst [vmem:[%s764 + $0x88] sm:$0xff] %v799
                  %v801 = vld [vmem:[%s763 + $0x120] sm:$0xff]
                  %802 = vst [vmem:[%s764 + $0x90] sm:$0xff] %v801
                  %v803 = vld [vmem:[%s763 + $0x130] sm:$0xff]
                  %804 = vst [vmem:[%s764 + $0x98] sm:$0xff] %v803
                  %v805 = vld [vmem:[%s763 + $0x140] sm:$0xff]
                  %806 = vst [vmem:[%s764 + $0xa0] sm:$0xff] %v805
                  %v807 = vld [vmem:[%s763 + $0x150] sm:$0xff]
                  %808 = vst [vmem:[%s764 + $0xa8] sm:$0xff] %v807
                  %v809 = vld [vmem:[%s763 + $0x160] sm:$0xff]
                  %810 = vst [vmem:[%s764 + $0xb0] sm:$0xff] %v809
                  %v811 = vld [vmem:[%s763 + $0x170] sm:$0xff]
                  %812 = vst [vmem:[%s764 + $0xb8] sm:$0xff] %v811
                  %v813 = vld [vmem:[%s763 + $0x180] sm:$0xff]
                  %814 = vst [vmem:[%s764 + $0xc0] sm:$0xff] %v813
                  %v815 = vld [vmem:[%s763 + $0x190] sm:$0xff]
                  %816 = vst [vmem:[%s764 + $0xc8] sm:$0xff] %v815
                  %v817 = vld [vmem:[%s763 + $0x1a0] sm:$0xff]
                  %818 = vst [vmem:[%s764 + $0xd0] sm:$0xff] %v817
                  %v819 = vld [vmem:[%s763 + $0x1b0] sm:$0xff]
                  %820 = vst [vmem:[%s764 + $0xd8] sm:$0xff] %v819
                  %v821 = vld [vmem:[%s763 + $0x1c0] sm:$0xff]
                  %822 = vst [vmem:[%s764 + $0xe0] sm:$0xff] %v821
                  %v823 = vld [vmem:[%s763 + $0x1d0] sm:$0xff]
                  %824 = vst [vmem:[%s764 + $0xe8] sm:$0xff] %v823
                  %v825 = vld [vmem:[%s763 + $0x1e0] sm:$0xff]
                  %826 = vst [vmem:[%s764 + $0xf0] sm:$0xff] %v825
                  %v827 = vld [vmem:[%s763 + $0x1f0] sm:$0xff]
                  %828 = vst [vmem:[%s764 + $0xf8] sm:$0xff] %v827
                  %v829 = vld [vmem:[%s763 + $0x200] sm:$0xff]
                  %830 = vst [vmem:[%s764 + $0x100] sm:$0xff] %v829
                  %v831 = vld [vmem:[%s763 + $0x210] sm:$0xff]
                  %832 = vst [vmem:[%s764 + $0x108] sm:$0xff] %v831
                  %v833 = vld [vmem:[%s763 + $0x220] sm:$0xff]
                  %834 = vst [vmem:[%s764 + $0x110] sm:$0xff] %v833
                  %v835 = vld [vmem:[%s763 + $0x230] sm:$0xff]
                  %836 = vst [vmem:[%s764 + $0x118] sm:$0xff] %v835
                  %v837 = vld [vmem:[%s763 + $0x240] sm:$0xff]
                  %838 = vst [vmem:[%s764 + $0x120] sm:$0xff] %v837
                  %v839 = vld [vmem:[%s763 + $0x250] sm:$0xff]
                  %840 = vst [vmem:[%s764 + $0x128] sm:$0xff] %v839
                  %v841 = vld [vmem:[%s763 + $0x260] sm:$0xff]
                  %842 = vst [vmem:[%s764 + $0x130] sm:$0xff] %v841
                  %v843 = vld [vmem:[%s763 + $0x270] sm:$0xff]
                  %844 = vst [vmem:[%s764 + $0x138] sm:$0xff] %v843
                  %v845 = vld [vmem:[%s763 + $0x280] sm:$0xff]
                  %846 = vst [vmem:[%s764 + $0x140] sm:$0xff] %v845
                  %v847 = vld [vmem:[%s763 + $0x290] sm:$0xff]
                  %848 = vst [vmem:[%s764 + $0x148] sm:$0xff] %v847
                  %v849 = vld [vmem:[%s763 + $0x2a0] sm:$0xff]
                  %850 = vst [vmem:[%s764 + $0x150] sm:$0xff] %v849
                  %v851 = vld [vmem:[%s763 + $0x2b0] sm:$0xff]
                  %852 = vst [vmem:[%s764 + $0x158] sm:$0xff] %v851
                  %v853 = vld [vmem:[%s763 + $0x2c0] sm:$0xff]
                  %854 = vst [vmem:[%s764 + $0x160] sm:$0xff] %v853
                  %v855 = vld [vmem:[%s763 + $0x2d0] sm:$0xff]
                  %856 = vst [vmem:[%s764 + $0x168] sm:$0xff] %v855
                  %v857 = vld [vmem:[%s763 + $0x2e0] sm:$0xff]
                  %858 = vst [vmem:[%s764 + $0x170] sm:$0xff] %v857
                  %v859 = vld [vmem:[%s763 + $0x2f0] sm:$0xff]
                  %860 = vst [vmem:[%s764 + $0x178] sm:$0xff] %v859
                  %v861 = vld [vmem:[%s763 + $0x300] sm:$0xff]
                  %862 = vst [vmem:[%s764 + $0x180] sm:$0xff] %v861
                  %v863 = vld [vmem:[%s763 + $0x310] sm:$0xff]
                  %864 = vst [vmem:[%s764 + $0x188] sm:$0xff] %v863
                  %v865 = vld [vmem:[%s763 + $0x320] sm:$0xff]
                  %866 = vst [vmem:[%s764 + $0x190] sm:$0xff] %v865
                  %v867 = vld [vmem:[%s763 + $0x330] sm:$0xff]
                  %868 = vst [vmem:[%s764 + $0x198] sm:$0xff] %v867
                  %v869 = vld [vmem:[%s763 + $0x340] sm:$0xff]
                  %870 = vst [vmem:[%s764 + $0x1a0] sm:$0xff] %v869
                  %v871 = vld [vmem:[%s763 + $0x350] sm:$0xff]
                  %872 = vst [vmem:[%s764 + $0x1a8] sm:$0xff] %v871
                  %v873 = vld [vmem:[%s763 + $0x360] sm:$0xff]
                  %874 = vst [vmem:[%s764 + $0x1b0] sm:$0xff] %v873
                  %v875 = vld [vmem:[%s763 + $0x370] sm:$0xff]
                  %876 = vst [vmem:[%s764 + $0x1b8] sm:$0xff] %v875
                  %v877 = vld [vmem:[%s763 + $0x380] sm:$0xff]
                  %878 = vst [vmem:[%s764 + $0x1c0] sm:$0xff] %v877
                  %v879 = vld [vmem:[%s763 + $0x390] sm:$0xff]
                  %880 = vst [vmem:[%s764 + $0x1c8] sm:$0xff] %v879
                  %v881 = vld [vmem:[%s763 + $0x3a0] sm:$0xff]
                  %882 = vst [vmem:[%s764 + $0x1d0] sm:$0xff] %v881
                  %v883 = vld [vmem:[%s763 + $0x3b0] sm:$0xff]
                  %884 = vst [vmem:[%s764 + $0x1d8] sm:$0xff] %v883
                  %v885 = vld [vmem:[%s763 + $0x3c0] sm:$0xff]
                  %886 = vst [vmem:[%s764 + $0x1e0] sm:$0xff] %v885
                  %v887 = vld [vmem:[%s763 + $0x3d0] sm:$0xff]
                  %888 = vst [vmem:[%s764 + $0x1e8] sm:$0xff] %v887
                  %v889 = vld [vmem:[%s763 + $0x3e0] sm:$0xff]
                  %890 = vst [vmem:[%s764 + $0x1f0] sm:$0xff] %v889
                  %v891 = vld [vmem:[%s763 + $0x3f0] sm:$0xff]
                  %892 = vst [vmem:[%s764 + $0x1f8] sm:$0xff] %v891
                  %v893 = vld [vmem:[%s763 + $0x400] sm:$0xff]
                  %894 = vst [vmem:[%s764 + $0x200] sm:$0xff] %v893
                  %v895 = vld [vmem:[%s763 + $0x410] sm:$0xff]
                  %896 = vst [vmem:[%s764 + $0x208] sm:$0xff] %v895
                  %v897 = vld [vmem:[%s763 + $0x420] sm:$0xff]
                  %898 = vst [vmem:[%s764 + $0x210] sm:$0xff] %v897
                  %v899 = vld [vmem:[%s763 + $0x430] sm:$0xff]
                  %900 = vst [vmem:[%s764 + $0x218] sm:$0xff] %v899
                  %v901 = vld [vmem:[%s763 + $0x440] sm:$0xff]
                  %902 = vst [vmem:[%s764 + $0x220] sm:$0xff] %v901
                  %v903 = vld [vmem:[%s763 + $0x450] sm:$0xff]
                  %904 = vst [vmem:[%s764 + $0x228] sm:$0xff] %v903
                  %v905 = vld [vmem:[%s763 + $0x460] sm:$0xff]
                  %906 = vst [vmem:[%s764 + $0x230] sm:$0xff] %v905
                  %v907 = vld [vmem:[%s763 + $0x470] sm:$0xff]
                  %908 = vst [vmem:[%s764 + $0x238] sm:$0xff] %v907
                  %v909 = vld [vmem:[%s763 + $0x480] sm:$0xff]
                  %910 = vst [vmem:[%s764 + $0x240] sm:$0xff] %v909
                  %v911 = vld [vmem:[%s763 + $0x490] sm:$0xff]
                  %912 = vst [vmem:[%s764 + $0x248] sm:$0xff] %v911
                  %v913 = vld [vmem:[%s763 + $0x4a0] sm:$0xff]
                  %914 = vst [vmem:[%s764 + $0x250] sm:$0xff] %v913
                  %v915 = vld [vmem:[%s763 + $0x4b0] sm:$0xff]
                  %916 = vst [vmem:[%s764 + $0x258] sm:$0xff] %v915
                  %v917 = vld [vmem:[%s763 + $0x4c0] sm:$0xff]
                  %918 = vst [vmem:[%s764 + $0x260] sm:$0xff] %v917
                  %v919 = vld [vmem:[%s763 + $0x4d0] sm:$0xff]
                  %920 = vst [vmem:[%s764 + $0x268] sm:$0xff] %v919
                  %v921 = vld [vmem:[%s763 + $0x4e0] sm:$0xff]
                  %922 = vst [vmem:[%s764 + $0x270] sm:$0xff] %v921
                  %v923 = vld [vmem:[%s763 + $0x4f0] sm:$0xff]
                  %924 = vst [vmem:[%s764 + $0x278] sm:$0xff] %v923
                  %v925 = vld [vmem:[%s763 + $0x500] sm:$0xff]
                  %926 = vst [vmem:[%s764 + $0x280] sm:$0xff] %v925
                  %v927 = vld [vmem:[%s763 + $0x510] sm:$0xff]
                  %928 = vst [vmem:[%s764 + $0x288] sm:$0xff] %v927
                  %v929 = vld [vmem:[%s763 + $0x520] sm:$0xff]
                  %930 = vst [vmem:[%s764 + $0x290] sm:$0xff] %v929
                  %v931 = vld [vmem:[%s763 + $0x530] sm:$0xff]
                  %932 = vst [vmem:[%s764 + $0x298] sm:$0xff] %v931
                  %v933 = vld [vmem:[%s763 + $0x540] sm:$0xff]
                  %934 = vst [vmem:[%s764 + $0x2a0] sm:$0xff] %v933
                  %v935 = vld [vmem:[%s763 + $0x550] sm:$0xff]
                  %936 = vst [vmem:[%s764 + $0x2a8] sm:$0xff] %v935
                  %v937 = vld [vmem:[%s763 + $0x560] sm:$0xff]
                  %938 = vst [vmem:[%s764 + $0x2b0] sm:$0xff] %v937
                  %v939 = vld [vmem:[%s763 + $0x570] sm:$0xff]
                  %940 = vst [vmem:[%s764 + $0x2b8] sm:$0xff] %v939
                  %v941 = vld [vmem:[%s763 + $0x580] sm:$0xff]
                  %942 = vst [vmem:[%s764 + $0x2c0] sm:$0xff] %v941
                  %v943 = vld [vmem:[%s763 + $0x590] sm:$0xff]
                  %944 = vst [vmem:[%s764 + $0x2c8] sm:$0xff] %v943
                  %v945 = vld [vmem:[%s763 + $0x5a0] sm:$0xff]
                  %946 = vst [vmem:[%s764 + $0x2d0] sm:$0xff] %v945
                  %v947 = vld [vmem:[%s763 + $0x5b0] sm:$0xff]
                  %948 = vst [vmem:[%s764 + $0x2d8] sm:$0xff] %v947
                  %v949 = vld [vmem:[%s763 + $0x5c0] sm:$0xff]
                  %950 = vst [vmem:[%s764 + $0x2e0] sm:$0xff] %v949
                  %v951 = vld [vmem:[%s763 + $0x5d0] sm:$0xff]
                  %952 = vst [vmem:[%s764 + $0x2e8] sm:$0xff] %v951
                  %v953 = vld [vmem:[%s763 + $0x5e0] sm:$0xff]
                  %954 = vst [vmem:[%s764 + $0x2f0] sm:$0xff] %v953
                  %v955 = vld [vmem:[%s763 + $0x5f0] sm:$0xff]
                  %956 = vst [vmem:[%s764 + $0x2f8] sm:$0xff] %v955
                  %v957 = vld [vmem:[%s763 + $0x600] sm:$0xff]
                  %958 = vst [vmem:[%s764 + $0x300] sm:$0xff] %v957
                  %v959 = vld [vmem:[%s763 + $0x610] sm:$0xff]
                  %960 = vst [vmem:[%s764 + $0x308] sm:$0xff] %v959
                  %v961 = vld [vmem:[%s763 + $0x620] sm:$0xff]
                  %962 = vst [vmem:[%s764 + $0x310] sm:$0xff] %v961
                  %v963 = vld [vmem:[%s763 + $0x630] sm:$0xff]
                  %964 = vst [vmem:[%s764 + $0x318] sm:$0xff] %v963
                  %v965 = vld [vmem:[%s763 + $0x640] sm:$0xff]
                  %966 = vst [vmem:[%s764 + $0x320] sm:$0xff] %v965
                  %v967 = vld [vmem:[%s763 + $0x650] sm:$0xff]
                  %968 = vst [vmem:[%s764 + $0x328] sm:$0xff] %v967
                  %v969 = vld [vmem:[%s763 + $0x660] sm:$0xff]
                  %970 = vst [vmem:[%s764 + $0x330] sm:$0xff] %v969
                  %v971 = vld [vmem:[%s763 + $0x670] sm:$0xff]
                  %972 = vst [vmem:[%s764 + $0x338] sm:$0xff] %v971
                  %v973 = vld [vmem:[%s763 + $0x680] sm:$0xff]
                  %974 = vst [vmem:[%s764 + $0x340] sm:$0xff] %v973
                  %v975 = vld [vmem:[%s763 + $0x690] sm:$0xff]
                  %976 = vst [vmem:[%s764 + $0x348] sm:$0xff] %v975
                  %v977 = vld [vmem:[%s763 + $0x6a0] sm:$0xff]
                  %978 = vst [vmem:[%s764 + $0x350] sm:$0xff] %v977
                  %v979 = vld [vmem:[%s763 + $0x6b0] sm:$0xff]
                  %980 = vst [vmem:[%s764 + $0x358] sm:$0xff] %v979
                  %v981 = vld [vmem:[%s763 + $0x6c0] sm:$0xff]
                  %982 = vst [vmem:[%s764 + $0x360] sm:$0xff] %v981
                  %v983 = vld [vmem:[%s763 + $0x6d0] sm:$0xff]
                  %984 = vst [vmem:[%s764 + $0x368] sm:$0xff] %v983
                  %v985 = vld [vmem:[%s763 + $0x6e0] sm:$0xff]
                  %986 = vst [vmem:[%s764 + $0x370] sm:$0xff] %v985
                  %v987 = vld [vmem:[%s763 + $0x6f0] sm:$0xff]
                  %988 = vst [vmem:[%s764 + $0x378] sm:$0xff] %v987
                  %v989 = vld [vmem:[%s763 + $0x700] sm:$0xff]
                  %990 = vst [vmem:[%s764 + $0x380] sm:$0xff] %v989
                  %v991 = vld [vmem:[%s763 + $0x710] sm:$0xff]
                  %992 = vst [vmem:[%s764 + $0x388] sm:$0xff] %v991
                  %v993 = vld [vmem:[%s763 + $0x720] sm:$0xff]
                  %994 = vst [vmem:[%s764 + $0x390] sm:$0xff] %v993
                  %v995 = vld [vmem:[%s763 + $0x730] sm:$0xff]
                  %996 = vst [vmem:[%s764 + $0x398] sm:$0xff] %v995
                  %v997 = vld [vmem:[%s763 + $0x740] sm:$0xff]
                  %998 = vst [vmem:[%s764 + $0x3a0] sm:$0xff] %v997
                  %v999 = vld [vmem:[%s763 + $0x750] sm:$0xff]
                  %1000 = vst [vmem:[%s764 + $0x3a8] sm:$0xff] %v999
                  %v1001 = vld [vmem:[%s763 + $0x760] sm:$0xff]
                  %1002 = vst [vmem:[%s764 + $0x3b0] sm:$0xff] %v1001
                  %v1003 = vld [vmem:[%s763 + $0x770] sm:$0xff]
                  %1004 = vst [vmem:[%s764 + $0x3b8] sm:$0xff] %v1003
                  %v1005 = vld [vmem:[%s763 + $0x780] sm:$0xff]
                  %1006 = vst [vmem:[%s764 + $0x3c0] sm:$0xff] %v1005
                  %v1007 = vld [vmem:[%s763 + $0x790] sm:$0xff]
                  %1008 = vst [vmem:[%s764 + $0x3c8] sm:$0xff] %v1007
                  %v1009 = vld [vmem:[%s763 + $0x7a0] sm:$0xff]
                  %1010 = vst [vmem:[%s764 + $0x3d0] sm:$0xff] %v1009
                  %v1011 = vld [vmem:[%s763 + $0x7b0] sm:$0xff]
                  %1012 = vst [vmem:[%s764 + $0x3d8] sm:$0xff] %v1011
                  %v1013 = vld [vmem:[%s763 + $0x7c0] sm:$0xff]
                  %1014 = vst [vmem:[%s764 + $0x3e0] sm:$0xff] %v1013
                  %v1015 = vld [vmem:[%s763 + $0x7d0] sm:$0xff]
                  %1016 = vst [vmem:[%s764 + $0x3e8] sm:$0xff] %v1015
                  %v1017 = vld [vmem:[%s763 + $0x7e0] sm:$0xff]
                  %1018 = vst [vmem:[%s764 + $0x3f0] sm:$0xff] %v1017
                  %v1019 = vld [vmem:[%s763 + $0x7f0] sm:$0xff]
                  %1020 = vst [vmem:[%s764 + $0x3f8] sm:$0xff] %v1019
                  %v1021 = vld [vmem:[%s763 + $0x800] sm:$0xff]
                  %1022 = vst [vmem:[%s764 + $0x400] sm:$0xff] %v1021
                  %v1023 = vld [vmem:[%s763 + $0x810] sm:$0xff]
                  %1024 = vst [vmem:[%s764 + $0x408] sm:$0xff] %v1023
                  %v1025 = vld [vmem:[%s763 + $0x820] sm:$0xff]
                  %1026 = vst [vmem:[%s764 + $0x410] sm:$0xff] %v1025
                  %v1027 = vld [vmem:[%s763 + $0x830] sm:$0xff]
                  %1028 = vst [vmem:[%s764 + $0x418] sm:$0xff] %v1027
                  %v1029 = vld [vmem:[%s763 + $0x840] sm:$0xff]
                  %1030 = vst [vmem:[%s764 + $0x420] sm:$0xff] %v1029
                  %v1031 = vld [vmem:[%s763 + $0x850] sm:$0xff]
                  %1032 = vst [vmem:[%s764 + $0x428] sm:$0xff] %v1031
                  %v1033 = vld [vmem:[%s763 + $0x860] sm:$0xff]
                  %1034 = vst [vmem:[%s764 + $0x430] sm:$0xff] %v1033
                  %v1035 = vld [vmem:[%s763 + $0x870] sm:$0xff]
                  %1036 = vst [vmem:[%s764 + $0x438] sm:$0xff] %v1035
                  %v1037 = vld [vmem:[%s763 + $0x880] sm:$0xff]
                  %1038 = vst [vmem:[%s764 + $0x440] sm:$0xff] %v1037
                  %v1039 = vld [vmem:[%s763 + $0x890] sm:$0xff]
                  %1040 = vst [vmem:[%s764 + $0x448] sm:$0xff] %v1039
                  %v1041 = vld [vmem:[%s763 + $0x8a0] sm:$0xff]
                  %1042 = vst [vmem:[%s764 + $0x450] sm:$0xff] %v1041
                  %v1043 = vld [vmem:[%s763 + $0x8b0] sm:$0xff]
                  %1044 = vst [vmem:[%s764 + $0x458] sm:$0xff] %v1043
                  %v1045 = vld [vmem:[%s763 + $0x8c0] sm:$0xff]
                  %1046 = vst [vmem:[%s764 + $0x460] sm:$0xff] %v1045
                  %v1047 = vld [vmem:[%s763 + $0x8d0] sm:$0xff]
                  %1048 = vst [vmem:[%s764 + $0x468] sm:$0xff] %v1047
                  %v1049 = vld [vmem:[%s763 + $0x8e0] sm:$0xff]
                  %1050 = vst [vmem:[%s764 + $0x470] sm:$0xff] %v1049
                  %v1051 = vld [vmem:[%s763 + $0x8f0] sm:$0xff]
                  %1052 = vst [vmem:[%s764 + $0x478] sm:$0xff] %v1051
                  %v1053 = vld [vmem:[%s763 + $0x900] sm:$0xff]
                  %1054 = vst [vmem:[%s764 + $0x480] sm:$0xff] %v1053
                  %v1055 = vld [vmem:[%s763 + $0x910] sm:$0xff]
                  %1056 = vst [vmem:[%s764 + $0x488] sm:$0xff] %v1055
                  %v1057 = vld [vmem:[%s763 + $0x920] sm:$0xff]
                  %1058 = vst [vmem:[%s764 + $0x490] sm:$0xff] %v1057
                  %v1059 = vld [vmem:[%s763 + $0x930] sm:$0xff]
                  %1060 = vst [vmem:[%s764 + $0x498] sm:$0xff] %v1059
                  %v1061 = vld [vmem:[%s763 + $0x940] sm:$0xff]
                  %1062 = vst [vmem:[%s764 + $0x4a0] sm:$0xff] %v1061
                  %v1063 = vld [vmem:[%s763 + $0x950] sm:$0xff]
                  %1064 = vst [vmem:[%s764 + $0x4a8] sm:$0xff] %v1063
                  %v1065 = vld [vmem:[%s763 + $0x960] sm:$0xff]
                  %1066 = vst [vmem:[%s764 + $0x4b0] sm:$0xff] %v1065
                  %v1067 = vld [vmem:[%s763 + $0x970] sm:$0xff]
                  %1068 = vst [vmem:[%s764 + $0x4b8] sm:$0xff] %v1067
                  %v1069 = vld [vmem:[%s763 + $0x980] sm:$0xff]
                  %1070 = vst [vmem:[%s764 + $0x4c0] sm:$0xff] %v1069
                  %v1071 = vld [vmem:[%s763 + $0x990] sm:$0xff]
                  %1072 = vst [vmem:[%s764 + $0x4c8] sm:$0xff] %v1071
                  %v1073 = vld [vmem:[%s763 + $0x9a0] sm:$0xff]
                  %1074 = vst [vmem:[%s764 + $0x4d0] sm:$0xff] %v1073
                  %v1075 = vld [vmem:[%s763 + $0x9b0] sm:$0xff]
                  %1076 = vst [vmem:[%s764 + $0x4d8] sm:$0xff] %v1075
                  %v1077 = vld [vmem:[%s763 + $0x9c0] sm:$0xff]
                  %1078 = vst [vmem:[%s764 + $0x4e0] sm:$0xff] %v1077
                  %v1079 = vld [vmem:[%s763 + $0x9d0] sm:$0xff]
                  %1080 = vst [vmem:[%s764 + $0x4e8] sm:$0xff] %v1079
                  %v1081 = vld [vmem:[%s763 + $0x9e0] sm:$0xff]
                  %1082 = vst [vmem:[%s764 + $0x4f0] sm:$0xff] %v1081
                  %v1083 = vld [vmem:[%s763 + $0x9f0] sm:$0xff]
                  %1084 = vst [vmem:[%s764 + $0x4f8] sm:$0xff] %v1083
                  %v1085 = vld [vmem:[%s763 + $0xa00] sm:$0xff]
                  %1086 = vst [vmem:[%s764 + $0x500] sm:$0xff] %v1085
                  %v1087 = vld [vmem:[%s763 + $0xa10] sm:$0xff]
                  %1088 = vst [vmem:[%s764 + $0x508] sm:$0xff] %v1087
                  %v1089 = vld [vmem:[%s763 + $0xa20] sm:$0xff]
                  %1090 = vst [vmem:[%s764 + $0x510] sm:$0xff] %v1089
                  %v1091 = vld [vmem:[%s763 + $0xa30] sm:$0xff]
                  %1092 = vst [vmem:[%s764 + $0x518] sm:$0xff] %v1091
                  %v1093 = vld [vmem:[%s763 + $0xa40] sm:$0xff]
                  %1094 = vst [vmem:[%s764 + $0x520] sm:$0xff] %v1093
                  %v1095 = vld [vmem:[%s763 + $0xa50] sm:$0xff]
                  %1096 = vst [vmem:[%s764 + $0x528] sm:$0xff] %v1095
                  %v1097 = vld [vmem:[%s763 + $0xa60] sm:$0xff]
                  %1098 = vst [vmem:[%s764 + $0x530] sm:$0xff] %v1097
                  %v1099 = vld [vmem:[%s763 + $0xa70] sm:$0xff]
                  %1100 = vst [vmem:[%s764 + $0x538] sm:$0xff] %v1099
                  %v1101 = vld [vmem:[%s763 + $0xa80] sm:$0xff]
                  %1102 = vst [vmem:[%s764 + $0x540] sm:$0xff] %v1101
                  %v1103 = vld [vmem:[%s763 + $0xa90] sm:$0xff]
                  %1104 = vst [vmem:[%s764 + $0x548] sm:$0xff] %v1103
                  %v1105 = vld [vmem:[%s763 + $0xaa0] sm:$0xff]
                  %1106 = vst [vmem:[%s764 + $0x550] sm:$0xff] %v1105
                  %v1107 = vld [vmem:[%s763 + $0xab0] sm:$0xff]
                  %1108 = vst [vmem:[%s764 + $0x558] sm:$0xff] %v1107
                  %v1109 = vld [vmem:[%s763 + $0xac0] sm:$0xff]
                  %1110 = vst [vmem:[%s764 + $0x560] sm:$0xff] %v1109
                  %v1111 = vld [vmem:[%s763 + $0xad0] sm:$0xff]
                  %1112 = vst [vmem:[%s764 + $0x568] sm:$0xff] %v1111
                  %v1113 = vld [vmem:[%s763 + $0xae0] sm:$0xff]
                  %1114 = vst [vmem:[%s764 + $0x570] sm:$0xff] %v1113
                  %v1115 = vld [vmem:[%s763 + $0xaf0] sm:$0xff]
                  %1116 = vst [vmem:[%s764 + $0x578] sm:$0xff] %v1115
                  %v1117 = vld [vmem:[%s763 + $0xb00] sm:$0xff]
                  %1118 = vst [vmem:[%s764 + $0x580] sm:$0xff] %v1117
                  %v1119 = vld [vmem:[%s763 + $0xb10] sm:$0xff]
                  %1120 = vst [vmem:[%s764 + $0x588] sm:$0xff] %v1119
                  %v1121 = vld [vmem:[%s763 + $0xb20] sm:$0xff]
                  %1122 = vst [vmem:[%s764 + $0x590] sm:$0xff] %v1121
                  %v1123 = vld [vmem:[%s763 + $0xb30] sm:$0xff]
                  %1124 = vst [vmem:[%s764 + $0x598] sm:$0xff] %v1123
                  %v1125 = vld [vmem:[%s763 + $0xb40] sm:$0xff]
                  %1126 = vst [vmem:[%s764 + $0x5a0] sm:$0xff] %v1125
                  %v1127 = vld [vmem:[%s763 + $0xb50] sm:$0xff]
                  %1128 = vst [vmem:[%s764 + $0x5a8] sm:$0xff] %v1127
                  %v1129 = vld [vmem:[%s763 + $0xb60] sm:$0xff]
                  %1130 = vst [vmem:[%s764 + $0x5b0] sm:$0xff] %v1129
                  %v1131 = vld [vmem:[%s763 + $0xb70] sm:$0xff]
                  %1132 = vst [vmem:[%s764 + $0x5b8] sm:$0xff] %v1131
                  %v1133 = vld [vmem:[%s763 + $0xb80] sm:$0xff]
                  %1134 = vst [vmem:[%s764 + $0x5c0] sm:$0xff] %v1133
                  %v1135 = vld [vmem:[%s763 + $0xb90] sm:$0xff]
                  %1136 = vst [vmem:[%s764 + $0x5c8] sm:$0xff] %v1135
                  %v1137 = vld [vmem:[%s763 + $0xba0] sm:$0xff]
                  %1138 = vst [vmem:[%s764 + $0x5d0] sm:$0xff] %v1137
                  %v1139 = vld [vmem:[%s763 + $0xbb0] sm:$0xff]
                  %1140 = vst [vmem:[%s764 + $0x5d8] sm:$0xff] %v1139
                  %v1141 = vld [vmem:[%s763 + $0xbc0] sm:$0xff]
                  %1142 = vst [vmem:[%s764 + $0x5e0] sm:$0xff] %v1141
                  %v1143 = vld [vmem:[%s763 + $0xbd0] sm:$0xff]
                  %1144 = vst [vmem:[%s764 + $0x5e8] sm:$0xff] %v1143
                  %v1145 = vld [vmem:[%s763 + $0xbe0] sm:$0xff]
                  %1146 = vst [vmem:[%s764 + $0x5f0] sm:$0xff] %v1145
                  %v1147 = vld [vmem:[%s763 + $0xbf0] sm:$0xff]
                  %1148 = vst [vmem:[%s764 + $0x5f8] sm:$0xff] %v1147
                  %v1149 = vld [vmem:[%s763 + $0xc00] sm:$0xff]
                  %1150 = vst [vmem:[%s764 + $0x600] sm:$0xff] %v1149
                  %v1151 = vld [vmem:[%s763 + $0xc10] sm:$0xff]
                  %1152 = vst [vmem:[%s764 + $0x608] sm:$0xff] %v1151
                  %v1153 = vld [vmem:[%s763 + $0xc20] sm:$0xff]
                  %1154 = vst [vmem:[%s764 + $0x610] sm:$0xff] %v1153
                  %v1155 = vld [vmem:[%s763 + $0xc30] sm:$0xff]
                  %1156 = vst [vmem:[%s764 + $0x618] sm:$0xff] %v1155
                  %v1157 = vld [vmem:[%s763 + $0xc40] sm:$0xff]
                  %1158 = vst [vmem:[%s764 + $0x620] sm:$0xff] %v1157
                  %v1159 = vld [vmem:[%s763 + $0xc50] sm:$0xff]
                  %1160 = vst [vmem:[%s764 + $0x628] sm:$0xff] %v1159
                  %v1161 = vld [vmem:[%s763 + $0xc60] sm:$0xff]
                  %1162 = vst [vmem:[%s764 + $0x630] sm:$0xff] %v1161
                  %v1163 = vld [vmem:[%s763 + $0xc70] sm:$0xff]
                  %1164 = vst [vmem:[%s764 + $0x638] sm:$0xff] %v1163
                  %v1165 = vld [vmem:[%s763 + $0xc80] sm:$0xff]
                  %1166 = vst [vmem:[%s764 + $0x640] sm:$0xff] %v1165
                  %v1167 = vld [vmem:[%s763 + $0xc90] sm:$0xff]
                  %1168 = vst [vmem:[%s764 + $0x648] sm:$0xff] %v1167
                  %v1169 = vld [vmem:[%s763 + $0xca0] sm:$0xff]
                  %1170 = vst [vmem:[%s764 + $0x650] sm:$0xff] %v1169
                  %v1171 = vld [vmem:[%s763 + $0xcb0] sm:$0xff]
                  %1172 = vst [vmem:[%s764 + $0x658] sm:$0xff] %v1171
                  %v1173 = vld [vmem:[%s763 + $0xcc0] sm:$0xff]
                  %1174 = vst [vmem:[%s764 + $0x660] sm:$0xff] %v1173
                  %v1175 = vld [vmem:[%s763 + $0xcd0] sm:$0xff]
                  %1176 = vst [vmem:[%s764 + $0x668] sm:$0xff] %v1175
                  %v1177 = vld [vmem:[%s763 + $0xce0] sm:$0xff]
                  %1178 = vst [vmem:[%s764 + $0x670] sm:$0xff] %v1177
                  %v1179 = vld [vmem:[%s763 + $0xcf0] sm:$0xff]
                  %1180 = vst [vmem:[%s764 + $0x678] sm:$0xff] %v1179
                  %v1181 = vld [vmem:[%s763 + $0xd00] sm:$0xff]
                  %1182 = vst [vmem:[%s764 + $0x680] sm:$0xff] %v1181
                  %v1183 = vld [vmem:[%s763 + $0xd10] sm:$0xff]
                  %1184 = vst [vmem:[%s764 + $0x688] sm:$0xff] %v1183
                  %v1185 = vld [vmem:[%s763 + $0xd20] sm:$0xff]
                  %1186 = vst [vmem:[%s764 + $0x690] sm:$0xff] %v1185
                  %v1187 = vld [vmem:[%s763 + $0xd30] sm:$0xff]
                  %1188 = vst [vmem:[%s764 + $0x698] sm:$0xff] %v1187
                  %v1189 = vld [vmem:[%s763 + $0xd40] sm:$0xff]
                  %1190 = vst [vmem:[%s764 + $0x6a0] sm:$0xff] %v1189
                  %v1191 = vld [vmem:[%s763 + $0xd50] sm:$0xff]
                  %1192 = vst [vmem:[%s764 + $0x6a8] sm:$0xff] %v1191
                  %v1193 = vld [vmem:[%s763 + $0xd60] sm:$0xff]
                  %1194 = vst [vmem:[%s764 + $0x6b0] sm:$0xff] %v1193
                  %v1195 = vld [vmem:[%s763 + $0xd70] sm:$0xff]
                  %1196 = vst [vmem:[%s764 + $0x6b8] sm:$0xff] %v1195
                  %v1197 = vld [vmem:[%s763 + $0xd80] sm:$0xff]
                  %1198 = vst [vmem:[%s764 + $0x6c0] sm:$0xff] %v1197
                  %v1199 = vld [vmem:[%s763 + $0xd90] sm:$0xff]
                  %1200 = vst [vmem:[%s764 + $0x6c8] sm:$0xff] %v1199
                  %v1201 = vld [vmem:[%s763 + $0xda0] sm:$0xff]
                  %1202 = vst [vmem:[%s764 + $0x6d0] sm:$0xff] %v1201
                  %v1203 = vld [vmem:[%s763 + $0xdb0] sm:$0xff]
                  %1204 = vst [vmem:[%s764 + $0x6d8] sm:$0xff] %v1203
                  %v1205 = vld [vmem:[%s763 + $0xdc0] sm:$0xff]
                  %1206 = vst [vmem:[%s764 + $0x6e0] sm:$0xff] %v1205
                  %v1207 = vld [vmem:[%s763 + $0xdd0] sm:$0xff]
                  %1208 = vst [vmem:[%s764 + $0x6e8] sm:$0xff] %v1207
                  %v1209 = vld [vmem:[%s763 + $0xde0] sm:$0xff]
                  %1210 = vst [vmem:[%s764 + $0x6f0] sm:$0xff] %v1209
                  %v1211 = vld [vmem:[%s763 + $0xdf0] sm:$0xff]
                  %1212 = vst [vmem:[%s764 + $0x6f8] sm:$0xff] %v1211
                  %v1213 = vld [vmem:[%s763 + $0xe00] sm:$0xff]
                  %1214 = vst [vmem:[%s764 + $0x700] sm:$0xff] %v1213
                  %v1215 = vld [vmem:[%s763 + $0xe10] sm:$0xff]
                  %1216 = vst [vmem:[%s764 + $0x708] sm:$0xff] %v1215
                  %v1217 = vld [vmem:[%s763 + $0xe20] sm:$0xff]
                  %1218 = vst [vmem:[%s764 + $0x710] sm:$0xff] %v1217
                  %v1219 = vld [vmem:[%s763 + $0xe30] sm:$0xff]
                  %1220 = vst [vmem:[%s764 + $0x718] sm:$0xff] %v1219
                  %v1221 = vld [vmem:[%s763 + $0xe40] sm:$0xff]
                  %1222 = vst [vmem:[%s764 + $0x720] sm:$0xff] %v1221
                  %v1223 = vld [vmem:[%s763 + $0xe50] sm:$0xff]
                  %1224 = vst [vmem:[%s764 + $0x728] sm:$0xff] %v1223
                  %v1225 = vld [vmem:[%s763 + $0xe60] sm:$0xff]
                  %1226 = vst [vmem:[%s764 + $0x730] sm:$0xff] %v1225
                  %v1227 = vld [vmem:[%s763 + $0xe70] sm:$0xff]
                  %1228 = vst [vmem:[%s764 + $0x738] sm:$0xff] %v1227
                  %v1229 = vld [vmem:[%s763 + $0xe80] sm:$0xff]
                  %1230 = vst [vmem:[%s764 + $0x740] sm:$0xff] %v1229
                  %v1231 = vld [vmem:[%s763 + $0xe90] sm:$0xff]
                  %1232 = vst [vmem:[%s764 + $0x748] sm:$0xff] %v1231
                  %v1233 = vld [vmem:[%s763 + $0xea0] sm:$0xff]
                  %1234 = vst [vmem:[%s764 + $0x750] sm:$0xff] %v1233
                  %v1235 = vld [vmem:[%s763 + $0xeb0] sm:$0xff]
                  %1236 = vst [vmem:[%s764 + $0x758] sm:$0xff] %v1235
                  %v1237 = vld [vmem:[%s763 + $0xec0] sm:$0xff]
                  %1238 = vst [vmem:[%s764 + $0x760] sm:$0xff] %v1237
                  %v1239 = vld [vmem:[%s763 + $0xed0] sm:$0xff]
                  %1240 = vst [vmem:[%s764 + $0x768] sm:$0xff] %v1239
                  %v1241 = vld [vmem:[%s763 + $0xee0] sm:$0xff]
                  %1242 = vst [vmem:[%s764 + $0x770] sm:$0xff] %v1241
                  %v1243 = vld [vmem:[%s763 + $0xef0] sm:$0xff]
                  %1244 = vst [vmem:[%s764 + $0x778] sm:$0xff] %v1243
                  %v1245 = vld [vmem:[%s763 + $0xf00] sm:$0xff]
                  %1246 = vst [vmem:[%s764 + $0x780] sm:$0xff] %v1245
                  %v1247 = vld [vmem:[%s763 + $0xf10] sm:$0xff]
                  %1248 = vst [vmem:[%s764 + $0x788] sm:$0xff] %v1247
                  %v1249 = vld [vmem:[%s763 + $0xf20] sm:$0xff]
                  %1250 = vst [vmem:[%s764 + $0x790] sm:$0xff] %v1249
                  %v1251 = vld [vmem:[%s763 + $0xf30] sm:$0xff]
                  %1252 = vst [vmem:[%s764 + $0x798] sm:$0xff] %v1251
                  %v1253 = vld [vmem:[%s763 + $0xf40] sm:$0xff]
                  %1254 = vst [vmem:[%s764 + $0x7a0] sm:$0xff] %v1253
                  %v1255 = vld [vmem:[%s763 + $0xf50] sm:$0xff]
                  %1256 = vst [vmem:[%s764 + $0x7a8] sm:$0xff] %v1255
                  %v1257 = vld [vmem:[%s763 + $0xf60] sm:$0xff]
                  %1258 = vst [vmem:[%s764 + $0x7b0] sm:$0xff] %v1257
                  %v1259 = vld [vmem:[%s763 + $0xf70] sm:$0xff]
                  %1260 = vst [vmem:[%s764 + $0x7b8] sm:$0xff] %v1259
                  %v1261 = vld [vmem:[%s763 + $0xf80] sm:$0xff]
                  %1262 = vst [vmem:[%s764 + $0x7c0] sm:$0xff] %v1261
                  %v1263 = vld [vmem:[%s763 + $0xf90] sm:$0xff]
                  %1264 = vst [vmem:[%s764 + $0x7c8] sm:$0xff] %v1263
                  %v1265 = vld [vmem:[%s763 + $0xfa0] sm:$0xff]
                  %1266 = vst [vmem:[%s764 + $0x7d0] sm:$0xff] %v1265
                  %v1267 = vld [vmem:[%s763 + $0xfb0] sm:$0xff]
                  %1268 = vst [vmem:[%s764 + $0x7d8] sm:$0xff] %v1267
                  %v1269 = vld [vmem:[%s763 + $0xfc0] sm:$0xff]
                  %1270 = vst [vmem:[%s764 + $0x7e0] sm:$0xff] %v1269
                  %v1271 = vld [vmem:[%s763 + $0xfd0] sm:$0xff]
                  %1272 = vst [vmem:[%s764 + $0x7e8] sm:$0xff] %v1271
                  %v1273 = vld [vmem:[%s763 + $0xfe0] sm:$0xff]
                  %1274 = vst [vmem:[%s764 + $0x7f0] sm:$0xff] %v1273
                  %v1275 = vld [vmem:[%s763 + $0xff0] sm:$0xff]
                  %1276 = vst [vmem:[%s764 + $0x7f8] sm:$0xff] %v1275
                  %v1277 = vld [vmem:[%s763 + $0x1000] sm:$0xff]
                  %1278 = vst [vmem:[%s764 + $0x800] sm:$0xff] %v1277
                  %v1279 = vld [vmem:[%s763 + $0x1010] sm:$0xff]
                  %1280 = vst [vmem:[%s764 + $0x808] sm:$0xff] %v1279
                  %v1281 = vld [vmem:[%s763 + $0x1020] sm:$0xff]
                  %1282 = vst [vmem:[%s764 + $0x810] sm:$0xff] %v1281
                  %v1283 = vld [vmem:[%s763 + $0x1030] sm:$0xff]
                  %1284 = vst [vmem:[%s764 + $0x818] sm:$0xff] %v1283
                  %v1285 = vld [vmem:[%s763 + $0x1040] sm:$0xff]
                  %1286 = vst [vmem:[%s764 + $0x820] sm:$0xff] %v1285
                  %v1287 = vld [vmem:[%s763 + $0x1050] sm:$0xff]
                  %1288 = vst [vmem:[%s764 + $0x828] sm:$0xff] %v1287
                  %v1289 = vld [vmem:[%s763 + $0x1060] sm:$0xff]
                  %1290 = vst [vmem:[%s764 + $0x830] sm:$0xff] %v1289
                  %v1291 = vld [vmem:[%s763 + $0x1070] sm:$0xff]
                  %1292 = vst [vmem:[%s764 + $0x838] sm:$0xff] %v1291
                  %v1293 = vld [vmem:[%s763 + $0x1080] sm:$0xff]
                  %1294 = vst [vmem:[%s764 + $0x840] sm:$0xff] %v1293
                  %v1295 = vld [vmem:[%s763 + $0x1090] sm:$0xff]
                  %1296 = vst [vmem:[%s764 + $0x848] sm:$0xff] %v1295
                  %v1297 = vld [vmem:[%s763 + $0x10a0] sm:$0xff]
                  %1298 = vst [vmem:[%s764 + $0x850] sm:$0xff] %v1297
                  %v1299 = vld [vmem:[%s763 + $0x10b0] sm:$0xff]
                  %1300 = vst [vmem:[%s764 + $0x858] sm:$0xff] %v1299
                  %v1301 = vld [vmem:[%s763 + $0x10c0] sm:$0xff]
                  %1302 = vst [vmem:[%s764 + $0x860] sm:$0xff] %v1301
                  %v1303 = vld [vmem:[%s763 + $0x10d0] sm:$0xff]
                  %1304 = vst [vmem:[%s764 + $0x868] sm:$0xff] %v1303
                  %v1305 = vld [vmem:[%s763 + $0x10e0] sm:$0xff]
                  %1306 = vst [vmem:[%s764 + $0x870] sm:$0xff] %v1305
                  %v1307 = vld [vmem:[%s763 + $0x10f0] sm:$0xff]
                  %1308 = vst [vmem:[%s764 + $0x878] sm:$0xff] %v1307
                  %v1309 = vld [vmem:[%s763 + $0x1100] sm:$0xff]
                  %1310 = vst [vmem:[%s764 + $0x880] sm:$0xff] %v1309
                  %v1311 = vld [vmem:[%s763 + $0x1110] sm:$0xff]
                  %1312 = vst [vmem:[%s764 + $0x888] sm:$0xff] %v1311
                  %v1313 = vld [vmem:[%s763 + $0x1120] sm:$0xff]
                  %1314 = vst [vmem:[%s764 + $0x890] sm:$0xff] %v1313
                  %v1315 = vld [vmem:[%s763 + $0x1130] sm:$0xff]
                  %1316 = vst [vmem:[%s764 + $0x898] sm:$0xff] %v1315
                  %v1317 = vld [vmem:[%s763 + $0x1140] sm:$0xff]
                  %1318 = vst [vmem:[%s764 + $0x8a0] sm:$0xff] %v1317
                  %v1319 = vld [vmem:[%s763 + $0x1150] sm:$0xff]
                  %1320 = vst [vmem:[%s764 + $0x8a8] sm:$0xff] %v1319
                  %v1321 = vld [vmem:[%s763 + $0x1160] sm:$0xff]
                  %1322 = vst [vmem:[%s764 + $0x8b0] sm:$0xff] %v1321
                  %v1323 = vld [vmem:[%s763 + $0x1170] sm:$0xff]
                  %1324 = vst [vmem:[%s764 + $0x8b8] sm:$0xff] %v1323
                  %v1325 = vld [vmem:[%s763 + $0x1180] sm:$0xff]
                  %1326 = vst [vmem:[%s764 + $0x8c0] sm:$0xff] %v1325
                  %v1327 = vld [vmem:[%s763 + $0x1190] sm:$0xff]
                  %1328 = vst [vmem:[%s764 + $0x8c8] sm:$0xff] %v1327
                  %v1329 = vld [vmem:[%s763 + $0x11a0] sm:$0xff]
                  %1330 = vst [vmem:[%s764 + $0x8d0] sm:$0xff] %v1329
                  %v1331 = vld [vmem:[%s763 + $0x11b0] sm:$0xff]
                  %1332 = vst [vmem:[%s764 + $0x8d8] sm:$0xff] %v1331
                  %v1333 = vld [vmem:[%s763 + $0x11c0] sm:$0xff]
                  %1334 = vst [vmem:[%s764 + $0x8e0] sm:$0xff] %v1333
                  %v1335 = vld [vmem:[%s763 + $0x11d0] sm:$0xff]
                  %1336 = vst [vmem:[%s764 + $0x8e8] sm:$0xff] %v1335
                  %v1337 = vld [vmem:[%s763 + $0x11e0] sm:$0xff]
                  %1338 = vst [vmem:[%s764 + $0x8f0] sm:$0xff] %v1337
                  %v1339 = vld [vmem:[%s763 + $0x11f0] sm:$0xff]
                  %1340 = vst [vmem:[%s764 + $0x8f8] sm:$0xff] %v1339
                $region52: #{yolov10_forward.8} parent=46 // loop_footer
                  %s762 = sadd.s32 1, %s758
                $region53: #{yolov10_forward.8} parent=46 // loop_footer_branch
                  %757 = sbr.rel target = $region49
                $region54: #{yolov10_forward.8} parent=46 // loop_exit
                  _
              $region47: #{yolov10_forward.8} parent=31 // pred_fallthru
                _
              // Predicated region
              $region55: #{yolov10_forward.8} parent=31 // pred_check
                _
              $region56: #{yolov10_forward.8} parent=31 // pred_check_branch
                %1342 = sbr.rel target = $region58
              $region57: #{yolov10_forward.8} parent=31 // pred_region
                _
              $region58: #{yolov10_forward.8} parent=31 // pred_fallthru
                _
            $region32: #{yolov10_forward.8} parent=27 // pred_fallthru
              _
            // Predicated region
            $region33: #{yolov10_forward.8} parent=27 // pred_check
              _
            $region34: #{yolov10_forward.8} parent=27 // pred_check_branch
              %169 = sbr.rel target = $region36
            $region35: #{yolov10_forward.8} parent=27 // pred_region
              loop: start=0, step=1, limit=1
              $region37: #{yolov10_forward.8} parent=35 // loop_pre_header
                _
              $region38: #{yolov10_forward.8} parent=35 // loop_header
                %s172 = sphi 0, %s176
                %p173 = scmp.ge.s32.totalorder %s172, 1
                %s177 = sphi %s163, %s163
                %s178 = sphi %s160, %s160
              $region39: #{yolov10_forward.8} parent=35 // loop_header_branch
                %175 = sbr.rel (%p173) target = $region43
              $region40: #{yolov10_forward.8} parent=35 // loop_body
                %v179 = vld [vmem:[%s177] sm:$0xff]
                %180 = vst [vmem:[%s178] sm:$0xff] %v179
                %v181 = vld [vmem:[%s177 + $0x10] sm:$0xff]
                %182 = vst [vmem:[%s178 + $0x8] sm:$0xff] %v181
                %v183 = vld [vmem:[%s177 + $0x20] sm:$0xff]
                %184 = vst [vmem:[%s178 + $0x10] sm:$0xff] %v183
                %v185 = vld [vmem:[%s177 + $0x30] sm:$0xff]
                %186 = vst [vmem:[%s178 + $0x18] sm:$0xff] %v185
                %v187 = vld [vmem:[%s177 + $0x40] sm:$0xff]
                %188 = vst [vmem:[%s178 + $0x20] sm:$0xff] %v187
                %v189 = vld [vmem:[%s177 + $0x50] sm:$0xff]
                %190 = vst [vmem:[%s178 + $0x28] sm:$0xff] %v189
                %v191 = vld [vmem:[%s177 + $0x60] sm:$0xff]
                %192 = vst [vmem:[%s178 + $0x30] sm:$0xff] %v191
                %v193 = vld [vmem:[%s177 + $0x70] sm:$0xff]
                %194 = vst [vmem:[%s178 + $0x38] sm:$0xff] %v193
                %v195 = vld [vmem:[%s177 + $0x80] sm:$0xff]
                %196 = vst [vmem:[%s178 + $0x40] sm:$0xff] %v195
                %v197 = vld [vmem:[%s177 + $0x90] sm:$0xff]
                %198 = vst [vmem:[%s178 + $0x48] sm:$0xff] %v197
                %v199 = vld [vmem:[%s177 + $0xa0] sm:$0xff]
                %200 = vst [vmem:[%s178 + $0x50] sm:$0xff] %v199
                %v201 = vld [vmem:[%s177 + $0xb0] sm:$0xff]
                %202 = vst [vmem:[%s178 + $0x58] sm:$0xff] %v201
                %v203 = vld [vmem:[%s177 + $0xc0] sm:$0xff]
                %204 = vst [vmem:[%s178 + $0x60] sm:$0xff] %v203
                %v205 = vld [vmem:[%s177 + $0xd0] sm:$0xff]
                %206 = vst [vmem:[%s178 + $0x68] sm:$0xff] %v205
                %v207 = vld [vmem:[%s177 + $0xe0] sm:$0xff]
                %208 = vst [vmem:[%s178 + $0x70] sm:$0xff] %v207
                %v209 = vld [vmem:[%s177 + $0xf0] sm:$0xff]
                %210 = vst [vmem:[%s178 + $0x78] sm:$0xff] %v209
                %v211 = vld [vmem:[%s177 + $0x100] sm:$0xff]
                %212 = vst [vmem:[%s178 + $0x80] sm:$0xff] %v211
                %v213 = vld [vmem:[%s177 + $0x110] sm:$0xff]
                %214 = vst [vmem:[%s178 + $0x88] sm:$0xff] %v213
                %v215 = vld [vmem:[%s177 + $0x120] sm:$0xff]
                %216 = vst [vmem:[%s178 + $0x90] sm:$0xff] %v215
                %v217 = vld [vmem:[%s177 + $0x130] sm:$0xff]
                %218 = vst [vmem:[%s178 + $0x98] sm:$0xff] %v217
                %v219 = vld [vmem:[%s177 + $0x140] sm:$0xff]
                %220 = vst [vmem:[%s178 + $0xa0] sm:$0xff] %v219
                %v221 = vld [vmem:[%s177 + $0x150] sm:$0xff]
                %222 = vst [vmem:[%s178 + $0xa8] sm:$0xff] %v221
                %v223 = vld [vmem:[%s177 + $0x160] sm:$0xff]
                %224 = vst [vmem:[%s178 + $0xb0] sm:$0xff] %v223
                %v225 = vld [vmem:[%s177 + $0x170] sm:$0xff]
                %226 = vst [vmem:[%s178 + $0xb8] sm:$0xff] %v225
                %v227 = vld [vmem:[%s177 + $0x180] sm:$0xff]
                %228 = vst [vmem:[%s178 + $0xc0] sm:$0xff] %v227
                %v229 = vld [vmem:[%s177 + $0x190] sm:$0xff]
                %230 = vst [vmem:[%s178 + $0xc8] sm:$0xff] %v229
                %v231 = vld [vmem:[%s177 + $0x1a0] sm:$0xff]
                %232 = vst [vmem:[%s178 + $0xd0] sm:$0xff] %v231
                %v233 = vld [vmem:[%s177 + $0x1b0] sm:$0xff]
                %234 = vst [vmem:[%s178 + $0xd8] sm:$0xff] %v233
                %v235 = vld [vmem:[%s177 + $0x1c0] sm:$0xff]
                %236 = vst [vmem:[%s178 + $0xe0] sm:$0xff] %v235
                %v237 = vld [vmem:[%s177 + $0x1d0] sm:$0xff]
                %238 = vst [vmem:[%s178 + $0xe8] sm:$0xff] %v237
                %v239 = vld [vmem:[%s177 + $0x1e0] sm:$0xff]
                %240 = vst [vmem:[%s178 + $0xf0] sm:$0xff] %v239
                %v241 = vld [vmem:[%s177 + $0x1f0] sm:$0xff]
                %242 = vst [vmem:[%s178 + $0xf8] sm:$0xff] %v241
                %v243 = vld [vmem:[%s177 + $0x200] sm:$0xff]
                %244 = vst [vmem:[%s178 + $0x100] sm:$0xff] %v243
                %v245 = vld [vmem:[%s177 + $0x210] sm:$0xff]
                %246 = vst [vmem:[%s178 + $0x108] sm:$0xff] %v245
                %v247 = vld [vmem:[%s177 + $0x220] sm:$0xff]
                %248 = vst [vmem:[%s178 + $0x110] sm:$0xff] %v247
                %v249 = vld [vmem:[%s177 + $0x230] sm:$0xff]
                %250 = vst [vmem:[%s178 + $0x118] sm:$0xff] %v249
                %v251 = vld [vmem:[%s177 + $0x240] sm:$0xff]
                %252 = vst [vmem:[%s178 + $0x120] sm:$0xff] %v251
                %v253 = vld [vmem:[%s177 + $0x250] sm:$0xff]
                %254 = vst [vmem:[%s178 + $0x128] sm:$0xff] %v253
                %v255 = vld [vmem:[%s177 + $0x260] sm:$0xff]
                %256 = vst [vmem:[%s178 + $0x130] sm:$0xff] %v255
                %v257 = vld [vmem:[%s177 + $0x270] sm:$0xff]
                %258 = vst [vmem:[%s178 + $0x138] sm:$0xff] %v257
                %v259 = vld [vmem:[%s177 + $0x280] sm:$0xff]
                %260 = vst [vmem:[%s178 + $0x140] sm:$0xff] %v259
                %v261 = vld [vmem:[%s177 + $0x290] sm:$0xff]
                %262 = vst [vmem:[%s178 + $0x148] sm:$0xff] %v261
                %v263 = vld [vmem:[%s177 + $0x2a0] sm:$0xff]
                %264 = vst [vmem:[%s178 + $0x150] sm:$0xff] %v263
                %v265 = vld [vmem:[%s177 + $0x2b0] sm:$0xff]
                %266 = vst [vmem:[%s178 + $0x158] sm:$0xff] %v265
                %v267 = vld [vmem:[%s177 + $0x2c0] sm:$0xff]
                %268 = vst [vmem:[%s178 + $0x160] sm:$0xff] %v267
                %v269 = vld [vmem:[%s177 + $0x2d0] sm:$0xff]
                %270 = vst [vmem:[%s178 + $0x168] sm:$0xff] %v269
                %v271 = vld [vmem:[%s177 + $0x2e0] sm:$0xff]
                %272 = vst [vmem:[%s178 + $0x170] sm:$0xff] %v271
                %v273 = vld [vmem:[%s177 + $0x2f0] sm:$0xff]
                %274 = vst [vmem:[%s178 + $0x178] sm:$0xff] %v273
                %v275 = vld [vmem:[%s177 + $0x300] sm:$0xff]
                %276 = vst [vmem:[%s178 + $0x180] sm:$0xff] %v275
                %v277 = vld [vmem:[%s177 + $0x310] sm:$0xff]
                %278 = vst [vmem:[%s178 + $0x188] sm:$0xff] %v277
                %v279 = vld [vmem:[%s177 + $0x320] sm:$0xff]
                %280 = vst [vmem:[%s178 + $0x190] sm:$0xff] %v279
                %v281 = vld [vmem:[%s177 + $0x330] sm:$0xff]
                %282 = vst [vmem:[%s178 + $0x198] sm:$0xff] %v281
                %v283 = vld [vmem:[%s177 + $0x340] sm:$0xff]
                %284 = vst [vmem:[%s178 + $0x1a0] sm:$0xff] %v283
                %v285 = vld [vmem:[%s177 + $0x350] sm:$0xff]
                %286 = vst [vmem:[%s178 + $0x1a8] sm:$0xff] %v285
                %v287 = vld [vmem:[%s177 + $0x360] sm:$0xff]
                %288 = vst [vmem:[%s178 + $0x1b0] sm:$0xff] %v287
                %v289 = vld [vmem:[%s177 + $0x370] sm:$0xff]
                %290 = vst [vmem:[%s178 + $0x1b8] sm:$0xff] %v289
                %v291 = vld [vmem:[%s177 + $0x380] sm:$0xff]
                %292 = vst [vmem:[%s178 + $0x1c0] sm:$0xff] %v291
                %v293 = vld [vmem:[%s177 + $0x390] sm:$0xff]
                %294 = vst [vmem:[%s178 + $0x1c8] sm:$0xff] %v293
                %v295 = vld [vmem:[%s177 + $0x3a0] sm:$0xff]
                %296 = vst [vmem:[%s178 + $0x1d0] sm:$0xff] %v295
                %v297 = vld [vmem:[%s177 + $0x3b0] sm:$0xff]
                %298 = vst [vmem:[%s178 + $0x1d8] sm:$0xff] %v297
                %v299 = vld [vmem:[%s177 + $0x3c0] sm:$0xff]
                %300 = vst [vmem:[%s178 + $0x1e0] sm:$0xff] %v299
                %v301 = vld [vmem:[%s177 + $0x3d0] sm:$0xff]
                %302 = vst [vmem:[%s178 + $0x1e8] sm:$0xff] %v301
                %v303 = vld [vmem:[%s177 + $0x3e0] sm:$0xff]
                %304 = vst [vmem:[%s178 + $0x1f0] sm:$0xff] %v303
                %v305 = vld [vmem:[%s177 + $0x3f0] sm:$0xff]
                %306 = vst [vmem:[%s178 + $0x1f8] sm:$0xff] %v305
                %v307 = vld [vmem:[%s177 + $0x400] sm:$0xff]
                %308 = vst [vmem:[%s178 + $0x200] sm:$0xff] %v307
                %v309 = vld [vmem:[%s177 + $0x410] sm:$0xff]
                %310 = vst [vmem:[%s178 + $0x208] sm:$0xff] %v309
                %v311 = vld [vmem:[%s177 + $0x420] sm:$0xff]
                %312 = vst [vmem:[%s178 + $0x210] sm:$0xff] %v311
                %v313 = vld [vmem:[%s177 + $0x430] sm:$0xff]
                %314 = vst [vmem:[%s178 + $0x218] sm:$0xff] %v313
                %v315 = vld [vmem:[%s177 + $0x440] sm:$0xff]
                %316 = vst [vmem:[%s178 + $0x220] sm:$0xff] %v315
                %v317 = vld [vmem:[%s177 + $0x450] sm:$0xff]
                %318 = vst [vmem:[%s178 + $0x228] sm:$0xff] %v317
                %v319 = vld [vmem:[%s177 + $0x460] sm:$0xff]
                %320 = vst [vmem:[%s178 + $0x230] sm:$0xff] %v319
                %v321 = vld [vmem:[%s177 + $0x470] sm:$0xff]
                %322 = vst [vmem:[%s178 + $0x238] sm:$0xff] %v321
                %v323 = vld [vmem:[%s177 + $0x480] sm:$0xff]
                %324 = vst [vmem:[%s178 + $0x240] sm:$0xff] %v323
                %v325 = vld [vmem:[%s177 + $0x490] sm:$0xff]
                %326 = vst [vmem:[%s178 + $0x248] sm:$0xff] %v325
                %v327 = vld [vmem:[%s177 + $0x4a0] sm:$0xff]
                %328 = vst [vmem:[%s178 + $0x250] sm:$0xff] %v327
                %v329 = vld [vmem:[%s177 + $0x4b0] sm:$0xff]
                %330 = vst [vmem:[%s178 + $0x258] sm:$0xff] %v329
                %v331 = vld [vmem:[%s177 + $0x4c0] sm:$0xff]
                %332 = vst [vmem:[%s178 + $0x260] sm:$0xff] %v331
                %v333 = vld [vmem:[%s177 + $0x4d0] sm:$0xff]
                %334 = vst [vmem:[%s178 + $0x268] sm:$0xff] %v333
                %v335 = vld [vmem:[%s177 + $0x4e0] sm:$0xff]
                %336 = vst [vmem:[%s178 + $0x270] sm:$0xff] %v335
                %v337 = vld [vmem:[%s177 + $0x4f0] sm:$0xff]
                %338 = vst [vmem:[%s178 + $0x278] sm:$0xff] %v337
                %v339 = vld [vmem:[%s177 + $0x500] sm:$0xff]
                %340 = vst [vmem:[%s178 + $0x280] sm:$0xff] %v339
                %v341 = vld [vmem:[%s177 + $0x510] sm:$0xff]
                %342 = vst [vmem:[%s178 + $0x288] sm:$0xff] %v341
                %v343 = vld [vmem:[%s177 + $0x520] sm:$0xff]
                %344 = vst [vmem:[%s178 + $0x290] sm:$0xff] %v343
                %v345 = vld [vmem:[%s177 + $0x530] sm:$0xff]
                %346 = vst [vmem:[%s178 + $0x298] sm:$0xff] %v345
                %v347 = vld [vmem:[%s177 + $0x540] sm:$0xff]
                %348 = vst [vmem:[%s178 + $0x2a0] sm:$0xff] %v347
                %v349 = vld [vmem:[%s177 + $0x550] sm:$0xff]
                %350 = vst [vmem:[%s178 + $0x2a8] sm:$0xff] %v349
                %v351 = vld [vmem:[%s177 + $0x560] sm:$0xff]
                %352 = vst [vmem:[%s178 + $0x2b0] sm:$0xff] %v351
                %v353 = vld [vmem:[%s177 + $0x570] sm:$0xff]
                %354 = vst [vmem:[%s178 + $0x2b8] sm:$0xff] %v353
                %v355 = vld [vmem:[%s177 + $0x580] sm:$0xff]
                %356 = vst [vmem:[%s178 + $0x2c0] sm:$0xff] %v355
                %v357 = vld [vmem:[%s177 + $0x590] sm:$0xff]
                %358 = vst [vmem:[%s178 + $0x2c8] sm:$0xff] %v357
                %v359 = vld [vmem:[%s177 + $0x5a0] sm:$0xff]
                %360 = vst [vmem:[%s178 + $0x2d0] sm:$0xff] %v359
                %v361 = vld [vmem:[%s177 + $0x5b0] sm:$0xff]
                %362 = vst [vmem:[%s178 + $0x2d8] sm:$0xff] %v361
                %v363 = vld [vmem:[%s177 + $0x5c0] sm:$0xff]
                %364 = vst [vmem:[%s178 + $0x2e0] sm:$0xff] %v363
                %v365 = vld [vmem:[%s177 + $0x5d0] sm:$0xff]
                %366 = vst [vmem:[%s178 + $0x2e8] sm:$0xff] %v365
                %v367 = vld [vmem:[%s177 + $0x5e0] sm:$0xff]
                %368 = vst [vmem:[%s178 + $0x2f0] sm:$0xff] %v367
                %v369 = vld [vmem:[%s177 + $0x5f0] sm:$0xff]
                %370 = vst [vmem:[%s178 + $0x2f8] sm:$0xff] %v369
                %v371 = vld [vmem:[%s177 + $0x600] sm:$0xff]
                %372 = vst [vmem:[%s178 + $0x300] sm:$0xff] %v371
                %v373 = vld [vmem:[%s177 + $0x610] sm:$0xff]
                %374 = vst [vmem:[%s178 + $0x308] sm:$0xff] %v373
                %v375 = vld [vmem:[%s177 + $0x620] sm:$0xff]
                %376 = vst [vmem:[%s178 + $0x310] sm:$0xff] %v375
                %v377 = vld [vmem:[%s177 + $0x630] sm:$0xff]
                %378 = vst [vmem:[%s178 + $0x318] sm:$0xff] %v377
                %v379 = vld [vmem:[%s177 + $0x640] sm:$0xff]
                %380 = vst [vmem:[%s178 + $0x320] sm:$0xff] %v379
                %v381 = vld [vmem:[%s177 + $0x650] sm:$0xff]
                %382 = vst [vmem:[%s178 + $0x328] sm:$0xff] %v381
                %v383 = vld [vmem:[%s177 + $0x660] sm:$0xff]
                %384 = vst [vmem:[%s178 + $0x330] sm:$0xff] %v383
                %v385 = vld [vmem:[%s177 + $0x670] sm:$0xff]
                %386 = vst [vmem:[%s178 + $0x338] sm:$0xff] %v385
                %v387 = vld [vmem:[%s177 + $0x680] sm:$0xff]
                %388 = vst [vmem:[%s178 + $0x340] sm:$0xff] %v387
                %v389 = vld [vmem:[%s177 + $0x690] sm:$0xff]
                %390 = vst [vmem:[%s178 + $0x348] sm:$0xff] %v389
                %v391 = vld [vmem:[%s177 + $0x6a0] sm:$0xff]
                %392 = vst [vmem:[%s178 + $0x350] sm:$0xff] %v391
                %v393 = vld [vmem:[%s177 + $0x6b0] sm:$0xff]
                %394 = vst [vmem:[%s178 + $0x358] sm:$0xff] %v393
                %v395 = vld [vmem:[%s177 + $0x6c0] sm:$0xff]
                %396 = vst [vmem:[%s178 + $0x360] sm:$0xff] %v395
                %v397 = vld [vmem:[%s177 + $0x6d0] sm:$0xff]
                %398 = vst [vmem:[%s178 + $0x368] sm:$0xff] %v397
                %v399 = vld [vmem:[%s177 + $0x6e0] sm:$0xff]
                %400 = vst [vmem:[%s178 + $0x370] sm:$0xff] %v399
                %v401 = vld [vmem:[%s177 + $0x6f0] sm:$0xff]
                %402 = vst [vmem:[%s178 + $0x378] sm:$0xff] %v401
                %v403 = vld [vmem:[%s177 + $0x700] sm:$0xff]
                %404 = vst [vmem:[%s178 + $0x380] sm:$0xff] %v403
                %v405 = vld [vmem:[%s177 + $0x710] sm:$0xff]
                %406 = vst [vmem:[%s178 + $0x388] sm:$0xff] %v405
                %v407 = vld [vmem:[%s177 + $0x720] sm:$0xff]
                %408 = vst [vmem:[%s178 + $0x390] sm:$0xff] %v407
                %v409 = vld [vmem:[%s177 + $0x730] sm:$0xff]
                %410 = vst [vmem:[%s178 + $0x398] sm:$0xff] %v409
                %v411 = vld [vmem:[%s177 + $0x740] sm:$0xff]
                %412 = vst [vmem:[%s178 + $0x3a0] sm:$0xff] %v411
                %v413 = vld [vmem:[%s177 + $0x750] sm:$0xff]
                %414 = vst [vmem:[%s178 + $0x3a8] sm:$0xff] %v413
                %v415 = vld [vmem:[%s177 + $0x760] sm:$0xff]
                %416 = vst [vmem:[%s178 + $0x3b0] sm:$0xff] %v415
                %v417 = vld [vmem:[%s177 + $0x770] sm:$0xff]
                %418 = vst [vmem:[%s178 + $0x3b8] sm:$0xff] %v417
                %v419 = vld [vmem:[%s177 + $0x780] sm:$0xff]
                %420 = vst [vmem:[%s178 + $0x3c0] sm:$0xff] %v419
                %v421 = vld [vmem:[%s177 + $0x790] sm:$0xff]
                %422 = vst [vmem:[%s178 + $0x3c8] sm:$0xff] %v421
                %v423 = vld [vmem:[%s177 + $0x7a0] sm:$0xff]
                %424 = vst [vmem:[%s178 + $0x3d0] sm:$0xff] %v423
                %v425 = vld [vmem:[%s177 + $0x7b0] sm:$0xff]
                %426 = vst [vmem:[%s178 + $0x3d8] sm:$0xff] %v425
                %v427 = vld [vmem:[%s177 + $0x7c0] sm:$0xff]
                %428 = vst [vmem:[%s178 + $0x3e0] sm:$0xff] %v427
                %v429 = vld [vmem:[%s177 + $0x7d0] sm:$0xff]
                %430 = vst [vmem:[%s178 + $0x3e8] sm:$0xff] %v429
                %v431 = vld [vmem:[%s177 + $0x7e0] sm:$0xff]
                %432 = vst [vmem:[%s178 + $0x3f0] sm:$0xff] %v431
                %v433 = vld [vmem:[%s177 + $0x7f0] sm:$0xff]
                %434 = vst [vmem:[%s178 + $0x3f8] sm:$0xff] %v433
                %v435 = vld [vmem:[%s177 + $0x800] sm:$0xff]
                %436 = vst [vmem:[%s178 + $0x400] sm:$0xff] %v435
                %v437 = vld [vmem:[%s177 + $0x810] sm:$0xff]
                %438 = vst [vmem:[%s178 + $0x408] sm:$0xff] %v437
                %v439 = vld [vmem:[%s177 + $0x820] sm:$0xff]
                %440 = vst [vmem:[%s178 + $0x410] sm:$0xff] %v439
                %v441 = vld [vmem:[%s177 + $0x830] sm:$0xff]
                %442 = vst [vmem:[%s178 + $0x418] sm:$0xff] %v441
                %v443 = vld [vmem:[%s177 + $0x840] sm:$0xff]
                %444 = vst [vmem:[%s178 + $0x420] sm:$0xff] %v443
                %v445 = vld [vmem:[%s177 + $0x850] sm:$0xff]
                %446 = vst [vmem:[%s178 + $0x428] sm:$0xff] %v445
                %v447 = vld [vmem:[%s177 + $0x860] sm:$0xff]
                %448 = vst [vmem:[%s178 + $0x430] sm:$0xff] %v447
                %v449 = vld [vmem:[%s177 + $0x870] sm:$0xff]
                %450 = vst [vmem:[%s178 + $0x438] sm:$0xff] %v449
                %v451 = vld [vmem:[%s177 + $0x880] sm:$0xff]
                %452 = vst [vmem:[%s178 + $0x440] sm:$0xff] %v451
                %v453 = vld [vmem:[%s177 + $0x890] sm:$0xff]
                %454 = vst [vmem:[%s178 + $0x448] sm:$0xff] %v453
                %v455 = vld [vmem:[%s177 + $0x8a0] sm:$0xff]
                %456 = vst [vmem:[%s178 + $0x450] sm:$0xff] %v455
                %v457 = vld [vmem:[%s177 + $0x8b0] sm:$0xff]
                %458 = vst [vmem:[%s178 + $0x458] sm:$0xff] %v457
                %v459 = vld [vmem:[%s177 + $0x8c0] sm:$0xff]
                %460 = vst [vmem:[%s178 + $0x460] sm:$0xff] %v459
                %v461 = vld [vmem:[%s177 + $0x8d0] sm:$0xff]
                %462 = vst [vmem:[%s178 + $0x468] sm:$0xff] %v461
                %v463 = vld [vmem:[%s177 + $0x8e0] sm:$0xff]
                %464 = vst [vmem:[%s178 + $0x470] sm:$0xff] %v463
                %v465 = vld [vmem:[%s177 + $0x8f0] sm:$0xff]
                %466 = vst [vmem:[%s178 + $0x478] sm:$0xff] %v465
                %v467 = vld [vmem:[%s177 + $0x900] sm:$0xff]
                %468 = vst [vmem:[%s178 + $0x480] sm:$0xff] %v467
                %v469 = vld [vmem:[%s177 + $0x910] sm:$0xff]
                %470 = vst [vmem:[%s178 + $0x488] sm:$0xff] %v469
                %v471 = vld [vmem:[%s177 + $0x920] sm:$0xff]
                %472 = vst [vmem:[%s178 + $0x490] sm:$0xff] %v471
                %v473 = vld [vmem:[%s177 + $0x930] sm:$0xff]
                %474 = vst [vmem:[%s178 + $0x498] sm:$0xff] %v473
                %v475 = vld [vmem:[%s177 + $0x940] sm:$0xff]
                %476 = vst [vmem:[%s178 + $0x4a0] sm:$0xff] %v475
                %v477 = vld [vmem:[%s177 + $0x950] sm:$0xff]
                %478 = vst [vmem:[%s178 + $0x4a8] sm:$0xff] %v477
                %v479 = vld [vmem:[%s177 + $0x960] sm:$0xff]
                %480 = vst [vmem:[%s178 + $0x4b0] sm:$0xff] %v479
                %v481 = vld [vmem:[%s177 + $0x970] sm:$0xff]
                %482 = vst [vmem:[%s178 + $0x4b8] sm:$0xff] %v481
                %v483 = vld [vmem:[%s177 + $0x980] sm:$0xff]
                %484 = vst [vmem:[%s178 + $0x4c0] sm:$0xff] %v483
                %v485 = vld [vmem:[%s177 + $0x990] sm:$0xff]
                %486 = vst [vmem:[%s178 + $0x4c8] sm:$0xff] %v485
                %v487 = vld [vmem:[%s177 + $0x9a0] sm:$0xff]
                %488 = vst [vmem:[%s178 + $0x4d0] sm:$0xff] %v487
                %v489 = vld [vmem:[%s177 + $0x9b0] sm:$0xff]
                %490 = vst [vmem:[%s178 + $0x4d8] sm:$0xff] %v489
                %v491 = vld [vmem:[%s177 + $0x9c0] sm:$0xff]
                %492 = vst [vmem:[%s178 + $0x4e0] sm:$0xff] %v491
                %v493 = vld [vmem:[%s177 + $0x9d0] sm:$0xff]
                %494 = vst [vmem:[%s178 + $0x4e8] sm:$0xff] %v493
                %v495 = vld [vmem:[%s177 + $0x9e0] sm:$0xff]
                %496 = vst [vmem:[%s178 + $0x4f0] sm:$0xff] %v495
                %v497 = vld [vmem:[%s177 + $0x9f0] sm:$0xff]
                %498 = vst [vmem:[%s178 + $0x4f8] sm:$0xff] %v497
                %v499 = vld [vmem:[%s177 + $0xa00] sm:$0xff]
                %500 = vst [vmem:[%s178 + $0x500] sm:$0xff] %v499
                %v501 = vld [vmem:[%s177 + $0xa10] sm:$0xff]
                %502 = vst [vmem:[%s178 + $0x508] sm:$0xff] %v501
                %v503 = vld [vmem:[%s177 + $0xa20] sm:$0xff]
                %504 = vst [vmem:[%s178 + $0x510] sm:$0xff] %v503
                %v505 = vld [vmem:[%s177 + $0xa30] sm:$0xff]
                %506 = vst [vmem:[%s178 + $0x518] sm:$0xff] %v505
                %v507 = vld [vmem:[%s177 + $0xa40] sm:$0xff]
                %508 = vst [vmem:[%s178 + $0x520] sm:$0xff] %v507
                %v509 = vld [vmem:[%s177 + $0xa50] sm:$0xff]
                %510 = vst [vmem:[%s178 + $0x528] sm:$0xff] %v509
                %v511 = vld [vmem:[%s177 + $0xa60] sm:$0xff]
                %512 = vst [vmem:[%s178 + $0x530] sm:$0xff] %v511
                %v513 = vld [vmem:[%s177 + $0xa70] sm:$0xff]
                %514 = vst [vmem:[%s178 + $0x538] sm:$0xff] %v513
                %v515 = vld [vmem:[%s177 + $0xa80] sm:$0xff]
                %516 = vst [vmem:[%s178 + $0x540] sm:$0xff] %v515
                %v517 = vld [vmem:[%s177 + $0xa90] sm:$0xff]
                %518 = vst [vmem:[%s178 + $0x548] sm:$0xff] %v517
                %v519 = vld [vmem:[%s177 + $0xaa0] sm:$0xff]
                %520 = vst [vmem:[%s178 + $0x550] sm:$0xff] %v519
                %v521 = vld [vmem:[%s177 + $0xab0] sm:$0xff]
                %522 = vst [vmem:[%s178 + $0x558] sm:$0xff] %v521
                %v523 = vld [vmem:[%s177 + $0xac0] sm:$0xff]
                %524 = vst [vmem:[%s178 + $0x560] sm:$0xff] %v523
                %v525 = vld [vmem:[%s177 + $0xad0] sm:$0xff]
                %526 = vst [vmem:[%s178 + $0x568] sm:$0xff] %v525
                %v527 = vld [vmem:[%s177 + $0xae0] sm:$0xff]
                %528 = vst [vmem:[%s178 + $0x570] sm:$0xff] %v527
                %v529 = vld [vmem:[%s177 + $0xaf0] sm:$0xff]
                %530 = vst [vmem:[%s178 + $0x578] sm:$0xff] %v529
                %v531 = vld [vmem:[%s177 + $0xb00] sm:$0xff]
                %532 = vst [vmem:[%s178 + $0x580] sm:$0xff] %v531
                %v533 = vld [vmem:[%s177 + $0xb10] sm:$0xff]
                %534 = vst [vmem:[%s178 + $0x588] sm:$0xff] %v533
                %v535 = vld [vmem:[%s177 + $0xb20] sm:$0xff]
                %536 = vst [vmem:[%s178 + $0x590] sm:$0xff] %v535
                %v537 = vld [vmem:[%s177 + $0xb30] sm:$0xff]
                %538 = vst [vmem:[%s178 + $0x598] sm:$0xff] %v537
                %v539 = vld [vmem:[%s177 + $0xb40] sm:$0xff]
                %540 = vst [vmem:[%s178 + $0x5a0] sm:$0xff] %v539
                %v541 = vld [vmem:[%s177 + $0xb50] sm:$0xff]
                %542 = vst [vmem:[%s178 + $0x5a8] sm:$0xff] %v541
                %v543 = vld [vmem:[%s177 + $0xb60] sm:$0xff]
                %544 = vst [vmem:[%s178 + $0x5b0] sm:$0xff] %v543
                %v545 = vld [vmem:[%s177 + $0xb70] sm:$0xff]
                %546 = vst [vmem:[%s178 + $0x5b8] sm:$0xff] %v545
                %v547 = vld [vmem:[%s177 + $0xb80] sm:$0xff]
                %548 = vst [vmem:[%s178 + $0x5c0] sm:$0xff] %v547
                %v549 = vld [vmem:[%s177 + $0xb90] sm:$0xff]
                %550 = vst [vmem:[%s178 + $0x5c8] sm:$0xff] %v549
                %v551 = vld [vmem:[%s177 + $0xba0] sm:$0xff]
                %552 = vst [vmem:[%s178 + $0x5d0] sm:$0xff] %v551
                %v553 = vld [vmem:[%s177 + $0xbb0] sm:$0xff]
                %554 = vst [vmem:[%s178 + $0x5d8] sm:$0xff] %v553
                %v555 = vld [vmem:[%s177 + $0xbc0] sm:$0xff]
                %556 = vst [vmem:[%s178 + $0x5e0] sm:$0xff] %v555
                %v557 = vld [vmem:[%s177 + $0xbd0] sm:$0xff]
                %558 = vst [vmem:[%s178 + $0x5e8] sm:$0xff] %v557
                %v559 = vld [vmem:[%s177 + $0xbe0] sm:$0xff]
                %560 = vst [vmem:[%s178 + $0x5f0] sm:$0xff] %v559
                %v561 = vld [vmem:[%s177 + $0xbf0] sm:$0xff]
                %562 = vst [vmem:[%s178 + $0x5f8] sm:$0xff] %v561
                %v563 = vld [vmem:[%s177 + $0xc00] sm:$0xff]
                %564 = vst [vmem:[%s178 + $0x600] sm:$0xff] %v563
                %v565 = vld [vmem:[%s177 + $0xc10] sm:$0xff]
                %566 = vst [vmem:[%s178 + $0x608] sm:$0xff] %v565
                %v567 = vld [vmem:[%s177 + $0xc20] sm:$0xff]
                %568 = vst [vmem:[%s178 + $0x610] sm:$0xff] %v567
                %v569 = vld [vmem:[%s177 + $0xc30] sm:$0xff]
                %570 = vst [vmem:[%s178 + $0x618] sm:$0xff] %v569
                %v571 = vld [vmem:[%s177 + $0xc40] sm:$0xff]
                %572 = vst [vmem:[%s178 + $0x620] sm:$0xff] %v571
                %v573 = vld [vmem:[%s177 + $0xc50] sm:$0xff]
                %574 = vst [vmem:[%s178 + $0x628] sm:$0xff] %v573
                %v575 = vld [vmem:[%s177 + $0xc60] sm:$0xff]
                %576 = vst [vmem:[%s178 + $0x630] sm:$0xff] %v575
                %v577 = vld [vmem:[%s177 + $0xc70] sm:$0xff]
                %578 = vst [vmem:[%s178 + $0x638] sm:$0xff] %v577
                %v579 = vld [vmem:[%s177 + $0xc80] sm:$0xff]
                %580 = vst [vmem:[%s178 + $0x640] sm:$0xff] %v579
                %v581 = vld [vmem:[%s177 + $0xc90] sm:$0xff]
                %582 = vst [vmem:[%s178 + $0x648] sm:$0xff] %v581
                %v583 = vld [vmem:[%s177 + $0xca0] sm:$0xff]
                %584 = vst [vmem:[%s178 + $0x650] sm:$0xff] %v583
                %v585 = vld [vmem:[%s177 + $0xcb0] sm:$0xff]
                %586 = vst [vmem:[%s178 + $0x658] sm:$0xff] %v585
                %v587 = vld [vmem:[%s177 + $0xcc0] sm:$0xff]
                %588 = vst [vmem:[%s178 + $0x660] sm:$0xff] %v587
                %v589 = vld [vmem:[%s177 + $0xcd0] sm:$0xff]
                %590 = vst [vmem:[%s178 + $0x668] sm:$0xff] %v589
                %v591 = vld [vmem:[%s177 + $0xce0] sm:$0xff]
                %592 = vst [vmem:[%s178 + $0x670] sm:$0xff] %v591
                %v593 = vld [vmem:[%s177 + $0xcf0] sm:$0xff]
                %594 = vst [vmem:[%s178 + $0x678] sm:$0xff] %v593
                %v595 = vld [vmem:[%s177 + $0xd00] sm:$0xff]
                %596 = vst [vmem:[%s178 + $0x680] sm:$0xff] %v595
                %v597 = vld [vmem:[%s177 + $0xd10] sm:$0xff]
                %598 = vst [vmem:[%s178 + $0x688] sm:$0xff] %v597
                %v599 = vld [vmem:[%s177 + $0xd20] sm:$0xff]
                %600 = vst [vmem:[%s178 + $0x690] sm:$0xff] %v599
                %v601 = vld [vmem:[%s177 + $0xd30] sm:$0xff]
                %602 = vst [vmem:[%s178 + $0x698] sm:$0xff] %v601
                %v603 = vld [vmem:[%s177 + $0xd40] sm:$0xff]
                %604 = vst [vmem:[%s178 + $0x6a0] sm:$0xff] %v603
                %v605 = vld [vmem:[%s177 + $0xd50] sm:$0xff]
                %606 = vst [vmem:[%s178 + $0x6a8] sm:$0xff] %v605
                %v607 = vld [vmem:[%s177 + $0xd60] sm:$0xff]
                %608 = vst [vmem:[%s178 + $0x6b0] sm:$0xff] %v607
                %v609 = vld [vmem:[%s177 + $0xd70] sm:$0xff]
                %610 = vst [vmem:[%s178 + $0x6b8] sm:$0xff] %v609
                %v611 = vld [vmem:[%s177 + $0xd80] sm:$0xff]
                %612 = vst [vmem:[%s178 + $0x6c0] sm:$0xff] %v611
                %v613 = vld [vmem:[%s177 + $0xd90] sm:$0xff]
                %614 = vst [vmem:[%s178 + $0x6c8] sm:$0xff] %v613
                %v615 = vld [vmem:[%s177 + $0xda0] sm:$0xff]
                %616 = vst [vmem:[%s178 + $0x6d0] sm:$0xff] %v615
                %v617 = vld [vmem:[%s177 + $0xdb0] sm:$0xff]
                %618 = vst [vmem:[%s178 + $0x6d8] sm:$0xff] %v617
                %v619 = vld [vmem:[%s177 + $0xdc0] sm:$0xff]
                %620 = vst [vmem:[%s178 + $0x6e0] sm:$0xff] %v619
                %v621 = vld [vmem:[%s177 + $0xdd0] sm:$0xff]
                %622 = vst [vmem:[%s178 + $0x6e8] sm:$0xff] %v621
                %v623 = vld [vmem:[%s177 + $0xde0] sm:$0xff]
                %624 = vst [vmem:[%s178 + $0x6f0] sm:$0xff] %v623
                %v625 = vld [vmem:[%s177 + $0xdf0] sm:$0xff]
                %626 = vst [vmem:[%s178 + $0x6f8] sm:$0xff] %v625
                %v627 = vld [vmem:[%s177 + $0xe00] sm:$0xff]
                %628 = vst [vmem:[%s178 + $0x700] sm:$0xff] %v627
                %v629 = vld [vmem:[%s177 + $0xe10] sm:$0xff]
                %630 = vst [vmem:[%s178 + $0x708] sm:$0xff] %v629
                %v631 = vld [vmem:[%s177 + $0xe20] sm:$0xff]
                %632 = vst [vmem:[%s178 + $0x710] sm:$0xff] %v631
                %v633 = vld [vmem:[%s177 + $0xe30] sm:$0xff]
                %634 = vst [vmem:[%s178 + $0x718] sm:$0xff] %v633
                %v635 = vld [vmem:[%s177 + $0xe40] sm:$0xff]
                %636 = vst [vmem:[%s178 + $0x720] sm:$0xff] %v635
                %v637 = vld [vmem:[%s177 + $0xe50] sm:$0xff]
                %638 = vst [vmem:[%s178 + $0x728] sm:$0xff] %v637
                %v639 = vld [vmem:[%s177 + $0xe60] sm:$0xff]
                %640 = vst [vmem:[%s178 + $0x730] sm:$0xff] %v639
                %v641 = vld [vmem:[%s177 + $0xe70] sm:$0xff]
                %642 = vst [vmem:[%s178 + $0x738] sm:$0xff] %v641
                %v643 = vld [vmem:[%s177 + $0xe80] sm:$0xff]
                %644 = vst [vmem:[%s178 + $0x740] sm:$0xff] %v643
                %v645 = vld [vmem:[%s177 + $0xe90] sm:$0xff]
                %646 = vst [vmem:[%s178 + $0x748] sm:$0xff] %v645
                %v647 = vld [vmem:[%s177 + $0xea0] sm:$0xff]
                %648 = vst [vmem:[%s178 + $0x750] sm:$0xff] %v647
                %v649 = vld [vmem:[%s177 + $0xeb0] sm:$0xff]
                %650 = vst [vmem:[%s178 + $0x758] sm:$0xff] %v649
                %v651 = vld [vmem:[%s177 + $0xec0] sm:$0xff]
                %652 = vst [vmem:[%s178 + $0x760] sm:$0xff] %v651
                %v653 = vld [vmem:[%s177 + $0xed0] sm:$0xff]
                %654 = vst [vmem:[%s178 + $0x768] sm:$0xff] %v653
                %v655 = vld [vmem:[%s177 + $0xee0] sm:$0xff]
                %656 = vst [vmem:[%s178 + $0x770] sm:$0xff] %v655
                %v657 = vld [vmem:[%s177 + $0xef0] sm:$0xff]
                %658 = vst [vmem:[%s178 + $0x778] sm:$0xff] %v657
                %v659 = vld [vmem:[%s177 + $0xf00] sm:$0xff]
                %660 = vst [vmem:[%s178 + $0x780] sm:$0xff] %v659
                %v661 = vld [vmem:[%s177 + $0xf10] sm:$0xff]
                %662 = vst [vmem:[%s178 + $0x788] sm:$0xff] %v661
                %v663 = vld [vmem:[%s177 + $0xf20] sm:$0xff]
                %664 = vst [vmem:[%s178 + $0x790] sm:$0xff] %v663
                %v665 = vld [vmem:[%s177 + $0xf30] sm:$0xff]
                %666 = vst [vmem:[%s178 + $0x798] sm:$0xff] %v665
                %v667 = vld [vmem:[%s177 + $0xf40] sm:$0xff]
                %668 = vst [vmem:[%s178 + $0x7a0] sm:$0xff] %v667
                %v669 = vld [vmem:[%s177 + $0xf50] sm:$0xff]
                %670 = vst [vmem:[%s178 + $0x7a8] sm:$0xff] %v669
                %v671 = vld [vmem:[%s177 + $0xf60] sm:$0xff]
                %672 = vst [vmem:[%s178 + $0x7b0] sm:$0xff] %v671
                %v673 = vld [vmem:[%s177 + $0xf70] sm:$0xff]
                %674 = vst [vmem:[%s178 + $0x7b8] sm:$0xff] %v673
                %v675 = vld [vmem:[%s177 + $0xf80] sm:$0xff]
                %676 = vst [vmem:[%s178 + $0x7c0] sm:$0xff] %v675
                %v677 = vld [vmem:[%s177 + $0xf90] sm:$0xff]
                %678 = vst [vmem:[%s178 + $0x7c8] sm:$0xff] %v677
                %v679 = vld [vmem:[%s177 + $0xfa0] sm:$0xff]
                %680 = vst [vmem:[%s178 + $0x7d0] sm:$0xff] %v679
                %v681 = vld [vmem:[%s177 + $0xfb0] sm:$0xff]
                %682 = vst [vmem:[%s178 + $0x7d8] sm:$0xff] %v681
                %v683 = vld [vmem:[%s177 + $0xfc0] sm:$0xff]
                %684 = vst [vmem:[%s178 + $0x7e0] sm:$0xff] %v683
                %v685 = vld [vmem:[%s177 + $0xfd0] sm:$0xff]
                %686 = vst [vmem:[%s178 + $0x7e8] sm:$0xff] %v685
                %v687 = vld [vmem:[%s177 + $0xfe0] sm:$0xff]
                %688 = vst [vmem:[%s178 + $0x7f0] sm:$0xff] %v687
                %v689 = vld [vmem:[%s177 + $0xff0] sm:$0xff]
                %690 = vst [vmem:[%s178 + $0x7f8] sm:$0xff] %v689
                %v691 = vld [vmem:[%s177 + $0x1000] sm:$0xff]
                %692 = vst [vmem:[%s178 + $0x800] sm:$0xff] %v691
                %v693 = vld [vmem:[%s177 + $0x1010] sm:$0xff]
                %694 = vst [vmem:[%s178 + $0x808] sm:$0xff] %v693
                %v695 = vld [vmem:[%s177 + $0x1020] sm:$0xff]
                %696 = vst [vmem:[%s178 + $0x810] sm:$0xff] %v695
                %v697 = vld [vmem:[%s177 + $0x1030] sm:$0xff]
                %698 = vst [vmem:[%s178 + $0x818] sm:$0xff] %v697
                %v699 = vld [vmem:[%s177 + $0x1040] sm:$0xff]
                %700 = vst [vmem:[%s178 + $0x820] sm:$0xff] %v699
                %v701 = vld [vmem:[%s177 + $0x1050] sm:$0xff]
                %702 = vst [vmem:[%s178 + $0x828] sm:$0xff] %v701
                %v703 = vld [vmem:[%s177 + $0x1060] sm:$0xff]
                %704 = vst [vmem:[%s178 + $0x830] sm:$0xff] %v703
                %v705 = vld [vmem:[%s177 + $0x1070] sm:$0xff]
                %706 = vst [vmem:[%s178 + $0x838] sm:$0xff] %v705
                %v707 = vld [vmem:[%s177 + $0x1080] sm:$0xff]
                %708 = vst [vmem:[%s178 + $0x840] sm:$0xff] %v707
                %v709 = vld [vmem:[%s177 + $0x1090] sm:$0xff]
                %710 = vst [vmem:[%s178 + $0x848] sm:$0xff] %v709
                %v711 = vld [vmem:[%s177 + $0x10a0] sm:$0xff]
                %712 = vst [vmem:[%s178 + $0x850] sm:$0xff] %v711
                %v713 = vld [vmem:[%s177 + $0x10b0] sm:$0xff]
                %714 = vst [vmem:[%s178 + $0x858] sm:$0xff] %v713
                %v715 = vld [vmem:[%s177 + $0x10c0] sm:$0xff]
                %716 = vst [vmem:[%s178 + $0x860] sm:$0xff] %v715
                %v717 = vld [vmem:[%s177 + $0x10d0] sm:$0xff]
                %718 = vst [vmem:[%s178 + $0x868] sm:$0xff] %v717
                %v719 = vld [vmem:[%s177 + $0x10e0] sm:$0xff]
                %720 = vst [vmem:[%s178 + $0x870] sm:$0xff] %v719
                %v721 = vld [vmem:[%s177 + $0x10f0] sm:$0xff]
                %722 = vst [vmem:[%s178 + $0x878] sm:$0xff] %v721
                %v723 = vld [vmem:[%s177 + $0x1100] sm:$0xff]
                %724 = vst [vmem:[%s178 + $0x880] sm:$0xff] %v723
                %v725 = vld [vmem:[%s177 + $0x1110] sm:$0xff]
                %726 = vst [vmem:[%s178 + $0x888] sm:$0xff] %v725
                %v727 = vld [vmem:[%s177 + $0x1120] sm:$0xff]
                %728 = vst [vmem:[%s178 + $0x890] sm:$0xff] %v727
                %v729 = vld [vmem:[%s177 + $0x1130] sm:$0xff]
                %730 = vst [vmem:[%s178 + $0x898] sm:$0xff] %v729
                %v731 = vld [vmem:[%s177 + $0x1140] sm:$0xff]
                %732 = vst [vmem:[%s178 + $0x8a0] sm:$0xff] %v731
                %v733 = vld [vmem:[%s177 + $0x1150] sm:$0xff]
                %734 = vst [vmem:[%s178 + $0x8a8] sm:$0xff] %v733
                %v735 = vld [vmem:[%s177 + $0x1160] sm:$0xff]
                %736 = vst [vmem:[%s178 + $0x8b0] sm:$0xff] %v735
                %v737 = vld [vmem:[%s177 + $0x1170] sm:$0xff]
                %738 = vst [vmem:[%s178 + $0x8b8] sm:$0xff] %v737
                %v739 = vld [vmem:[%s177 + $0x1180] sm:$0xff]
                %740 = vst [vmem:[%s178 + $0x8c0] sm:$0xff] %v739
                %v741 = vld [vmem:[%s177 + $0x1190] sm:$0xff]
                %742 = vst [vmem:[%s178 + $0x8c8] sm:$0xff] %v741
                %v743 = vld [vmem:[%s177 + $0x11a0] sm:$0xff]
                %744 = vst [vmem:[%s178 + $0x8d0] sm:$0xff] %v743
                %v745 = vld [vmem:[%s177 + $0x11b0] sm:$0xff]
                %746 = vst [vmem:[%s178 + $0x8d8] sm:$0xff] %v745
                %v747 = vld [vmem:[%s177 + $0x11c0] sm:$0xff]
                %748 = vst [vmem:[%s178 + $0x8e0] sm:$0xff] %v747
                %v749 = vld [vmem:[%s177 + $0x11d0] sm:$0xff]
                %750 = vst [vmem:[%s178 + $0x8e8] sm:$0xff] %v749
                %v751 = vld [vmem:[%s177 + $0x11e0] sm:$0xff]
                %752 = vst [vmem:[%s178 + $0x8f0] sm:$0xff] %v751
                %v753 = vld [vmem:[%s177 + $0x11f0] sm:$0xff]
                %754 = vst [vmem:[%s178 + $0x8f8] sm:$0xff] %v753
              $region41: #{yolov10_forward.8} parent=35 // loop_footer
                %s176 = sadd.s32 1, %s172
              $region42: #{yolov10_forward.8} parent=35 // loop_footer_branch
                %171 = sbr.rel target = $region38
              $region43: #{yolov10_forward.8} parent=35 // loop_exit
                _
            $region36: #{yolov10_forward.8} parent=27 // pred_fallthru
              _
          $region28: #{yolov10_forward.8} parent=23 // pred_fallthru
            _
          %1343 = vnop
        $region24: #{yolov10_forward.8} parent=19 // pred_fallthru
          _
        // Predicated region
        $region59: #{yolov10_forward.8} parent=19 // pred_check
          %p1344 = pneg %p93
        $region60: #{yolov10_forward.8} parent=19 // pred_check_branch
          %1346 = sbr.rel (%p1344) target = $region62
        $region61: #{yolov10_forward.8} parent=19 // pred_region
          %s1347 = smul.u32 2, %s16
          %p1348 = scmp.lt.s32.totalorder %s1347, 3
          %s1349 = scalar_select %p1348, %s1347, 3
          %s1350 = scalar_lea.vmem %s2, %s1349
          %s1351 = smul.u32 2, %s16
        $region62: #{yolov10_forward.8} parent=19 // pred_fallthru
          _
      $region20: #{yolov10_forward.8} parent=5 // pred_fallthru
        _
      %p1352 = scmp.le.s32.totalorder 1, %s9
      %p1353 = scmp.lt.s32.totalorder %s9, 3
      %p1354 = pnand %p1352, %p1353
      %p1355 = pneg %p1354
      // Predicated region
      $region63: #{yolov10_forward.8} parent=5 // pred_check
        _
      $region64: #{yolov10_forward.8} parent=5 // pred_check_branch
        %1357 = sbr.rel (%p1354) target = $region66
      $region65: #{yolov10_forward.8} parent=5 // pred_region
        %s1358 = ssub.s32 %s9, 1
        %s1359 = sand.u32 %s60, 1
        %s1360 = sand.u32 %s60, 1
        %s1361 = smul.addr %s1360, 2304
        %s1362 = scalar_lea.vmem [#allocation2], %s1361
        // Predicated region
        $region67: #{yolov10_forward.8} parent=65 // pred_check
          %p1363 = pneg %p73
        $region68: #{yolov10_forward.8} parent=65 // pred_check_branch
          %1365 = sbr.rel (%p1363) target = $region70
        $region69: #{yolov10_forward.8} parent=65 // pred_region
          _
        $region70: #{yolov10_forward.8} parent=65 // pred_fallthru
          _
        %p1366 = scmp.lt.s32.totalorder %s19, 0
        %s1367 = scalar_select %p1366, %s19, 0
        %s1368 = smul.addr %s1367, 18
        %s1369 = smul.addr %s1368, 4
        %s1370 = scalar_lea.vmem %s0, %s1369
        %p1371 = pneg %p47
        %p1372 = pneg %p44
        %s1373 = sand.u32 %s60, 1
        %s1374 = sand.u32 %s60, 1
        %s1375 = smul.addr %s1374, 2304
        %s1376 = scalar_lea.vmem [#allocation2], %s1375
        %p1377 = pneg %p73
        %p1378 = pneg %p70
        %s1379 = smul.u32 2, %s18
        %p1380 = scmp.lt.s32.totalorder %s1379, 3
        %s1381 = scalar_select %p1380, %s1379, 3
        %s1382 = scalar_lea.vmem %s2, %s1381
        %p1383 = pneg %p99
        %p1384 = pneg %p96
        %p1385 = pneg %p127
        %p1386 = pneg %p124
        %s1387 = smul.u32 2, %s18
        %p1388 = scmp.lt.s32.totalorder %s19, 0
        %s1389 = scalar_select %p1388, %s19, 0
        %p1390 = scmp.lt.s32.totalorder %s1387, 3
        %s1391 = scalar_select %p1390, %s1387, 3
        %s1392 = smul.addr %s1389, 4
        %s1393 = sadd.s32 %s1391, %s1392
        %s1394 = smul.addr %s1393, 4
        %s1395 = scalar_lea.vmem %s3, %s1394
        %p1396 = scmp.lt.s32.totalorder %s19, 0
        %s1397 = scalar_select %p1396, %s19, 0
        %s1398 = smul.addr %s1397, 18
        %s1399 = smul.addr %s1398, 4
        %s1400 = scalar_lea.vmem %s0, %s1399
        %s1401 = smul.u32 2, %s18
        %s1402 = smul.u32 2, %s18
        %p1403 = scmp.lt.s32.totalorder %s1402, 3
        %s1404 = scalar_select %p1403, %s1402, 3
        %s1405 = scalar_lea.vmem %s2, %s1404
        %s1406 = smul.u32 2, %s18
        %s1407 = smul.u32 2, %s18
        %p1408 = scmp.lt.s32.totalorder %s19, 0
        %s1409 = scalar_select %p1408, %s19, 0
        %p1410 = scmp.lt.s32.totalorder %s1407, 3
        %s1411 = scalar_select %p1410, %s1407, 3
        %s1412 = smul.addr %s1409, 4
        %s1413 = sadd.s32 %s1411, %s1412
        %s1414 = smul.addr %s1413, 4
        %s1415 = scalar_lea.vmem %s3, %s1414
        %s1416 = smul.u32 2, %s18
        %v1417 = vld [vmem:[%s1400] sm:$0xff]
        %v1418 = vld [vmem:[%s1400 + $0x8] sm:$0xff]
        %v1419 = vld [vmem:[%s1400 + $0x10] sm:$0xff]
        %v1420 = vld [vmem:[%s1400 + $0x18] sm:$0xff]
        %v1421 = vld [vmem:[%s1400 + $0x20] sm:$0xff]
        %v1422 = vld [vmem:[%s1400 + $0x28] sm:$0xff]
        %v1423 = vld [vmem:[%s1400 + $0x30] sm:$0xff]
        %v1424 = vld [vmem:[%s1400 + $0x38] sm:$0xff]
        %v1425 = vld [vmem:[%s1400 + $0x40] sm:$0xff]
        %v1426 = vld [vmem:[%s1362] sm:$0xff]
        %v1427 = vld [vmem:[%s1362 + $0x8] sm:$0xff]
        %v1428 = vld [vmem:[%s1362 + $0x10] sm:$0xff]
        %v1429 = vld [vmem:[%s1362 + $0x18] sm:$0xff]
        %v1430 = vld [vmem:[%s1362 + $0x20] sm:$0xff]
        %v1431 = vld [vmem:[%s1362 + $0x28] sm:$0xff]
        %v1432 = vld [vmem:[%s1362 + $0x30] sm:$0xff]
        %v1433 = vld [vmem:[%s1362 + $0x38] sm:$0xff]
        %v1434 = vld [vmem:[%s1362 + $0x40] sm:$0xff]
        %v1435 = vld [vmem:[%s1362 + $0x48] sm:$0xff]
        %v1436 = vld [vmem:[%s1362 + $0x50] sm:$0xff]
        %v1437 = vld [vmem:[%s1362 + $0x58] sm:$0xff]
        %v1438 = vld [vmem:[%s1362 + $0x60] sm:$0xff]
        %v1439 = vld [vmem:[%s1362 + $0x68] sm:$0xff]
        %v1440 = vld [vmem:[%s1362 + $0x70] sm:$0xff]
        %v1441 = vld [vmem:[%s1362 + $0x78] sm:$0xff]
        %v1442 = vld [vmem:[%s1362 + $0x80] sm:$0xff]
        %v1443 = vld [vmem:[%s1362 + $0x88] sm:$0xff]
        %v1444 = vld [vmem:[%s1362 + $0x90] sm:$0xff]
        %v1445 = vld [vmem:[%s1362 + $0x98] sm:$0xff]
        %v1446 = vld [vmem:[%s1362 + $0xa0] sm:$0xff]
        %v1447 = vld [vmem:[%s1362 + $0xa8] sm:$0xff]
        %v1448 = vld [vmem:[%s1362 + $0xb0] sm:$0xff]
        %v1449 = vld [vmem:[%s1362 + $0xb8] sm:$0xff]
        %v1450 = vld [vmem:[%s1362 + $0xc0] sm:$0xff]
        %v1451 = vld [vmem:[%s1362 + $0xc8] sm:$0xff]
        %v1452 = vld [vmem:[%s1362 + $0xd0] sm:$0xff]
        %v1453 = vld [vmem:[%s1362 + $0xd8] sm:$0xff]
        %v1454 = vld [vmem:[%s1362 + $0xe0] sm:$0xff]
        %v1455 = vld [vmem:[%s1362 + $0xe8] sm:$0xff]
        %v1456 = vld [vmem:[%s1362 + $0xf0] sm:$0xff]
        %v1457 = vld [vmem:[%s1362 + $0xf8] sm:$0xff]
        %v1458 = vld [vmem:[%s1362 + $0x100] sm:$0xff]
        %v1459 = vld [vmem:[%s1362 + $0x108] sm:$0xff]
        %v1460 = vld [vmem:[%s1362 + $0x110] sm:$0xff]
        %v1461 = vld [vmem:[%s1362 + $0x118] sm:$0xff]
        %v1462 = vld [vmem:[%s1362 + $0x120] sm:$0xff]
        %v1463 = vld [vmem:[%s1362 + $0x128] sm:$0xff]
        %v1464 = vld [vmem:[%s1362 + $0x130] sm:$0xff]
        %v1465 = vld [vmem:[%s1362 + $0x138] sm:$0xff]
        %v1466 = vld [vmem:[%s1362 + $0x140] sm:$0xff]
        %v1467 = vld [vmem:[%s1362 + $0x148] sm:$0xff]
        %v1468 = vld [vmem:[%s1362 + $0x150] sm:$0xff]
        %v1469 = vld [vmem:[%s1362 + $0x158] sm:$0xff]
        %v1470 = vld [vmem:[%s1362 + $0x160] sm:$0xff]
        %v1471 = vld [vmem:[%s1362 + $0x168] sm:$0xff]
        %v1472 = vld [vmem:[%s1362 + $0x170] sm:$0xff]
        %v1473 = vld [vmem:[%s1362 + $0x178] sm:$0xff]
        %v1474 = vld [vmem:[%s1362 + $0x180] sm:$0xff]
        %v1475 = vld [vmem:[%s1362 + $0x188] sm:$0xff]
        %v1476 = vld [vmem:[%s1362 + $0x190] sm:$0xff]
        %v1477 = vld [vmem:[%s1362 + $0x198] sm:$0xff]
        %v1478 = vld [vmem:[%s1362 + $0x1a0] sm:$0xff]
        %v1479 = vld [vmem:[%s1362 + $0x1a8] sm:$0xff]
        %v1480 = vld [vmem:[%s1362 + $0x1b0] sm:$0xff]
        %v1481 = vld [vmem:[%s1362 + $0x1b8] sm:$0xff]
        %v1482 = vld [vmem:[%s1362 + $0x1c0] sm:$0xff]
        %v1483 = vld [vmem:[%s1362 + $0x1c8] sm:$0xff]
        %v1484 = vld [vmem:[%s1362 + $0x1d0] sm:$0xff]
        %v1485 = vld [vmem:[%s1362 + $0x1d8] sm:$0xff]
        %v1486 = vld [vmem:[%s1362 + $0x1e0] sm:$0xff]
        %v1487 = vld [vmem:[%s1362 + $0x1e8] sm:$0xff]
        %v1488 = vld [vmem:[%s1362 + $0x1f0] sm:$0xff]
        %v1489 = vld [vmem:[%s1362 + $0x1f8] sm:$0xff]
        %v1490 = vld [vmem:[%s1362 + $0x200] sm:$0xff]
        %v1491 = vld [vmem:[%s1362 + $0x208] sm:$0xff]
        %v1492 = vld [vmem:[%s1362 + $0x210] sm:$0xff]
        %v1493 = vld [vmem:[%s1362 + $0x218] sm:$0xff]
        %v1494 = vld [vmem:[%s1362 + $0x220] sm:$0xff]
        %v1495 = vld [vmem:[%s1362 + $0x228] sm:$0xff]
        %v1496 = vld [vmem:[%s1362 + $0x230] sm:$0xff]
        %v1497 = vld [vmem:[%s1362 + $0x238] sm:$0xff]
        %v1498 = vld [vmem:[%s1362 + $0x240] sm:$0xff]
        %v1499 = vld [vmem:[%s1362 + $0x248] sm:$0xff]
        %v1500 = vld [vmem:[%s1362 + $0x250] sm:$0xff]
        %v1501 = vld [vmem:[%s1362 + $0x258] sm:$0xff]
        %v1502 = vld [vmem:[%s1362 + $0x260] sm:$0xff]
        %v1503 = vld [vmem:[%s1362 + $0x268] sm:$0xff]
        %v1504 = vld [vmem:[%s1362 + $0x270] sm:$0xff]
        %v1505 = vld [vmem:[%s1362 + $0x278] sm:$0xff]
        %v1506 = vld [vmem:[%s1362 + $0x280] sm:$0xff]
        %v1507 = vld [vmem:[%s1362 + $0x288] sm:$0xff]
        %v1508 = vld [vmem:[%s1362 + $0x290] sm:$0xff]
        %v1509 = vld [vmem:[%s1362 + $0x298] sm:$0xff]
        %v1510 = vld [vmem:[%s1362 + $0x2a0] sm:$0xff]
        %v1511 = vld [vmem:[%s1362 + $0x2a8] sm:$0xff]
        %v1512 = vld [vmem:[%s1362 + $0x2b0] sm:$0xff]
        %v1513 = vld [vmem:[%s1362 + $0x2b8] sm:$0xff]
        %v1514 = vld [vmem:[%s1362 + $0x2c0] sm:$0xff]
        %v1515 = vld [vmem:[%s1362 + $0x2c8] sm:$0xff]
        %v1516 = vld [vmem:[%s1362 + $0x2d0] sm:$0xff]
        %v1517 = vld [vmem:[%s1362 + $0x2d8] sm:$0xff]
        %v1518 = vld [vmem:[%s1362 + $0x2e0] sm:$0xff]
        %v1519 = vld [vmem:[%s1362 + $0x2e8] sm:$0xff]
        %v1520 = vld [vmem:[%s1362 + $0x2f0] sm:$0xff]
        %v1521 = vld [vmem:[%s1362 + $0x2f8] sm:$0xff]
        %v1522 = vld [vmem:[%s1362 + $0x300] sm:$0xff]
        %v1523 = vld [vmem:[%s1362 + $0x308] sm:$0xff]
        %v1524 = vld [vmem:[%s1362 + $0x310] sm:$0xff]
        %v1525 = vld [vmem:[%s1362 + $0x318] sm:$0xff]
        %v1526 = vld [vmem:[%s1362 + $0x320] sm:$0xff]
        %v1527 = vld [vmem:[%s1362 + $0x328] sm:$0xff]
        %v1528 = vld [vmem:[%s1362 + $0x330] sm:$0xff]
        %v1529 = vld [vmem:[%s1362 + $0x338] sm:$0xff]
        %v1530 = vld [vmem:[%s1362 + $0x340] sm:$0xff]
        %v1531 = vld [vmem:[%s1362 + $0x348] sm:$0xff]
        %v1532 = vld [vmem:[%s1362 + $0x350] sm:$0xff]
        %v1533 = vld [vmem:[%s1362 + $0x358] sm:$0xff]
        %v1534 = vld [vmem:[%s1362 + $0x360] sm:$0xff]
        %v1535 = vld [vmem:[%s1362 + $0x368] sm:$0xff]
        %v1536 = vld [vmem:[%s1362 + $0x370] sm:$0xff]
        %v1537 = vld [vmem:[%s1362 + $0x378] sm:$0xff]
        %v1538 = vld [vmem:[%s1362 + $0x380] sm:$0xff]
        %v1539 = vld [vmem:[%s1362 + $0x388] sm:$0xff]
        %v1540 = vld [vmem:[%s1362 + $0x390] sm:$0xff]
        %v1541 = vld [vmem:[%s1362 + $0x398] sm:$0xff]
        %v1542 = vld [vmem:[%s1362 + $0x3a0] sm:$0xff]
        %v1543 = vld [vmem:[%s1362 + $0x3a8] sm:$0xff]
        %v1544 = vld [vmem:[%s1362 + $0x3b0] sm:$0xff]
        %v1545 = vld [vmem:[%s1362 + $0x3b8] sm:$0xff]
        %v1546 = vld [vmem:[%s1362 + $0x3c0] sm:$0xff]
        %v1547 = vld [vmem:[%s1362 + $0x3c8] sm:$0xff]
        %v1548 = vld [vmem:[%s1362 + $0x3d0] sm:$0xff]
        %v1549 = vld [vmem:[%s1362 + $0x3d8] sm:$0xff]
        %v1550 = vld [vmem:[%s1362 + $0x3e0] sm:$0xff]
        %v1551 = vld [vmem:[%s1362 + $0x3e8] sm:$0xff]
        %v1552 = vld [vmem:[%s1362 + $0x3f0] sm:$0xff]
        %v1553 = vld [vmem:[%s1362 + $0x3f8] sm:$0xff]
        %v1554 = vld [vmem:[%s1362 + $0x400] sm:$0xff]
        %v1555 = vld [vmem:[%s1362 + $0x408] sm:$0xff]
        %v1556 = vld [vmem:[%s1362 + $0x410] sm:$0xff]
        %v1557 = vld [vmem:[%s1362 + $0x418] sm:$0xff]
        %v1558 = vld [vmem:[%s1362 + $0x420] sm:$0xff]
        %v1559 = vld [vmem:[%s1362 + $0x428] sm:$0xff]
        %v1560 = vld [vmem:[%s1362 + $0x430] sm:$0xff]
        %v1561 = vld [vmem:[%s1362 + $0x438] sm:$0xff]
        %v1562 = vld [vmem:[%s1362 + $0x440] sm:$0xff]
        %v1563 = vld [vmem:[%s1362 + $0x448] sm:$0xff]
        %v1564 = vld [vmem:[%s1362 + $0x450] sm:$0xff]
        %v1565 = vld [vmem:[%s1362 + $0x458] sm:$0xff]
        %v1566 = vld [vmem:[%s1362 + $0x460] sm:$0xff]
        %v1567 = vld [vmem:[%s1362 + $0x468] sm:$0xff]
        %v1568 = vld [vmem:[%s1362 + $0x470] sm:$0xff]
        %v1569 = vld [vmem:[%s1362 + $0x478] sm:$0xff]
        %v1570 = vld [vmem:[%s1362 + $0x480] sm:$0xff]
        %v1571 = vld [vmem:[%s1362 + $0x488] sm:$0xff]
        %v1572 = vld [vmem:[%s1362 + $0x490] sm:$0xff]
        %v1573 = vld [vmem:[%s1362 + $0x498] sm:$0xff]
        %v1574 = vld [vmem:[%s1362 + $0x4a0] sm:$0xff]
        %v1575 = vld [vmem:[%s1362 + $0x4a8] sm:$0xff]
        %v1576 = vld [vmem:[%s1362 + $0x4b0] sm:$0xff]
        %v1577 = vld [vmem:[%s1362 + $0x4b8] sm:$0xff]
        %v1578 = vld [vmem:[%s1362 + $0x4c0] sm:$0xff]
        %v1579 = vld [vmem:[%s1362 + $0x4c8] sm:$0xff]
        %v1580 = vld [vmem:[%s1362 + $0x4d0] sm:$0xff]
        %v1581 = vld [vmem:[%s1362 + $0x4d8] sm:$0xff]
        %v1582 = vld [vmem:[%s1362 + $0x4e0] sm:$0xff]
        %v1583 = vld [vmem:[%s1362 + $0x4e8] sm:$0xff]
        %v1584 = vld [vmem:[%s1362 + $0x4f0] sm:$0xff]
        %v1585 = vld [vmem:[%s1362 + $0x4f8] sm:$0xff]
        %v1586 = vld [vmem:[%s1362 + $0x500] sm:$0xff]
        %v1587 = vld [vmem:[%s1362 + $0x508] sm:$0xff]
        %v1588 = vld [vmem:[%s1362 + $0x510] sm:$0xff]
        %v1589 = vld [vmem:[%s1362 + $0x518] sm:$0xff]
        %v1590 = vld [vmem:[%s1362 + $0x520] sm:$0xff]
        %v1591 = vld [vmem:[%s1362 + $0x528] sm:$0xff]
        %v1592 = vld [vmem:[%s1362 + $0x530] sm:$0xff]
        %v1593 = vld [vmem:[%s1362 + $0x538] sm:$0xff]
        %v1594 = vld [vmem:[%s1362 + $0x540] sm:$0xff]
        %v1595 = vld [vmem:[%s1362 + $0x548] sm:$0xff]
        %v1596 = vld [vmem:[%s1362 + $0x550] sm:$0xff]
        %v1597 = vld [vmem:[%s1362 + $0x558] sm:$0xff]
        %v1598 = vld [vmem:[%s1362 + $0x560] sm:$0xff]
        %v1599 = vld [vmem:[%s1362 + $0x568] sm:$0xff]
        %v1600 = vld [vmem:[%s1362 + $0x570] sm:$0xff]
        %v1601 = vld [vmem:[%s1362 + $0x578] sm:$0xff]
        %v1602 = vld [vmem:[%s1362 + $0x580] sm:$0xff]
        %v1603 = vld [vmem:[%s1362 + $0x588] sm:$0xff]
        %v1604 = vld [vmem:[%s1362 + $0x590] sm:$0xff]
        %v1605 = vld [vmem:[%s1362 + $0x598] sm:$0xff]
        %v1606 = vld [vmem:[%s1362 + $0x5a0] sm:$0xff]
        %v1607 = vld [vmem:[%s1362 + $0x5a8] sm:$0xff]
        %v1608 = vld [vmem:[%s1362 + $0x5b0] sm:$0xff]
        %v1609 = vld [vmem:[%s1362 + $0x5b8] sm:$0xff]
        %v1610 = vld [vmem:[%s1362 + $0x5c0] sm:$0xff]
        %v1611 = vld [vmem:[%s1362 + $0x5c8] sm:$0xff]
        %v1612 = vld [vmem:[%s1362 + $0x5d0] sm:$0xff]
        %v1613 = vld [vmem:[%s1362 + $0x5d8] sm:$0xff]
        %v1614 = vld [vmem:[%s1362 + $0x5e0] sm:$0xff]
        %v1615 = vld [vmem:[%s1362 + $0x5e8] sm:$0xff]
        %v1616 = vld [vmem:[%s1362 + $0x5f0] sm:$0xff]
        %v1617 = vld [vmem:[%s1362 + $0x5f8] sm:$0xff]
        %v1618 = vld [vmem:[%s1362 + $0x600] sm:$0xff]
        %v1619 = vld [vmem:[%s1362 + $0x608] sm:$0xff]
        %v1620 = vld [vmem:[%s1362 + $0x610] sm:$0xff]
        %v1621 = vld [vmem:[%s1362 + $0x618] sm:$0xff]
        %v1622 = vld [vmem:[%s1362 + $0x620] sm:$0xff]
        %v1623 = vld [vmem:[%s1362 + $0x628] sm:$0xff]
        %v1624 = vld [vmem:[%s1362 + $0x630] sm:$0xff]
        %v1625 = vld [vmem:[%s1362 + $0x638] sm:$0xff]
        %v1626 = vld [vmem:[%s1362 + $0x640] sm:$0xff]
        %v1627 = vld [vmem:[%s1362 + $0x648] sm:$0xff]
        %v1628 = vld [vmem:[%s1362 + $0x650] sm:$0xff]
        %v1629 = vld [vmem:[%s1362 + $0x658] sm:$0xff]
        %v1630 = vld [vmem:[%s1362 + $0x660] sm:$0xff]
        %v1631 = vld [vmem:[%s1362 + $0x668] sm:$0xff]
        %v1632 = vld [vmem:[%s1362 + $0x670] sm:$0xff]
        %v1633 = vld [vmem:[%s1362 + $0x678] sm:$0xff]
        %v1634 = vld [vmem:[%s1362 + $0x680] sm:$0xff]
        %v1635 = vld [vmem:[%s1362 + $0x688] sm:$0xff]
        %v1636 = vld [vmem:[%s1362 + $0x690] sm:$0xff]
        %v1637 = vld [vmem:[%s1362 + $0x698] sm:$0xff]
        %v1638 = vld [vmem:[%s1362 + $0x6a0] sm:$0xff]
        %v1639 = vld [vmem:[%s1362 + $0x6a8] sm:$0xff]
        %v1640 = vld [vmem:[%s1362 + $0x6b0] sm:$0xff]
        %v1641 = vld [vmem:[%s1362 + $0x6b8] sm:$0xff]
        %v1642 = vld [vmem:[%s1362 + $0x6c0] sm:$0xff]
        %v1643 = vld [vmem:[%s1362 + $0x6c8] sm:$0xff]
        %v1644 = vld [vmem:[%s1362 + $0x6d0] sm:$0xff]
        %v1645 = vld [vmem:[%s1362 + $0x6d8] sm:$0xff]
        %v1646 = vld [vmem:[%s1362 + $0x6e0] sm:$0xff]
        %v1647 = vld [vmem:[%s1362 + $0x6e8] sm:$0xff]
        %v1648 = vld [vmem:[%s1362 + $0x6f0] sm:$0xff]
        %v1649 = vld [vmem:[%s1362 + $0x6f8] sm:$0xff]
        %v1650 = vld [vmem:[%s1362 + $0x700] sm:$0xff]
        %v1651 = vld [vmem:[%s1362 + $0x708] sm:$0xff]
        %v1652 = vld [vmem:[%s1362 + $0x710] sm:$0xff]
        %v1653 = vld [vmem:[%s1362 + $0x718] sm:$0xff]
        %v1654 = vld [vmem:[%s1362 + $0x720] sm:$0xff]
        %v1655 = vld [vmem:[%s1362 + $0x728] sm:$0xff]
        %v1656 = vld [vmem:[%s1362 + $0x730] sm:$0xff]
        %v1657 = vld [vmem:[%s1362 + $0x738] sm:$0xff]
        %v1658 = vld [vmem:[%s1362 + $0x740] sm:$0xff]
        %v1659 = vld [vmem:[%s1362 + $0x748] sm:$0xff]
        %v1660 = vld [vmem:[%s1362 + $0x750] sm:$0xff]
        %v1661 = vld [vmem:[%s1362 + $0x758] sm:$0xff]
        %v1662 = vld [vmem:[%s1362 + $0x760] sm:$0xff]
        %v1663 = vld [vmem:[%s1362 + $0x768] sm:$0xff]
        %v1664 = vld [vmem:[%s1362 + $0x770] sm:$0xff]
        %v1665 = vld [vmem:[%s1362 + $0x778] sm:$0xff]
        %v1666 = vld [vmem:[%s1362 + $0x780] sm:$0xff]
        %v1667 = vld [vmem:[%s1362 + $0x788] sm:$0xff]
        %v1668 = vld [vmem:[%s1362 + $0x790] sm:$0xff]
        %v1669 = vld [vmem:[%s1362 + $0x798] sm:$0xff]
        %v1670 = vld [vmem:[%s1362 + $0x7a0] sm:$0xff]
        %v1671 = vld [vmem:[%s1362 + $0x7a8] sm:$0xff]
        %v1672 = vld [vmem:[%s1362 + $0x7b0] sm:$0xff]
        %v1673 = vld [vmem:[%s1362 + $0x7b8] sm:$0xff]
        %v1674 = vld [vmem:[%s1362 + $0x7c0] sm:$0xff]
        %v1675 = vld [vmem:[%s1362 + $0x7c8] sm:$0xff]
        %v1676 = vld [vmem:[%s1362 + $0x7d0] sm:$0xff]
        %v1677 = vld [vmem:[%s1362 + $0x7d8] sm:$0xff]
        %v1678 = vld [vmem:[%s1362 + $0x7e0] sm:$0xff]
        %v1679 = vld [vmem:[%s1362 + $0x7e8] sm:$0xff]
        %v1680 = vld [vmem:[%s1362 + $0x7f0] sm:$0xff]
        %v1681 = vld [vmem:[%s1362 + $0x7f8] sm:$0xff]
        %v1682 = vld [vmem:[%s1362 + $0x800] sm:$0xff]
        %v1683 = vld [vmem:[%s1362 + $0x808] sm:$0xff]
        %v1684 = vld [vmem:[%s1362 + $0x810] sm:$0xff]
        %v1685 = vld [vmem:[%s1362 + $0x818] sm:$0xff]
        %v1686 = vld [vmem:[%s1362 + $0x820] sm:$0xff]
        %v1687 = vld [vmem:[%s1362 + $0x828] sm:$0xff]
        %v1688 = vld [vmem:[%s1362 + $0x830] sm:$0xff]
        %v1689 = vld [vmem:[%s1362 + $0x838] sm:$0xff]
        %v1690 = vld [vmem:[%s1362 + $0x840] sm:$0xff]
        %v1691 = vld [vmem:[%s1362 + $0x848] sm:$0xff]
        %v1692 = vld [vmem:[%s1362 + $0x850] sm:$0xff]
        %v1693 = vld [vmem:[%s1362 + $0x858] sm:$0xff]
        %v1694 = vld [vmem:[%s1362 + $0x860] sm:$0xff]
        %v1695 = vld [vmem:[%s1362 + $0x868] sm:$0xff]
        %v1696 = vld [vmem:[%s1362 + $0x870] sm:$0xff]
        %v1697 = vld [vmem:[%s1362 + $0x878] sm:$0xff]
        %v1698 = vld [vmem:[%s1362 + $0x880] sm:$0xff]
        %v1699 = vld [vmem:[%s1362 + $0x888] sm:$0xff]
        %v1700 = vld [vmem:[%s1362 + $0x890] sm:$0xff]
        %v1701 = vld [vmem:[%s1362 + $0x898] sm:$0xff]
        %v1702 = vld [vmem:[%s1362 + $0x8a0] sm:$0xff]
        %v1703 = vld [vmem:[%s1362 + $0x8a8] sm:$0xff]
        %v1704 = vld [vmem:[%s1362 + $0x8b0] sm:$0xff]
        %v1705 = vld [vmem:[%s1362 + $0x8b8] sm:$0xff]
        %v1706 = vld [vmem:[%s1362 + $0x8c0] sm:$0xff]
        %v1707 = vld [vmem:[%s1362 + $0x8c8] sm:$0xff]
        %v1708 = vld [vmem:[%s1362 + $0x8d0] sm:$0xff]
        %v1709 = vld [vmem:[%s1362 + $0x8d8] sm:$0xff]
        %v1710 = vld [vmem:[%s1362 + $0x8e0] sm:$0xff]
        %v1711 = vld [vmem:[%s1362 + $0x8e8] sm:$0xff]
        %v1712 = vld [vmem:[%s1362 + $0x8f0] sm:$0xff]
        %v1713 = vld [vmem:[%s1362 + $0x8f8] sm:$0xff]
        %v1714 = vld [vmem:[%s1405] sm:$0x3]
        %v1716 = vlaneseq
        %v1717 = vshrl.u32 %v1716, 7
        %v1718 = vsub.s32 0, %v1717
        %v1719 = vrot.slane %v1714, %v1718
        %v1720 = vlaneseq
        %v1721 = vshrl.u32 %v1720, 7
        %v1722 = vsub.s32 1, %v1721
        %v1723 = vrot.slane %v1714, %v1722
        %v1735 = vunpack.c.l.b16 %v1417
        %v1736 = vunpack.c.h.b16 %v1417
        %v1737 = vunpack.c.l.b16 %v1418
        %v1738 = vunpack.c.h.b16 %v1418
        %v1739 = vunpack.c.l.b16 %v1419
        %v1740 = vunpack.c.h.b16 %v1419
        %v1741 = vunpack.c.l.b16 %v1420
        %v1742 = vunpack.c.h.b16 %v1420
        %v1743 = vunpack.c.l.b16 %v1421
        %v1744 = vunpack.c.h.b16 %v1421
        %v1745 = vunpack.c.l.b16 %v1422
        %v1746 = vunpack.c.h.b16 %v1422
        %v1747 = vunpack.c.l.b16 %v1423
        %v1748 = vunpack.c.h.b16 %v1423
        %v1749 = vunpack.c.l.b16 %v1424
        %v1750 = vunpack.c.h.b16 %v1424
        %v1751 = vunpack.c.l.b16 %v1425
        %v1752 = vunpack.c.h.b16 %v1425
        %v1753 = vpack.c.b16 %v1735, %v1735
        %v1754 = vpack.c.b16 %v1736, %v1736
        %v1755 = vpack.c.b16 %v1737, %v1737
        %v1756 = vpack.c.b16 %v1738, %v1738
        %v1757 = vpack.c.b16 %v1739, %v1739
        %v1758 = vpack.c.b16 %v1740, %v1740
        %v1759 = vpack.c.b16 %v1741, %v1741
        %v1760 = vpack.c.b16 %v1742, %v1742
        %v1761 = vpack.c.b16 %v1743, %v1743
        %v1762 = vpack.c.b16 %v1744, %v1744
        %v1763 = vpack.c.b16 %v1745, %v1745
        %v1764 = vpack.c.b16 %v1746, %v1746
        %v1765 = vpack.c.b16 %v1747, %v1747
        %v1766 = vpack.c.b16 %v1748, %v1748
        %v1767 = vpack.c.b16 %v1749, %v1749
        %v1768 = vpack.c.b16 %v1750, %v1750
        %v1769 = vpack.c.b16 %v1751, %v1751
        %v1770 = vpack.c.b16 %v1752, %v1752
        %v2077 = vunpack.c.l.b16 %v1426
        %v2078 = vunpack.c.h.b16 %v1426
        %v2079 = vunpack.c.l.b16 %v1427
        %v2080 = vunpack.c.h.b16 %v1427
        %v2081 = vunpack.c.l.b16 %v1428
        %v2082 = vunpack.c.h.b16 %v1428
        %v2083 = vunpack.c.l.b16 %v1429
        %v2084 = vunpack.c.h.b16 %v1429
        %v2085 = vunpack.c.l.b16 %v1430
        %v2086 = vunpack.c.h.b16 %v1430
        %v2087 = vunpack.c.l.b16 %v1431
        %v2088 = vunpack.c.h.b16 %v1431
        %v2089 = vunpack.c.l.b16 %v1432
        %v2090 = vunpack.c.h.b16 %v1432
        %v2091 = vunpack.c.l.b16 %v1433
        %v2092 = vunpack.c.h.b16 %v1433
        %v2093 = vunpack.c.l.b16 %v1434
        %v2094 = vunpack.c.h.b16 %v1434
        %v2095 = vunpack.c.l.b16 %v1435
        %v2096 = vunpack.c.h.b16 %v1435
        %v2097 = vunpack.c.l.b16 %v1436
        %v2098 = vunpack.c.h.b16 %v1436
        %v2099 = vunpack.c.l.b16 %v1437
        %v2100 = vunpack.c.h.b16 %v1437
        %v2101 = vunpack.c.l.b16 %v1438
        %v2102 = vunpack.c.h.b16 %v1438
        %v2103 = vunpack.c.l.b16 %v1439
        %v2104 = vunpack.c.h.b16 %v1439
        %v2105 = vunpack.c.l.b16 %v1440
        %v2106 = vunpack.c.h.b16 %v1440
        %v2107 = vunpack.c.l.b16 %v1441
        %v2108 = vunpack.c.h.b16 %v1441
        %v2109 = vunpack.c.l.b16 %v1442
        %v2110 = vunpack.c.h.b16 %v1442
        %v2111 = vunpack.c.l.b16 %v1443
        %v2112 = vunpack.c.h.b16 %v1443
        %v2113 = vunpack.c.l.b16 %v1444
        %v2114 = vunpack.c.h.b16 %v1444
        %v2115 = vunpack.c.l.b16 %v1445
        %v2116 = vunpack.c.h.b16 %v1445
        %v2117 = vunpack.c.l.b16 %v1446
        %v2118 = vunpack.c.h.b16 %v1446
        %v2119 = vunpack.c.l.b16 %v1447
        %v2120 = vunpack.c.h.b16 %v1447
        %v2121 = vunpack.c.l.b16 %v1448
        %v2122 = vunpack.c.h.b16 %v1448
        %v2123 = vunpack.c.l.b16 %v1449
        %v2124 = vunpack.c.h.b16 %v1449
        %v2125 = vunpack.c.l.b16 %v1450
        %v2126 = vunpack.c.h.b16 %v1450
        %v2127 = vunpack.c.l.b16 %v1451
        %v2128 = vunpack.c.h.b16 %v1451
        %v2129 = vunpack.c.l.b16 %v1452
        %v2130 = vunpack.c.h.b16 %v1452
        %v2131 = vunpack.c.l.b16 %v1453
        %v2132 = vunpack.c.h.b16 %v1453
        %v2133 = vunpack.c.l.b16 %v1454
        %v2134 = vunpack.c.h.b16 %v1454
        %v2135 = vunpack.c.l.b16 %v1455
        %v2136 = vunpack.c.h.b16 %v1455
        %v2137 = vunpack.c.l.b16 %v1456
        %v2138 = vunpack.c.h.b16 %v1456
        %v2139 = vunpack.c.l.b16 %v1457
        %v2140 = vunpack.c.h.b16 %v1457
        %v2141 = vunpack.c.l.b16 %v1458
        %v2142 = vunpack.c.h.b16 %v1458
        %v2143 = vunpack.c.l.b16 %v1459
        %v2144 = vunpack.c.h.b16 %v1459
        %v2145 = vunpack.c.l.b16 %v1460
        %v2146 = vunpack.c.h.b16 %v1460
        %v2147 = vunpack.c.l.b16 %v1461
        %v2148 = vunpack.c.h.b16 %v1461
        %v2149 = vunpack.c.l.b16 %v1462
        %v2150 = vunpack.c.h.b16 %v1462
        %v2151 = vunpack.c.l.b16 %v1463
        %v2152 = vunpack.c.h.b16 %v1463
        %v2153 = vunpack.c.l.b16 %v1464
        %v2154 = vunpack.c.h.b16 %v1464
        %v2155 = vunpack.c.l.b16 %v1465
        %v2156 = vunpack.c.h.b16 %v1465
        %v2157 = vunpack.c.l.b16 %v1466
        %v2158 = vunpack.c.h.b16 %v1466
        %v2159 = vunpack.c.l.b16 %v1467
        %v2160 = vunpack.c.h.b16 %v1467
        %v2161 = vunpack.c.l.b16 %v1468
        %v2162 = vunpack.c.h.b16 %v1468
        %v2163 = vunpack.c.l.b16 %v1469
        %v2164 = vunpack.c.h.b16 %v1469
        %v2165 = vunpack.c.l.b16 %v1470
        %v2166 = vunpack.c.h.b16 %v1470
        %v2167 = vunpack.c.l.b16 %v1471
        %v2168 = vunpack.c.h.b16 %v1471
        %v2169 = vunpack.c.l.b16 %v1472
        %v2170 = vunpack.c.h.b16 %v1472
        %v2171 = vunpack.c.l.b16 %v1473
        %v2172 = vunpack.c.h.b16 %v1473
        %v2173 = vunpack.c.l.b16 %v1474
        %v2174 = vunpack.c.h.b16 %v1474
        %v2175 = vunpack.c.l.b16 %v1475
        %v2176 = vunpack.c.h.b16 %v1475
        %v2177 = vunpack.c.l.b16 %v1476
        %v2178 = vunpack.c.h.b16 %v1476
        %v2179 = vunpack.c.l.b16 %v1477
        %v2180 = vunpack.c.h.b16 %v1477
        %v2181 = vunpack.c.l.b16 %v1478
        %v2182 = vunpack.c.h.b16 %v1478
        %v2183 = vunpack.c.l.b16 %v1479
        %v2184 = vunpack.c.h.b16 %v1479
        %v2185 = vunpack.c.l.b16 %v1480
        %v2186 = vunpack.c.h.b16 %v1480
        %v2187 = vunpack.c.l.b16 %v1481
        %v2188 = vunpack.c.h.b16 %v1481
        %v2189 = vunpack.c.l.b16 %v1482
        %v2190 = vunpack.c.h.b16 %v1482
        %v2191 = vunpack.c.l.b16 %v1483
        %v2192 = vunpack.c.h.b16 %v1483
        %v2193 = vunpack.c.l.b16 %v1484
        %v2194 = vunpack.c.h.b16 %v1484
        %v2195 = vunpack.c.l.b16 %v1485
        %v2196 = vunpack.c.h.b16 %v1485
        %v2197 = vunpack.c.l.b16 %v1486
        %v2198 = vunpack.c.h.b16 %v1486
        %v2199 = vunpack.c.l.b16 %v1487
        %v2200 = vunpack.c.h.b16 %v1487
        %v2201 = vunpack.c.l.b16 %v1488
        %v2202 = vunpack.c.h.b16 %v1488
        %v2203 = vunpack.c.l.b16 %v1489
        %v2204 = vunpack.c.h.b16 %v1489
        %v2205 = vunpack.c.l.b16 %v1490
        %v2206 = vunpack.c.h.b16 %v1490
        %v2207 = vunpack.c.l.b16 %v1491
        %v2208 = vunpack.c.h.b16 %v1491
        %v2209 = vunpack.c.l.b16 %v1492
        %v2210 = vunpack.c.h.b16 %v1492
        %v2211 = vunpack.c.l.b16 %v1493
        %v2212 = vunpack.c.h.b16 %v1493
        %v2213 = vunpack.c.l.b16 %v1494
        %v2214 = vunpack.c.h.b16 %v1494
        %v2215 = vunpack.c.l.b16 %v1495
        %v2216 = vunpack.c.h.b16 %v1495
        %v2217 = vunpack.c.l.b16 %v1496
        %v2218 = vunpack.c.h.b16 %v1496
        %v2219 = vunpack.c.l.b16 %v1497
        %v2220 = vunpack.c.h.b16 %v1497
        %v2221 = vunpack.c.l.b16 %v1498
        %v2222 = vunpack.c.h.b16 %v1498
        %v2223 = vunpack.c.l.b16 %v1499
        %v2224 = vunpack.c.h.b16 %v1499
        %v2225 = vunpack.c.l.b16 %v1500
        %v2226 = vunpack.c.h.b16 %v1500
        %v2227 = vunpack.c.l.b16 %v1501
        %v2228 = vunpack.c.h.b16 %v1501
        %v2229 = vunpack.c.l.b16 %v1502
        %v2230 = vunpack.c.h.b16 %v1502
        %v2231 = vunpack.c.l.b16 %v1503
        %v2232 = vunpack.c.h.b16 %v1503
        %v2233 = vunpack.c.l.b16 %v1504
        %v2234 = vunpack.c.h.b16 %v1504
        %v2235 = vunpack.c.l.b16 %v1505
        %v2236 = vunpack.c.h.b16 %v1505
        %v2237 = vunpack.c.l.b16 %v1506
        %v2238 = vunpack.c.h.b16 %v1506
        %v2239 = vunpack.c.l.b16 %v1507
        %v2240 = vunpack.c.h.b16 %v1507
        %v2241 = vunpack.c.l.b16 %v1508
        %v2242 = vunpack.c.h.b16 %v1508
        %v2243 = vunpack.c.l.b16 %v1509
        %v2244 = vunpack.c.h.b16 %v1509
        %v2245 = vunpack.c.l.b16 %v1510
        %v2246 = vunpack.c.h.b16 %v1510
        %v2247 = vunpack.c.l.b16 %v1511
        %v2248 = vunpack.c.h.b16 %v1511
        %v2249 = vunpack.c.l.b16 %v1512
        %v2250 = vunpack.c.h.b16 %v1512
        %v2251 = vunpack.c.l.b16 %v1513
        %v2252 = vunpack.c.h.b16 %v1513
        %v2253 = vunpack.c.l.b16 %v1514
        %v2254 = vunpack.c.h.b16 %v1514
        %v2255 = vunpack.c.l.b16 %v1515
        %v2256 = vunpack.c.h.b16 %v1515
        %v2257 = vunpack.c.l.b16 %v1516
        %v2258 = vunpack.c.h.b16 %v1516
        %v2259 = vunpack.c.l.b16 %v1517
        %v2260 = vunpack.c.h.b16 %v1517
        %v2261 = vunpack.c.l.b16 %v1518
        %v2262 = vunpack.c.h.b16 %v1518
        %v2263 = vunpack.c.l.b16 %v1519
        %v2264 = vunpack.c.h.b16 %v1519
        %v2265 = vunpack.c.l.b16 %v1520
        %v2266 = vunpack.c.h.b16 %v1520
        %v2267 = vunpack.c.l.b16 %v1521
        %v2268 = vunpack.c.h.b16 %v1521
        %v2269 = vunpack.c.l.b16 %v1522
        %v2270 = vunpack.c.h.b16 %v1522
        %v2271 = vunpack.c.l.b16 %v1523
        %v2272 = vunpack.c.h.b16 %v1523
        %v2273 = vunpack.c.l.b16 %v1524
        %v2274 = vunpack.c.h.b16 %v1524
        %v2275 = vunpack.c.l.b16 %v1525
        %v2276 = vunpack.c.h.b16 %v1525
        %v2277 = vunpack.c.l.b16 %v1526
        %v2278 = vunpack.c.h.b16 %v1526
        %v2279 = vunpack.c.l.b16 %v1527
        %v2280 = vunpack.c.h.b16 %v1527
        %v2281 = vunpack.c.l.b16 %v1528
        %v2282 = vunpack.c.h.b16 %v1528
        %v2283 = vunpack.c.l.b16 %v1529
        %v2284 = vunpack.c.h.b16 %v1529
        %v2285 = vunpack.c.l.b16 %v1530
        %v2286 = vunpack.c.h.b16 %v1530
        %v2287 = vunpack.c.l.b16 %v1531
        %v2288 = vunpack.c.h.b16 %v1531
        %v2289 = vunpack.c.l.b16 %v1532
        %v2290 = vunpack.c.h.b16 %v1532
        %v2291 = vunpack.c.l.b16 %v1533
        %v2292 = vunpack.c.h.b16 %v1533
        %v2293 = vunpack.c.l.b16 %v1534
        %v2294 = vunpack.c.h.b16 %v1534
        %v2295 = vunpack.c.l.b16 %v1535
        %v2296 = vunpack.c.h.b16 %v1535
        %v2297 = vunpack.c.l.b16 %v1536
        %v2298 = vunpack.c.h.b16 %v1536
        %v2299 = vunpack.c.l.b16 %v1537
        %v2300 = vunpack.c.h.b16 %v1537
        %v2301 = vunpack.c.l.b16 %v1538
        %v2302 = vunpack.c.h.b16 %v1538
        %v2303 = vunpack.c.l.b16 %v1539
        %v2304 = vunpack.c.h.b16 %v1539
        %v2305 = vunpack.c.l.b16 %v1540
        %v2306 = vunpack.c.h.b16 %v1540
        %v2307 = vunpack.c.l.b16 %v1541
        %v2308 = vunpack.c.h.b16 %v1541
        %v2309 = vunpack.c.l.b16 %v1542
        %v2310 = vunpack.c.h.b16 %v1542
        %v2311 = vunpack.c.l.b16 %v1543
        %v2312 = vunpack.c.h.b16 %v1543
        %v2313 = vunpack.c.l.b16 %v1544
        %v2314 = vunpack.c.h.b16 %v1544
        %v2315 = vunpack.c.l.b16 %v1545
        %v2316 = vunpack.c.h.b16 %v1545
        %v2317 = vunpack.c.l.b16 %v1546
        %v2318 = vunpack.c.h.b16 %v1546
        %v2319 = vunpack.c.l.b16 %v1547
        %v2320 = vunpack.c.h.b16 %v1547
        %v2321 = vunpack.c.l.b16 %v1548
        %v2322 = vunpack.c.h.b16 %v1548
        %v2323 = vunpack.c.l.b16 %v1549
        %v2324 = vunpack.c.h.b16 %v1549
        %v2325 = vunpack.c.l.b16 %v1550
        %v2326 = vunpack.c.h.b16 %v1550
        %v2327 = vunpack.c.l.b16 %v1551
        %v2328 = vunpack.c.h.b16 %v1551
        %v2329 = vunpack.c.l.b16 %v1552
        %v2330 = vunpack.c.h.b16 %v1552
        %v2331 = vunpack.c.l.b16 %v1553
        %v2332 = vunpack.c.h.b16 %v1553
        %v2333 = vunpack.c.l.b16 %v1554
        %v2334 = vunpack.c.h.b16 %v1554
        %v2335 = vunpack.c.l.b16 %v1555
        %v2336 = vunpack.c.h.b16 %v1555
        %v2337 = vunpack.c.l.b16 %v1556
        %v2338 = vunpack.c.h.b16 %v1556
        %v2339 = vunpack.c.l.b16 %v1557
        %v2340 = vunpack.c.h.b16 %v1557
        %v2341 = vunpack.c.l.b16 %v1558
        %v2342 = vunpack.c.h.b16 %v1558
        %v2343 = vunpack.c.l.b16 %v1559
        %v2344 = vunpack.c.h.b16 %v1559
        %v2345 = vunpack.c.l.b16 %v1560
        %v2346 = vunpack.c.h.b16 %v1560
        %v2347 = vunpack.c.l.b16 %v1561
        %v2348 = vunpack.c.h.b16 %v1561
        %v2349 = vunpack.c.l.b16 %v1562
        %v2350 = vunpack.c.h.b16 %v1562
        %v2351 = vunpack.c.l.b16 %v1563
        %v2352 = vunpack.c.h.b16 %v1563
        %v2353 = vunpack.c.l.b16 %v1564
        %v2354 = vunpack.c.h.b16 %v1564
        %v2355 = vunpack.c.l.b16 %v1565
        %v2356 = vunpack.c.h.b16 %v1565
        %v2357 = vunpack.c.l.b16 %v1566
        %v2358 = vunpack.c.h.b16 %v1566
        %v2359 = vunpack.c.l.b16 %v1567
        %v2360 = vunpack.c.h.b16 %v1567
        %v2361 = vunpack.c.l.b16 %v1568
        %v2362 = vunpack.c.h.b16 %v1568
        %v2363 = vunpack.c.l.b16 %v1569
        %v2364 = vunpack.c.h.b16 %v1569
        %v2365 = vunpack.c.l.b16 %v1570
        %v2366 = vunpack.c.h.b16 %v1570
        %v2367 = vunpack.c.l.b16 %v1571
        %v2368 = vunpack.c.h.b16 %v1571
        %v2369 = vunpack.c.l.b16 %v1572
        %v2370 = vunpack.c.h.b16 %v1572
        %v2371 = vunpack.c.l.b16 %v1573
        %v2372 = vunpack.c.h.b16 %v1573
        %v2373 = vunpack.c.l.b16 %v1574
        %v2374 = vunpack.c.h.b16 %v1574
        %v2375 = vunpack.c.l.b16 %v1575
        %v2376 = vunpack.c.h.b16 %v1575
        %v2377 = vunpack.c.l.b16 %v1576
        %v2378 = vunpack.c.h.b16 %v1576
        %v2379 = vunpack.c.l.b16 %v1577
        %v2380 = vunpack.c.h.b16 %v1577
        %v2381 = vunpack.c.l.b16 %v1578
        %v2382 = vunpack.c.h.b16 %v1578
        %v2383 = vunpack.c.l.b16 %v1579
        %v2384 = vunpack.c.h.b16 %v1579
        %v2385 = vunpack.c.l.b16 %v1580
        %v2386 = vunpack.c.h.b16 %v1580
        %v2387 = vunpack.c.l.b16 %v1581
        %v2388 = vunpack.c.h.b16 %v1581
        %v2389 = vunpack.c.l.b16 %v1582
        %v2390 = vunpack.c.h.b16 %v1582
        %v2391 = vunpack.c.l.b16 %v1583
        %v2392 = vunpack.c.h.b16 %v1583
        %v2393 = vunpack.c.l.b16 %v1584
        %v2394 = vunpack.c.h.b16 %v1584
        %v2395 = vunpack.c.l.b16 %v1585
        %v2396 = vunpack.c.h.b16 %v1585
        %v2397 = vunpack.c.l.b16 %v1586
        %v2398 = vunpack.c.h.b16 %v1586
        %v2399 = vunpack.c.l.b16 %v1587
        %v2400 = vunpack.c.h.b16 %v1587
        %v2401 = vunpack.c.l.b16 %v1588
        %v2402 = vunpack.c.h.b16 %v1588
        %v2403 = vunpack.c.l.b16 %v1589
        %v2404 = vunpack.c.h.b16 %v1589
        %v2405 = vunpack.c.l.b16 %v1590
        %v2406 = vunpack.c.h.b16 %v1590
        %v2407 = vunpack.c.l.b16 %v1591
        %v2408 = vunpack.c.h.b16 %v1591
        %v2409 = vunpack.c.l.b16 %v1592
        %v2410 = vunpack.c.h.b16 %v1592
        %v2411 = vunpack.c.l.b16 %v1593
        %v2412 = vunpack.c.h.b16 %v1593
        %v2413 = vunpack.c.l.b16 %v1594
        %v2414 = vunpack.c.h.b16 %v1594
        %v2415 = vunpack.c.l.b16 %v1595
        %v2416 = vunpack.c.h.b16 %v1595
        %v2417 = vunpack.c.l.b16 %v1596
        %v2418 = vunpack.c.h.b16 %v1596
        %v2419 = vunpack.c.l.b16 %v1597
        %v2420 = vunpack.c.h.b16 %v1597
        %v2421 = vunpack.c.l.b16 %v1598
        %v2422 = vunpack.c.h.b16 %v1598
        %v2423 = vunpack.c.l.b16 %v1599
        %v2424 = vunpack.c.h.b16 %v1599
        %v2425 = vunpack.c.l.b16 %v1600
        %v2426 = vunpack.c.h.b16 %v1600
        %v2427 = vunpack.c.l.b16 %v1601
        %v2428 = vunpack.c.h.b16 %v1601
        %v2429 = vunpack.c.l.b16 %v1602
        %v2430 = vunpack.c.h.b16 %v1602
        %v2431 = vunpack.c.l.b16 %v1603
        %v2432 = vunpack.c.h.b16 %v1603
        %v2433 = vunpack.c.l.b16 %v1604
        %v2434 = vunpack.c.h.b16 %v1604
        %v2435 = vunpack.c.l.b16 %v1605
        %v2436 = vunpack.c.h.b16 %v1605
        %v2437 = vunpack.c.l.b16 %v1606
        %v2438 = vunpack.c.h.b16 %v1606
        %v2439 = vunpack.c.l.b16 %v1607
        %v2440 = vunpack.c.h.b16 %v1607
        %v2441 = vunpack.c.l.b16 %v1608
        %v2442 = vunpack.c.h.b16 %v1608
        %v2443 = vunpack.c.l.b16 %v1609
        %v2444 = vunpack.c.h.b16 %v1609
        %v2445 = vunpack.c.l.b16 %v1610
        %v2446 = vunpack.c.h.b16 %v1610
        %v2447 = vunpack.c.l.b16 %v1611
        %v2448 = vunpack.c.h.b16 %v1611
        %v2449 = vunpack.c.l.b16 %v1612
        %v2450 = vunpack.c.h.b16 %v1612
        %v2451 = vunpack.c.l.b16 %v1613
        %v2452 = vunpack.c.h.b16 %v1613
        %v2453 = vunpack.c.l.b16 %v1614
        %v2454 = vunpack.c.h.b16 %v1614
        %v2455 = vunpack.c.l.b16 %v1615
        %v2456 = vunpack.c.h.b16 %v1615
        %v2457 = vunpack.c.l.b16 %v1616
        %v2458 = vunpack.c.h.b16 %v1616
        %v2459 = vunpack.c.l.b16 %v1617
        %v2460 = vunpack.c.h.b16 %v1617
        %v2461 = vunpack.c.l.b16 %v1618
        %v2462 = vunpack.c.h.b16 %v1618
        %v2463 = vunpack.c.l.b16 %v1619
        %v2464 = vunpack.c.h.b16 %v1619
        %v2465 = vunpack.c.l.b16 %v1620
        %v2466 = vunpack.c.h.b16 %v1620
        %v2467 = vunpack.c.l.b16 %v1621
        %v2468 = vunpack.c.h.b16 %v1621
        %v2469 = vunpack.c.l.b16 %v1622
        %v2470 = vunpack.c.h.b16 %v1622
        %v2471 = vunpack.c.l.b16 %v1623
        %v2472 = vunpack.c.h.b16 %v1623
        %v2473 = vunpack.c.l.b16 %v1624
        %v2474 = vunpack.c.h.b16 %v1624
        %v2475 = vunpack.c.l.b16 %v1625
        %v2476 = vunpack.c.h.b16 %v1625
        %v2477 = vunpack.c.l.b16 %v1626
        %v2478 = vunpack.c.h.b16 %v1626
        %v2479 = vunpack.c.l.b16 %v1627
        %v2480 = vunpack.c.h.b16 %v1627
        %v2481 = vunpack.c.l.b16 %v1628
        %v2482 = vunpack.c.h.b16 %v1628
        %v2483 = vunpack.c.l.b16 %v1629
        %v2484 = vunpack.c.h.b16 %v1629
        %v2485 = vunpack.c.l.b16 %v1630
        %v2486 = vunpack.c.h.b16 %v1630
        %v2487 = vunpack.c.l.b16 %v1631
        %v2488 = vunpack.c.h.b16 %v1631
        %v2489 = vunpack.c.l.b16 %v1632
        %v2490 = vunpack.c.h.b16 %v1632
        %v2491 = vunpack.c.l.b16 %v1633
        %v2492 = vunpack.c.h.b16 %v1633
        %v2493 = vunpack.c.l.b16 %v1634
        %v2494 = vunpack.c.h.b16 %v1634
        %v2495 = vunpack.c.l.b16 %v1635
        %v2496 = vunpack.c.h.b16 %v1635
        %v2497 = vunpack.c.l.b16 %v1636
        %v2498 = vunpack.c.h.b16 %v1636
        %v2499 = vunpack.c.l.b16 %v1637
        %v2500 = vunpack.c.h.b16 %v1637
        %v2501 = vunpack.c.l.b16 %v1638
        %v2502 = vunpack.c.h.b16 %v1638
        %v2503 = vunpack.c.l.b16 %v1639
        %v2504 = vunpack.c.h.b16 %v1639
        %v2505 = vunpack.c.l.b16 %v1640
        %v2506 = vunpack.c.h.b16 %v1640
        %v2507 = vunpack.c.l.b16 %v1641
        %v2508 = vunpack.c.h.b16 %v1641
        %v2509 = vunpack.c.l.b16 %v1642
        %v2510 = vunpack.c.h.b16 %v1642
        %v2511 = vunpack.c.l.b16 %v1643
        %v2512 = vunpack.c.h.b16 %v1643
        %v2513 = vunpack.c.l.b16 %v1644
        %v2514 = vunpack.c.h.b16 %v1644
        %v2515 = vunpack.c.l.b16 %v1645
        %v2516 = vunpack.c.h.b16 %v1645
        %v2517 = vunpack.c.l.b16 %v1646
        %v2518 = vunpack.c.h.b16 %v1646
        %v2519 = vunpack.c.l.b16 %v1647
        %v2520 = vunpack.c.h.b16 %v1647
        %v2521 = vunpack.c.l.b16 %v1648
        %v2522 = vunpack.c.h.b16 %v1648
        %v2523 = vunpack.c.l.b16 %v1649
        %v2524 = vunpack.c.h.b16 %v1649
        %v2525 = vunpack.c.l.b16 %v1650
        %v2526 = vunpack.c.h.b16 %v1650
        %v2527 = vunpack.c.l.b16 %v1651
        %v2528 = vunpack.c.h.b16 %v1651
        %v2529 = vunpack.c.l.b16 %v1652
        %v2530 = vunpack.c.h.b16 %v1652
        %v2531 = vunpack.c.l.b16 %v1653
        %v2532 = vunpack.c.h.b16 %v1653
        %v2533 = vunpack.c.l.b16 %v1654
        %v2534 = vunpack.c.h.b16 %v1654
        %v2535 = vunpack.c.l.b16 %v1655
        %v2536 = vunpack.c.h.b16 %v1655
        %v2537 = vunpack.c.l.b16 %v1656
        %v2538 = vunpack.c.h.b16 %v1656
        %v2539 = vunpack.c.l.b16 %v1657
        %v2540 = vunpack.c.h.b16 %v1657
        %v2541 = vunpack.c.l.b16 %v1658
        %v2542 = vunpack.c.h.b16 %v1658
        %v2543 = vunpack.c.l.b16 %v1659
        %v2544 = vunpack.c.h.b16 %v1659
        %v2545 = vunpack.c.l.b16 %v1660
        %v2546 = vunpack.c.h.b16 %v1660
        %v2547 = vunpack.c.l.b16 %v1661
        %v2548 = vunpack.c.h.b16 %v1661
        %v2549 = vunpack.c.l.b16 %v1662
        %v2550 = vunpack.c.h.b16 %v1662
        %v2551 = vunpack.c.l.b16 %v1663
        %v2552 = vunpack.c.h.b16 %v1663
        %v2553 = vunpack.c.l.b16 %v1664
        %v2554 = vunpack.c.h.b16 %v1664
        %v2555 = vunpack.c.l.b16 %v1665
        %v2556 = vunpack.c.h.b16 %v1665
        %v2557 = vunpack.c.l.b16 %v1666
        %v2558 = vunpack.c.h.b16 %v1666
        %v2559 = vunpack.c.l.b16 %v1667
        %v2560 = vunpack.c.h.b16 %v1667
        %v2561 = vunpack.c.l.b16 %v1668
        %v2562 = vunpack.c.h.b16 %v1668
        %v2563 = vunpack.c.l.b16 %v1669
        %v2564 = vunpack.c.h.b16 %v1669
        %v2565 = vunpack.c.l.b16 %v1670
        %v2566 = vunpack.c.h.b16 %v1670
        %v2567 = vunpack.c.l.b16 %v1671
        %v2568 = vunpack.c.h.b16 %v1671
        %v2569 = vunpack.c.l.b16 %v1672
        %v2570 = vunpack.c.h.b16 %v1672
        %v2571 = vunpack.c.l.b16 %v1673
        %v2572 = vunpack.c.h.b16 %v1673
        %v2573 = vunpack.c.l.b16 %v1674
        %v2574 = vunpack.c.h.b16 %v1674
        %v2575 = vunpack.c.l.b16 %v1675
        %v2576 = vunpack.c.h.b16 %v1675
        %v2577 = vunpack.c.l.b16 %v1676
        %v2578 = vunpack.c.h.b16 %v1676
        %v2579 = vunpack.c.l.b16 %v1677
        %v2580 = vunpack.c.h.b16 %v1677
        %v2581 = vunpack.c.l.b16 %v1678
        %v2582 = vunpack.c.h.b16 %v1678
        %v2583 = vunpack.c.l.b16 %v1679
        %v2584 = vunpack.c.h.b16 %v1679
        %v2585 = vunpack.c.l.b16 %v1680
        %v2586 = vunpack.c.h.b16 %v1680
        %v2587 = vunpack.c.l.b16 %v1681
        %v2588 = vunpack.c.h.b16 %v1681
        %v2589 = vunpack.c.l.b16 %v1682
        %v2590 = vunpack.c.h.b16 %v1682
        %v2591 = vunpack.c.l.b16 %v1683
        %v2592 = vunpack.c.h.b16 %v1683
        %v2593 = vunpack.c.l.b16 %v1684
        %v2594 = vunpack.c.h.b16 %v1684
        %v2595 = vunpack.c.l.b16 %v1685
        %v2596 = vunpack.c.h.b16 %v1685
        %v2597 = vunpack.c.l.b16 %v1686
        %v2598 = vunpack.c.h.b16 %v1686
        %v2599 = vunpack.c.l.b16 %v1687
        %v2600 = vunpack.c.h.b16 %v1687
        %v2601 = vunpack.c.l.b16 %v1688
        %v2602 = vunpack.c.h.b16 %v1688
        %v2603 = vunpack.c.l.b16 %v1689
        %v2604 = vunpack.c.h.b16 %v1689
        %v2605 = vunpack.c.l.b16 %v1690
        %v2606 = vunpack.c.h.b16 %v1690
        %v2607 = vunpack.c.l.b16 %v1691
        %v2608 = vunpack.c.h.b16 %v1691
        %v2609 = vunpack.c.l.b16 %v1692
        %v2610 = vunpack.c.h.b16 %v1692
        %v2611 = vunpack.c.l.b16 %v1693
        %v2612 = vunpack.c.h.b16 %v1693
        %v2613 = vunpack.c.l.b16 %v1694
        %v2614 = vunpack.c.h.b16 %v1694
        %v2615 = vunpack.c.l.b16 %v1695
        %v2616 = vunpack.c.h.b16 %v1695
        %v2617 = vunpack.c.l.b16 %v1696
        %v2618 = vunpack.c.h.b16 %v1696
        %v2619 = vunpack.c.l.b16 %v1697
        %v2620 = vunpack.c.h.b16 %v1697
        %v2621 = vunpack.c.l.b16 %v1698
        %v2622 = vunpack.c.h.b16 %v1698
        %v2623 = vunpack.c.l.b16 %v1699
        %v2624 = vunpack.c.h.b16 %v1699
        %v2625 = vunpack.c.l.b16 %v1700
        %v2626 = vunpack.c.h.b16 %v1700
        %v2627 = vunpack.c.l.b16 %v1701
        %v2628 = vunpack.c.h.b16 %v1701
        %v2629 = vunpack.c.l.b16 %v1702
        %v2630 = vunpack.c.h.b16 %v1702
        %v2631 = vunpack.c.l.b16 %v1703
        %v2632 = vunpack.c.h.b16 %v1703
        %v2633 = vunpack.c.l.b16 %v1704
        %v2634 = vunpack.c.h.b16 %v1704
        %v2635 = vunpack.c.l.b16 %v1705
        %v2636 = vunpack.c.h.b16 %v1705
        %v2637 = vunpack.c.l.b16 %v1706
        %v2638 = vunpack.c.h.b16 %v1706
        %v2639 = vunpack.c.l.b16 %v1707
        %v2640 = vunpack.c.h.b16 %v1707
        %v2641 = vunpack.c.l.b16 %v1708
        %v2642 = vunpack.c.h.b16 %v1708
        %v2643 = vunpack.c.l.b16 %v1709
        %v2644 = vunpack.c.h.b16 %v1709
        %v2645 = vunpack.c.l.b16 %v1710
        %v2646 = vunpack.c.h.b16 %v1710
        %v2647 = vunpack.c.l.b16 %v1711
        %v2648 = vunpack.c.h.b16 %v1711
        %v2649 = vunpack.c.l.b16 %v1712
        %v2650 = vunpack.c.h.b16 %v1712
        %v2651 = vunpack.c.l.b16 %v1713
        %v2652 = vunpack.c.h.b16 %v1713
        %v2653 = vpack.c.b16 %v2079, %v2077
        %v2654 = vpack.c.b16 %v2080, %v2078
        %v2655 = vpack.c.b16 %v2083, %v2081
        %v2656 = vpack.c.b16 %v2084, %v2082
        %v2657 = vpack.c.b16 %v2087, %v2085
        %v2658 = vpack.c.b16 %v2088, %v2086
        %v2659 = vpack.c.b16 %v2091, %v2089
        %v2660 = vpack.c.b16 %v2092, %v2090
        %v2661 = vpack.c.b16 %v2095, %v2093
        %v2662 = vpack.c.b16 %v2096, %v2094
        %v2663 = vpack.c.b16 %v2099, %v2097
        %v2664 = vpack.c.b16 %v2100, %v2098
        %v2665 = vpack.c.b16 %v2103, %v2101
        %v2666 = vpack.c.b16 %v2104, %v2102
        %v2667 = vpack.c.b16 %v2107, %v2105
        %v2668 = vpack.c.b16 %v2108, %v2106
        %v2669 = vpack.c.b16 %v2111, %v2109
        %v2670 = vpack.c.b16 %v2112, %v2110
        %v2671 = vpack.c.b16 %v2115, %v2113
        %v2672 = vpack.c.b16 %v2116, %v2114
        %v2673 = vpack.c.b16 %v2119, %v2117
        %v2674 = vpack.c.b16 %v2120, %v2118
        %v2675 = vpack.c.b16 %v2123, %v2121
        %v2676 = vpack.c.b16 %v2124, %v2122
        %v2677 = vpack.c.b16 %v2127, %v2125
        %v2678 = vpack.c.b16 %v2128, %v2126
        %v2679 = vpack.c.b16 %v2131, %v2129
        %v2680 = vpack.c.b16 %v2132, %v2130
        %v2681 = vpack.c.b16 %v2135, %v2133
        %v2682 = vpack.c.b16 %v2136, %v2134
        %v2683 = vpack.c.b16 %v2139, %v2137
        %v2684 = vpack.c.b16 %v2140, %v2138
        %v2685 = vpack.c.b16 %v2143, %v2141
        %v2686 = vpack.c.b16 %v2144, %v2142
        %v2687 = vpack.c.b16 %v2147, %v2145
        %v2688 = vpack.c.b16 %v2148, %v2146
        %v2689 = vpack.c.b16 %v2151, %v2149
        %v2690 = vpack.c.b16 %v2152, %v2150
        %v2691 = vpack.c.b16 %v2155, %v2153
        %v2692 = vpack.c.b16 %v2156, %v2154
        %v2693 = vpack.c.b16 %v2159, %v2157
        %v2694 = vpack.c.b16 %v2160, %v2158
        %v2695 = vpack.c.b16 %v2163, %v2161
        %v2696 = vpack.c.b16 %v2164, %v2162
        %v2697 = vpack.c.b16 %v2167, %v2165
        %v2698 = vpack.c.b16 %v2168, %v2166
        %v2699 = vpack.c.b16 %v2171, %v2169
        %v2700 = vpack.c.b16 %v2172, %v2170
        %v2701 = vpack.c.b16 %v2175, %v2173
        %v2702 = vpack.c.b16 %v2176, %v2174
        %v2703 = vpack.c.b16 %v2179, %v2177
        %v2704 = vpack.c.b16 %v2180, %v2178
        %v2705 = vpack.c.b16 %v2183, %v2181
        %v2706 = vpack.c.b16 %v2184, %v2182
        %v2707 = vpack.c.b16 %v2187, %v2185
        %v2708 = vpack.c.b16 %v2188, %v2186
        %v2709 = vpack.c.b16 %v2191, %v2189
        %v2710 = vpack.c.b16 %v2192, %v2190
        %v2711 = vpack.c.b16 %v2195, %v2193
        %v2712 = vpack.c.b16 %v2196, %v2194
        %v2713 = vpack.c.b16 %v2199, %v2197
        %v2714 = vpack.c.b16 %v2200, %v2198
        %v2715 = vpack.c.b16 %v2203, %v2201
        %v2716 = vpack.c.b16 %v2204, %v2202
        %v2717 = vpack.c.b16 %v2207, %v2205
        %v2718 = vpack.c.b16 %v2208, %v2206
        %v2719 = vpack.c.b16 %v2211, %v2209
        %v2720 = vpack.c.b16 %v2212, %v2210
        %v2721 = vpack.c.b16 %v2215, %v2213
        %v2722 = vpack.c.b16 %v2216, %v2214
        %v2723 = vpack.c.b16 %v2219, %v2217
        %v2724 = vpack.c.b16 %v2220, %v2218
        %v2725 = vpack.c.b16 %v2223, %v2221
        %v2726 = vpack.c.b16 %v2224, %v2222
        %v2727 = vpack.c.b16 %v2227, %v2225
        %v2728 = vpack.c.b16 %v2228, %v2226
        %v2729 = vpack.c.b16 %v2231, %v2229
        %v2730 = vpack.c.b16 %v2232, %v2230
        %v2731 = vpack.c.b16 %v2235, %v2233
        %v2732 = vpack.c.b16 %v2236, %v2234
        %v2733 = vpack.c.b16 %v2239, %v2237
        %v2734 = vpack.c.b16 %v2240, %v2238
        %v2735 = vpack.c.b16 %v2243, %v2241
        %v2736 = vpack.c.b16 %v2244, %v2242
        %v2737 = vpack.c.b16 %v2247, %v2245
        %v2738 = vpack.c.b16 %v2248, %v2246
        %v2739 = vpack.c.b16 %v2251, %v2249
        %v2740 = vpack.c.b16 %v2252, %v2250
        %v2741 = vpack.c.b16 %v2255, %v2253
        %v2742 = vpack.c.b16 %v2256, %v2254
        %v2743 = vpack.c.b16 %v2259, %v2257
        %v2744 = vpack.c.b16 %v2260, %v2258
        %v2745 = vpack.c.b16 %v2263, %v2261
        %v2746 = vpack.c.b16 %v2264, %v2262
        %v2747 = vpack.c.b16 %v2267, %v2265
        %v2748 = vpack.c.b16 %v2268, %v2266
        %v2749 = vpack.c.b16 %v2271, %v2269
        %v2750 = vpack.c.b16 %v2272, %v2270
        %v2751 = vpack.c.b16 %v2275, %v2273
        %v2752 = vpack.c.b16 %v2276, %v2274
        %v2753 = vpack.c.b16 %v2279, %v2277
        %v2754 = vpack.c.b16 %v2280, %v2278
        %v2755 = vpack.c.b16 %v2283, %v2281
        %v2756 = vpack.c.b16 %v2284, %v2282
        %v2757 = vpack.c.b16 %v2287, %v2285
        %v2758 = vpack.c.b16 %v2288, %v2286
        %v2759 = vpack.c.b16 %v2291, %v2289
        %v2760 = vpack.c.b16 %v2292, %v2290
        %v2761 = vpack.c.b16 %v2295, %v2293
        %v2762 = vpack.c.b16 %v2296, %v2294
        %v2763 = vpack.c.b16 %v2299, %v2297
        %v2764 = vpack.c.b16 %v2300, %v2298
        %v2765 = vpack.c.b16 %v2303, %v2301
        %v2766 = vpack.c.b16 %v2304, %v2302
        %v2767 = vpack.c.b16 %v2307, %v2305
        %v2768 = vpack.c.b16 %v2308, %v2306
        %v2769 = vpack.c.b16 %v2311, %v2309
        %v2770 = vpack.c.b16 %v2312, %v2310
        %v2771 = vpack.c.b16 %v2315, %v2313
        %v2772 = vpack.c.b16 %v2316, %v2314
        %v2773 = vpack.c.b16 %v2319, %v2317
        %v2774 = vpack.c.b16 %v2320, %v2318
        %v2775 = vpack.c.b16 %v2323, %v2321
        %v2776 = vpack.c.b16 %v2324, %v2322
        %v2777 = vpack.c.b16 %v2327, %v2325
        %v2778 = vpack.c.b16 %v2328, %v2326
        %v2779 = vpack.c.b16 %v2331, %v2329
        %v2780 = vpack.c.b16 %v2332, %v2330
        %v2781 = vpack.c.b16 %v2335, %v2333
        %v2782 = vpack.c.b16 %v2336, %v2334
        %v2783 = vpack.c.b16 %v2339, %v2337
        %v2784 = vpack.c.b16 %v2340, %v2338
        %v2785 = vpack.c.b16 %v2343, %v2341
        %v2786 = vpack.c.b16 %v2344, %v2342
        %v2787 = vpack.c.b16 %v2347, %v2345
        %v2788 = vpack.c.b16 %v2348, %v2346
        %v2789 = vpack.c.b16 %v2351, %v2349
        %v2790 = vpack.c.b16 %v2352, %v2350
        %v2791 = vpack.c.b16 %v2355, %v2353
        %v2792 = vpack.c.b16 %v2356, %v2354
        %v2793 = vpack.c.b16 %v2359, %v2357
        %v2794 = vpack.c.b16 %v2360, %v2358
        %v2795 = vpack.c.b16 %v2363, %v2361
        %v2796 = vpack.c.b16 %v2364, %v2362
        %v2797 = vpack.c.b16 %v2367, %v2365
        %v2798 = vpack.c.b16 %v2368, %v2366
        %v2799 = vpack.c.b16 %v2371, %v2369
        %v2800 = vpack.c.b16 %v2372, %v2370
        %v2801 = vpack.c.b16 %v2375, %v2373
        %v2802 = vpack.c.b16 %v2376, %v2374
        %v2803 = vpack.c.b16 %v2379, %v2377
        %v2804 = vpack.c.b16 %v2380, %v2378
        %v2805 = vpack.c.b16 %v2383, %v2381
        %v2806 = vpack.c.b16 %v2384, %v2382
        %v2807 = vpack.c.b16 %v2387, %v2385
        %v2808 = vpack.c.b16 %v2388, %v2386
        %v2809 = vpack.c.b16 %v2391, %v2389
        %v2810 = vpack.c.b16 %v2392, %v2390
        %v2811 = vpack.c.b16 %v2395, %v2393
        %v2812 = vpack.c.b16 %v2396, %v2394
        %v2813 = vpack.c.b16 %v2399, %v2397
        %v2814 = vpack.c.b16 %v2400, %v2398
        %v2815 = vpack.c.b16 %v2403, %v2401
        %v2816 = vpack.c.b16 %v2404, %v2402
        %v2817 = vpack.c.b16 %v2407, %v2405
        %v2818 = vpack.c.b16 %v2408, %v2406
        %v2819 = vpack.c.b16 %v2411, %v2409
        %v2820 = vpack.c.b16 %v2412, %v2410
        %v2821 = vpack.c.b16 %v2415, %v2413
        %v2822 = vpack.c.b16 %v2416, %v2414
        %v2823 = vpack.c.b16 %v2419, %v2417
        %v2824 = vpack.c.b16 %v2420, %v2418
        %v2825 = vpack.c.b16 %v2423, %v2421
        %v2826 = vpack.c.b16 %v2424, %v2422
        %v2827 = vpack.c.b16 %v2427, %v2425
        %v2828 = vpack.c.b16 %v2428, %v2426
        %v2829 = vpack.c.b16 %v2431, %v2429
        %v2830 = vpack.c.b16 %v2432, %v2430
        %v2831 = vpack.c.b16 %v2435, %v2433
        %v2832 = vpack.c.b16 %v2436, %v2434
        %v2833 = vpack.c.b16 %v2439, %v2437
        %v2834 = vpack.c.b16 %v2440, %v2438
        %v2835 = vpack.c.b16 %v2443, %v2441
        %v2836 = vpack.c.b16 %v2444, %v2442
        %v2837 = vpack.c.b16 %v2447, %v2445
        %v2838 = vpack.c.b16 %v2448, %v2446
        %v2839 = vpack.c.b16 %v2451, %v2449
        %v2840 = vpack.c.b16 %v2452, %v2450
        %v2841 = vpack.c.b16 %v2455, %v2453
        %v2842 = vpack.c.b16 %v2456, %v2454
        %v2843 = vpack.c.b16 %v2459, %v2457
        %v2844 = vpack.c.b16 %v2460, %v2458
        %v2845 = vpack.c.b16 %v2463, %v2461
        %v2846 = vpack.c.b16 %v2464, %v2462
        %v2847 = vpack.c.b16 %v2467, %v2465
        %v2848 = vpack.c.b16 %v2468, %v2466
        %v2849 = vpack.c.b16 %v2471, %v2469
        %v2850 = vpack.c.b16 %v2472, %v2470
        %v2851 = vpack.c.b16 %v2475, %v2473
        %v2852 = vpack.c.b16 %v2476, %v2474
        %v2853 = vpack.c.b16 %v2479, %v2477
        %v2854 = vpack.c.b16 %v2480, %v2478
        %v2855 = vpack.c.b16 %v2483, %v2481
        %v2856 = vpack.c.b16 %v2484, %v2482
        %v2857 = vpack.c.b16 %v2487, %v2485
        %v2858 = vpack.c.b16 %v2488, %v2486
        %v2859 = vpack.c.b16 %v2491, %v2489
        %v2860 = vpack.c.b16 %v2492, %v2490
        %v2861 = vpack.c.b16 %v2495, %v2493
        %v2862 = vpack.c.b16 %v2496, %v2494
        %v2863 = vpack.c.b16 %v2499, %v2497
        %v2864 = vpack.c.b16 %v2500, %v2498
        %v2865 = vpack.c.b16 %v2503, %v2501
        %v2866 = vpack.c.b16 %v2504, %v2502
        %v2867 = vpack.c.b16 %v2507, %v2505
        %v2868 = vpack.c.b16 %v2508, %v2506
        %v2869 = vpack.c.b16 %v2511, %v2509
        %v2870 = vpack.c.b16 %v2512, %v2510
        %v2871 = vpack.c.b16 %v2515, %v2513
        %v2872 = vpack.c.b16 %v2516, %v2514
        %v2873 = vpack.c.b16 %v2519, %v2517
        %v2874 = vpack.c.b16 %v2520, %v2518
        %v2875 = vpack.c.b16 %v2523, %v2521
        %v2876 = vpack.c.b16 %v2524, %v2522
        %v2877 = vpack.c.b16 %v2527, %v2525
        %v2878 = vpack.c.b16 %v2528, %v2526
        %v2879 = vpack.c.b16 %v2531, %v2529
        %v2880 = vpack.c.b16 %v2532, %v2530
        %v2881 = vpack.c.b16 %v2535, %v2533
        %v2882 = vpack.c.b16 %v2536, %v2534
        %v2883 = vpack.c.b16 %v2539, %v2537
        %v2884 = vpack.c.b16 %v2540, %v2538
        %v2885 = vpack.c.b16 %v2543, %v2541
        %v2886 = vpack.c.b16 %v2544, %v2542
        %v2887 = vpack.c.b16 %v2547, %v2545
        %v2888 = vpack.c.b16 %v2548, %v2546
        %v2889 = vpack.c.b16 %v2551, %v2549
        %v2890 = vpack.c.b16 %v2552, %v2550
        %v2891 = vpack.c.b16 %v2555, %v2553
        %v2892 = vpack.c.b16 %v2556, %v2554
        %v2893 = vpack.c.b16 %v2559, %v2557
        %v2894 = vpack.c.b16 %v2560, %v2558
        %v2895 = vpack.c.b16 %v2563, %v2561
        %v2896 = vpack.c.b16 %v2564, %v2562
        %v2897 = vpack.c.b16 %v2567, %v2565
        %v2898 = vpack.c.b16 %v2568, %v2566
        %v2899 = vpack.c.b16 %v2571, %v2569
        %v2900 = vpack.c.b16 %v2572, %v2570
        %v2901 = vpack.c.b16 %v2575, %v2573
        %v2902 = vpack.c.b16 %v2576, %v2574
        %v2903 = vpack.c.b16 %v2579, %v2577
        %v2904 = vpack.c.b16 %v2580, %v2578
        %v2905 = vpack.c.b16 %v2583, %v2581
        %v2906 = vpack.c.b16 %v2584, %v2582
        %v2907 = vpack.c.b16 %v2587, %v2585
        %v2908 = vpack.c.b16 %v2588, %v2586
        %v2909 = vpack.c.b16 %v2591, %v2589
        %v2910 = vpack.c.b16 %v2592, %v2590
        %v2911 = vpack.c.b16 %v2595, %v2593
        %v2912 = vpack.c.b16 %v2596, %v2594
        %v2913 = vpack.c.b16 %v2599, %v2597
        %v2914 = vpack.c.b16 %v2600, %v2598
        %v2915 = vpack.c.b16 %v2603, %v2601
        %v2916 = vpack.c.b16 %v2604, %v2602
        %v2917 = vpack.c.b16 %v2607, %v2605
        %v2918 = vpack.c.b16 %v2608, %v2606
        %v2919 = vpack.c.b16 %v2611, %v2609
        %v2920 = vpack.c.b16 %v2612, %v2610
        %v2921 = vpack.c.b16 %v2615, %v2613
        %v2922 = vpack.c.b16 %v2616, %v2614
        %v2923 = vpack.c.b16 %v2619, %v2617
        %v2924 = vpack.c.b16 %v2620, %v2618
        %v2925 = vpack.c.b16 %v2623, %v2621
        %v2926 = vpack.c.b16 %v2624, %v2622
        %v2927 = vpack.c.b16 %v2627, %v2625
        %v2928 = vpack.c.b16 %v2628, %v2626
        %v2929 = vpack.c.b16 %v2631, %v2629
        %v2930 = vpack.c.b16 %v2632, %v2630
        %v2931 = vpack.c.b16 %v2635, %v2633
        %v2932 = vpack.c.b16 %v2636, %v2634
        %v2933 = vpack.c.b16 %v2639, %v2637
        %v2934 = vpack.c.b16 %v2640, %v2638
        %v2935 = vpack.c.b16 %v2643, %v2641
        %v2936 = vpack.c.b16 %v2644, %v2642
        %v2937 = vpack.c.b16 %v2647, %v2645
        %v2938 = vpack.c.b16 %v2648, %v2646
        %v2939 = vpack.c.b16 %v2651, %v2649
        %v2940 = vpack.c.b16 %v2652, %v2650
        %3229 = vmatprep.subr.bf16.mxu0 %v2654
        %3230 = vmatpush1.bf16.msra.mxu0 %v2653
        %3231 = vmatprep.subr.bf16.mxu0 %v2656
        %3232 = vmatpush1.bf16.msra.mxu0 %v2655
        %3233 = vmatprep.subr.bf16.mxu0 %v2658
        %3234 = vmatpush1.bf16.msra.mxu0 %v2657
        %3235 = vmatprep.subr.bf16.mxu0 %v2660
        %3236 = vmatpush1.bf16.msra.mxu0 %v2659
        %3237 = vmatprep.subr.bf16.mxu0 %v2662
        %3238 = vmatpush1.bf16.msra.mxu0 %v2661
        %3239 = vmatprep.subr.bf16.mxu0 %v2664
        %3240 = vmatpush1.bf16.msra.mxu0 %v2663
        %3241 = vmatprep.subr.bf16.mxu0 %v2666
        %3242 = vmatpush1.bf16.msra.mxu0 %v2665
        %3243 = vmatprep.subr.bf16.mxu0 %v2668
        %3244 = vmatpush1.bf16.msra.mxu0 %v2667
        %3245 = vmatprep.subr.bf16.mxu0 %v2670
        %3246 = vmatpush1.bf16.msra.mxu0 %v2669
        %3247 = vmatprep.subr.bf16.mxu0 %v2672
        %3248 = vmatpush1.bf16.msra.mxu0 %v2671
        %3249 = vmatprep.subr.bf16.mxu0 %v2674
        %3250 = vmatpush1.bf16.msra.mxu0 %v2673
        %3251 = vmatprep.subr.bf16.mxu0 %v2676
        %3252 = vmatpush1.bf16.msra.mxu0 %v2675
        %3253 = vmatprep.subr.bf16.mxu0 %v2678
        %3254 = vmatpush1.bf16.msra.mxu0 %v2677
        %3255 = vmatprep.subr.bf16.mxu0 %v2680
        %3256 = vmatpush1.bf16.msra.mxu0 %v2679
        %3257 = vmatprep.subr.bf16.mxu0 %v2682
        %3258 = vmatpush1.bf16.msra.mxu0 %v2681
        %3259 = vmatprep.subr.bf16.mxu0 %v2684
        %3260 = vmatpush1.bf16.msra.mxu0 %v2683
        %3261 = vmatprep.mubr.bf16.mxu0 %v1754
        %3262 = vmatmul.mubr.bf16.gmra.mrb[0].mxu0 %v1753
        %v3263 = vpop.f32.mrb[0].mxu0
        %v3264 = vadd.f32 %v1719, %v3263
        %v3265 = vpop.f32.mrb[0].mxu0
        %v3266 = vadd.f32 %v1723, %v3265
        %v3267 = vpop.f32.mrb[0].mxu0
        %v3268 = vpop.f32.mrb[0].mxu0
        %3269 = vdwg.mxu0
        %3270 = vmatprep.subr.bf16.mxu0 %v2686
        %3271 = vmatpush1.bf16.msra.mxu0 %v2685
        %3272 = vmatprep.subr.bf16.mxu0 %v2688
        %3273 = vmatpush1.bf16.msra.mxu0 %v2687
        %3274 = vmatprep.subr.bf16.mxu0 %v2690
        %3275 = vmatpush1.bf16.msra.mxu0 %v2689
        %3276 = vmatprep.subr.bf16.mxu0 %v2692
        %3277 = vmatpush1.bf16.msra.mxu0 %v2691
        %3278 = vmatprep.subr.bf16.mxu0 %v2694
        %3279 = vmatpush1.bf16.msra.mxu0 %v2693
        %3280 = vmatprep.subr.bf16.mxu0 %v2696
        %3281 = vmatpush1.bf16.msra.mxu0 %v2695
        %3282 = vmatprep.subr.bf16.mxu0 %v2698
        %3283 = vmatpush1.bf16.msra.mxu0 %v2697
        %3284 = vmatprep.subr.bf16.mxu0 %v2700
        %3285 = vmatpush1.bf16.msra.mxu0 %v2699
        %3286 = vmatprep.subr.bf16.mxu0 %v2702
        %3287 = vmatpush1.bf16.msra.mxu0 %v2701
        %3288 = vmatprep.subr.bf16.mxu0 %v2704
        %3289 = vmatpush1.bf16.msra.mxu0 %v2703
        %3290 = vmatprep.subr.bf16.mxu0 %v2706
        %3291 = vmatpush1.bf16.msra.mxu0 %v2705
        %3292 = vmatprep.subr.bf16.mxu0 %v2708
        %3293 = vmatpush1.bf16.msra.mxu0 %v2707
        %3294 = vmatprep.subr.bf16.mxu0 %v2710
        %3295 = vmatpush1.bf16.msra.mxu0 %v2709
        %3296 = vmatprep.subr.bf16.mxu0 %v2712
        %3297 = vmatpush1.bf16.msra.mxu0 %v2711
        %3298 = vmatprep.subr.bf16.mxu0 %v2714
        %3299 = vmatpush1.bf16.msra.mxu0 %v2713
        %3300 = vmatprep.subr.bf16.mxu0 %v2716
        %3301 = vmatpush1.bf16.msra.mxu0 %v2715
        %3302 = vmatprep.mubr.bf16.mxu0 %v1756
        %3303 = vmatmul.mubr.bf16.gmra.mrb[0].mxu0 %v1755
        %v3304 = vpop.f32.mrb[0].mxu0
        %v3305 = vadd.f32 %v3264, %v3304
        %v3306 = vpop.f32.mrb[0].mxu0
        %v3307 = vadd.f32 %v3266, %v3306
        %v3308 = vpop.f32.mrb[0].mxu0
        %v3309 = vpop.f32.mrb[0].mxu0
        %3310 = vdwg.mxu0
        %3311 = vmatprep.subr.bf16.mxu0 %v2718
        %3312 = vmatpush1.bf16.msra.mxu0 %v2717
        %3313 = vmatprep.subr.bf16.mxu0 %v2720
        %3314 = vmatpush1.bf16.msra.mxu0 %v2719
        %3315 = vmatprep.subr.bf16.mxu0 %v2722
        %3316 = vmatpush1.bf16.msra.mxu0 %v2721
        %3317 = vmatprep.subr.bf16.mxu0 %v2724
        %3318 = vmatpush1.bf16.msra.mxu0 %v2723
        %3319 = vmatprep.subr.bf16.mxu0 %v2726
        %3320 = vmatpush1.bf16.msra.mxu0 %v2725
        %3321 = vmatprep.subr.bf16.mxu0 %v2728
        %3322 = vmatpush1.bf16.msra.mxu0 %v2727
        %3323 = vmatprep.subr.bf16.mxu0 %v2730
        %3324 = vmatpush1.bf16.msra.mxu0 %v2729
        %3325 = vmatprep.subr.bf16.mxu0 %v2732
        %3326 = vmatpush1.bf16.msra.mxu0 %v2731
        %3327 = vmatprep.subr.bf16.mxu0 %v2734
        %3328 = vmatpush1.bf16.msra.mxu0 %v2733
        %3329 = vmatprep.subr.bf16.mxu0 %v2736
        %3330 = vmatpush1.bf16.msra.mxu0 %v2735
        %3331 = vmatprep.subr.bf16.mxu0 %v2738
        %3332 = vmatpush1.bf16.msra.mxu0 %v2737
        %3333 = vmatprep.subr.bf16.mxu0 %v2740
        %3334 = vmatpush1.bf16.msra.mxu0 %v2739
        %3335 = vmatprep.subr.bf16.mxu0 %v2742
        %3336 = vmatpush1.bf16.msra.mxu0 %v2741
        %3337 = vmatprep.subr.bf16.mxu0 %v2744
        %3338 = vmatpush1.bf16.msra.mxu0 %v2743
        %3339 = vmatprep.subr.bf16.mxu0 %v2746
        %3340 = vmatpush1.bf16.msra.mxu0 %v2745
        %3341 = vmatprep.subr.bf16.mxu0 %v2748
        %3342 = vmatpush1.bf16.msra.mxu0 %v2747
        %3343 = vmatprep.mubr.bf16.mxu0 %v1758
        %3344 = vmatmul.mubr.bf16.gmra.mrb[0].mxu0 %v1757
        %v3345 = vpop.f32.mrb[0].mxu0
        %v3346 = vadd.f32 %v3305, %v3345
        %v3347 = vpop.f32.mrb[0].mxu0
        %v3348 = vadd.f32 %v3307, %v3347
        %v3349 = vpop.f32.mrb[0].mxu0
        %v3350 = vpop.f32.mrb[0].mxu0
        %3351 = vdwg.mxu0
        %3352 = vmatprep.subr.bf16.mxu0 %v2750
        %3353 = vmatpush1.bf16.msra.mxu0 %v2749
        %3354 = vmatprep.subr.bf16.mxu0 %v2752
        %3355 = vmatpush1.bf16.msra.mxu0 %v2751
        %3356 = vmatprep.subr.bf16.mxu0 %v2754
        %3357 = vmatpush1.bf16.msra.mxu0 %v2753
        %3358 = vmatprep.subr.bf16.mxu0 %v2756
        %3359 = vmatpush1.bf16.msra.mxu0 %v2755
        %3360 = vmatprep.subr.bf16.mxu0 %v2758
        %3361 = vmatpush1.bf16.msra.mxu0 %v2757
        %3362 = vmatprep.subr.bf16.mxu0 %v2760
        %3363 = vmatpush1.bf16.msra.mxu0 %v2759
        %3364 = vmatprep.subr.bf16.mxu0 %v2762
        %3365 = vmatpush1.bf16.msra.mxu0 %v2761
        %3366 = vmatprep.subr.bf16.mxu0 %v2764
        %3367 = vmatpush1.bf16.msra.mxu0 %v2763
        %3368 = vmatprep.subr.bf16.mxu0 %v2766
        %3369 = vmatpush1.bf16.msra.mxu0 %v2765
        %3370 = vmatprep.subr.bf16.mxu0 %v2768
        %3371 = vmatpush1.bf16.msra.mxu0 %v2767
        %3372 = vmatprep.subr.bf16.mxu0 %v2770
        %3373 = vmatpush1.bf16.msra.mxu0 %v2769
        %3374 = vmatprep.subr.bf16.mxu0 %v2772
        %3375 = vmatpush1.bf16.msra.mxu0 %v2771
        %3376 = vmatprep.subr.bf16.mxu0 %v2774
        %3377 = vmatpush1.bf16.msra.mxu0 %v2773
        %3378 = vmatprep.subr.bf16.mxu0 %v2776
        %3379 = vmatpush1.bf16.msra.mxu0 %v2775
        %3380 = vmatprep.subr.bf16.mxu0 %v2778
        %3381 = vmatpush1.bf16.msra.mxu0 %v2777
        %3382 = vmatprep.subr.bf16.mxu0 %v2780
        %3383 = vmatpush1.bf16.msra.mxu0 %v2779
        %3384 = vmatprep.mubr.bf16.mxu0 %v1760
        %3385 = vmatmul.mubr.bf16.gmra.mrb[0].mxu0 %v1759
        %v3386 = vpop.f32.mrb[0].mxu0
        %v3387 = vadd.f32 %v3346, %v3386
        %v3388 = vpop.f32.mrb[0].mxu0
        %v3389 = vadd.f32 %v3348, %v3388
        %v3390 = vpop.f32.mrb[0].mxu0
        %v3391 = vpop.f32.mrb[0].mxu0
        %3392 = vdwg.mxu0
        %3393 = vmatprep.subr.bf16.mxu0 %v2782
        %3394 = vmatpush1.bf16.msra.mxu0 %v2781
        %3395 = vmatprep.subr.bf16.mxu0 %v2784
        %3396 = vmatpush1.bf16.msra.mxu0 %v2783
        %3397 = vmatprep.subr.bf16.mxu0 %v2786
        %3398 = vmatpush1.bf16.msra.mxu0 %v2785
        %3399 = vmatprep.subr.bf16.mxu0 %v2788
        %3400 = vmatpush1.bf16.msra.mxu0 %v2787
        %3401 = vmatprep.subr.bf16.mxu0 %v2790
        %3402 = vmatpush1.bf16.msra.mxu0 %v2789
        %3403 = vmatprep.subr.bf16.mxu0 %v2792
        %3404 = vmatpush1.bf16.msra.mxu0 %v2791
        %3405 = vmatprep.subr.bf16.mxu0 %v2794
        %3406 = vmatpush1.bf16.msra.mxu0 %v2793
        %3407 = vmatprep.subr.bf16.mxu0 %v2796
        %3408 = vmatpush1.bf16.msra.mxu0 %v2795
        %3409 = vmatprep.subr.bf16.mxu0 %v2798
        %3410 = vmatpush1.bf16.msra.mxu0 %v2797
        %3411 = vmatprep.subr.bf16.mxu0 %v2800
        %3412 = vmatpush1.bf16.msra.mxu0 %v2799
        %3413 = vmatprep.subr.bf16.mxu0 %v2802
        %3414 = vmatpush1.bf16.msra.mxu0 %v2801
        %3415 = vmatprep.subr.bf16.mxu0 %v2804
        %3416 = vmatpush1.bf16.msra.mxu0 %v2803
        %3417 = vmatprep.subr.bf16.mxu0 %v2806
        %3418 = vmatpush1.bf16.msra.mxu0 %v2805
        %3419 = vmatprep.subr.bf16.mxu0 %v2808
        %3420 = vmatpush1.bf16.msra.mxu0 %v2807
        %3421 = vmatprep.subr.bf16.mxu0 %v2810
        %3422 = vmatpush1.bf16.msra.mxu0 %v2809
        %3423 = vmatprep.subr.bf16.mxu0 %v2812
        %3424 = vmatpush1.bf16.msra.mxu0 %v2811
        %3425 = vmatprep.mubr.bf16.mxu0 %v1762
        %3426 = vmatmul.mubr.bf16.gmra.mrb[0].mxu0 %v1761
        %v3427 = vpop.f32.mrb[0].mxu0
        %v3428 = vadd.f32 %v3387, %v3427
        %v3429 = vpop.f32.mrb[0].mxu0
        %v3430 = vadd.f32 %v3389, %v3429
        %v3431 = vpop.f32.mrb[0].mxu0
        %v3432 = vpop.f32.mrb[0].mxu0
        %3433 = vdwg.mxu0
        %3434 = vmatprep.subr.bf16.mxu0 %v2814
        %3435 = vmatpush1.bf16.msra.mxu0 %v2813
        %3436 = vmatprep.subr.bf16.mxu0 %v2816
        %3437 = vmatpush1.bf16.msra.mxu0 %v2815
        %3438 = vmatprep.subr.bf16.mxu0 %v2818
        %3439 = vmatpush1.bf16.msra.mxu0 %v2817
        %3440 = vmatprep.subr.bf16.mxu0 %v2820
        %3441 = vmatpush1.bf16.msra.mxu0 %v2819
        %3442 = vmatprep.subr.bf16.mxu0 %v2822
        %3443 = vmatpush1.bf16.msra.mxu0 %v2821
        %3444 = vmatprep.subr.bf16.mxu0 %v2824
        %3445 = vmatpush1.bf16.msra.mxu0 %v2823
        %3446 = vmatprep.subr.bf16.mxu0 %v2826
        %3447 = vmatpush1.bf16.msra.mxu0 %v2825
        %3448 = vmatprep.subr.bf16.mxu0 %v2828
        %3449 = vmatpush1.bf16.msra.mxu0 %v2827
        %3450 = vmatprep.subr.bf16.mxu0 %v2830
        %3451 = vmatpush1.bf16.msra.mxu0 %v2829
        %3452 = vmatprep.subr.bf16.mxu0 %v2832
        %3453 = vmatpush1.bf16.msra.mxu0 %v2831
        %3454 = vmatprep.subr.bf16.mxu0 %v2834
        %3455 = vmatpush1.bf16.msra.mxu0 %v2833
        %3456 = vmatprep.subr.bf16.mxu0 %v2836
        %3457 = vmatpush1.bf16.msra.mxu0 %v2835
        %3458 = vmatprep.subr.bf16.mxu0 %v2838
        %3459 = vmatpush1.bf16.msra.mxu0 %v2837
        %3460 = vmatprep.subr.bf16.mxu0 %v2840
        %3461 = vmatpush1.bf16.msra.mxu0 %v2839
        %3462 = vmatprep.subr.bf16.mxu0 %v2842
        %3463 = vmatpush1.bf16.msra.mxu0 %v2841
        %3464 = vmatprep.subr.bf16.mxu0 %v2844
        %3465 = vmatpush1.bf16.msra.mxu0 %v2843
        %3466 = vmatprep.mubr.bf16.mxu0 %v1764
        %3467 = vmatmul.mubr.bf16.gmra.mrb[0].mxu0 %v1763
        %v3468 = vpop.f32.mrb[0].mxu0
        %v3469 = vadd.f32 %v3428, %v3468
        %v3470 = vpop.f32.mrb[0].mxu0
        %v3471 = vadd.f32 %v3430, %v3470
        %v3472 = vpop.f32.mrb[0].mxu0
        %v3473 = vpop.f32.mrb[0].mxu0
        %3474 = vdwg.mxu0
        %3475 = vmatprep.subr.bf16.mxu0 %v2846
        %3476 = vmatpush1.bf16.msra.mxu0 %v2845
        %3477 = vmatprep.subr.bf16.mxu0 %v2848
        %3478 = vmatpush1.bf16.msra.mxu0 %v2847
        %3479 = vmatprep.subr.bf16.mxu0 %v2850
        %3480 = vmatpush1.bf16.msra.mxu0 %v2849
        %3481 = vmatprep.subr.bf16.mxu0 %v2852
        %3482 = vmatpush1.bf16.msra.mxu0 %v2851
        %3483 = vmatprep.subr.bf16.mxu0 %v2854
        %3484 = vmatpush1.bf16.msra.mxu0 %v2853
        %3485 = vmatprep.subr.bf16.mxu0 %v2856
        %3486 = vmatpush1.bf16.msra.mxu0 %v2855
        %3487 = vmatprep.subr.bf16.mxu0 %v2858
        %3488 = vmatpush1.bf16.msra.mxu0 %v2857
        %3489 = vmatprep.subr.bf16.mxu0 %v2860
        %3490 = vmatpush1.bf16.msra.mxu0 %v2859
        %3491 = vmatprep.subr.bf16.mxu0 %v2862
        %3492 = vmatpush1.bf16.msra.mxu0 %v2861
        %3493 = vmatprep.subr.bf16.mxu0 %v2864
        %3494 = vmatpush1.bf16.msra.mxu0 %v2863
        %3495 = vmatprep.subr.bf16.mxu0 %v2866
        %3496 = vmatpush1.bf16.msra.mxu0 %v2865
        %3497 = vmatprep.subr.bf16.mxu0 %v2868
        %3498 = vmatpush1.bf16.msra.mxu0 %v2867
        %3499 = vmatprep.subr.bf16.mxu0 %v2870
        %3500 = vmatpush1.bf16.msra.mxu0 %v2869
        %3501 = vmatprep.subr.bf16.mxu0 %v2872
        %3502 = vmatpush1.bf16.msra.mxu0 %v2871
        %3503 = vmatprep.subr.bf16.mxu0 %v2874
        %3504 = vmatpush1.bf16.msra.mxu0 %v2873
        %3505 = vmatprep.subr.bf16.mxu0 %v2876
        %3506 = vmatpush1.bf16.msra.mxu0 %v2875
        %3507 = vmatprep.mubr.bf16.mxu0 %v1766
        %3508 = vmatmul.mubr.bf16.gmra.mrb[0].mxu0 %v1765
        %v3509 = vpop.f32.mrb[0].mxu0
        %v3510 = vadd.f32 %v3469, %v3509
        %v3511 = vpop.f32.mrb[0].mxu0
        %v3512 = vadd.f32 %v3471, %v3511
        %v3513 = vpop.f32.mrb[0].mxu0
        %v3514 = vpop.f32.mrb[0].mxu0
        %3515 = vdwg.mxu0
        %3516 = vmatprep.subr.bf16.mxu0 %v2878
        %3517 = vmatpush1.bf16.msra.mxu0 %v2877
        %3518 = vmatprep.subr.bf16.mxu0 %v2880
        %3519 = vmatpush1.bf16.msra.mxu0 %v2879
        %3520 = vmatprep.subr.bf16.mxu0 %v2882
        %3521 = vmatpush1.bf16.msra.mxu0 %v2881
        %3522 = vmatprep.subr.bf16.mxu0 %v2884
        %3523 = vmatpush1.bf16.msra.mxu0 %v2883
        %3524 = vmatprep.subr.bf16.mxu0 %v2886
        %3525 = vmatpush1.bf16.msra.mxu0 %v2885
        %3526 = vmatprep.subr.bf16.mxu0 %v2888
        %3527 = vmatpush1.bf16.msra.mxu0 %v2887
        %3528 = vmatprep.subr.bf16.mxu0 %v2890
        %3529 = vmatpush1.bf16.msra.mxu0 %v2889
        %3530 = vmatprep.subr.bf16.mxu0 %v2892
        %3531 = vmatpush1.bf16.msra.mxu0 %v2891
        %3532 = vmatprep.subr.bf16.mxu0 %v2894
        %3533 = vmatpush1.bf16.msra.mxu0 %v2893
        %3534 = vmatprep.subr.bf16.mxu0 %v2896
        %3535 = vmatpush1.bf16.msra.mxu0 %v2895
        %3536 = vmatprep.subr.bf16.mxu0 %v2898
        %3537 = vmatpush1.bf16.msra.mxu0 %v2897
        %3538 = vmatprep.subr.bf16.mxu0 %v2900
        %3539 = vmatpush1.bf16.msra.mxu0 %v2899
        %3540 = vmatprep.subr.bf16.mxu0 %v2902
        %3541 = vmatpush1.bf16.msra.mxu0 %v2901
        %3542 = vmatprep.subr.bf16.mxu0 %v2904
        %3543 = vmatpush1.bf16.msra.mxu0 %v2903
        %3544 = vmatprep.subr.bf16.mxu0 %v2906
        %3545 = vmatpush1.bf16.msra.mxu0 %v2905
        %3546 = vmatprep.subr.bf16.mxu0 %v2908
        %3547 = vmatpush1.bf16.msra.mxu0 %v2907
        %3548 = vmatprep.mubr.bf16.mxu0 %v1768
        %3549 = vmatmul.mubr.bf16.gmra.mrb[0].mxu0 %v1767
        %v3550 = vpop.f32.mrb[0].mxu0
        %v3551 = vadd.f32 %v3510, %v3550
        %v3552 = vpop.f32.mrb[0].mxu0
        %v3553 = vadd.f32 %v3512, %v3552
        %v3554 = vpop.f32.mrb[0].mxu0
        %v3555 = vpop.f32.mrb[0].mxu0
        %3556 = vdwg.mxu0
        %3557 = vmatprep.subr.bf16.mxu0 %v2910
        %3558 = vmatpush1.bf16.msra.mxu0 %v2909
        %3559 = vmatprep.subr.bf16.mxu0 %v2912
        %3560 = vmatpush1.bf16.msra.mxu0 %v2911
        %3561 = vmatprep.subr.bf16.mxu0 %v2914
        %3562 = vmatpush1.bf16.msra.mxu0 %v2913
        %3563 = vmatprep.subr.bf16.mxu0 %v2916
        %3564 = vmatpush1.bf16.msra.mxu0 %v2915
        %3565 = vmatprep.subr.bf16.mxu0 %v2918
        %3566 = vmatpush1.bf16.msra.mxu0 %v2917
        %3567 = vmatprep.subr.bf16.mxu0 %v2920
        %3568 = vmatpush1.bf16.msra.mxu0 %v2919
        %3569 = vmatprep.subr.bf16.mxu0 %v2922
        %3570 = vmatpush1.bf16.msra.mxu0 %v2921
        %3571 = vmatprep.subr.bf16.mxu0 %v2924
        %3572 = vmatpush1.bf16.msra.mxu0 %v2923
        %3573 = vmatprep.subr.bf16.mxu0 %v2926
        %3574 = vmatpush1.bf16.msra.mxu0 %v2925
        %3575 = vmatprep.subr.bf16.mxu0 %v2928
        %3576 = vmatpush1.bf16.msra.mxu0 %v2927
        %3577 = vmatprep.subr.bf16.mxu0 %v2930
        %3578 = vmatpush1.bf16.msra.mxu0 %v2929
        %3579 = vmatprep.subr.bf16.mxu0 %v2932
        %3580 = vmatpush1.bf16.msra.mxu0 %v2931
        %3581 = vmatprep.subr.bf16.mxu0 %v2934
        %3582 = vmatpush1.bf16.msra.mxu0 %v2933
        %3583 = vmatprep.subr.bf16.mxu0 %v2936
        %3584 = vmatpush1.bf16.msra.mxu0 %v2935
        %3585 = vmatprep.subr.bf16.mxu0 %v2938
        %3586 = vmatpush1.bf16.msra.mxu0 %v2937
        %3587 = vmatprep.subr.bf16.mxu0 %v2940
        %3588 = vmatpush1.bf16.msra.mxu0 %v2939
        %3589 = vmatprep.mubr.bf16.mxu0 %v1770
        %3590 = vmatmul.mubr.bf16.gmra.mrb[0].mxu0 %v1769
        %v3591 = vpop.f32.mrb[0].mxu0
        %v3592 = vadd.f32 %v3551, %v3591
        %v3593 = vpop.f32.mrb[0].mxu0
        %v3594 = vadd.f32 %v3553, %v3593
        %v3595 = vpop.f32.mrb[0].mxu0
        %v3596 = vpop.f32.mrb[0].mxu0
        %3597 = vdwg.mxu0
        %v3598 = vmax.f32 %v3592, 0.0
        %v3599 = vmax.f32 %v3594, 0.0
        %v3600 = vpack.c.bf16 %v3598, %v3598
        %v3601 = vpack.c.bf16 %v3599, %v3599
        %v3604 = vunpack.c.l.b16 %v3600
        %v3605 = vunpack.c.l.b16 %v3601
        %v3606 = vpack.c.b16 %v3605, %v3604
        %3608 = vst [vmem:[%s1415] sm:$0xff] %v3606
        %s3609 = smul.u32 2, %s18
        %p3610 = scmp.lt.s32.totalorder %s19, 0
        %s3611 = scalar_select %p3610, %s19, 0
        %p3612 = scmp.lt.s32.totalorder %s3609, 3
        %s3613 = scalar_select %p3612, %s3609, 3
        %s3614 = smul.addr %s3611, 4
        %s3615 = sadd.s32 %s3613, %s3614
        %s3616 = smul.addr %s3615, 4
        %s3617 = scalar_lea.vmem %s3, %s3616
        // Predicated region
        $region71: #{yolov10_forward.8} parent=65 // pred_check
          %p3618 = pneg %p124
        $region72: #{yolov10_forward.8} parent=65 // pred_check_branch
          %3620 = sbr.rel (%p3618) target = $region74
        $region73: #{yolov10_forward.8} parent=65 // pred_region
          %s3621 = smul.u32 2, %s18
        $region74: #{yolov10_forward.8} parent=65 // pred_fallthru
          _
      $region66: #{yolov10_forward.8} parent=5 // pred_fallthru
        _
      %p3622 = scmp.le.s32.totalorder 2, %s9
      // Predicated region
      $region75: #{yolov10_forward.8} parent=5 // pred_check
        %p3623 = pneg %p3622
      $region76: #{yolov10_forward.8} parent=5 // pred_check_branch
        %3625 = sbr.rel (%p3623) target = $region78
      $region77: #{yolov10_forward.8} parent=5 // pred_region
        %s3626 = ssub.s32 %s9, 2
        // Predicated region
        $region79: #{yolov10_forward.8} parent=77 // pred_check
          %p3627 = pneg %p130
        $region80: #{yolov10_forward.8} parent=77 // pred_check_branch
          %3629 = sbr.rel (%p3627) target = $region82
        $region81: #{yolov10_forward.8} parent=77 // pred_region
          %s3630 = smul.u32 2, %s20
          %p3631 = scmp.lt.s32.totalorder %s21, 0
          %s3632 = scalar_select %p3631, %s21, 0
          %p3633 = scmp.lt.s32.totalorder %s3630, 3
          %s3634 = scalar_select %p3633, %s3630, 3
          %s3635 = smul.addr %s3632, 4
          %s3636 = sadd.s32 %s3634, %s3635
          %s3637 = smul.addr %s3636, 4
          %s3638 = scalar_lea.vmem %s3, %s3637
        $region82: #{yolov10_forward.8} parent=77 // pred_fallthru
          _
      $region78: #{yolov10_forward.8} parent=5 // pred_fallthru
        _
    $region6: #{yolov10_forward.8} parent=1 // loop_footer
      %s13 = sadd.s32 1, %s9
    $region7: #{yolov10_forward.8} parent=1 // loop_footer_branch
      %8 = sbr.rel target = $region3
    $region8: #{yolov10_forward.8} parent=1 // loop_exit
      _

</llo_original>
